<compile_context>
chip_gen: v5e
topology: v5e:2x2
jax: 0.10.0
libtpu: 0.0.40
codegen_flags: <defaults>
</compile_context>

<pallas_src>
import functools
import numpy as np

import jax
import jax.numpy as jnp
from jax import lax
from jax.experimental import pallas as pl
from jax.experimental.pallas import tpu as pltpu


# contract the LAST dims of both operands: A @ B^T (same form as the official
# Pallas TPU flash-attention kernel).
_NT_DIMS = (((1,), (1,)), ((), ()))


# ---------------------------------------------------------------------------
# Kernel 1: fused patch embedding
#   tokens_body = relu(bn1(patches @ W1 + b1) @ W2 + b2) + pos_embed[1:]
# ---------------------------------------------------------------------------

def _embed_kernel(p_ref, w1_ref, b1_ref, bns_ref, bnb_ref, w2_ref, b2_ref,
                  pos_ref, o_ref):
    pt = p_ref[0]                                                     # (P, p*p)
    t = jnp.dot(pt, w1_ref[...], preferred_element_type=jnp.float32) + b1_ref[...]
    t = t * bns_ref[...] + bnb_ref[...]                               # eval BatchNorm1d(P)
    t = jnp.dot(t, w2_ref[...], preferred_element_type=jnp.float32) + b2_ref[...]
    t = jnp.maximum(t, 0.0)
    o_ref[0] = t + pos_ref[...]                                       # pos rows 1..P


def embed_tokens(patches, ep):
    n, P, pp = patches.shape
    E = ep["w1"].shape[1]
    return pl.pallas_call(
        _embed_kernel,
        out_shape=jax.ShapeDtypeStruct((n, P, E), jnp.float32),
        grid=(n,),
        in_specs=[
            pl.BlockSpec((1, P, pp), lambda b: (b, 0, 0)),
            pl.BlockSpec((pp, E), lambda b: (0, 0)),
            pl.BlockSpec((1, E), lambda b: (0, 0)),
            pl.BlockSpec((P, 1), lambda b: (0, 0)),
            pl.BlockSpec((P, 1), lambda b: (0, 0)),
            pl.BlockSpec((E, E), lambda b: (0, 0)),
            pl.BlockSpec((1, E), lambda b: (0, 0)),
            pl.BlockSpec((P, E), lambda b: (0, 0)),
        ],
        out_specs=pl.BlockSpec((1, P, E), lambda b: (b, 0, 0)),
        compiler_params=pltpu.CompilerParams(dimension_semantics=("parallel",)),
    )(patches, ep["w1"], ep["b1"], ep["bn_scale"], ep["bn_shift"],
      ep["w2"], ep["b2"], ep["pos_body"])


# ---------------------------------------------------------------------------
# Kernel 2: one full TransformerEncoderLayer (post-norm, ReLU, batch_first, eval)
#   Per-head Q/K/V weights are pre-split at parameter-prep time to (H, E, Dh) so the
#   head split is free inside the kernel (no lane slicing, no HBM transposes).
# ---------------------------------------------------------------------------

def _encoder_layer_kernel(x_ref, wq_ref, bq_ref, wk_ref, bk_ref, wv_ref, bv_ref,
                          wo_ref, bo_ref, ln1g_ref, ln1b_ref,
                          w1_ref, b1_ref, w2_ref, b2_ref, ln2g_ref, ln2b_ref,
                          o_ref, *, num_heads, head_dim, eps):
    x = x_ref[0]                                                      # (S, E)
    scale = 1.0 / float(np.sqrt(head_dim))

    # Multi-head self-attention; accumulate the out-projection per head so no
    # concatenation of head outputs is needed.
    acc = jnp.zeros(x.shape, jnp.float32)
    for h in range(num_heads):                                        # static unroll
        qh = jnp.dot(x, wq_ref[h], preferred_element_type=jnp.float32) + bq_ref[h]
        kh = jnp.dot(x, wk_ref[h], preferred_element_type=jnp.float32) + bk_ref[h]
        vh = jnp.dot(x, wv_ref[h], preferred_element_type=jnp.float32) + bv_ref[h]
        s = lax.dot_general(qh, kh, _NT_DIMS,
                            preferred_element_type=jnp.float32) * scale   # (S, S)
        s = s - jnp.max(s, axis=-1, keepdims=True)
        p = jnp.exp(s)
        p = p / jnp.sum(p, axis=-1, keepdims=True)
        oh = jnp.dot(p, vh, preferred_element_type=jnp.float32)           # (S, Dh)
        acc = acc + jnp.dot(oh, wo_ref[h], preferred_element_type=jnp.float32)
    attn = acc + bo_ref[...]

    # residual + LayerNorm1
    h1 = x + attn
    mu = jnp.mean(h1, axis=-1, keepdims=True)
    var = jnp.mean((h1 - mu) ** 2, axis=-1, keepdims=True)
    h1 = (h1 - mu) * lax.rsqrt(var + eps) * ln1g_ref[...] + ln1b_ref[...]

    # FFN
    f = jnp.dot(h1, w1_ref[...], preferred_element_type=jnp.float32) + b1_ref[...]
    f = jnp.maximum(f, 0.0)
    f = jnp.dot(f, w2_ref[...], preferred_element_type=jnp.float32) + b2_ref[...]

    # residual + LayerNorm2
    h2 = h1 + f
    mu2 = jnp.mean(h2, axis=-1, keepdims=True)
    var2 = jnp.mean((h2 - mu2) ** 2, axis=-1, keepdims=True)
    o_ref[0] = (h2 - mu2) * lax.rsqrt(var2 + eps) * ln2g_ref[...] + ln2b_ref[...]


def encoder_layer(x, lp, num_heads, eps=1e-5):
    n, S, E = x.shape
    Dh = E // num_heads

    def full(a):
        nd = a.ndim
        return pl.BlockSpec(a.shape, lambda b, _nd=nd: (0,) * _nd)

    weights = [lp["wq"], lp["bq"], lp["wk"], lp["bk"], lp["wv"], lp["bv"],
               lp["wo"], lp["bo"], lp["ln1_g"], lp["ln1_b"],
               lp["w1"], lp["b1"], lp["w2"], lp["b2"], lp["ln2_g"], lp["ln2_b"]]

    return pl.pallas_call(
        functools.partial(_encoder_layer_kernel, num_heads=num_heads,
                          head_dim=Dh, eps=eps),
        out_shape=jax.ShapeDtypeStruct((n, S, E), jnp.float32),
        grid=(n,),
        in_specs=[pl.BlockSpec((1, S, E), lambda b: (b, 0, 0))]
                 + [full(w) for w in weights],
        out_specs=pl.BlockSpec((1, S, E), lambda b: (b, 0, 0)),
        compiler_params=pltpu.CompilerParams(dimension_semantics=("parallel",)),
    )(x, *weights)


# ---------------------------------------------------------------------------
# Kernel 3: fused MLP head
#   h1 = relu(linear_2_with_bn2_folded(cls))          (computed once, kept in VMEM)
#   f  = tanh(h1 @ W3[:, tile] + b3[tile])            (per N-tile of the 2048x2048)
#   logits += f @ Wout[tile, :]                       (K-tiled output projection)
#   out = sigmoid(logits + b_out)                     (last grid step)
# ---------------------------------------------------------------------------

def _head_kernel(h_ref, w2_ref, b2_ref, w3_ref, b3_ref, wo_ref, bo_ref,
                 o_ref, h1_s, acc_s):
    j = pl.program_id(0)

    @pl.when(j == 0)
    def _():
        y = jnp.dot(h_ref[...].astype(jnp.bfloat16), w2_ref[...],
                    preferred_element_type=jnp.float32) + b2_ref[...]
        h1_s[...] = jnp.maximum(y, 0.0)          # bn2 folded into w2/b2 at prep time
        acc_s[...] = jnp.zeros_like(acc_s)

    f = jnp.dot(h1_s[...].astype(jnp.bfloat16), w3_ref[...],
                preferred_element_type=jnp.float32) + b3_ref[...]
    f = jnp.tanh(f)
    acc_s[...] += jnp.dot(f.astype(jnp.bfloat16), wo_ref[...],
                          preferred_element_type=jnp.float32)

    @pl.when(j == pl.num_programs(0) - 1)
    def _():
        o_ref[...] = jax.nn.sigmoid(acc_s[...] + bo_ref[...])


def mlp_head(cls_h, hp, tn=512):
    n, E = cls_h.shape
    Dmid = hp["w3"].shape[0]                     # 2048
    C = hp["wo"].shape[1]
    grid = (Dmid // tn,)
    return pl.pallas_call(
        _head_kernel,
        out_shape=jax.ShapeDtypeStruct((n, C), jnp.float32),
        grid=grid,
        in_specs=[
            pl.BlockSpec((n, E), lambda j: (0, 0)),
            pl.BlockSpec((E, Dmid), lambda j: (0, 0)),
            pl.BlockSpec((1, Dmid), lambda j: (0, 0)),
            pl.BlockSpec((Dmid, tn), lambda j: (0, j)),
            pl.BlockSpec((1, tn), lambda j: (0, j)),
            pl.BlockSpec((tn, C), lambda j: (j, 0)),
            pl.BlockSpec((1, C), lambda j: (0, 0)),
        ],
        out_specs=pl.BlockSpec((n, C), lambda j: (0, 0)),
        scratch_shapes=[pltpu.VMEM((n, Dmid), jnp.float32),
                        pltpu.VMEM((n, C), jnp.float32)],
        compiler_params=pltpu.CompilerParams(dimension_semantics=("arbitrary",)),
    )(cls_h, hp["w2"], hp["b2"], hp["w3"], hp["b3"], hp["wo"], hp["bo"])


# ---------------------------------------------------------------------------
# JAX glue
# ---------------------------------------------------------------------------

def patchify(x, patch_size):
    """Equivalent of the module's unfold-based patchify (c == 1, as the module implies)."""
    n, c, H, W = x.shape
    p = patch_size
    x = x.reshape(n, c, H // p, p, W // p, p)
    x = jnp.transpose(x, (0, 1, 2, 4, 3, 5))
    return x.reshape(n, c * (H // p) * (W // p), p * p)


def vitnet_forward(x, params, cfg):
    n = x.shape[0]
    patches = patchify(x, cfg["patch_size"])                 # (n, P, p*p)
    body = embed_tokens(patches, params["embed"])            # (n, P, E)
    E = body.shape[-1]
    # class token (+ its positional row, pre-added at prep time) prepended per batch.
    cls_row = jnp.broadcast_to(params["embed"]["cls_pos"], (n, 1, E))
    out = jnp.concatenate([cls_row, body], axis=1)           # (n, P+1, E)
    for lp in params["layers"]:
        out = encoder_layer(out, lp, cfg["num_heads"])
    cls_out = out[:, 0]                                      # (n, E)
    return mlp_head(cls_out, params["head"])                 # (n, num_classes)


# ---------------------------------------------------------------------------
# Deterministic parameter construction (synthetic; no checkpoint load)
# ---------------------------------------------------------------------------

def get_positional_embeddings(seq_len, d):
    res = np.ones((seq_len, d), dtype=np.float32)
    for i in range(seq_len):
        for j in range(d):
            if j % 2 == 0:
                res[i, j] = np.sin(i / 10000 ** (j / d))
            else:
                res[i, j] = np.cos(i / 10000 ** ((j - 1) / d))
    return jnp.asarray(res)


def init_params(key, cfg):
    p = cfg["patch_size"]
    E = cfg["hidden_dim"]
    C = cfg["num_classes"]
    H = cfg["num_heads"]
    Dh = E // H
    P = (cfg["img_size"] // p) ** 2
    F = E * cfg["hidden_dim_mult"]
    eps = 1e-5
    keys = iter(jax.random.split(key, 256))

    def lin(kin, kout):
        w = jax.random.normal(next(keys), (kin, kout), jnp.float32) / np.sqrt(kin)
        b = jax.random.normal(next(keys), (kout,), jnp.float32) * 0.01
        return w, b

    # --- patch embedding ---
    w_in1, b_in1 = lin(p * p, E)
    w_in2, b_in2 = lin(E, E)
    bn1_gamma = jnp.ones((P,), jnp.float32)
    bn1_beta = jnp.zeros((P,), jnp.float32)
    bn1_mean = jnp.zeros((P,), jnp.float32)
    bn1_var = jnp.ones((P,), jnp.float32)
    bn1_scale = bn1_gamma * lax.rsqrt(bn1_var + eps)
    bn1_shift = bn1_beta - bn1_mean * bn1_scale
    class_token = jax.random.uniform(next(keys), (1, E), jnp.float32)
    pos = get_positional_embeddings(P + 1, E)
    embed = dict(
        w1=w_in1, b1=b_in1.reshape(1, E),
        bn_scale=bn1_scale.reshape(P, 1), bn_shift=bn1_shift.reshape(P, 1),
        w2=w_in2, b2=b_in2.reshape(1, E),
        pos_body=pos[1:], cls_pos=class_token + pos[0:1],
    )

    # --- encoder layers (per-head weight layout for the fused kernel) ---
    def split_heads_w(wcol):                     # (E, E) -> (H, E, Dh)
        return jnp.transpose(wcol.reshape(E, H, Dh), (1, 0, 2))

    def split_heads_b(bcol):                     # (E,) -> (H, 1, Dh)
        return bcol.reshape(H, 1, Dh)

    layers = []
    for _ in range(cfg["num_encoder_layer"]):
        w_in, b_in = lin(E, 3 * E)               # fused QKV (in, out) layout
        w_o, b_o = lin(E, E)                     # attention out_proj
        w1, b1 = lin(E, F)
        w2, b2 = lin(F, E)
        layers.append(dict(
            wq=split_heads_w(w_in[:, 0:E]),      bq=split_heads_b(b_in[0:E]),
            wk=split_heads_w(w_in[:, E:2 * E]),  bk=split_heads_b(b_in[E:2 * E]),
            wv=split_heads_w(w_in[:, 2 * E:]),   bv=split_heads_b(b_in[2 * E:]),
            wo=w_o.reshape(H, Dh, E),            bo=b_o.reshape(1, E),
            ln1_g=jnp.ones((1, E), jnp.float32), ln1_b=jnp.zeros((1, E), jnp.float32),
            w1=w1, b1=b1.reshape(1, F),
            w2=w2, b2=b2.reshape(1, E),
            ln2_g=jnp.ones((1, E), jnp.float32), ln2_b=jnp.zeros((1, E), jnp.float32),
        ))

    # --- MLP head: fold eval-mode bn2 into linear_2; bf16 weights (bandwidth-bound) ---
    w2h, b2h = lin(E, 2048)
    bn2_gamma = jnp.ones((2048,), jnp.float32)
    bn2_beta = jnp.zeros((2048,), jnp.float32)
    bn2_mean = jnp.zeros((2048,), jnp.float32)
    bn2_var = jnp.ones((2048,), jnp.float32)
    inv = bn2_gamma * lax.rsqrt(bn2_var + eps)
    w2f = w2h * inv[None, :]
    b2f = (b2h - bn2_mean) * inv + bn2_beta
    w3, b3 = lin(2048, 2048)
    w_out, b_out = lin(2048, C)
    head = dict(
        w2=w2f.astype(jnp.bfloat16), b2=b2f.reshape(1, 2048),
        w3=w3.astype(jnp.bfloat16), b3=b3.reshape(1, 2048),
        wo=w_out.astype(jnp.bfloat16), bo=b_out.reshape(1, C),
    )

    return dict(embed=embed, layers=layers, head=head)


# ---------------------------------------------------------------------------
# Main
# ---------------------------------------------------------------------------

if __name__ == "__main__":
    cfg = dict(patch_size=4, num_classes=10, img_size=16, hidden_dim=32,
               num_heads=8, hidden_dim_mult=4, num_encoder_layer=2)

    params = init_params(jax.random.PRNGKey(0), cfg)

    # input: NCHW with c=1 (implied by linear_in_1 / num_patches in the module)
    x = jax.random.normal(jax.random.PRNGKey(0),
                          (2, 1, cfg["img_size"], cfg["img_size"]), dtype=jnp.float32)

    fwd = jax.jit(lambda xx, pp: vitnet_forward(xx, pp, cfg))
    out = jax.block_until_ready(fwd(x, params))

    assert out.shape == (2, cfg["num_classes"])
    assert bool(jnp.all(jnp.isfinite(out)))
    assert bool(jnp.all((out >= 0.0) & (out <= 1.0)))   # sigmoid output range
    print("KERNEL_OK")
</pallas_src>

<mosaic_0001>
module attributes {stable_mosaic.version = 11 : i64} {
  func.func @_embed_kernel(%arg0: i32, %arg1: memref<1x16x16xf32, #tpu.memory_space<vmem>>, %arg2: memref<16x32xf32, #tpu.memory_space<vmem>>, %arg3: memref<1x32xf32, #tpu.memory_space<vmem>>, %arg4: memref<16x1xf32, #tpu.memory_space<vmem>>, %arg5: memref<16x1xf32, #tpu.memory_space<vmem>>, %arg6: memref<32x32xf32, #tpu.memory_space<vmem>>, %arg7: memref<1x32xf32, #tpu.memory_space<vmem>>, %arg8: memref<16x32xf32, #tpu.memory_space<vmem>>, %arg9: memref<1x16x32xf32, #tpu.memory_space<vmem>>) attributes {dimension_semantics = [#tpu.dimension_semantics<parallel>], iteration_bounds = array<i64: 2>, scalar_prefetch = 0 : i64, scratch_operands = 0 : i64, tpu.core_type = #tpu.core_type<tc>, window_params = [{transform_indices = @transform_0, window_bounds = array<i64: 1, 16, 16>}, {pipeline_mode = #tpu.pipeline_mode<synchronous>, transform_indices = @transform_1, window_bounds = array<i64: 16, 32>}, {pipeline_mode = #tpu.pipeline_mode<synchronous>, transform_indices = @transform_2, window_bounds = array<i64: 1, 32>}, {pipeline_mode = #tpu.pipeline_mode<synchronous>, transform_indices = @transform_3, window_bounds = array<i64: 16, 1>}, {pipeline_mode = #tpu.pipeline_mode<synchronous>, transform_indices = @transform_4, window_bounds = array<i64: 16, 1>}, {pipeline_mode = #tpu.pipeline_mode<synchronous>, transform_indices = @transform_5, window_bounds = array<i64: 32, 32>}, {pipeline_mode = #tpu.pipeline_mode<synchronous>, transform_indices = @transform_6, window_bounds = array<i64: 1, 32>}, {pipeline_mode = #tpu.pipeline_mode<synchronous>, transform_indices = @transform_7, window_bounds = array<i64: 16, 32>}, {transform_indices = @transform_8, window_bounds = array<i64: 1, 16, 32>}]} {
    %c0 = arith.constant 0 : index
    %c0_0 = arith.constant 0 : index
    %c0_1 = arith.constant 0 : index
    %0 = vector.load %arg1[%c0, %c0_0, %c0_1] : memref<1x16x16xf32, #tpu.memory_space<vmem>>, vector<1x16x16xf32>
    %1 = vector.shape_cast %0 : vector<1x16x16xf32> to vector<16x16xf32>
    %c0_2 = arith.constant 0 : index
    %c0_3 = arith.constant 0 : index
    %2 = vector.load %arg2[%c0_2, %c0_3] : memref<16x32xf32, #tpu.memory_space<vmem>>, vector<16x32xf32>
    %cst = arith.constant dense<0.000000e+00> : vector<16x32xf32>
    %3 = tpu.matmul %1, %2, %cst {dimension_numbers = #tpu.dot_dimension_numbers<[1], [0], [0], [1], [0, 0, 1, 1], [], []>} : vector<16x16xf32>, vector<16x32xf32>, vector<16x32xf32> -> vector<16x32xf32>
    %c0_4 = arith.constant 0 : index
    %c0_5 = arith.constant 0 : index
    %4 = vector.load %arg3[%c0_4, %c0_5] : memref<1x32xf32, #tpu.memory_space<vmem>>, vector<1x32xf32>
    %5 = vector.broadcast %4 : vector<1x32xf32> to vector<16x32xf32>
    %6 = arith.addf %3, %5 : vector<16x32xf32>
    %c0_6 = arith.constant 0 : index
    %c0_7 = arith.constant 0 : index
    %7 = vector.load %arg4[%c0_6, %c0_7] : memref<16x1xf32, #tpu.memory_space<vmem>>, vector<16x1xf32>
    %8 = vector.broadcast %7 : vector<16x1xf32> to vector<16x32xf32>
    %9 = arith.mulf %6, %8 : vector<16x32xf32>
    %c0_8 = arith.constant 0 : index
    %c0_9 = arith.constant 0 : index
    %10 = vector.load %arg5[%c0_8, %c0_9] : memref<16x1xf32, #tpu.memory_space<vmem>>, vector<16x1xf32>
    %11 = vector.broadcast %10 : vector<16x1xf32> to vector<16x32xf32>
    %12 = arith.addf %9, %11 : vector<16x32xf32>
    %c0_10 = arith.constant 0 : index
    %c0_11 = arith.constant 0 : index
    %13 = vector.load %arg6[%c0_10, %c0_11] : memref<32x32xf32, #tpu.memory_space<vmem>>, vector<32x32xf32>
    %cst_12 = arith.constant dense<0.000000e+00> : vector<16x32xf32>
    %14 = tpu.matmul %12, %13, %cst_12 {dimension_numbers = #tpu.dot_dimension_numbers<[1], [0], [0], [1], [0, 0, 1, 1], [], []>} : vector<16x32xf32>, vector<32x32xf32>, vector<16x32xf32> -> vector<16x32xf32>
    %c0_13 = arith.constant 0 : index
    %c0_14 = arith.constant 0 : index
    %15 = vector.load %arg7[%c0_13, %c0_14] : memref<1x32xf32, #tpu.memory_space<vmem>>, vector<1x32xf32>
    %16 = vector.broadcast %15 : vector<1x32xf32> to vector<16x32xf32>
    %17 = arith.addf %14, %16 : vector<16x32xf32>
    %cst_15 = arith.constant 0.000000e+00 : f32
    %18 = vector.broadcast %cst_15 : f32 to vector<16x32xf32>
    %19 = arith.maximumf %17, %18 : vector<16x32xf32>
    %c0_16 = arith.constant 0 : index
    %c0_17 = arith.constant 0 : index
    %20 = vector.load %arg8[%c0_16, %c0_17] : memref<16x32xf32, #tpu.memory_space<vmem>>, vector<16x32xf32>
    %21 = arith.addf %19, %20 : vector<16x32xf32>
    %c0_18 = arith.constant 0 : index
    %c0_19 = arith.constant 0 : index
    %c0_20 = arith.constant 0 : index
    %22 = vector.load %arg9[%c0_18, %c0_19, %c0_20] : memref<1x16x32xf32, #tpu.memory_space<vmem>>, vector<1x16x32xf32>
    %23 = vector.shape_cast %22 : vector<1x16x32xf32> to vector<16x32xf32>
    %24 = vector.shape_cast %21 : vector<16x32xf32> to vector<1x16x32xf32>
    tpu.vector_store %arg9[%c0_18, %c0_19, %c0_20], %24 {strides = array<i32>} : memref<1x16x32xf32, #tpu.memory_space<vmem>>, vector<1x16x32xf32>,
    return
  }
  func.func @transform_0(%arg0: i32) -> (i32, i32, i32) {
    %c0_i32 = arith.constant 0 : i32
    %c0_i32_0 = arith.constant 0 : i32
    %c0_i32_1 = arith.constant 0 : i32
    return %arg0, %c0_i32, %c0_i32_0 : i32, i32, i32
  }
  func.func @transform_1(%arg0: i32) -> (i32, i32) {
    %c0_i32 = arith.constant 0 : i32
    %c0_i32_0 = arith.constant 0 : i32
    %c0_i32_1 = arith.constant 0 : i32
    return %c0_i32, %c0_i32_0 : i32, i32
  }
  func.func @transform_2(%arg0: i32) -> (i32, i32) {
    %c0_i32 = arith.constant 0 : i32
    %c0_i32_0 = arith.constant 0 : i32
    %c0_i32_1 = arith.constant 0 : i32
    return %c0_i32, %c0_i32_0 : i32, i32
  }
  func.func @transform_3(%arg0: i32) -> (i32, i32) {
    %c0_i32 = arith.constant 0 : i32
    %c0_i32_0 = arith.constant 0 : i32
    %c0_i32_1 = arith.constant 0 : i32
    return %c0_i32, %c0_i32_0 : i32, i32
  }
  func.func @transform_4(%arg0: i32) -> (i32, i32) {
    %c0_i32 = arith.constant 0 : i32
    %c0_i32_0 = arith.constant 0 : i32
    %c0_i32_1 = arith.constant 0 : i32
    return %c0_i32, %c0_i32_0 : i32, i32
  }
  func.func @transform_5(%arg0: i32) -> (i32, i32) {
    %c0_i32 = arith.constant 0 : i32
    %c0_i32_0 = arith.constant 0 : i32
    %c0_i32_1 = arith.constant 0 : i32
    return %c0_i32, %c0_i32_0 : i32, i32
  }
  func.func @transform_6(%arg0: i32) -> (i32, i32) {
    %c0_i32 = arith.constant 0 : i32
    %c0_i32_0 = arith.constant 0 : i32
    %c0_i32_1 = arith.constant 0 : i32
    return %c0_i32, %c0_i32_0 : i32, i32
  }
  func.func @transform_7(%arg0: i32) -> (i32, i32) {
    %c0_i32 = arith.constant 0 : i32
    %c0_i32_0 = arith.constant 0 : i32
    %c0_i32_1 = arith.constant 0 : i32
    return %c0_i32, %c0_i32_0 : i32, i32
  }
  func.func @transform_8(%arg0: i32) -> (i32, i32, i32) {
    %c0_i32 = arith.constant 0 : i32
    %c0_i32_0 = arith.constant 0 : i32
    %c0_i32_1 = arith.constant 0 : i32
    return %arg0, %c0_i32, %c0_i32_0 : i32, i32, i32
  }
}

module attributes {stable_mosaic.version = 11 : i64} {
  func.func @_head_kernel(%arg0: i32, %arg1: memref<2x32xf32, #tpu.memory_space<vmem>>, %arg2: memref<32x2048xbf16, #tpu.memory_space<vmem>>, %arg3: memref<1x2048xf32, #tpu.memory_space<vmem>>, %arg4: memref<2048x512xbf16, #tpu.memory_space<vmem>>, %arg5: memref<1x512xf32, #tpu.memory_space<vmem>>, %arg6: memref<512x10xbf16, #tpu.memory_space<vmem>>, %arg7: memref<1x10xf32, #tpu.memory_space<vmem>>, %arg8: memref<2x10xf32, #tpu.memory_space<vmem>>, %arg9: memref<2x2048xf32, #tpu.memory_space<vmem>>, %arg10: memref<2x10xf32, #tpu.memory_space<vmem>>) attributes {dimension_semantics = [#tpu.dimension_semantics<arbitrary>], iteration_bounds = array<i64: 4>, scalar_prefetch = 0 : i64, scratch_operands = 2 : i64, tpu.core_type = #tpu.core_type<tc>, window_params = [{pipeline_mode = #tpu.pipeline_mode<synchronous>, transform_indices = @transform_0, window_bounds = array<i64: 2, 32>}, {pipeline_mode = #tpu.pipeline_mode<synchronous>, transform_indices = @transform_1, window_bounds = array<i64: 32, 2048>}, {pipeline_mode = #tpu.pipeline_mode<synchronous>, transform_indices = @transform_2, window_bounds = array<i64: 1, 2048>}, {transform_indices = @transform_3, window_bounds = array<i64: 2048, 512>}, {transform_indices = @transform_4, window_bounds = array<i64: 1, 512>}, {transform_indices = @transform_5, window_bounds = array<i64: 512, 10>}, {pipeline_mode = #tpu.pipeline_mode<synchronous>, transform_indices = @transform_6, window_bounds = array<i64: 1, 10>}, {pipeline_mode = #tpu.pipeline_mode<synchronous>, transform_indices = @transform_7, window_bounds = array<i64: 2, 10>}]} {
    %c0_i32 = arith.constant 0 : i32
    %0 = arith.cmpi eq, %arg0, %c0_i32 : i32
    %1 = arith.extui %0 : i1 to i32
    %c0_i32_0 = arith.constant 0 : i32
    %2 = arith.cmpi ne, %1, %c0_i32_0 : i32
    scf.if %2 {
      %c0_14 = arith.constant 0 : index
      %c0_15 = arith.constant 0 : index
      %20 = vector.load %arg1[%c0_14, %c0_15] : memref<2x32xf32, #tpu.memory_space<vmem>>, vector<2x32xf32>
      %21 = arith.truncf %20 : vector<2x32xf32> to vector<2x32xbf16>
      %c0_16 = arith.constant 0 : index
      %c0_17 = arith.constant 0 : index
      %22 = vector.load %arg2[%c0_16, %c0_17] : memref<32x2048xbf16, #tpu.memory_space<vmem>>, vector<32x2048xbf16>
      %cst_18 = arith.constant dense<0.000000e+00> : vector<2x2048xf32>
      %23 = tpu.matmul %21, %22, %cst_18 {dimension_numbers = #tpu.dot_dimension_numbers<[1], [0], [0], [1], [0, 0, 1, 1], [], []>} : vector<2x32xbf16>, vector<32x2048xbf16>, vector<2x2048xf32> -> vector<2x2048xf32>
      %c0_19 = arith.constant 0 : index
      %c0_20 = arith.constant 0 : index
      %24 = vector.load %arg3[%c0_19, %c0_20] : memref<1x2048xf32, #tpu.memory_space<vmem>>, vector<1x2048xf32>
      %25 = vector.broadcast %24 : vector<1x2048xf32> to vector<2x2048xf32>
      %26 = arith.addf %23, %25 : vector<2x2048xf32>
      %cst_21 = arith.constant 0.000000e+00 : f32
      %27 = vector.broadcast %cst_21 : f32 to vector<2x2048xf32>
      %28 = arith.maximumf %26, %27 : vector<2x2048xf32>
      %c0_22 = arith.constant 0 : index
      %c0_23 = arith.constant 0 : index
      %29 = vector.load %arg9[%c0_22, %c0_23] : memref<2x2048xf32, #tpu.memory_space<vmem>>, vector<2x2048xf32>
      tpu.vector_store %arg9[%c0_22, %c0_23], %28 {strides = array<i32>} : memref<2x2048xf32, #tpu.memory_space<vmem>>, vector<2x2048xf32>,
      %cst_24 = arith.constant 0.000000e+00 : f32
      %30 = vector.broadcast %cst_24 : f32 to vector<2x10xf32>
      %c0_25 = arith.constant 0 : index
      %c0_26 = arith.constant 0 : index
      %31 = vector.load %arg10[%c0_25, %c0_26] : memref<2x10xf32, #tpu.memory_space<vmem>>, vector<2x10xf32>
      tpu.vector_store %arg10[%c0_25, %c0_26], %30 {strides = array<i32>} : memref<2x10xf32, #tpu.memory_space<vmem>>, vector<2x10xf32>,
    } else {
    }
    %c0 = arith.constant 0 : index
    %c0_1 = arith.constant 0 : index
    %3 = vector.load %arg9[%c0, %c0_1] : memref<2x2048xf32, #tpu.memory_space<vmem>>, vector<2x2048xf32>
    %4 = arith.truncf %3 : vector<2x2048xf32> to vector<2x2048xbf16>
    %c0_2 = arith.constant 0 : index
    %c0_3 = arith.constant 0 : index
    %5 = vector.load %arg4[%c0_2, %c0_3] : memref<2048x512xbf16, #tpu.memory_space<vmem>>, vector<2048x512xbf16>
    %cst = arith.constant dense<0.000000e+00> : vector<2x512xf32>
    %6 = tpu.matmul %4, %5, %cst {dimension_numbers = #tpu.dot_dimension_numbers<[1], [0], [0], [1], [0, 0, 1, 1], [], []>} : vector<2x2048xbf16>, vector<2048x512xbf16>, vector<2x512xf32> -> vector<2x512xf32>
    %c0_4 = arith.constant 0 : index
    %c0_5 = arith.constant 0 : index
    %7 = vector.load %arg5[%c0_4, %c0_5] : memref<1x512xf32, #tpu.memory_space<vmem>>, vector<1x512xf32>
    %8 = vector.broadcast %7 : vector<1x512xf32> to vector<2x512xf32>
    %9 = arith.addf %6, %8 : vector<2x512xf32>
    %10 = math.tanh %9 : vector<2x512xf32>
    %c0_6 = arith.constant 0 : index
    %c0_7 = arith.constant 0 : index
    %11 = vector.load %arg10[%c0_6, %c0_7] : memref<2x10xf32, #tpu.memory_space<vmem>>, vector<2x10xf32>
    %12 = arith.truncf %10 : vector<2x512xf32> to vector<2x512xbf16>
    %c0_8 = arith.constant 0 : index
    %c0_9 = arith.constant 0 : index
    %13 = vector.load %arg6[%c0_8, %c0_9] : memref<512x10xbf16, #tpu.memory_space<vmem>>, vector<512x10xbf16>
    %cst_10 = arith.constant dense<0.000000e+00> : vector<2x10xf32>
    %14 = tpu.matmul %12, %13, %cst_10 {dimension_numbers = #tpu.dot_dimension_numbers<[1], [0], [0], [1], [0, 0, 1, 1], [], []>} : vector<2x512xbf16>, vector<512x10xbf16>, vector<2x10xf32> -> vector<2x10xf32>
    %15 = arith.addf %11, %14 : vector<2x10xf32>
    %c0_11 = arith.constant 0 : index
    %c0_12 = arith.constant 0 : index
    %16 = vector.load %arg10[%c0_11, %c0_12] : memref<2x10xf32, #tpu.memory_space<vmem>>, vector<2x10xf32>
    tpu.vector_store %arg10[%c0_11, %c0_12], %15 {strides = array<i32>} : memref<2x10xf32, #tpu.memory_space<vmem>>, vector<2x10xf32>,
    %c3_i32 = arith.constant 3 : i32
    %17 = arith.cmpi eq, %arg0, %c3_i32 : i32
    %18 = arith.extui %17 : i1 to i32
    %c0_i32_13 = arith.constant 0 : i32
    %19 = arith.cmpi ne, %18, %c0_i32_13 : i32
    scf.if %19 {
      %c0_14 = arith.constant 0 : index
      %c0_15 = arith.constant 0 : index
      %20 = vector.load %arg10[%c0_14, %c0_15] : memref<2x10xf32, #tpu.memory_space<vmem>>, vector<2x10xf32>
      %c0_16 = arith.constant 0 : index
      %c0_17 = arith.constant 0 : index
      %21 = vector.load %arg7[%c0_16, %c0_17] : memref<1x10xf32, #tpu.memory_space<vmem>>, vector<1x10xf32>
      %22 = vector.broadcast %21 : vector<1x10xf32> to vector<2x10xf32>
      %23 = arith.addf %20, %22 : vector<2x10xf32>
      %24 = arith.negf %23 : vector<2x10xf32>
      %25 = math.exp %24 : vector<2x10xf32>
      %cst_18 = arith.constant 1.000000e+00 : f32
      %26 = vector.broadcast %cst_18 : f32 to vector<2x10xf32>
      %27 = arith.addf %26, %25 : vector<2x10xf32>
      %28 = arith.divf %26, %27 : vector<2x10xf32>
      %c0_19 = arith.constant 0 : index
      %c0_20 = arith.constant 0 : index
      %29 = vector.load %arg8[%c0_19, %c0_20] : memref<2x10xf32, #tpu.memory_space<vmem>>, vector<2x10xf32>
      tpu.vector_store %arg8[%c0_19, %c0_20], %28 {strides = array<i32>} : memref<2x10xf32, #tpu.memory_space<vmem>>, vector<2x10xf32>,
    } else {
    }
    return
  }
  func.func @transform_0(%arg0: i32) -> (i32, i32) {
    %c0_i32 = arith.constant 0 : i32
    %c0_i32_0 = arith.constant 0 : i32
    %c0_i32_1 = arith.constant 0 : i32
    return %c0_i32, %c0_i32_0 : i32, i32
  }
  func.func @transform_1(%arg0: i32) -> (i32, i32) {
    %c0_i32 = arith.constant 0 : i32
    %c0_i32_0 = arith.constant 0 : i32
    %c0_i32_1 = arith.constant 0 : i32
    return %c0_i32, %c0_i32_0 : i32, i32
  }
  func.func @transform_2(%arg0: i32) -> (i32, i32) {
    %c0_i32 = arith.constant 0 : i32
    %c0_i32_0 = arith.constant 0 : i32
    %c0_i32_1 = arith.constant 0 : i32
    return %c0_i32, %c0_i32_0 : i32, i32
  }
  func.func @transform_3(%arg0: i32) -> (i32, i32) {
    %c0_i32 = arith.constant 0 : i32
    %c0_i32_0 = arith.constant 0 : i32
    return %c0_i32, %arg0 : i32, i32
  }
  func.func @transform_4(%arg0: i32) -> (i32, i32) {
    %c0_i32 = arith.constant 0 : i32
    %c0_i32_0 = arith.constant 0 : i32
    return %c0_i32, %arg0 : i32, i32
  }
  func.func @transform_5(%arg0: i32) -> (i32, i32) {
    %c0_i32 = arith.constant 0 : i32
    %c0_i32_0 = arith.constant 0 : i32
    return %arg0, %c0_i32 : i32, i32
  }
  func.func @transform_6(%arg0: i32) -> (i32, i32) {
    %c0_i32 = arith.constant 0 : i32
    %c0_i32_0 = arith.constant 0 : i32
    %c0_i32_1 = arith.constant 0 : i32
    return %c0_i32, %c0_i32_0 : i32, i32
  }
  func.func @transform_7(%arg0: i32) -> (i32, i32) {
    %c0_i32 = arith.constant 0 : i32
    %c0_i32_0 = arith.constant 0 : i32
    %c0_i32_1 = arith.constant 0 : i32
    return %c0_i32, %c0_i32_0 : i32, i32
  }
}

module attributes {stable_mosaic.version = 11 : i64} {
  func.func @_encoder_layer_kernel(%arg0: i32, %arg1: memref<1x17x32xf32, #tpu.memory_space<vmem>>, %arg2: memref<8x32x4xf32, #tpu.memory_space<vmem>>, %arg3: memref<8x1x4xf32, #tpu.memory_space<vmem>>, %arg4: memref<8x32x4xf32, #tpu.memory_space<vmem>>, %arg5: memref<8x1x4xf32, #tpu.memory_space<vmem>>, %arg6: memref<8x32x4xf32, #tpu.memory_space<vmem>>, %arg7: memref<8x1x4xf32, #tpu.memory_space<vmem>>, %arg8: memref<8x4x32xf32, #tpu.memory_space<vmem>>, %arg9: memref<1x32xf32, #tpu.memory_space<vmem>>, %arg10: memref<1x32xf32, #tpu.memory_space<vmem>>, %arg11: memref<1x32xf32, #tpu.memory_space<vmem>>, %arg12: memref<32x128xf32, #tpu.memory_space<vmem>>, %arg13: memref<1x128xf32, #tpu.memory_space<vmem>>, %arg14: memref<128x32xf32, #tpu.memory_space<vmem>>, %arg15: memref<1x32xf32, #tpu.memory_space<vmem>>, %arg16: memref<1x32xf32, #tpu.memory_space<vmem>>, %arg17: memref<1x32xf32, #tpu.memory_space<vmem>>, %arg18: memref<1x17x32xf32, #tpu.memory_space<vmem>>) attributes {dimension_semantics = [#tpu.dimension_semantics<parallel>], iteration_bounds = array<i64: 2>, scalar_prefetch = 0 : i64, scratch_operands = 0 : i64, tpu.core_type = #tpu.core_type<tc>, window_params = [{transform_indices = @transform_0, window_bounds = array<i64: 1, 17, 32>}, {pipeline_mode = #tpu.pipeline_mode<synchronous>, transform_indices = @transform_1, window_bounds = array<i64: 8, 32, 4>}, {pipeline_mode = #tpu.pipeline_mode<synchronous>, transform_indices = @transform_2, window_bounds = array<i64: 8, 1, 4>}, {pipeline_mode = #tpu.pipeline_mode<synchronous>, transform_indices = @transform_3, window_bounds = array<i64: 8, 32, 4>}, {pipeline_mode = #tpu.pipeline_mode<synchronous>, transform_indices = @transform_4, window_bounds = array<i64: 8, 1, 4>}, {pipeline_mode = #tpu.pipeline_mode<synchronous>, transform_indices = @transform_5, window_bounds = array<i64: 8, 32, 4>}, {pipeline_mode = #tpu.pipeline_mode<synchronous>, transform_indices = @transform_6, window_bounds = array<i64: 8, 1, 4>}, {pipeline_mode = #tpu.pipeline_mode<synchronous>, transform_indices = @transform_7, window_bounds = array<i64: 8, 4, 32>}, {pipeline_mode = #tpu.pipeline_mode<synchronous>, transform_indices = @transform_8, window_bounds = array<i64: 1, 32>}, {pipeline_mode = #tpu.pipeline_mode<synchronous>, transform_indices = @transform_9, window_bounds = array<i64: 1, 32>}, {pipeline_mode = #tpu.pipeline_mode<synchronous>, transform_indices = @transform_10, window_bounds = array<i64: 1, 32>}, {pipeline_mode = #tpu.pipeline_mode<synchronous>, transform_indices = @transform_11, window_bounds = array<i64: 32, 128>}, {pipeline_mode = #tpu.pipeline_mode<synchronous>, transform_indices = @transform_12, window_bounds = array<i64: 1, 128>}, {pipeline_mode = #tpu.pipeline_mode<synchronous>, transform_indices = @transform_13, window_bounds = array<i64: 128, 32>}, {pipeline_mode = #tpu.pipeline_mode<synchronous>, transform_indices = @transform_14, window_bounds = array<i64: 1, 32>}, {pipeline_mode = #tpu.pipeline_mode<synchronous>, transform_indices = @transform_15, window_bounds = array<i64: 1, 32>}, {pipeline_mode = #tpu.pipeline_mode<synchronous>, transform_indices = @transform_16, window_bounds = array<i64: 1, 32>}, {transform_indices = @transform_17, window_bounds = array<i64: 1, 17, 32>}]} {
    %c0 = arith.constant 0 : index
    %c0_0 = arith.constant 0 : index
    %c0_1 = arith.constant 0 : index
    %0 = vector.load %arg1[%c0, %c0_0, %c0_1] : memref<1x17x32xf32, #tpu.memory_space<vmem>>, vector<1x17x32xf32>
    %1 = vector.shape_cast %0 : vector<1x17x32xf32> to vector<17x32xf32>
    %cst = arith.constant 0.000000e+00 : f32
    %2 = vector.broadcast %cst : f32 to vector<17x32xf32>
    %c0_2 = arith.constant 0 : index
    %c0_3 = arith.constant 0 : index
    %c0_4 = arith.constant 0 : index
    %3 = vector.load %arg2[%c0_2, %c0_3, %c0_4] : memref<8x32x4xf32, #tpu.memory_space<vmem>>, vector<1x32x4xf32>
    %4 = vector.shape_cast %3 : vector<1x32x4xf32> to vector<32x4xf32>
    %cst_5 = arith.constant dense<0.000000e+00> : vector<17x4xf32>
    %5 = tpu.matmul %1, %4, %cst_5 {dimension_numbers = #tpu.dot_dimension_numbers<[1], [0], [0], [1], [0, 0, 1, 1], [], []>} : vector<17x32xf32>, vector<32x4xf32>, vector<17x4xf32> -> vector<17x4xf32>
    %c0_6 = arith.constant 0 : index
    %c0_7 = arith.constant 0 : index
    %c0_8 = arith.constant 0 : index
    %6 = vector.load %arg3[%c0_6, %c0_7, %c0_8] : memref<8x1x4xf32, #tpu.memory_space<vmem>>, vector<1x1x4xf32>
    %7 = vector.shape_cast %6 : vector<1x1x4xf32> to vector<1x4xf32>
    %8 = vector.broadcast %7 : vector<1x4xf32> to vector<17x4xf32>
    %9 = arith.addf %5, %8 : vector<17x4xf32>
    %c0_9 = arith.constant 0 : index
    %c0_10 = arith.constant 0 : index
    %c0_11 = arith.constant 0 : index
    %10 = vector.load %arg4[%c0_9, %c0_10, %c0_11] : memref<8x32x4xf32, #tpu.memory_space<vmem>>, vector<1x32x4xf32>
    %11 = vector.shape_cast %10 : vector<1x32x4xf32> to vector<32x4xf32>
    %cst_12 = arith.constant dense<0.000000e+00> : vector<17x4xf32>
    %12 = tpu.matmul %1, %11, %cst_12 {dimension_numbers = #tpu.dot_dimension_numbers<[1], [0], [0], [1], [0, 0, 1, 1], [], []>} : vector<17x32xf32>, vector<32x4xf32>, vector<17x4xf32> -> vector<17x4xf32>
    %c0_13 = arith.constant 0 : index
    %c0_14 = arith.constant 0 : index
    %c0_15 = arith.constant 0 : index
    %13 = vector.load %arg5[%c0_13, %c0_14, %c0_15] : memref<8x1x4xf32, #tpu.memory_space<vmem>>, vector<1x1x4xf32>
    %14 = vector.shape_cast %13 : vector<1x1x4xf32> to vector<1x4xf32>
    %15 = vector.broadcast %14 : vector<1x4xf32> to vector<17x4xf32>
    %16 = arith.addf %12, %15 : vector<17x4xf32>
    %c0_16 = arith.constant 0 : index
    %c0_17 = arith.constant 0 : index
    %c0_18 = arith.constant 0 : index
    %17 = vector.load %arg6[%c0_16, %c0_17, %c0_18] : memref<8x32x4xf32, #tpu.memory_space<vmem>>, vector<1x32x4xf32>
    %18 = vector.shape_cast %17 : vector<1x32x4xf32> to vector<32x4xf32>
    %cst_19 = arith.constant dense<0.000000e+00> : vector<17x4xf32>
    %19 = tpu.matmul %1, %18, %cst_19 {dimension_numbers = #tpu.dot_dimension_numbers<[1], [0], [0], [1], [0, 0, 1, 1], [], []>} : vector<17x32xf32>, vector<32x4xf32>, vector<17x4xf32> -> vector<17x4xf32>
    %c0_20 = arith.constant 0 : index
    %c0_21 = arith.constant 0 : index
    %c0_22 = arith.constant 0 : index
    %20 = vector.load %arg7[%c0_20, %c0_21, %c0_22] : memref<8x1x4xf32, #tpu.memory_space<vmem>>, vector<1x1x4xf32>
    %21 = vector.shape_cast %20 : vector<1x1x4xf32> to vector<1x4xf32>
    %22 = vector.broadcast %21 : vector<1x4xf32> to vector<17x4xf32>
    %23 = arith.addf %19, %22 : vector<17x4xf32>
    %cst_23 = arith.constant dense<0.000000e+00> : vector<17x17xf32>
    %24 = tpu.matmul %9, %16, %cst_23 {dimension_numbers = #tpu.dot_dimension_numbers<[1], [1], [0], [0], [0, 0, 1, 0], [], []>} : vector<17x4xf32>, vector<17x4xf32>, vector<17x17xf32> -> vector<17x17xf32>
    %cst_24 = arith.constant 5.000000e-01 : f32
    %25 = vector.broadcast %cst_24 : f32 to vector<17x17xf32>
    %26 = arith.mulf %24, %25 : vector<17x17xf32>
    %cst_25 = arith.constant dense<0xFF800000> : vector<17xf32>
    %27 = vector.multi_reduction <maximumf>, %26, %cst_25 [1] : vector<17x17xf32> to vector<17xf32>
    %28 = vector.shape_cast %27 : vector<17xf32> to vector<17x1xf32>
    %29 = vector.broadcast %28 : vector<17x1xf32> to vector<17x17xf32>
    %30 = arith.subf %26, %29 : vector<17x17xf32>
    %31 = math.exp %30 : vector<17x17xf32>
    %cst_26 = arith.constant dense<0.000000e+00> : vector<17xf32>
    %32 = vector.multi_reduction <add>, %31, %cst_26 [1] : vector<17x17xf32> to vector<17xf32>
    %33 = vector.shape_cast %32 : vector<17xf32> to vector<17x1xf32>
    %34 = vector.broadcast %33 : vector<17x1xf32> to vector<17x17xf32>
    %35 = arith.divf %31, %34 : vector<17x17xf32>
    %cst_27 = arith.constant dense<0.000000e+00> : vector<17x4xf32>
    %36 = tpu.matmul %35, %23, %cst_27 {dimension_numbers = #tpu.dot_dimension_numbers<[1], [0], [0], [1], [0, 0, 1, 1], [], []>} : vector<17x17xf32>, vector<17x4xf32>, vector<17x4xf32> -> vector<17x4xf32>
    %c0_28 = arith.constant 0 : index
    %c0_29 = arith.constant 0 : index
    %c0_30 = arith.constant 0 : index
    %37 = vector.load %arg8[%c0_28, %c0_29, %c0_30] : memref<8x4x32xf32, #tpu.memory_space<vmem>>, vector<1x4x32xf32>
    %38 = vector.shape_cast %37 : vector<1x4x32xf32> to vector<4x32xf32>
    %cst_31 = arith.constant dense<0.000000e+00> : vector<17x32xf32>
    %39 = tpu.matmul %36, %38, %cst_31 {dimension_numbers = #tpu.dot_dimension_numbers<[1], [0], [0], [1], [0, 0, 1, 1], [], []>} : vector<17x4xf32>, vector<4x32xf32>, vector<17x32xf32> -> vector<17x32xf32>
    %40 = arith.addf %2, %39 : vector<17x32xf32>
    %c1 = arith.constant 1 : index
    %c0_32 = arith.constant 0 : index
    %c0_33 = arith.constant 0 : index
    %41 = vector.load %arg2[%c1, %c0_32, %c0_33] : memref<8x32x4xf32, #tpu.memory_space<vmem>>, vector<1x32x4xf32>
    %42 = vector.shape_cast %41 : vector<1x32x4xf32> to vector<32x4xf32>
    %cst_34 = arith.constant dense<0.000000e+00> : vector<17x4xf32>
    %43 = tpu.matmul %1, %42, %cst_34 {dimension_numbers = #tpu.dot_dimension_numbers<[1], [0], [0], [1], [0, 0, 1, 1], [], []>} : vector<17x32xf32>, vector<32x4xf32>, vector<17x4xf32> -> vector<17x4xf32>
    %c1_35 = arith.constant 1 : index
    %c0_36 = arith.constant 0 : index
    %c0_37 = arith.constant 0 : index
    %44 = vector.load %arg3[%c1_35, %c0_36, %c0_37] : memref<8x1x4xf32, #tpu.memory_space<vmem>>, vector<1x1x4xf32>
    %45 = vector.shape_cast %44 : vector<1x1x4xf32> to vector<1x4xf32>
    %46 = vector.broadcast %45 : vector<1x4xf32> to vector<17x4xf32>
    %47 = arith.addf %43, %46 : vector<17x4xf32>
    %c1_38 = arith.constant 1 : index
    %c0_39 = arith.constant 0 : index
    %c0_40 = arith.constant 0 : index
    %48 = vector.load %arg4[%c1_38, %c0_39, %c0_40] : memref<8x32x4xf32, #tpu.memory_space<vmem>>, vector<1x32x4xf32>
    %49 = vector.shape_cast %48 : vector<1x32x4xf32> to vector<32x4xf32>
    %cst_41 = arith.constant dense<0.000000e+00> : vector<17x4xf32>
    %50 = tpu.matmul %1, %49, %cst_41 {dimension_numbers = #tpu.dot_dimension_numbers<[1], [0], [0], [1], [0, 0, 1, 1], [], []>} : vector<17x32xf32>, vector<32x4xf32>, vector<17x4xf32> -> vector<17x4xf32>
    %c1_42 = arith.constant 1 : index
    %c0_43 = arith.constant 0 : index
    %c0_44 = arith.constant 0 : index
    %51 = vector.load %arg5[%c1_42, %c0_43, %c0_44] : memref<8x1x4xf32, #tpu.memory_space<vmem>>, vector<1x1x4xf32>
    %52 = vector.shape_cast %51 : vector<1x1x4xf32> to vector<1x4xf32>
    %53 = vector.broadcast %52 : vector<1x4xf32> to vector<17x4xf32>
    %54 = arith.addf %50, %53 : vector<17x4xf32>
    %c1_45 = arith.constant 1 : index
    %c0_46 = arith.constant 0 : index
    %c0_47 = arith.constant 0 : index
    %55 = vector.load %arg6[%c1_45, %c0_46, %c0_47] : memref<8x32x4xf32, #tpu.memory_space<vmem>>, vector<1x32x4xf32>
    %56 = vector.shape_cast %55 : vector<1x32x4xf32> to vector<32x4xf32>
    %cst_48 = arith.constant dense<0.000000e+00> : vector<17x4xf32>
    %57 = tpu.matmul %1, %56, %cst_48 {dimension_numbers = #tpu.dot_dimension_numbers<[1], [0], [0], [1], [0, 0, 1, 1], [], []>} : vector<17x32xf32>, vector<32x4xf32>, vector<17x4xf32> -> vector<17x4xf32>
    %c1_49 = arith.constant 1 : index
    %c0_50 = arith.constant 0 : index
    %c0_51 = arith.constant 0 : index
    %58 = vector.load %arg7[%c1_49, %c0_50, %c0_51] : memref<8x1x4xf32, #tpu.memory_space<vmem>>, vector<1x1x4xf32>
    %59 = vector.shape_cast %58 : vector<1x1x4xf32> to vector<1x4xf32>
    %60 = vector.broadcast %59 : vector<1x4xf32> to vector<17x4xf32>
    %61 = arith.addf %57, %60 : vector<17x4xf32>
    %cst_52 = arith.constant dense<0.000000e+00> : vector<17x17xf32>
    %62 = tpu.matmul %47, %54, %cst_52 {dimension_numbers = #tpu.dot_dimension_numbers<[1], [1], [0], [0], [0, 0, 1, 0], [], []>} : vector<17x4xf32>, vector<17x4xf32>, vector<17x17xf32> -> vector<17x17xf32>
    %cst_53 = arith.constant 5.000000e-01 : f32
    %63 = vector.broadcast %cst_53 : f32 to vector<17x17xf32>
    %64 = arith.mulf %62, %63 : vector<17x17xf32>
    %cst_54 = arith.constant dense<0xFF800000> : vector<17xf32>
    %65 = vector.multi_reduction <maximumf>, %64, %cst_54 [1] : vector<17x17xf32> to vector<17xf32>
    %66 = vector.shape_cast %65 : vector<17xf32> to vector<17x1xf32>
    %67 = vector.broadcast %66 : vector<17x1xf32> to vector<17x17xf32>
    %68 = arith.subf %64, %67 : vector<17x17xf32>
    %69 = math.exp %68 : vector<17x17xf32>
    %cst_55 = arith.constant dense<0.000000e+00> : vector<17xf32>
    %70 = vector.multi_reduction <add>, %69, %cst_55 [1] : vector<17x17xf32> to vector<17xf32>
    %71 = vector.shape_cast %70 : vector<17xf32> to vector<17x1xf32>
    %72 = vector.broadcast %71 : vector<17x1xf32> to vector<17x17xf32>
    %73 = arith.divf %69, %72 : vector<17x17xf32>
    %cst_56 = arith.constant dense<0.000000e+00> : vector<17x4xf32>
    %74 = tpu.matmul %73, %61, %cst_56 {dimension_numbers = #tpu.dot_dimension_numbers<[1], [0], [0], [1], [0, 0, 1, 1], [], []>} : vector<17x17xf32>, vector<17x4xf32>, vector<17x4xf32> -> vector<17x4xf32>
    %c1_57 = arith.constant 1 : index
    %c0_58 = arith.constant 0 : index
    %c0_59 = arith.constant 0 : index
    %75 = vector.load %arg8[%c1_57, %c0_58, %c0_59] : memref<8x4x32xf32, #tpu.memory_space<vmem>>, vector<1x4x32xf32>
    %76 = vector.shape_cast %75 : vector<1x4x32xf32> to vector<4x32xf32>
    %cst_60 = arith.constant dense<0.000000e+00> : vector<17x32xf32>
    %77 = tpu.matmul %74, %76, %cst_60 {dimension_numbers = #tpu.dot_dimension_numbers<[1], [0], [0], [1], [0, 0, 1, 1], [], []>} : vector<17x4xf32>, vector<4x32xf32>, vector<17x32xf32> -> vector<17x32xf32>
    %78 = arith.addf %40, %77 : vector<17x32xf32>
    %c2 = arith.constant 2 : index
    %c0_61 = arith.constant 0 : index
    %c0_62 = arith.constant 0 : index
    %79 = vector.load %arg2[%c2, %c0_61, %c0_62] : memref<8x32x4xf32, #tpu.memory_space<vmem>>, vector<1x32x4xf32>
    %80 = vector.shape_cast %79 : vector<1x32x4xf32> to vector<32x4xf32>
    %cst_63 = arith.constant dense<0.000000e+00> : vector<17x4xf32>
    %81 = tpu.matmul %1, %80, %cst_63 {dimension_numbers = #tpu.dot_dimension_numbers<[1], [0], [0], [1], [0, 0, 1, 1], [], []>} : vector<17x32xf32>, vector<32x4xf32>, vector<17x4xf32> -> vector<17x4xf32>
    %c2_64 = arith.constant 2 : index
    %c0_65 = arith.constant 0 : index
    %c0_66 = arith.constant 0 : index
    %82 = vector.load %arg3[%c2_64, %c0_65, %c0_66] : memref<8x1x4xf32, #tpu.memory_space<vmem>>, vector<1x1x4xf32>
    %83 = vector.shape_cast %82 : vector<1x1x4xf32> to vector<1x4xf32>
    %84 = vector.broadcast %83 : vector<1x4xf32> to vector<17x4xf32>
    %85 = arith.addf %81, %84 : vector<17x4xf32>
    %c2_67 = arith.constant 2 : index
    %c0_68 = arith.constant 0 : index
    %c0_69 = arith.constant 0 : index
    %86 = vector.load %arg4[%c2_67, %c0_68, %c0_69] : memref<8x32x4xf32, #tpu.memory_space<vmem>>, vector<1x32x4xf32>
    %87 = vector.shape_cast %86 : vector<1x32x4xf32> to vector<32x4xf32>
    %cst_70 = arith.constant dense<0.000000e+00> : vector<17x4xf32>
    %88 = tpu.matmul %1, %87, %cst_70 {dimension_numbers = #tpu.dot_dimension_numbers<[1], [0], [0], [1], [0, 0, 1, 1], [], []>} : vector<17x32xf32>, vector<32x4xf32>, vector<17x4xf32> -> vector<17x4xf32>
    %c2_71 = arith.constant 2 : index
    %c0_72 = arith.constant 0 : index
    %c0_73 = arith.constant 0 : index
    %89 = vector.load %arg5[%c2_71, %c0_72, %c0_73] : memref<8x1x4xf32, #tpu.memory_space<vmem>>, vector<1x1x4xf32>
    %90 = vector.shape_cast %89 : vector<1x1x4xf32> to vector<1x4xf32>
    %91 = vector.broadcast %90 : vector<1x4xf32> to vector<17x4xf32>
    %92 = arith.addf %88, %91 : vector<17x4xf32>
    %c2_74 = arith.constant 2 : index
    %c0_75 = arith.constant 0 : index
    %c0_76 = arith.constant 0 : index
    %93 = vector.load %arg6[%c2_74, %c0_75, %c0_76] : memref<8x32x4xf32, #tpu.memory_space<vmem>>, vector<1x32x4xf32>
    %94 = vector.shape_cast %93 : vector<1x32x4xf32> to vector<32x4xf32>
    %cst_77 = arith.constant dense<0.000000e+00> : vector<17x4xf32>
    %95 = tpu.matmul %1, %94, %cst_77 {dimension_numbers = #tpu.dot_dimension_numbers<[1], [0], [0], [1], [0, 0, 1, 1], [], []>} : vector<17x32xf32>, vector<32x4xf32>, vector<17x4xf32> -> vector<17x4xf32>
    %c2_78 = arith.constant 2 : index
    %c0_79 = arith.constant 0 : index
    %c0_80 = arith.constant 0 : index
    %96 = vector.load %arg7[%c2_78, %c0_79, %c0_80] : memref<8x1x4xf32, #tpu.memory_space<vmem>>, vector<1x1x4xf32>
    %97 = vector.shape_cast %96 : vector<1x1x4xf32> to vector<1x4xf32>
    %98 = vector.broadcast %97 : vector<1x4xf32> to vector<17x4xf32>
    %99 = arith.addf %95, %98 : vector<17x4xf32>
    %cst_81 = arith.constant dense<0.000000e+00> : vector<17x17xf32>
    %100 = tpu.matmul %85, %92, %cst_81 {dimension_numbers = #tpu.dot_dimension_numbers<[1], [1], [0], [0], [0, 0, 1, 0], [], []>} : vector<17x4xf32>, vector<17x4xf32>, vector<17x17xf32> -> vector<17x17xf32>
    %cst_82 = arith.constant 5.000000e-01 : f32
    %101 = vector.broadcast %cst_82 : f32 to vector<17x17xf32>
    %102 = arith.mulf %100, %101 : vector<17x17xf32>
    %cst_83 = arith.constant dense<0xFF800000> : vector<17xf32>
    %103 = vector.multi_reduction <maximumf>, %102, %cst_83 [1] : vector<17x17xf32> to vector<17xf32>
    %104 = vector.shape_cast %103 : vector<17xf32> to vector<17x1xf32>
    %105 = vector.broadcast %104 : vector<17x1xf32> to vector<17x17xf32>
    %106 = arith.subf %102, %105 : vector<17x17xf32>
    %107 = math.exp %106 : vector<17x17xf32>
    %cst_84 = arith.constant dense<0.000000e+00> : vector<17xf32>
    %108 = vector.multi_reduction <add>, %107, %cst_84 [1] : vector<17x17xf32> to vector<17xf32>
    %109 = vector.shape_cast %108 : vector<17xf32> to vector<17x1xf32>
    %110 = vector.broadcast %109 : vector<17x1xf32> to vector<17x17xf32>
    %111 = arith.divf %107, %110 : vector<17x17xf32>
    %cst_85 = arith.constant dense<0.000000e+00> : vector<17x4xf32>
    %112 = tpu.matmul %111, %99, %cst_85 {dimension_numbers = #tpu.dot_dimension_numbers<[1], [0], [0], [1], [0, 0, 1, 1], [], []>} : vector<17x17xf32>, vector<17x4xf32>, vector<17x4xf32> -> vector<17x4xf32>
    %c2_86 = arith.constant 2 : index
    %c0_87 = arith.constant 0 : index
    %c0_88 = arith.constant 0 : index
    %113 = vector.load %arg8[%c2_86, %c0_87, %c0_88] : memref<8x4x32xf32, #tpu.memory_space<vmem>>, vector<1x4x32xf32>
    %114 = vector.shape_cast %113 : vector<1x4x32xf32> to vector<4x32xf32>
    %cst_89 = arith.constant dense<0.000000e+00> : vector<17x32xf32>
    %115 = tpu.matmul %112, %114, %cst_89 {dimension_numbers = #tpu.dot_dimension_numbers<[1], [0], [0], [1], [0, 0, 1, 1], [], []>} : vector<17x4xf32>, vector<4x32xf32>, vector<17x32xf32> -> vector<17x32xf32>
    %116 = arith.addf %78, %115 : vector<17x32xf32>
    %c3 = arith.constant 3 : index
    %c0_90 = arith.constant 0 : index
    %c0_91 = arith.constant 0 : index
    %117 = vector.load %arg2[%c3, %c0_90, %c0_91] : memref<8x32x4xf32, #tpu.memory_space<vmem>>, vector<1x32x4xf32>
    %118 = vector.shape_cast %117 : vector<1x32x4xf32> to vector<32x4xf32>
    %cst_92 = arith.constant dense<0.000000e+00> : vector<17x4xf32>
    %119 = tpu.matmul %1, %118, %cst_92 {dimension_numbers = #tpu.dot_dimension_numbers<[1], [0], [0], [1], [0, 0, 1, 1], [], []>} : vector<17x32xf32>, vector<32x4xf32>, vector<17x4xf32> -> vector<17x4xf32>
    %c3_93 = arith.constant 3 : index
    %c0_94 = arith.constant 0 : index
    %c0_95 = arith.constant 0 : index
    %120 = vector.load %arg3[%c3_93, %c0_94, %c0_95] : memref<8x1x4xf32, #tpu.memory_space<vmem>>, vector<1x1x4xf32>
    %121 = vector.shape_cast %120 : vector<1x1x4xf32> to vector<1x4xf32>
    %122 = vector.broadcast %121 : vector<1x4xf32> to vector<17x4xf32>
    %123 = arith.addf %119, %122 : vector<17x4xf32>
    %c3_96 = arith.constant 3 : index
    %c0_97 = arith.constant 0 : index
    %c0_98 = arith.constant 0 : index
    %124 = vector.load %arg4[%c3_96, %c0_97, %c0_98] : memref<8x32x4xf32, #tpu.memory_space<vmem>>, vector<1x32x4xf32>
    %125 = vector.shape_cast %124 : vector<1x32x4xf32> to vector<32x4xf32>
    %cst_99 = arith.constant dense<0.000000e+00> : vector<17x4xf32>
    %126 = tpu.matmul %1, %125, %cst_99 {dimension_numbers = #tpu.dot_dimension_numbers<[1], [0], [0], [1], [0, 0, 1, 1], [], []>} : vector<17x32xf32>, vector<32x4xf32>, vector<17x4xf32> -> vector<17x4xf32>
    %c3_100 = arith.constant 3 : index
    %c0_101 = arith.constant 0 : index
    %c0_102 = arith.constant 0 : index
    %127 = vector.load %arg5[%c3_100, %c0_101, %c0_102] : memref<8x1x4xf32, #tpu.memory_space<vmem>>, vector<1x1x4xf32>
    %128 = vector.shape_cast %127 : vector<1x1x4xf32> to vector<1x4xf32>
    %129 = vector.broadcast %128 : vector<1x4xf32> to vector<17x4xf32>
    %130 = arith.addf %126, %129 : vector<17x4xf32>
    %c3_103 = arith.constant 3 : index
    %c0_104 = arith.constant 0 : index
    %c0_105 = arith.constant 0 : index
    %131 = vector.load %arg6[%c3_103, %c0_104, %c0_105] : memref<8x32x4xf32, #tpu.memory_space<vmem>>, vector<1x32x4xf32>
    %132 = vector.shape_cast %131 : vector<1x32x4xf32> to vector<32x4xf32>
    %cst_106 = arith.constant dense<0.000000e+00> : vector<17x4xf32>
    %133 = tpu.matmul %1, %132, %cst_106 {dimension_numbers = #tpu.dot_dimension_numbers<[1], [0], [0], [1], [0, 0, 1, 1], [], []>} : vector<17x32xf32>, vector<32x4xf32>, vector<17x4xf32> -> vector<17x4xf32>
    %c3_107 = arith.constant 3 : index
    %c0_108 = arith.constant 0 : index
    %c0_109 = arith.constant 0 : index
    %134 = vector.load %arg7[%c3_107, %c0_108, %c0_109] : memref<8x1x4xf32, #tpu.memory_space<vmem>>, vector<1x1x4xf32>
    %135 = vector.shape_cast %134 : vector<1x1x4xf32> to vector<1x4xf32>
    %136 = vector.broadcast %135 : vector<1x4xf32> to vector<17x4xf32>
    %137 = arith.addf %133, %136 : vector<17x4xf32>
    %cst_110 = arith.constant dense<0.000000e+00> : vector<17x17xf32>
    %138 = tpu.matmul %123, %130, %cst_110 {dimension_numbers = #tpu.dot_dimension_numbers<[1], [1], [0], [0], [0, 0, 1, 0], [], []>} : vector<17x4xf32>, vector<17x4xf32>, vector<17x17xf32> -> vector<17x17xf32>
    %cst_111 = arith.constant 5.000000e-01 : f32
    %139 = vector.broadcast %cst_111 : f32 to vector<17x17xf32>
    %140 = arith.mulf %138, %139 : vector<17x17xf32>
    %cst_112 = arith.constant dense<0xFF800000> : vector<17xf32>
    %141 = vector.multi_reduction <maximumf>, %140, %cst_112 [1] : vector<17x17xf32> to vector<17xf32>
    %142 = vector.shape_cast %141 : vector<17xf32> to vector<17x1xf32>
    %143 = vector.broadcast %142 : vector<17x1xf32> to vector<17x17xf32>
    %144 = arith.subf %140, %143 : vector<17x17xf32>
    %145 = math.exp %144 : vector<17x17xf32>
    %cst_113 = arith.constant dense<0.000000e+00> : vector<17xf32>
    %146 = vector.multi_reduction <add>, %145, %cst_113 [1] : vector<17x17xf32> to vector<17xf32>
    %147 = vector.shape_cast %146 : vector<17xf32> to vector<17x1xf32>
    %148 = vector.broadcast %147 : vector<17x1xf32> to vector<17x17xf32>
    %149 = arith.divf %145, %148 : vector<17x17xf32>
    %cst_114 = arith.constant dense<0.000000e+00> : vector<17x4xf32>
    %150 = tpu.matmul %149, %137, %cst_114 {dimension_numbers = #tpu.dot_dimension_numbers<[1], [0], [0], [1], [0, 0, 1, 1], [], []>} : vector<17x17xf32>, vector<17x4xf32>, vector<17x4xf32> -> vector<17x4xf32>
    %c3_115 = arith.constant 3 : index
    %c0_116 = arith.constant 0 : index
    %c0_117 = arith.constant 0 : index
    %151 = vector.load %arg8[%c3_115, %c0_116, %c0_117] : memref<8x4x32xf32, #tpu.memory_space<vmem>>, vector<1x4x32xf32>
    %152 = vector.shape_cast %151 : vector<1x4x32xf32> to vector<4x32xf32>
    %cst_118 = arith.constant dense<0.000000e+00> : vector<17x32xf32>
    %153 = tpu.matmul %150, %152, %cst_118 {dimension_numbers = #tpu.dot_dimension_numbers<[1], [0], [0], [1], [0, 0, 1, 1], [], []>} : vector<17x4xf32>, vector<4x32xf32>, vector<17x32xf32> -> vector<17x32xf32>
    %154 = arith.addf %116, %153 : vector<17x32xf32>
    %c4 = arith.constant 4 : index
    %c0_119 = arith.constant 0 : index
    %c0_120 = arith.constant 0 : index
    %155 = vector.load %arg2[%c4, %c0_119, %c0_120] : memref<8x32x4xf32, #tpu.memory_space<vmem>>, vector<1x32x4xf32>
    %156 = vector.shape_cast %155 : vector<1x32x4xf32> to vector<32x4xf32>
    %cst_121 = arith.constant dense<0.000000e+00> : vector<17x4xf32>
    %157 = tpu.matmul %1, %156, %cst_121 {dimension_numbers = #tpu.dot_dimension_numbers<[1], [0], [0], [1], [0, 0, 1, 1], [], []>} : vector<17x32xf32>, vector<32x4xf32>, vector<17x4xf32> -> vector<17x4xf32>
    %c4_122 = arith.constant 4 : index
    %c0_123 = arith.constant 0 : index
    %c0_124 = arith.constant 0 : index
    %158 = vector.load %arg3[%c4_122, %c0_123, %c0_124] : memref<8x1x4xf32, #tpu.memory_space<vmem>>, vector<1x1x4xf32>
    %159 = vector.shape_cast %158 : vector<1x1x4xf32> to vector<1x4xf32>
    %160 = vector.broadcast %159 : vector<1x4xf32> to vector<17x4xf32>
    %161 = arith.addf %157, %160 : vector<17x4xf32>
    %c4_125 = arith.constant 4 : index
    %c0_126 = arith.constant 0 : index
    %c0_127 = arith.constant 0 : index
    %162 = vector.load %arg4[%c4_125, %c0_126, %c0_127] : memref<8x32x4xf32, #tpu.memory_space<vmem>>, vector<1x32x4xf32>
    %163 = vector.shape_cast %162 : vector<1x32x4xf32> to vector<32x4xf32>
    %cst_128 = arith.constant dense<0.000000e+00> : vector<17x4xf32>
    %164 = tpu.matmul %1, %163, %cst_128 {dimension_numbers = #tpu.dot_dimension_numbers<[1], [0], [0], [1], [0, 0, 1, 1], [], []>} : vector<17x32xf32>, vector<32x4xf32>, vector<17x4xf32> -> vector<17x4xf32>
    %c4_129 = arith.constant 4 : index
    %c0_130 = arith.constant 0 : index
    %c0_131 = arith.constant 0 : index
    %165 = vector.load %arg5[%c4_129, %c0_130, %c0_131] : memref<8x1x4xf32, #tpu.memory_space<vmem>>, vector<1x1x4xf32>
    %166 = vector.shape_cast %165 : vector<1x1x4xf32> to vector<1x4xf32>
    %167 = vector.broadcast %166 : vector<1x4xf32> to vector<17x4xf32>
    %168 = arith.addf %164, %167 : vector<17x4xf32>
    %c4_132 = arith.constant 4 : index
    %c0_133 = arith.constant 0 : index
    %c0_134 = arith.constant 0 : index
    %169 = vector.load %arg6[%c4_132, %c0_133, %c0_134] : memref<8x32x4xf32, #tpu.memory_space<vmem>>, vector<1x32x4xf32>
    %170 = vector.shape_cast %169 : vector<1x32x4xf32> to vector<32x4xf32>
    %cst_135 = arith.constant dense<0.000000e+00> : vector<17x4xf32>
    %171 = tpu.matmul %1, %170, %cst_135 {dimension_numbers = #tpu.dot_dimension_numbers<[1], [0], [0], [1], [0, 0, 1, 1], [], []>} : vector<17x32xf32>, vector<32x4xf32>, vector<17x4xf32> -> vector<17x4xf32>
    %c4_136 = arith.constant 4 : index
    %c0_137 = arith.constant 0 : index
    %c0_138 = arith.constant 0 : index
    %172 = vector.load %arg7[%c4_136, %c0_137, %c0_138] : memref<8x1x4xf32, #tpu.memory_space<vmem>>, vector<1x1x4xf32>
    %173 = vector.shape_cast %172 : vector<1x1x4xf32> to vector<1x4xf32>
    %174 = vector.broadcast %173 : vector<1x4xf32> to vector<17x4xf32>
    %175 = arith.addf %171, %174 : vector<17x4xf32>
    %cst_139 = arith.constant dense<0.000000e+00> : vector<17x17xf32>
    %176 = tpu.matmul %161, %168, %cst_139 {dimension_numbers = #tpu.dot_dimension_numbers<[1], [1], [0], [0], [0, 0, 1, 0], [], []>} : vector<17x4xf32>, vector<17x4xf32>, vector<17x17xf32> -> vector<17x17xf32>
    %cst_140 = arith.constant 5.000000e-01 : f32
    %177 = vector.broadcast %cst_140 : f32 to vector<17x17xf32>
    %178 = arith.mulf %176, %177 : vector<17x17xf32>
    %cst_141 = arith.constant dense<0xFF800000> : vector<17xf32>
    %179 = vector.multi_reduction <maximumf>, %178, %cst_141 [1] : vector<17x17xf32> to vector<17xf32>
    %180 = vector.shape_cast %179 : vector<17xf32> to vector<17x1xf32>
    %181 = vector.broadcast %180 : vector<17x1xf32> to vector<17x17xf32>
    %182 = arith.subf %178, %181 : vector<17x17xf32>
    %183 = math.exp %182 : vector<17x17xf32>
    %cst_142 = arith.constant dense<0.000000e+00> : vector<17xf32>
    %184 = vector.multi_reduction <add>, %183, %cst_142 [1] : vector<17x17xf32> to vector<17xf32>
    %185 = vector.shape_cast %184 : vector<17xf32> to vector<17x1xf32>
    %186 = vector.broadcast %185 : vector<17x1xf32> to vector<17x17xf32>
    %187 = arith.divf %183, %186 : vector<17x17xf32>
    %cst_143 = arith.constant dense<0.000000e+00> : vector<17x4xf32>
    %188 = tpu.matmul %187, %175, %cst_143 {dimension_numbers = #tpu.dot_dimension_numbers<[1], [0], [0], [1], [0, 0, 1, 1], [], []>} : vector<17x17xf32>, vector<17x4xf32>, vector<17x4xf32> -> vector<17x4xf32>
    %c4_144 = arith.constant 4 : index
    %c0_145 = arith.constant 0 : index
    %c0_146 = arith.constant 0 : index
    %189 = vector.load %arg8[%c4_144, %c0_145, %c0_146] : memref<8x4x32xf32, #tpu.memory_space<vmem>>, vector<1x4x32xf32>
    %190 = vector.shape_cast %189 : vector<1x4x32xf32> to vector<4x32xf32>
    %cst_147 = arith.constant dense<0.000000e+00> : vector<17x32xf32>
    %191 = tpu.matmul %188, %190, %cst_147 {dimension_numbers = #tpu.dot_dimension_numbers<[1], [0], [0], [1], [0, 0, 1, 1], [], []>} : vector<17x4xf32>, vector<4x32xf32>, vector<17x32xf32> -> vector<17x32xf32>
    %192 = arith.addf %154, %191 : vector<17x32xf32>
    %c5 = arith.constant 5 : index
    %c0_148 = arith.constant 0 : index
    %c0_149 = arith.constant 0 : index
    %193 = vector.load %arg2[%c5, %c0_148, %c0_149] : memref<8x32x4xf32, #tpu.memory_space<vmem>>, vector<1x32x4xf32>
    %194 = vector.shape_cast %193 : vector<1x32x4xf32> to vector<32x4xf32>
    %cst_150 = arith.constant dense<0.000000e+00> : vector<17x4xf32>
    %195 = tpu.matmul %1, %194, %cst_150 {dimension_numbers = #tpu.dot_dimension_numbers<[1], [0], [0], [1], [0, 0, 1, 1], [], []>} : vector<17x32xf32>, vector<32x4xf32>, vector<17x4xf32> -> vector<17x4xf32>
    %c5_151 = arith.constant 5 : index
    %c0_152 = arith.constant 0 : index
    %c0_153 = arith.constant 0 : index
    %196 = vector.load %arg3[%c5_151, %c0_152, %c0_153] : memref<8x1x4xf32, #tpu.memory_space<vmem>>, vector<1x1x4xf32>
    %197 = vector.shape_cast %196 : vector<1x1x4xf32> to vector<1x4xf32>
    %198 = vector.broadcast %197 : vector<1x4xf32> to vector<17x4xf32>
    %199 = arith.addf %195, %198 : vector<17x4xf32>
    %c5_154 = arith.constant 5 : index
    %c0_155 = arith.constant 0 : index
    %c0_156 = arith.constant 0 : index
    %200 = vector.load %arg4[%c5_154, %c0_155, %c0_156] : memref<8x32x4xf32, #tpu.memory_space<vmem>>, vector<1x32x4xf32>
    %201 = vector.shape_cast %200 : vector<1x32x4xf32> to vector<32x4xf32>
    %cst_157 = arith.constant dense<0.000000e+00> : vector<17x4xf32>
    %202 = tpu.matmul %1, %201, %cst_157 {dimension_numbers = #tpu.dot_dimension_numbers<[1], [0], [0], [1], [0, 0, 1, 1], [], []>} : vector<17x32xf32>, vector<32x4xf32>, vector<17x4xf32> -> vector<17x4xf32>
    %c5_158 = arith.constant 5 : index
    %c0_159 = arith.constant 0 : index
    %c0_160 = arith.constant 0 : index
    %203 = vector.load %arg5[%c5_158, %c0_159, %c0_160] : memref<8x1x4xf32, #tpu.memory_space<vmem>>, vector<1x1x4xf32>
    %204 = vector.shape_cast %203 : vector<1x1x4xf32> to vector<1x4xf32>
    %205 = vector.broadcast %204 : vector<1x4xf32> to vector<17x4xf32>
    %206 = arith.addf %202, %205 : vector<17x4xf32>
    %c5_161 = arith.constant 5 : index
    %c0_162 = arith.constant 0 : index
    %c0_163 = arith.constant 0 : index
    %207 = vector.load %arg6[%c5_161, %c0_162, %c0_163] : memref<8x32x4xf32, #tpu.memory_space<vmem>>, vector<1x32x4xf32>
    %208 = vector.shape_cast %207 : vector<1x32x4xf32> to vector<32x4xf32>
    %cst_164 = arith.constant dense<0.000000e+00> : vector<17x4xf32>
    %209 = tpu.matmul %1, %208, %cst_164 {dimension_numbers = #tpu.dot_dimension_numbers<[1], [0], [0], [1], [0, 0, 1, 1], [], []>} : vector<17x32xf32>, vector<32x4xf32>, vector<17x4xf32> -> vector<17x4xf32>
    %c5_165 = arith.constant 5 : index
    %c0_166 = arith.constant 0 : index
    %c0_167 = arith.constant 0 : index
    %210 = vector.load %arg7[%c5_165, %c0_166, %c0_167] : memref<8x1x4xf32, #tpu.memory_space<vmem>>, vector<1x1x4xf32>
    %211 = vector.shape_cast %210 : vector<1x1x4xf32> to vector<1x4xf32>
    %212 = vector.broadcast %211 : vector<1x4xf32> to vector<17x4xf32>
    %213 = arith.addf %209, %212 : vector<17x4xf32>
    %cst_168 = arith.constant dense<0.000000e+00> : vector<17x17xf32>
    %214 = tpu.matmul %199, %206, %cst_168 {dimension_numbers = #tpu.dot_dimension_numbers<[1], [1], [0], [0], [0, 0, 1, 0], [], []>} : vector<17x4xf32>, vector<17x4xf32>, vector<17x17xf32> -> vector<17x17xf32>
    %cst_169 = arith.constant 5.000000e-01 : f32
    %215 = vector.broadcast %cst_169 : f32 to vector<17x17xf32>
    %216 = arith.mulf %214, %215 : vector<17x17xf32>
    %cst_170 = arith.constant dense<0xFF800000> : vector<17xf32>
    %217 = vector.multi_reduction <maximumf>, %216, %cst_170 [1] : vector<17x17xf32> to vector<17xf32>
    %218 = vector.shape_cast %217 : vector<17xf32> to vector<17x1xf32>
    %219 = vector.broadcast %218 : vector<17x1xf32> to vector<17x17xf32>
    %220 = arith.subf %216, %219 : vector<17x17xf32>
    %221 = math.exp %220 : vector<17x17xf32>
    %cst_171 = arith.constant dense<0.000000e+00> : vector<17xf32>
    %222 = vector.multi_reduction <add>, %221, %cst_171 [1] : vector<17x17xf32> to vector<17xf32>
    %223 = vector.shape_cast %222 : vector<17xf32> to vector<17x1xf32>
    %224 = vector.broadcast %223 : vector<17x1xf32> to vector<17x17xf32>
    %225 = arith.divf %221, %224 : vector<17x17xf32>
    %cst_172 = arith.constant dense<0.000000e+00> : vector<17x4xf32>
    %226 = tpu.matmul %225, %213, %cst_172 {dimension_numbers = #tpu.dot_dimension_numbers<[1], [0], [0], [1], [0, 0, 1, 1], [], []>} : vector<17x17xf32>, vector<17x4xf32>, vector<17x4xf32> -> vector<17x4xf32>
    %c5_173 = arith.constant 5 : index
    %c0_174 = arith.constant 0 : index
    %c0_175 = arith.constant 0 : index
    %227 = vector.load %arg8[%c5_173, %c0_174, %c0_175] : memref<8x4x32xf32, #tpu.memory_space<vmem>>, vector<1x4x32xf32>
    %228 = vector.shape_cast %227 : vector<1x4x32xf32> to vector<4x32xf32>
    %cst_176 = arith.constant dense<0.000000e+00> : vector<17x32xf32>
    %229 = tpu.matmul %226, %228, %cst_176 {dimension_numbers = #tpu.dot_dimension_numbers<[1], [0], [0], [1], [0, 0, 1, 1], [], []>} : vector<17x4xf32>, vector<4x32xf32>, vector<17x32xf32> -> vector<17x32xf32>
    %230 = arith.addf %192, %229 : vector<17x32xf32>
    %c6 = arith.constant 6 : index
    %c0_177 = arith.constant 0 : index
    %c0_178 = arith.constant 0 : index
    %231 = vector.load %arg2[%c6, %c0_177, %c0_178] : memref<8x32x4xf32, #tpu.memory_space<vmem>>, vector<1x32x4xf32>
    %232 = vector.shape_cast %231 : vector<1x32x4xf32> to vector<32x4xf32>
    %cst_179 = arith.constant dense<0.000000e+00> : vector<17x4xf32>
    %233 = tpu.matmul %1, %232, %cst_179 {dimension_numbers = #tpu.dot_dimension_numbers<[1], [0], [0], [1], [0, 0, 1, 1], [], []>} : vector<17x32xf32>, vector<32x4xf32>, vector<17x4xf32> -> vector<17x4xf32>
    %c6_180 = arith.constant 6 : index
    %c0_181 = arith.constant 0 : index
    %c0_182 = arith.constant 0 : index
    %234 = vector.load %arg3[%c6_180, %c0_181, %c0_182] : memref<8x1x4xf32, #tpu.memory_space<vmem>>, vector<1x1x4xf32>
    %235 = vector.shape_cast %234 : vector<1x1x4xf32> to vector<1x4xf32>
    %236 = vector.broadcast %235 : vector<1x4xf32> to vector<17x4xf32>
    %237 = arith.addf %233, %236 : vector<17x4xf32>
    %c6_183 = arith.constant 6 : index
    %c0_184 = arith.constant 0 : index
    %c0_185 = arith.constant 0 : index
    %238 = vector.load %arg4[%c6_183, %c0_184, %c0_185] : memref<8x32x4xf32, #tpu.memory_space<vmem>>, vector<1x32x4xf32>
    %239 = vector.shape_cast %238 : vector<1x32x4xf32> to vector<32x4xf32>
    %cst_186 = arith.constant dense<0.000000e+00> : vector<17x4xf32>
    %240 = tpu.matmul %1, %239, %cst_186 {dimension_numbers = #tpu.dot_dimension_numbers<[1], [0], [0], [1], [0, 0, 1, 1], [], []>} : vector<17x32xf32>, vector<32x4xf32>, vector<17x4xf32> -> vector<17x4xf32>
    %c6_187 = arith.constant 6 : index
    %c0_188 = arith.constant 0 : index
    %c0_189 = arith.constant 0 : index
    %241 = vector.load %arg5[%c6_187, %c0_188, %c0_189] : memref<8x1x4xf32, #tpu.memory_space<vmem>>, vector<1x1x4xf32>
    %242 = vector.shape_cast %241 : vector<1x1x4xf32> to vector<1x4xf32>
    %243 = vector.broadcast %242 : vector<1x4xf32> to vector<17x4xf32>
    %244 = arith.addf %240, %243 : vector<17x4xf32>
    %c6_190 = arith.constant 6 : index
    %c0_191 = arith.constant 0 : index
    %c0_192 = arith.constant 0 : index
    %245 = vector.load %arg6[%c6_190, %c0_191, %c0_192] : memref<8x32x4xf32, #tpu.memory_space<vmem>>, vector<1x32x4xf32>
    %246 = vector.shape_cast %245 : vector<1x32x4xf32> to vector<32x4xf32>
    %cst_193 = arith.constant dense<0.000000e+00> : vector<17x4xf32>
    %247 = tpu.matmul %1, %246, %cst_193 {dimension_numbers = #tpu.dot_dimension_numbers<[1], [0], [0], [1], [0, 0, 1, 1], [], []>} : vector<17x32xf32>, vector<32x4xf32>, vector<17x4xf32> -> vector<17x4xf32>
    %c6_194 = arith.constant 6 : index
    %c0_195 = arith.constant 0 : index
    %c0_196 = arith.constant 0 : index
    %248 = vector.load %arg7[%c6_194, %c0_195, %c0_196] : memref<8x1x4xf32, #tpu.memory_space<vmem>>, vector<1x1x4xf32>
    %249 = vector.shape_cast %248 : vector<1x1x4xf32> to vector<1x4xf32>
    %250 = vector.broadcast %249 : vector<1x4xf32> to vector<17x4xf32>
    %251 = arith.addf %247, %250 : vector<17x4xf32>
    %cst_197 = arith.constant dense<0.000000e+00> : vector<17x17xf32>
    %252 = tpu.matmul %237, %244, %cst_197 {dimension_numbers = #tpu.dot_dimension_numbers<[1], [1], [0], [0], [0, 0, 1, 0], [], []>} : vector<17x4xf32>, vector<17x4xf32>, vector<17x17xf32> -> vector<17x17xf32>
    %cst_198 = arith.constant 5.000000e-01 : f32
    %253 = vector.broadcast %cst_198 : f32 to vector<17x17xf32>
    %254 = arith.mulf %252, %253 : vector<17x17xf32>
    %cst_199 = arith.constant dense<0xFF800000> : vector<17xf32>
    %255 = vector.multi_reduction <maximumf>, %254, %cst_199 [1] : vector<17x17xf32> to vector<17xf32>
    %256 = vector.shape_cast %255 : vector<17xf32> to vector<17x1xf32>
    %257 = vector.broadcast %256 : vector<17x1xf32> to vector<17x17xf32>
    %258 = arith.subf %254, %257 : vector<17x17xf32>
    %259 = math.exp %258 : vector<17x17xf32>
    %cst_200 = arith.constant dense<0.000000e+00> : vector<17xf32>
    %260 = vector.multi_reduction <add>, %259, %cst_200 [1] : vector<17x17xf32> to vector<17xf32>
    %261 = vector.shape_cast %260 : vector<17xf32> to vector<17x1xf32>
    %262 = vector.broadcast %261 : vector<17x1xf32> to vector<17x17xf32>
    %263 = arith.divf %259, %262 : vector<17x17xf32>
    %cst_201 = arith.constant dense<0.000000e+00> : vector<17x4xf32>
    %264 = tpu.matmul %263, %251, %cst_201 {dimension_numbers = #tpu.dot_dimension_numbers<[1], [0], [0], [1], [0, 0, 1, 1], [], []>} : vector<17x17xf32>, vector<17x4xf32>, vector<17x4xf32> -> vector<17x4xf32>
    %c6_202 = arith.constant 6 : index
    %c0_203 = arith.constant 0 : index
    %c0_204 = arith.constant 0 : index
    %265 = vector.load %arg8[%c6_202, %c0_203, %c0_204] : memref<8x4x32xf32, #tpu.memory_space<vmem>>, vector<1x4x32xf32>
    %266 = vector.shape_cast %265 : vector<1x4x32xf32> to vector<4x32xf32>
    %cst_205 = arith.constant dense<0.000000e+00> : vector<17x32xf32>
    %267 = tpu.matmul %264, %266, %cst_205 {dimension_numbers = #tpu.dot_dimension_numbers<[1], [0], [0], [1], [0, 0, 1, 1], [], []>} : vector<17x4xf32>, vector<4x32xf32>, vector<17x32xf32> -> vector<17x32xf32>
    %268 = arith.addf %230, %267 : vector<17x32xf32>
    %c7 = arith.constant 7 : index
    %c0_206 = arith.constant 0 : index
    %c0_207 = arith.constant 0 : index
    %269 = vector.load %arg2[%c7, %c0_206, %c0_207] : memref<8x32x4xf32, #tpu.memory_space<vmem>>, vector<1x32x4xf32>
    %270 = vector.shape_cast %269 : vector<1x32x4xf32> to vector<32x4xf32>
    %cst_208 = arith.constant dense<0.000000e+00> : vector<17x4xf32>
    %271 = tpu.matmul %1, %270, %cst_208 {dimension_numbers = #tpu.dot_dimension_numbers<[1], [0], [0], [1], [0, 0, 1, 1], [], []>} : vector<17x32xf32>, vector<32x4xf32>, vector<17x4xf32> -> vector<17x4xf32>
    %c7_209 = arith.constant 7 : index
    %c0_210 = arith.constant 0 : index
    %c0_211 = arith.constant 0 : index
    %272 = vector.load %arg3[%c7_209, %c0_210, %c0_211] : memref<8x1x4xf32, #tpu.memory_space<vmem>>, vector<1x1x4xf32>
    %273 = vector.shape_cast %272 : vector<1x1x4xf32> to vector<1x4xf32>
    %274 = vector.broadcast %273 : vector<1x4xf32> to vector<17x4xf32>
    %275 = arith.addf %271, %274 : vector<17x4xf32>
    %c7_212 = arith.constant 7 : index
    %c0_213 = arith.constant 0 : index
    %c0_214 = arith.constant 0 : index
    %276 = vector.load %arg4[%c7_212, %c0_213, %c0_214] : memref<8x32x4xf32, #tpu.memory_space<vmem>>, vector<1x32x4xf32>
    %277 = vector.shape_cast %276 : vector<1x32x4xf32> to vector<32x4xf32>
    %cst_215 = arith.constant dense<0.000000e+00> : vector<17x4xf32>
    %278 = tpu.matmul %1, %277, %cst_215 {dimension_numbers = #tpu.dot_dimension_numbers<[1], [0], [0], [1], [0, 0, 1, 1], [], []>} : vector<17x32xf32>, vector<32x4xf32>, vector<17x4xf32> -> vector<17x4xf32>
    %c7_216 = arith.constant 7 : index
    %c0_217 = arith.constant 0 : index
    %c0_218 = arith.constant 0 : index
    %279 = vector.load %arg5[%c7_216, %c0_217, %c0_218] : memref<8x1x4xf32, #tpu.memory_space<vmem>>, vector<1x1x4xf32>
    %280 = vector.shape_cast %279 : vector<1x1x4xf32> to vector<1x4xf32>
    %281 = vector.broadcast %280 : vector<1x4xf32> to vector<17x4xf32>
    %282 = arith.addf %278, %281 : vector<17x4xf32>
    %c7_219 = arith.constant 7 : index
    %c0_220 = arith.constant 0 : index
    %c0_221 = arith.constant 0 : index
    %283 = vector.load %arg6[%c7_219, %c0_220, %c0_221] : memref<8x32x4xf32, #tpu.memory_space<vmem>>, vector<1x32x4xf32>
    %284 = vector.shape_cast %283 : vector<1x32x4xf32> to vector<32x4xf32>
    %cst_222 = arith.constant dense<0.000000e+00> : vector<17x4xf32>
    %285 = tpu.matmul %1, %284, %cst_222 {dimension_numbers = #tpu.dot_dimension_numbers<[1], [0], [0], [1], [0, 0, 1, 1], [], []>} : vector<17x32xf32>, vector<32x4xf32>, vector<17x4xf32> -> vector<17x4xf32>
    %c7_223 = arith.constant 7 : index
    %c0_224 = arith.constant 0 : index
    %c0_225 = arith.constant 0 : index
    %286 = vector.load %arg7[%c7_223, %c0_224, %c0_225] : memref<8x1x4xf32, #tpu.memory_space<vmem>>, vector<1x1x4xf32>
    %287 = vector.shape_cast %286 : vector<1x1x4xf32> to vector<1x4xf32>
    %288 = vector.broadcast %287 : vector<1x4xf32> to vector<17x4xf32>
    %289 = arith.addf %285, %288 : vector<17x4xf32>
    %cst_226 = arith.constant dense<0.000000e+00> : vector<17x17xf32>
    %290 = tpu.matmul %275, %282, %cst_226 {dimension_numbers = #tpu.dot_dimension_numbers<[1], [1], [0], [0], [0, 0, 1, 0], [], []>} : vector<17x4xf32>, vector<17x4xf32>, vector<17x17xf32> -> vector<17x17xf32>
    %cst_227 = arith.constant 5.000000e-01 : f32
    %291 = vector.broadcast %cst_227 : f32 to vector<17x17xf32>
    %292 = arith.mulf %290, %291 : vector<17x17xf32>
    %cst_228 = arith.constant dense<0xFF800000> : vector<17xf32>
    %293 = vector.multi_reduction <maximumf>, %292, %cst_228 [1] : vector<17x17xf32> to vector<17xf32>
    %294 = vector.shape_cast %293 : vector<17xf32> to vector<17x1xf32>
    %295 = vector.broadcast %294 : vector<17x1xf32> to vector<17x17xf32>
    %296 = arith.subf %292, %295 : vector<17x17xf32>
    %297 = math.exp %296 : vector<17x17xf32>
    %cst_229 = arith.constant dense<0.000000e+00> : vector<17xf32>
    %298 = vector.multi_reduction <add>, %297, %cst_229 [1] : vector<17x17xf32> to vector<17xf32>
    %299 = vector.shape_cast %298 : vector<17xf32> to vector<17x1xf32>
    %300 = vector.broadcast %299 : vector<17x1xf32> to vector<17x17xf32>
    %301 = arith.divf %297, %300 : vector<17x17xf32>
    %cst_230 = arith.constant dense<0.000000e+00> : vector<17x4xf32>
    %302 = tpu.matmul %301, %289, %cst_230 {dimension_numbers = #tpu.dot_dimension_numbers<[1], [0], [0], [1], [0, 0, 1, 1], [], []>} : vector<17x17xf32>, vector<17x4xf32>, vector<17x4xf32> -> vector<17x4xf32>
    %c7_231 = arith.constant 7 : index
    %c0_232 = arith.constant 0 : index
    %c0_233 = arith.constant 0 : index
    %303 = vector.load %arg8[%c7_231, %c0_232, %c0_233] : memref<8x4x32xf32, #tpu.memory_space<vmem>>, vector<1x4x32xf32>
    %304 = vector.shape_cast %303 : vector<1x4x32xf32> to vector<4x32xf32>
    %cst_234 = arith.constant dense<0.000000e+00> : vector<17x32xf32>
    %305 = tpu.matmul %302, %304, %cst_234 {dimension_numbers = #tpu.dot_dimension_numbers<[1], [0], [0], [1], [0, 0, 1, 1], [], []>} : vector<17x4xf32>, vector<4x32xf32>, vector<17x32xf32> -> vector<17x32xf32>
    %306 = arith.addf %268, %305 : vector<17x32xf32>
    %c0_235 = arith.constant 0 : index
    %c0_236 = arith.constant 0 : index
    %307 = vector.load %arg9[%c0_235, %c0_236] : memref<1x32xf32, #tpu.memory_space<vmem>>, vector<1x32xf32>
    %308 = vector.broadcast %307 : vector<1x32xf32> to vector<17x32xf32>
    %309 = arith.addf %306, %308 : vector<17x32xf32>
    %310 = arith.addf %1, %309 : vector<17x32xf32>
    %cst_237 = arith.constant dense<0.000000e+00> : vector<17xf32>
    %311 = vector.multi_reduction <add>, %310, %cst_237 [1] : vector<17x32xf32> to vector<17xf32>
    %312 = vector.shape_cast %311 : vector<17xf32> to vector<17x1xf32>
    %cst_238 = arith.constant 3.200000e+01 : f32
    %313 = vector.broadcast %cst_238 : f32 to vector<17x1xf32>
    %314 = arith.divf %312, %313 : vector<17x1xf32>
    %315 = vector.broadcast %314 : vector<17x1xf32> to vector<17x32xf32>
    %316 = arith.subf %310, %315 : vector<17x32xf32>
    %317 = arith.mulf %316, %316 : vector<17x32xf32>
    %cst_239 = arith.constant dense<0.000000e+00> : vector<17xf32>
    %318 = vector.multi_reduction <add>, %317, %cst_239 [1] : vector<17x32xf32> to vector<17xf32>
    %319 = vector.shape_cast %318 : vector<17xf32> to vector<17x1xf32>
    %cst_240 = arith.constant 3.200000e+01 : f32
    %320 = vector.broadcast %cst_240 : f32 to vector<17x1xf32>
    %321 = arith.divf %319, %320 : vector<17x1xf32>
    %322 = vector.broadcast %314 : vector<17x1xf32> to vector<17x32xf32>
    %323 = arith.subf %310, %322 : vector<17x32xf32>
    %cst_241 = arith.constant 9.99999974E-6 : f32
    %324 = vector.broadcast %cst_241 : f32 to vector<17x1xf32>
    %325 = arith.addf %321, %324 : vector<17x1xf32>
    %326 = math.rsqrt %325 : vector<17x1xf32>
    %327 = vector.broadcast %326 : vector<17x1xf32> to vector<17x32xf32>
    %328 = arith.mulf %323, %327 : vector<17x32xf32>
    %c0_242 = arith.constant 0 : index
    %c0_243 = arith.constant 0 : index
    %329 = vector.load %arg10[%c0_242, %c0_243] : memref<1x32xf32, #tpu.memory_space<vmem>>, vector<1x32xf32>
    %330 = vector.broadcast %329 : vector<1x32xf32> to vector<17x32xf32>
    %331 = arith.mulf %328, %330 : vector<17x32xf32>
    %c0_244 = arith.constant 0 : index
    %c0_245 = arith.constant 0 : index
    %332 = vector.load %arg11[%c0_244, %c0_245] : memref<1x32xf32, #tpu.memory_space<vmem>>, vector<1x32xf32>
    %333 = vector.broadcast %332 : vector<1x32xf32> to vector<17x32xf32>
    %334 = arith.addf %331, %333 : vector<17x32xf32>
    %c0_246 = arith.constant 0 : index
    %c0_247 = arith.constant 0 : index
    %335 = vector.load %arg12[%c0_246, %c0_247] : memref<32x128xf32, #tpu.memory_space<vmem>>, vector<32x128xf32>
    %cst_248 = arith.constant dense<0.000000e+00> : vector<17x128xf32>
    %336 = tpu.matmul %334, %335, %cst_248 {dimension_numbers = #tpu.dot_dimension_numbers<[1], [0], [0], [1], [0, 0, 1, 1], [], []>} : vector<17x32xf32>, vector<32x128xf32>, vector<17x128xf32> -> vector<17x128xf32>
    %c0_249 = arith.constant 0 : index
    %c0_250 = arith.constant 0 : index
    %337 = vector.load %arg13[%c0_249, %c0_250] : memref<1x128xf32, #tpu.memory_space<vmem>>, vector<1x128xf32>
    %338 = vector.broadcast %337 : vector<1x128xf32> to vector<17x128xf32>
    %339 = arith.addf %336, %338 : vector<17x128xf32>
    %cst_251 = arith.constant 0.000000e+00 : f32
    %340 = vector.broadcast %cst_251 : f32 to vector<17x128xf32>
    %341 = arith.maximumf %339, %340 : vector<17x128xf32>
    %c0_252 = arith.constant 0 : index
    %c0_253 = arith.constant 0 : index
    %342 = vector.load %arg14[%c0_252, %c0_253] : memref<128x32xf32, #tpu.memory_space<vmem>>, vector<128x32xf32>
    %cst_254 = arith.constant dense<0.000000e+00> : vector<17x32xf32>
    %343 = tpu.matmul %341, %342, %cst_254 {dimension_numbers = #tpu.dot_dimension_numbers<[1], [0], [0], [1], [0, 0, 1, 1], [], []>} : vector<17x128xf32>, vector<128x32xf32>, vector<17x32xf32> -> vector<17x32xf32>
    %c0_255 = arith.constant 0 : index
    %c0_256 = arith.constant 0 : index
    %344 = vector.load %arg15[%c0_255, %c0_256] : memref<1x32xf32, #tpu.memory_space<vmem>>, vector<1x32xf32>
    %345 = vector.broadcast %344 : vector<1x32xf32> to vector<17x32xf32>
    %346 = arith.addf %343, %345 : vector<17x32xf32>
    %347 = arith.addf %334, %346 : vector<17x32xf32>
    %cst_257 = arith.constant dense<0.000000e+00> : vector<17xf32>
    %348 = vector.multi_reduction <add>, %347, %cst_257 [1] : vector<17x32xf32> to vector<17xf32>
    %349 = vector.shape_cast %348 : vector<17xf32> to vector<17x1xf32>
    %cst_258 = arith.constant 3.200000e+01 : f32
    %350 = vector.broadcast %cst_258 : f32 to vector<17x1xf32>
    %351 = arith.divf %349, %350 : vector<17x1xf32>
    %352 = vector.broadcast %351 : vector<17x1xf32> to vector<17x32xf32>
    %353 = arith.subf %347, %352 : vector<17x32xf32>
    %354 = arith.mulf %353, %353 : vector<17x32xf32>
    %cst_259 = arith.constant dense<0.000000e+00> : vector<17xf32>
    %355 = vector.multi_reduction <add>, %354, %cst_259 [1] : vector<17x32xf32> to vector<17xf32>
    %356 = vector.shape_cast %355 : vector<17xf32> to vector<17x1xf32>
    %cst_260 = arith.constant 3.200000e+01 : f32
    %357 = vector.broadcast %cst_260 : f32 to vector<17x1xf32>
    %358 = arith.divf %356, %357 : vector<17x1xf32>
    %359 = vector.broadcast %351 : vector<17x1xf32> to vector<17x32xf32>
    %360 = arith.subf %347, %359 : vector<17x32xf32>
    %cst_261 = arith.constant 9.99999974E-6 : f32
    %361 = vector.broadcast %cst_261 : f32 to vector<17x1xf32>
    %362 = arith.addf %358, %361 : vector<17x1xf32>
    %363 = math.rsqrt %362 : vector<17x1xf32>
    %364 = vector.broadcast %363 : vector<17x1xf32> to vector<17x32xf32>
    %365 = arith.mulf %360, %364 : vector<17x32xf32>
    %c0_262 = arith.constant 0 : index
    %c0_263 = arith.constant 0 : index
    %366 = vector.load %arg16[%c0_262, %c0_263] : memref<1x32xf32, #tpu.memory_space<vmem>>, vector<1x32xf32>
    %367 = vector.broadcast %366 : vector<1x32xf32> to vector<17x32xf32>
    %368 = arith.mulf %365, %367 : vector<17x32xf32>
    %c0_264 = arith.constant 0 : index
    %c0_265 = arith.constant 0 : index
    %369 = vector.load %arg17[%c0_264, %c0_265] : memref<1x32xf32, #tpu.memory_space<vmem>>, vector<1x32xf32>
    %370 = vector.broadcast %369 : vector<1x32xf32> to vector<17x32xf32>
    %371 = arith.addf %368, %370 : vector<17x32xf32>
    %c0_266 = arith.constant 0 : index
    %c0_267 = arith.constant 0 : index
    %c0_268 = arith.constant 0 : index
    %372 = vector.load %arg18[%c0_266, %c0_267, %c0_268] : memref<1x17x32xf32, #tpu.memory_space<vmem>>, vector<1x17x32xf32>
    %373 = vector.shape_cast %372 : vector<1x17x32xf32> to vector<17x32xf32>
    %374 = vector.shape_cast %371 : vector<17x32xf32> to vector<1x17x32xf32>
    tpu.vector_store %arg18[%c0_266, %c0_267, %c0_268], %374 {strides = array<i32>} : memref<1x17x32xf32, #tpu.memory_space<vmem>>, vector<1x17x32xf32>,
    return
  }
  func.func @transform_0(%arg0: i32) -> (i32, i32, i32) {
    %c0_i32 = arith.constant 0 : i32
    %c0_i32_0 = arith.constant 0 : i32
    %c0_i32_1 = arith.constant 0 : i32
    return %arg0, %c0_i32, %c0_i32_0 : i32, i32, i32
  }
  func.func @transform_1(%arg0: i32) -> (i32, i32, i32) {
    %c0_i32 = arith.constant 0 : i32
    %c0_i32_0 = arith.constant 0 : i32
    %c0_i32_1 = arith.constant 0 : i32
    %c0_i32_2 = arith.constant 0 : i32
    return %c0_i32, %c0_i32_0, %c0_i32_1 : i32, i32, i32
  }
  func.func @transform_2(%arg0: i32) -> (i32, i32, i32) {
    %c0_i32 = arith.constant 0 : i32
    %c0_i32_0 = arith.constant 0 : i32
    %c0_i32_1 = arith.constant 0 : i32
    %c0_i32_2 = arith.constant 0 : i32
    return %c0_i32, %c0_i32_0, %c0_i32_1 : i32, i32, i32
  }
  func.func @transform_3(%arg0: i32) -> (i32, i32, i32) {
    %c0_i32 = arith.constant 0 : i32
    %c0_i32_0 = arith.constant 0 : i32
    %c0_i32_1 = arith.constant 0 : i32
    %c0_i32_2 = arith.constant 0 : i32
    return %c0_i32, %c0_i32_0, %c0_i32_1 : i32, i32, i32
  }
  func.func @transform_4(%arg0: i32) -> (i32, i32, i32) {
    %c0_i32 = arith.constant 0 : i32
    %c0_i32_0 = arith.constant 0 : i32
    %c0_i32_1 = arith.constant 0 : i32
    %c0_i32_2 = arith.constant 0 : i32
    return %c0_i32, %c0_i32_0, %c0_i32_1 : i32, i32, i32
  }
  func.func @transform_5(%arg0: i32) -> (i32, i32, i32) {
    %c0_i32 = arith.constant 0 : i32
    %c0_i32_0 = arith.constant 0 : i32
    %c0_i32_1 = arith.constant 0 : i32
    %c0_i32_2 = arith.constant 0 : i32
    return %c0_i32, %c0_i32_0, %c0_i32_1 : i32, i32, i32
  }
  func.func @transform_6(%arg0: i32) -> (i32, i32, i32) {
    %c0_i32 = arith.constant 0 : i32
    %c0_i32_0 = arith.constant 0 : i32
    %c0_i32_1 = arith.constant 0 : i32
    %c0_i32_2 = arith.constant 0 : i32
    return %c0_i32, %c0_i32_0, %c0_i32_1 : i32, i32, i32
  }
  func.func @transform_7(%arg0: i32) -> (i32, i32, i32) {
    %c0_i32 = arith.constant 0 : i32
    %c0_i32_0 = arith.constant 0 : i32
    %c0_i32_1 = arith.constant 0 : i32
    %c0_i32_2 = arith.constant 0 : i32
    return %c0_i32, %c0_i32_0, %c0_i32_1 : i32, i32, i32
  }
  func.func @transform_8(%arg0: i32) -> (i32, i32) {
    %c0_i32 = arith.constant 0 : i32
    %c0_i32_0 = arith.constant 0 : i32
    %c0_i32_1 = arith.constant 0 : i32
    return %c0_i32, %c0_i32_0 : i32, i32
  }
  func.func @transform_9(%arg0: i32) -> (i32, i32) {
    %c0_i32 = arith.constant 0 : i32
    %c0_i32_0 = arith.constant 0 : i32
    %c0_i32_1 = arith.constant 0 : i32
    return %c0_i32, %c0_i32_0 : i32, i32
  }
  func.func @transform_10(%arg0: i32) -> (i32, i32) {
    %c0_i32 = arith.constant 0 : i32
    %c0_i32_0 = arith.constant 0 : i32
    %c0_i32_1 = arith.constant 0 : i32
    return %c0_i32, %c0_i32_0 : i32, i32
  }
  func.func @transform_11(%arg0: i32) -> (i32, i32) {
    %c0_i32 = arith.constant 0 : i32
    %c0_i32_0 = arith.constant 0 : i32
    %c0_i32_1 = arith.constant 0 : i32
    return %c0_i32, %c0_i32_0 : i32, i32
  }
  func.func @transform_12(%arg0: i32) -> (i32, i32) {
    %c0_i32 = arith.constant 0 : i32
    %c0_i32_0 = arith.constant 0 : i32
    %c0_i32_1 = arith.constant 0 : i32
    return %c0_i32, %c0_i32_0 : i32, i32
  }
  func.func @transform_13(%arg0: i32) -> (i32, i32) {
    %c0_i32 = arith.constant 0 : i32
    %c0_i32_0 = arith.constant 0 : i32
    %c0_i32_1 = arith.constant 0 : i32
    return %c0_i32, %c0_i32_0 : i32, i32
  }
  func.func @transform_14(%arg0: i32) -> (i32, i32) {
    %c0_i32 = arith.constant 0 : i32
    %c0_i32_0 = arith.constant 0 : i32
    %c0_i32_1 = arith.constant 0 : i32
    return %c0_i32, %c0_i32_0 : i32, i32
  }
  func.func @transform_15(%arg0: i32) -> (i32, i32) {
    %c0_i32 = arith.constant 0 : i32
    %c0_i32_0 = arith.constant 0 : i32
    %c0_i32_1 = arith.constant 0 : i32
    return %c0_i32, %c0_i32_0 : i32, i32
  }
  func.func @transform_16(%arg0: i32) -> (i32, i32) {
    %c0_i32 = arith.constant 0 : i32
    %c0_i32_0 = arith.constant 0 : i32
    %c0_i32_1 = arith.constant 0 : i32
    return %c0_i32, %c0_i32_0 : i32, i32
  }
  func.func @transform_17(%arg0: i32) -> (i32, i32, i32) {
    %c0_i32 = arith.constant 0 : i32
    %c0_i32_0 = arith.constant 0 : i32
    %c0_i32_1 = arith.constant 0 : i32
    return %arg0, %c0_i32, %c0_i32_0 : i32, i32, i32
  }
}

</mosaic_0001>

<llo_original>
// kernel: _lambda_.4
$region0: #{_lambda_.4}
  #allocation0 [shape = 'u32[]', space=smem, size = 0x4, offset = 0x4, fixed_abs, tag = 'smem constant byte address 0x4 - core index']
  #allocation1 [shape = 'u32[72,128]{1,0:T(1,128)}', space=vmem, size = 0x9000, scoped, tag = 'internal scratch']
  %s0 = inlined_call_operand.vmem [shape: f32[2,16,16], index: 0, kind: input, shape index: {}]
  %s1 = inlined_call_operand.hbm [shape: f32[16,32], index: 1, kind: input, shape index: {}]
  %s2 = inlined_call_operand.hbm [shape: f32[1,32], index: 2, kind: input, shape index: {}]
  %s3 = inlined_call_operand.vmem [shape: f32[16,1], index: 3, kind: input, shape index: {}]
  %s4 = inlined_call_operand.vmem [shape: f32[16,1], index: 4, kind: input, shape index: {}]
  %s5 = inlined_call_operand.hbm [shape: f32[32,32], index: 5, kind: input, shape index: {}]
  %s6 = inlined_call_operand.hbm [shape: f32[1,32], index: 6, kind: input, shape index: {}]
  %s7 = inlined_call_operand.hbm [shape: f32[16,32], index: 7, kind: input, shape index: {}]
  %s8 = inlined_call_operand.vmem [shape: f32[2,16,32], index: 8, kind: output, shape index: {}]
  %s9 = sld [smem:[#allocation0]]
  $region85: #{_lambda_.4} parent=0
    _
  %s11 = ssub.s32 1, %s9
  %s12 = scalar_select 0, %s11, %s9
  $region1: #{_lambda_.4} parent=0
    #allocation2 [shape = 'u8[8192]{0}', space=vmem, size = 0x2000, scoped, tag = 'input window, operand 1, single buffered']
    #allocation3 [shape = 's32[2]{0}', space=sflag, size = 0x8, scoped, tag = 'scoped memory for _lambda_.4']
    #allocation4 [shape = 'u8[512]{0}', space=vmem, size = 0x400, scoped, tag = 'input window, operand 2, single buffered']
    #allocation5 [shape = 's32[1]{0}', space=sflag, size = 0x4, scoped, tag = 'scoped memory for _lambda_.4']
    #allocation6 [shape = 'u8[16384]{0}', space=vmem, size = 0x4000, scoped, tag = 'input window, operand 5, single buffered']
    #allocation7 [shape = 'u8[512]{0}', space=vmem, size = 0x400, scoped, tag = 'input window, operand 6, single buffered']
    #allocation8 [shape = 's32[1]{0}', space=sflag, size = 0x4, scoped, tag = 'scoped memory for _lambda_.4']
    #allocation9 [shape = 'u8[8192]{0}', space=vmem, size = 0x2000, scoped, tag = 'input window, operand 7, single buffered']
    %13 = vsyncpa [#allocation3], 0
    %14 = vsyncpa [#allocation5], 0
    %15 = vsyncpa [#allocation8], 0
    loop: start=0, step=1, limit=4
    $region2: #{_lambda_.4} parent=1 // loop_pre_header
      _
    $region3: #{_lambda_.4} parent=1 // loop_header
      %s17 = sphi 0, %s21
      %p18 = scmp.ge.s32.totalorder %s17, 4
      %s27 = sphi 0, %s29
      %s30 = sphi 0, %s27
      %s31 = sphi 0, %s30
      %s47 = sphi 0, %s31
      %s51 = sphi 0, %s51
      %s53 = sphi 0, %s51
      %s54 = sphi 0, %s53
      %s68 = sphi 0, %s54
      %s72 = sphi 0, %s72
      %s74 = sphi 0, %s72
      %s75 = sphi 0, %s74
      %s89 = sphi 0, %s75
      %s93 = sphi 0, %s93
      %s95 = sphi 0, %s93
      %s96 = sphi 0, %s95
      %s110 = sphi 0, %s96
      %s114 = sphi 0, %s114
      %s116 = sphi 0, %s114
      %s117 = sphi 0, %s116
      %s131 = sphi 0, %s117
      %s135 = sphi 0, %s135
      %s137 = sphi 0, %s135
      %s138 = sphi 0, %s137
      %s152 = sphi 0, %s138
      %s156 = sphi 0, %s156
      %s158 = sphi 0, %s156
      %s159 = sphi 0, %s158
      %s173 = sphi 0, %s159
      %s177 = sphi 0, %s177
      %s179 = sphi 0, %s177
      %s180 = sphi 0, %s179
      %s194 = sphi 0, %s180
      %s200 = sphi 0, %s202
      %s203 = sphi 0, %s200
      %s204 = sphi 0, %s203
      %s220 = sphi 0, %s204
    $region4: #{_lambda_.4} parent=1 // loop_header_branch
      %20 = sbr.rel (%p18) target = $region8
    $region5: #{_lambda_.4} parent=1 // loop_body
      %s22 = ssub.s32 %s17, 1
      %s23 = ssub.s32 %s17, 2
      %s24 = sadd.s32 %s17, 1
      %s25 = ssub.s32 %s17, %s24
      %p26 = scmp.eq.s32.totalorder %s25, 0
      %s28 = sadd.s32 %s27, 1
      %s29 = scalar_select %p26, %s27, %s28
      %p32 = pneg %p26
      %p33 = scmp.eq.s32.totalorder %s17, 1
      %p34 = por %p32, %p33
      %p35 = scmp.ne.s32.totalorder %s27, %s30
      %p36 = scmp.eq.s32.totalorder %s17, 0
      %p37 = por %p35, %p36
      %p38 = scmp.ne.s32.totalorder %s27, %s30
      %p39 = scmp.eq.s32.totalorder %s22, 1
      %p40 = por %p38, %p39
      %p41 = scmp.ne.s32.totalorder %s30, %s31
      %p42 = scmp.eq.s32.totalorder %s22, 0
      %p43 = por %p41, %p42
      %p44 = scmp.ne.s32.totalorder %s30, %s31
      %p45 = scmp.eq.s32.totalorder %s23, 1
      %p46 = por %p44, %p45
      %p48 = scmp.ne.s32.totalorder %s31, %s47
      %p49 = scmp.eq.s32.totalorder %s23, 0
      %p50 = por %p48, %p49
      %s52 = sadd.s32 %s51, 1
      %p55 = scmp.eq.s32.totalorder %s17, 1
      %p56 = scmp.ne.s32.totalorder %s51, %s53
      %p57 = scmp.eq.s32.totalorder %s17, 0
      %p58 = por %p56, %p57
      %p59 = scmp.ne.s32.totalorder %s51, %s53
      %p60 = scmp.eq.s32.totalorder %s22, 1
      %p61 = por %p59, %p60
      %p62 = scmp.ne.s32.totalorder %s53, %s54
      %p63 = scmp.eq.s32.totalorder %s22, 0
      %p64 = por %p62, %p63
      %p65 = scmp.ne.s32.totalorder %s53, %s54
      %p66 = scmp.eq.s32.totalorder %s23, 1
      %p67 = por %p65, %p66
      %p69 = scmp.ne.s32.totalorder %s54, %s68
      %p70 = scmp.eq.s32.totalorder %s23, 0
      %p71 = por %p69, %p70
      %s73 = sadd.s32 %s72, 1
      %p76 = scmp.eq.s32.totalorder %s17, 1
      %p77 = scmp.ne.s32.totalorder %s72, %s74
      %p78 = scmp.eq.s32.totalorder %s17, 0
      %p79 = por %p77, %p78
      %p80 = scmp.ne.s32.totalorder %s72, %s74
      %p81 = scmp.eq.s32.totalorder %s22, 1
      %p82 = por %p80, %p81
      %p83 = scmp.ne.s32.totalorder %s74, %s75
      %p84 = scmp.eq.s32.totalorder %s22, 0
      %p85 = por %p83, %p84
      %p86 = scmp.ne.s32.totalorder %s74, %s75
      %p87 = scmp.eq.s32.totalorder %s23, 1
      %p88 = por %p86, %p87
      %p90 = scmp.ne.s32.totalorder %s75, %s89
      %p91 = scmp.eq.s32.totalorder %s23, 0
      %p92 = por %p90, %p91
      %s94 = sadd.s32 %s93, 1
      %p97 = scmp.eq.s32.totalorder %s17, 1
      %p98 = scmp.ne.s32.totalorder %s93, %s95
      %p99 = scmp.eq.s32.totalorder %s17, 0
      %p100 = por %p98, %p99
      %p101 = scmp.ne.s32.totalorder %s93, %s95
      %p102 = scmp.eq.s32.totalorder %s22, 1
      %p103 = por %p101, %p102
      %p104 = scmp.ne.s32.totalorder %s95, %s96
      %p105 = scmp.eq.s32.totalorder %s22, 0
      %p106 = por %p104, %p105
      %p107 = scmp.ne.s32.totalorder %s95, %s96
      %p108 = scmp.eq.s32.totalorder %s23, 1
      %p109 = por %p107, %p108
      %p111 = scmp.ne.s32.totalorder %s96, %s110
      %p112 = scmp.eq.s32.totalorder %s23, 0
      %p113 = por %p111, %p112
      %s115 = sadd.s32 %s114, 1
      %p118 = scmp.eq.s32.totalorder %s17, 1
      %p119 = scmp.ne.s32.totalorder %s114, %s116
      %p120 = scmp.eq.s32.totalorder %s17, 0
      %p121 = por %p119, %p120
      %p122 = scmp.ne.s32.totalorder %s114, %s116
      %p123 = scmp.eq.s32.totalorder %s22, 1
      %p124 = por %p122, %p123
      %p125 = scmp.ne.s32.totalorder %s116, %s117
      %p126 = scmp.eq.s32.totalorder %s22, 0
      %p127 = por %p125, %p126
      %p128 = scmp.ne.s32.totalorder %s116, %s117
      %p129 = scmp.eq.s32.totalorder %s23, 1
      %p130 = por %p128, %p129
      %p132 = scmp.ne.s32.totalorder %s117, %s131
      %p133 = scmp.eq.s32.totalorder %s23, 0
      %p134 = por %p132, %p133
      %s136 = sadd.s32 %s135, 1
      %p139 = scmp.eq.s32.totalorder %s17, 1
      %p140 = scmp.ne.s32.totalorder %s135, %s137
      %p141 = scmp.eq.s32.totalorder %s17, 0
      %p142 = por %p140, %p141
      %p143 = scmp.ne.s32.totalorder %s135, %s137
      %p144 = scmp.eq.s32.totalorder %s22, 1
      %p145 = por %p143, %p144
      %p146 = scmp.ne.s32.totalorder %s137, %s138
      %p147 = scmp.eq.s32.totalorder %s22, 0
      %p148 = por %p146, %p147
      %p149 = scmp.ne.s32.totalorder %s137, %s138
      %p150 = scmp.eq.s32.totalorder %s23, 1
      %p151 = por %p149, %p150
      %p153 = scmp.ne.s32.totalorder %s138, %s152
      %p154 = scmp.eq.s32.totalorder %s23, 0
      %p155 = por %p153, %p154
      %s157 = sadd.s32 %s156, 1
      %p160 = scmp.eq.s32.totalorder %s17, 1
      %p161 = scmp.ne.s32.totalorder %s156, %s158
      %p162 = scmp.eq.s32.totalorder %s17, 0
      %p163 = por %p161, %p162
      %p164 = scmp.ne.s32.totalorder %s156, %s158
      %p165 = scmp.eq.s32.totalorder %s22, 1
      %p166 = por %p164, %p165
      %p167 = scmp.ne.s32.totalorder %s158, %s159
      %p168 = scmp.eq.s32.totalorder %s22, 0
      %p169 = por %p167, %p168
      %p170 = scmp.ne.s32.totalorder %s158, %s159
      %p171 = scmp.eq.s32.totalorder %s23, 1
      %p172 = por %p170, %p171
      %p174 = scmp.ne.s32.totalorder %s159, %s173
      %p175 = scmp.eq.s32.totalorder %s23, 0
      %p176 = por %p174, %p175
      %s178 = sadd.s32 %s177, 1
      %p181 = scmp.eq.s32.totalorder %s17, 1
      %p182 = scmp.ne.s32.totalorder %s177, %s179
      %p183 = scmp.eq.s32.totalorder %s17, 0
      %p184 = por %p182, %p183
      %p185 = scmp.ne.s32.totalorder %s177, %s179
      %p186 = scmp.eq.s32.totalorder %s22, 1
      %p187 = por %p185, %p186
      %p188 = scmp.ne.s32.totalorder %s179, %s180
      %p189 = scmp.eq.s32.totalorder %s22, 0
      %p190 = por %p188, %p189
      %p191 = scmp.ne.s32.totalorder %s179, %s180
      %p192 = scmp.eq.s32.totalorder %s23, 1
      %p193 = por %p191, %p192
      %p195 = scmp.ne.s32.totalorder %s180, %s194
      %p196 = scmp.eq.s32.totalorder %s23, 0
      %p197 = por %p195, %p196
      %s198 = ssub.s32 %s17, %s24
      %p199 = scmp.eq.s32.totalorder %s198, 0
      %s201 = sadd.s32 %s200, 1
      %s202 = scalar_select %p199, %s200, %s201
      %p205 = pneg %p199
      %p206 = scmp.eq.s32.totalorder %s17, 1
      %p207 = por %p205, %p206
      %p208 = scmp.ne.s32.totalorder %s200, %s203
      %p209 = scmp.eq.s32.totalorder %s17, 0
      %p210 = por %p208, %p209
      %p211 = scmp.ne.s32.totalorder %s200, %s203
      %p212 = scmp.eq.s32.totalorder %s22, 1
      %p213 = por %p211, %p212
      %p214 = scmp.ne.s32.totalorder %s203, %s204
      %p215 = scmp.eq.s32.totalorder %s22, 0
      %p216 = por %p214, %p215
      %p217 = scmp.ne.s32.totalorder %s203, %s204
      %p218 = scmp.eq.s32.totalorder %s23, 1
      %p219 = por %p217, %p218
      %p221 = scmp.ne.s32.totalorder %s204, %s220
      %p222 = scmp.eq.s32.totalorder %s23, 0
      %p223 = por %p221, %p222
      %p224 = scmp.le.s32.totalorder 1, %s17
      %p225 = scmp.lt.s32.totalorder %s17, 3
      %p226 = pnand %p224, %p225
      %p227 = pneg %p226
      // Predicated region
      $region9: #{_lambda_.4} parent=5 // pred_check
        _
      $region10: #{_lambda_.4} parent=5 // pred_check_branch
        %229 = sbr.rel (%p226) target = $region12
      $region11: #{_lambda_.4} parent=5 // pred_region
        %s230 = ssub.s32 %s17, 1
        // Predicated region
        $region13: #{_lambda_.4} parent=11 // pred_check
          %p231 = pneg %p64
        $region14: #{_lambda_.4} parent=11 // pred_check_branch
          %233 = sbr.rel (%p231) target = $region16
        $region15: #{_lambda_.4} parent=11 // pred_region
          %235 = vsyncadd [#allocation3], 0
          %s236 = sshll.u32 %s1, 4
          %s237 = int_to_ptr.hbm [resolvable:$true] %s236
          %s238 = sshll.u32 [#allocation2], 4
          %s239 = int_to_ptr.vmem [resolvable:$true] %s238
          %244 = dma.hbm_to_vmem [thread:$0]  %s237, 256, %s239, [#allocation3], 128, 128, 8
        $region16: #{_lambda_.4} parent=11 // pred_fallthru
          _
        // Predicated region
        $region17: #{_lambda_.4} parent=11 // pred_check
          %p245 = pneg %p85
        $region18: #{_lambda_.4} parent=11 // pred_check_branch
          %247 = sbr.rel (%p245) target = $region20
        $region19: #{_lambda_.4} parent=11 // pred_region
          %249 = vsyncadd [#allocation5], 0
          %s251 = sshll.u32 %s2, 4
          %s252 = int_to_ptr.hbm [resolvable:$true] %s251
          %s253 = sshll.u32 [#allocation4], 4
          %s254 = int_to_ptr.vmem [resolvable:$true] %s253
          %256 = dma.hbm_to_vmem [thread:$0]  %s252, 16, %s254, [#allocation5]
        $region20: #{_lambda_.4} parent=11 // pred_fallthru
          _
        // Predicated region
        $region21: #{_lambda_.4} parent=11 // pred_check
          %p257 = pneg %p106
        $region22: #{_lambda_.4} parent=11 // pred_check_branch
          %259 = sbr.rel (%p257) target = $region24
        $region23: #{_lambda_.4} parent=11 // pred_region
          _
        $region24: #{_lambda_.4} parent=11 // pred_fallthru
          _
        // Predicated region
        $region25: #{_lambda_.4} parent=11 // pred_check
          %p260 = pneg %p127
        $region26: #{_lambda_.4} parent=11 // pred_check_branch
          %262 = sbr.rel (%p260) target = $region28
        $region27: #{_lambda_.4} parent=11 // pred_region
          _
        $region28: #{_lambda_.4} parent=11 // pred_fallthru
          _
        // Predicated region
        $region29: #{_lambda_.4} parent=11 // pred_check
          %p263 = pneg %p148
        $region30: #{_lambda_.4} parent=11 // pred_check_branch
          %265 = sbr.rel (%p263) target = $region32
        $region31: #{_lambda_.4} parent=11 // pred_region
          %267 = vsyncadd [#allocation5], 0
          %s268 = sshll.u32 %s5, 4
          %s269 = int_to_ptr.hbm [resolvable:$true] %s268
          %s270 = sshll.u32 [#allocation6], 4
          %s271 = int_to_ptr.vmem [resolvable:$true] %s270
          %276 = dma.hbm_to_vmem [thread:$0]  %s269, 512, %s271, [#allocation5], 128, 128, 8
        $region32: #{_lambda_.4} parent=11 // pred_fallthru
          _
        // Predicated region
        $region33: #{_lambda_.4} parent=11 // pred_check
          %p277 = pneg %p169
        $region34: #{_lambda_.4} parent=11 // pred_check_branch
          %279 = sbr.rel (%p277) target = $region36
        $region35: #{_lambda_.4} parent=11 // pred_region
          %281 = vsyncadd [#allocation8], 0
          %s283 = sshll.u32 %s6, 4
          %s284 = int_to_ptr.hbm [resolvable:$true] %s283
          %s285 = sshll.u32 [#allocation7], 4
          %s286 = int_to_ptr.vmem [resolvable:$true] %s285
          %288 = dma.hbm_to_vmem [thread:$0]  %s284, 16, %s286, [#allocation8]
        $region36: #{_lambda_.4} parent=11 // pred_fallthru
          _
        // Predicated region
        $region37: #{_lambda_.4} parent=11 // pred_check
          %p289 = pneg %p190
        $region38: #{_lambda_.4} parent=11 // pred_check_branch
          %291 = sbr.rel (%p289) target = $region40
        $region39: #{_lambda_.4} parent=11 // pred_region
          %293 = vsyncadd [#allocation8], 0
          %s294 = sshll.u32 %s7, 4
          %s295 = int_to_ptr.hbm [resolvable:$true] %s294
          %s296 = sshll.u32 [#allocation9], 4
          %s297 = int_to_ptr.vmem [resolvable:$true] %s296
          %302 = dma.hbm_to_vmem [thread:$0]  %s295, 256, %s297, [#allocation8], 128, 128, 8
        $region40: #{_lambda_.4} parent=11 // pred_fallthru
          _
      $region12: #{_lambda_.4} parent=5 // pred_fallthru
        _
      %p303 = scmp.lt.s32.totalorder %s17, 2
      // Predicated region
      $region41: #{_lambda_.4} parent=5 // pred_check
        %p304 = pneg %p303
      $region42: #{_lambda_.4} parent=5 // pred_check_branch
        %306 = sbr.rel (%p304) target = $region44
      $region43: #{_lambda_.4} parent=5 // pred_region
        // Predicated region
        $region45: #{_lambda_.4} parent=43 // pred_check
          %p307 = pneg %p37
        $region46: #{_lambda_.4} parent=43 // pred_check_branch
          %309 = sbr.rel (%p307) target = $region48
        $region47: #{_lambda_.4} parent=43 // pred_region
          %p310 = scmp.lt.s32.totalorder %s17, 1
          %s311 = scalar_select %p310, %s17, 1
          %s312 = smul.addr %s311, 2
          %s313 = smul.addr %s312, 8
          %s314 = scalar_lea.vmem %s0, %s313
        $region48: #{_lambda_.4} parent=43 // pred_fallthru
          _
      $region44: #{_lambda_.4} parent=5 // pred_fallthru
        _
      %p315 = scmp.le.s32.totalorder 1, %s17
      %p316 = scmp.lt.s32.totalorder %s17, 3
      %p317 = pnand %p315, %p316
      %p318 = pneg %p317
      // Predicated region
      $region49: #{_lambda_.4} parent=5 // pred_check
        _
      $region50: #{_lambda_.4} parent=5 // pred_check_branch
        %320 = sbr.rel (%p317) target = $region52
      $region51: #{_lambda_.4} parent=5 // pred_region
        %s321 = ssub.s32 %s17, 1
        // Predicated region
        $region53: #{_lambda_.4} parent=51 // pred_check
          %p322 = pneg %p64
        $region54: #{_lambda_.4} parent=51 // pred_check_branch
          %324 = sbr.rel (%p322) target = $region56
        $region55: #{_lambda_.4} parent=51 // pred_region
          %326 = dma.done [#allocation3], 256
        $region56: #{_lambda_.4} parent=51 // pred_fallthru
          _
        // Predicated region
        $region57: #{_lambda_.4} parent=51 // pred_check
          %p327 = pneg %p85
        $region58: #{_lambda_.4} parent=51 // pred_check_branch
          %329 = sbr.rel (%p327) target = $region60
        $region59: #{_lambda_.4} parent=51 // pred_region
          %331 = dma.done [#allocation5], 16
        $region60: #{_lambda_.4} parent=51 // pred_fallthru
          _
        // Predicated region
        $region61: #{_lambda_.4} parent=51 // pred_check
          %p332 = pneg %p148
        $region62: #{_lambda_.4} parent=51 // pred_check_branch
          %334 = sbr.rel (%p332) target = $region64
        $region63: #{_lambda_.4} parent=51 // pred_region
          %336 = dma.done [#allocation5], 512
        $region64: #{_lambda_.4} parent=51 // pred_fallthru
          _
        // Predicated region
        $region65: #{_lambda_.4} parent=51 // pred_check
          %p337 = pneg %p169
        $region66: #{_lambda_.4} parent=51 // pred_check_branch
          %339 = sbr.rel (%p337) target = $region68
        $region67: #{_lambda_.4} parent=51 // pred_region
          %341 = dma.done [#allocation8], 16
        $region68: #{_lambda_.4} parent=51 // pred_fallthru
          _
        // Predicated region
        $region69: #{_lambda_.4} parent=51 // pred_check
          %p342 = pneg %p190
        $region70: #{_lambda_.4} parent=51 // pred_check_branch
          %344 = sbr.rel (%p342) target = $region72
        $region71: #{_lambda_.4} parent=51 // pred_region
          %346 = dma.done [#allocation8], 256
        $region72: #{_lambda_.4} parent=51 // pred_fallthru
          _
        %p347 = scmp.lt.s32.totalorder %s22, 1
        %s348 = scalar_select %p347, %s22, 1
        %s349 = smul.addr %s348, 2
        %s350 = smul.addr %s349, 8
        %s351 = scalar_lea.vmem %s0, %s350
        %p352 = pneg %p43
        %p353 = pneg %p40
        %p354 = pneg %p64
        %p355 = pneg %p61
        %p356 = pneg %p85
        %p357 = pneg %p82
        %p358 = pneg %p106
        %p359 = pneg %p103
        %p360 = pneg %p127
        %p361 = pneg %p124
        %p362 = pneg %p148
        %p363 = pneg %p145
        %p364 = pneg %p169
        %p365 = pneg %p166
        %p366 = pneg %p190
        %p367 = pneg %p187
        %p368 = pneg %p216
        %p369 = pneg %p213
        %p370 = scmp.lt.s32.totalorder %s22, 1
        %s371 = scalar_select %p370, %s22, 1
        %s372 = smul.addr %s371, 2
        %s373 = smul.addr %s372, 8
        %s374 = scalar_lea.vmem %s8, %s373
        %p375 = scmp.lt.s32.totalorder %s22, 1
        %s376 = scalar_select %p375, %s22, 1
        %s377 = smul.addr %s376, 2
        %s378 = smul.addr %s377, 8
        %s379 = scalar_lea.vmem %s0, %s378
        %p380 = scmp.lt.s32.totalorder %s22, 1
        %s381 = scalar_select %p380, %s22, 1
        %s382 = smul.addr %s381, 2
        %s383 = smul.addr %s382, 8
        %s384 = scalar_lea.vmem %s8, %s383
        %v385 = vld [vmem:[%s379] sm:$0xff]
        %v386 = vld [vmem:[%s379 + $0x8] sm:$0xff]
        %v387 = vld [vmem:[#allocation2] sm:$0xff]
        %v388 = vld [vmem:[#allocation2 + $0x8] sm:$0xff]
        %v389 = vld [vmem:[#allocation4] sm:$0x1]
        %v391 = vperm.slane %v389, 0
        %vm393 = vcmask 130048
        %v395 = vsel %vm393, %v385, 0
        %v398 = vsel %vm393, %v386, 0
        %400 = vmatpush.msra.mxu0 0.0
        %401 = vmatpush.msra.mxu0 0.0
        %402 = vmatpush.msra.mxu0 0.0
        %403 = vmatpush.msra.mxu0 0.0
        %404 = vmatpush.msra.mxu0 0.0
        %405 = vmatpush.msra.mxu0 0.0
        %406 = vmatpush.msra.mxu0 0.0
        %407 = vmatpush.msra.mxu0 0.0
        %408 = vmatpush.msra.mxu0 0.0
        %409 = vmatpush.msra.mxu0 0.0
        %410 = vmatpush.msra.mxu0 0.0
        %411 = vmatpush.msra.mxu0 0.0
        %412 = vmatpush.msra.mxu0 0.0
        %413 = vmatpush.msra.mxu0 0.0
        %414 = vmatpush.msra.mxu0 %v388
        %415 = vmatpush.msra.mxu0 %v387
        %416 = vmatmul.f32.gmra.mxu0 %v395
        %v417 = vpop.f32.mrf.mxu0
        %v418 = vadd.f32 %v391, %v417
        %419 = vmatmul.f32.gmra.mxu0 %v398
        %v420 = vpop.f32.mrf.mxu0
        %v421 = vadd.f32 %v391, %v420
        %422 = vdwg.mxu0
        %v423 = vld [vmem:[%s3] sm:$0xff]
        %v424 = vld [vmem:[%s3 + $0x8] sm:$0xff]
        %426 = vset.pattern.permute.xlu0 0
        %427 = vperm.xlu0 %426, %v423
        %v428 = vpop.permute.xlu0 %427
        %431 = vset.pattern.permute.xlu0 0
        %432 = vperm.xlu0 %431, %v424
        %v433 = vpop.permute.xlu0 %432
        %v435 = vmul.f32 %v418, %v428
        %v436 = vmul.f32 %v421, %v433
        %v437 = vld [vmem:[%s4] sm:$0xff]
        %v438 = vld [vmem:[%s4 + $0x8] sm:$0xff]
        %440 = vset.pattern.permute.xlu0 0
        %441 = vperm.xlu0 %440, %v437
        %v442 = vpop.permute.xlu0 %441
        %445 = vset.pattern.permute.xlu0 0
        %446 = vperm.xlu0 %445, %v438
        %v447 = vpop.permute.xlu0 %446
        %v449 = vadd.f32 %v435, %v442
        %v450 = vadd.f32 %v436, %v447
        %v451 = vld [vmem:[#allocation6] sm:$0xff]
        %v452 = vld [vmem:[#allocation6 + $0x8] sm:$0xff]
        %v453 = vld [vmem:[#allocation6 + $0x10] sm:$0xff]
        %v454 = vld [vmem:[#allocation6 + $0x18] sm:$0xff]
        %v455 = vld [vmem:[#allocation7] sm:$0x1]
        %v457 = vperm.slane %v455, 0
        %vm459 = vcmask 261120
        %v461 = vsel %vm459, %v449, 0
        %v464 = vsel %vm459, %v450, 0
        %466 = vmatpush.msra.mxu0 0.0
        %467 = vmatpush.msra.mxu0 0.0
        %468 = vmatpush.msra.mxu0 0.0
        %469 = vmatpush.msra.mxu0 0.0
        %470 = vmatpush.msra.mxu0 0.0
        %471 = vmatpush.msra.mxu0 0.0
        %472 = vmatpush.msra.mxu0 0.0
        %473 = vmatpush.msra.mxu0 0.0
        %474 = vmatpush.msra.mxu0 0.0
        %475 = vmatpush.msra.mxu0 0.0
        %476 = vmatpush.msra.mxu0 0.0
        %477 = vmatpush.msra.mxu0 0.0
        %478 = vmatpush.msra.mxu0 %v454
        %479 = vmatpush.msra.mxu0 %v453
        %480 = vmatpush.msra.mxu0 %v452
        %481 = vmatpush.msra.mxu0 %v451
        %482 = vmatmul.f32.gmra.mxu0 %v461
        %v483 = vpop.f32.mrf.mxu0
        %v484 = vadd.f32 %v457, %v483
        %485 = vmatmul.f32.gmra.mxu0 %v464
        %v486 = vpop.f32.mrf.mxu0
        %v487 = vadd.f32 %v457, %v486
        %488 = vdwg.mxu0
        %v489 = vmax.f32 %v484, 0.0
        %v490 = vmax.f32 %v487, 0.0
        %v491 = vld [vmem:[#allocation9] sm:$0xff]
        %v492 = vld [vmem:[#allocation9 + $0x8] sm:$0xff]
        %v493 = vadd.f32 %v489, %v491
        %v494 = vadd.f32 %v490, %v492
        %495 = vst.msk [vmem:[%s384] sm:$0xff] %vm459, %v493
        %496 = vst.msk [vmem:[%s384 + $0x8] sm:$0xff] %vm459, %v494
        %p497 = scmp.lt.s32.totalorder %s22, 1
        %s498 = scalar_select %p497, %s22, 1
        %s499 = smul.addr %s498, 2
        %s500 = smul.addr %s499, 8
        %s501 = scalar_lea.vmem %s8, %s500
        // Predicated region
        $region73: #{_lambda_.4} parent=51 // pred_check
          %p502 = pneg %p213
        $region74: #{_lambda_.4} parent=51 // pred_check_branch
          %504 = sbr.rel (%p502) target = $region76
        $region75: #{_lambda_.4} parent=51 // pred_region
          _
        $region76: #{_lambda_.4} parent=51 // pred_fallthru
          _
      $region52: #{_lambda_.4} parent=5 // pred_fallthru
        _
      %p505 = scmp.le.s32.totalorder 2, %s17
      // Predicated region
      $region77: #{_lambda_.4} parent=5 // pred_check
        %p506 = pneg %p505
      $region78: #{_lambda_.4} parent=5 // pred_check_branch
        %508 = sbr.rel (%p506) target = $region80
      $region79: #{_lambda_.4} parent=5 // pred_region
        %s509 = ssub.s32 %s17, 2
        // Predicated region
        $region81: #{_lambda_.4} parent=79 // pred_check
          %p510 = pneg %p219
        $region82: #{_lambda_.4} parent=79 // pred_check_branch
          %512 = sbr.rel (%p510) target = $region84
        $region83: #{_lambda_.4} parent=79 // pred_region
          %p513 = scmp.lt.s32.totalorder %s23, 1
          %s514 = scalar_select %p513, %s23, 1
          %s515 = smul.addr %s514, 2
          %s516 = smul.addr %s515, 8
          %s517 = scalar_lea.vmem %s8, %s516
        $region84: #{_lambda_.4} parent=79 // pred_fallthru
          _
      $region80: #{_lambda_.4} parent=5 // pred_fallthru
        _
    $region6: #{_lambda_.4} parent=1 // loop_footer
      %s21 = sadd.s32 1, %s17
    $region7: #{_lambda_.4} parent=1 // loop_footer_branch
      %16 = sbr.rel target = $region3
    $region8: #{_lambda_.4} parent=1 // loop_exit
      _
    %518 = vsyncpa [#allocation3], 1
    %s519 = scalar_lea.sflag [#allocation3], 1
    %520 = vsyncpa %s519, 1
    %521 = vsyncpa [#allocation5], 1
    %522 = vsyncpa [#allocation8], 1

// kernel: _lambda_.5
$region0: #{_lambda_.5}
  #allocation0 [shape = 'u32[]', space=smem, size = 0x4, offset = 0x4, fixed_abs, tag = 'smem constant byte address 0x4 - core index']
  #allocation1 [shape = 'u32[72,128]{1,0:T(1,128)}', space=vmem, size = 0x9000, scoped, tag = 'internal scratch']
  %s0 = inlined_call_operand.vmem [shape: f32[2,17,32], index: 0, kind: input, shape index: {}]
  %s1 = inlined_call_operand.vmem [shape: f32[8,32,4], index: 1, kind: input, shape index: {}]
  %s2 = inlined_call_operand.vmem [shape: f32[8,1,4], index: 2, kind: input, shape index: {}]
  %s3 = inlined_call_operand.vmem [shape: f32[8,32,4], index: 3, kind: input, shape index: {}]
  %s4 = inlined_call_operand.vmem [shape: f32[8,1,4], index: 4, kind: input, shape index: {}]
  %s5 = inlined_call_operand.vmem [shape: f32[8,32,4], index: 5, kind: input, shape index: {}]
  %s6 = inlined_call_operand.vmem [shape: f32[8,1,4], index: 6, kind: input, shape index: {}]
  %s7 = inlined_call_operand.hbm [shape: f32[8,4,32], index: 7, kind: input, shape index: {}]
  %s8 = inlined_call_operand.hbm [shape: f32[1,32], index: 8, kind: input, shape index: {}]
  %s9 = inlined_call_operand.hbm [shape: f32[1,32], index: 9, kind: input, shape index: {}]
  %s10 = inlined_call_operand.hbm [shape: f32[1,32], index: 10, kind: input, shape index: {}]
  %s11 = inlined_call_operand.hbm [shape: f32[32,128], index: 11, kind: input, shape index: {}]
  %s12 = inlined_call_operand.hbm [shape: f32[1,128], index: 12, kind: input, shape index: {}]
  %s13 = inlined_call_operand.vmem [shape: f32[128,32], index: 13, kind: input, shape index: {}]
  %s14 = inlined_call_operand.hbm [shape: f32[1,32], index: 14, kind: input, shape index: {}]
  %s15 = inlined_call_operand.hbm [shape: f32[1,32], index: 15, kind: input, shape index: {}]
  %s16 = inlined_call_operand.hbm [shape: f32[1,32], index: 16, kind: input, shape index: {}]
  %s17 = inlined_call_operand.vmem [shape: f32[2,17,32], index: 17, kind: output, shape index: {}]
  %s18 = sld [smem:[#allocation0]]
  $region137: #{_lambda_.5} parent=0
    _
  %s20 = ssub.s32 1, %s18
  %s21 = scalar_select 0, %s20, %s18
  $region1: #{_lambda_.5} parent=0
    #allocation2 [shape = 'u8[16384]{0}', space=vmem, size = 0x4000, scoped, tag = 'input window, operand 7, single buffered']
    #allocation3 [shape = 's32[2]{0}', space=sflag, size = 0x8, scoped, tag = 'scoped memory for _lambda_.5']
    #allocation4 [shape = 'u8[512]{0}', space=vmem, size = 0x400, scoped, tag = 'input window, operand 8, single buffered']
    #allocation5 [shape = 's32[1]{0}', space=sflag, size = 0x4, scoped, tag = 'scoped memory for _lambda_.5']
    #allocation6 [shape = 'u8[512]{0}', space=vmem, size = 0x400, scoped, tag = 'input window, operand 9, single buffered']
    #allocation7 [shape = 'u8[512]{0}', space=vmem, size = 0x400, scoped, tag = 'input window, operand 10, single buffered']
    #allocation8 [shape = 's32[1]{0}', space=sflag, size = 0x4, scoped, tag = 'scoped memory for _lambda_.5']
    #allocation9 [shape = 'u8[16384]{0}', space=vmem, size = 0x4000, scoped, tag = 'input window, operand 11, single buffered']
    #allocation10 [shape = 'u8[512]{0}', space=vmem, size = 0x400, scoped, tag = 'input window, operand 12, single buffered']
    #allocation11 [shape = 's32[1]{0}', space=sflag, size = 0x4, scoped, tag = 'scoped memory for _lambda_.5']
    #allocation12 [shape = 'u8[512]{0}', space=vmem, size = 0x400, scoped, tag = 'input window, operand 14, single buffered']
    #allocation13 [shape = 'u8[512]{0}', space=vmem, size = 0x400, scoped, tag = 'input window, operand 15, single buffered']
    #allocation14 [shape = 's32[1]{0}', space=sflag, size = 0x4, scoped, tag = 'scoped memory for _lambda_.5']
    #allocation15 [shape = 'u8[512]{0}', space=vmem, size = 0x400, scoped, tag = 'input window, operand 16, single buffered']
    %22 = vsyncpa [#allocation3], 0
    %23 = vsyncpa [#allocation5], 0
    %24 = vsyncpa [#allocation8], 0
    %25 = vsyncpa [#allocation11], 0
    %26 = vsyncpa [#allocation14], 0
    loop: start=0, step=1, limit=4
    $region2: #{_lambda_.5} parent=1 // loop_pre_header
      _
    $region3: #{_lambda_.5} parent=1 // loop_header
      %s28 = sphi 0, %s32
      %p29 = scmp.ge.s32.totalorder %s28, 4
      %s38 = sphi 0, %s40
      %s41 = sphi 0, %s38
      %s42 = sphi 0, %s41
      %s58 = sphi 0, %s42
      %s62 = sphi 0, %s62
      %s64 = sphi 0, %s62
      %s65 = sphi 0, %s64
      %s79 = sphi 0, %s65
      %s83 = sphi 0, %s83
      %s85 = sphi 0, %s83
      %s86 = sphi 0, %s85
      %s100 = sphi 0, %s86
      %s104 = sphi 0, %s104
      %s106 = sphi 0, %s104
      %s107 = sphi 0, %s106
      %s121 = sphi 0, %s107
      %s125 = sphi 0, %s125
      %s127 = sphi 0, %s125
      %s128 = sphi 0, %s127
      %s142 = sphi 0, %s128
      %s146 = sphi 0, %s146
      %s148 = sphi 0, %s146
      %s149 = sphi 0, %s148
      %s163 = sphi 0, %s149
      %s167 = sphi 0, %s167
      %s169 = sphi 0, %s167
      %s170 = sphi 0, %s169
      %s184 = sphi 0, %s170
      %s188 = sphi 0, %s188
      %s190 = sphi 0, %s188
      %s191 = sphi 0, %s190
      %s205 = sphi 0, %s191
      %s209 = sphi 0, %s209
      %s211 = sphi 0, %s209
      %s212 = sphi 0, %s211
      %s226 = sphi 0, %s212
      %s230 = sphi 0, %s230
      %s232 = sphi 0, %s230
      %s233 = sphi 0, %s232
      %s247 = sphi 0, %s233
      %s251 = sphi 0, %s251
      %s253 = sphi 0, %s251
      %s254 = sphi 0, %s253
      %s268 = sphi 0, %s254
      %s272 = sphi 0, %s272
      %s274 = sphi 0, %s272
      %s275 = sphi 0, %s274
      %s289 = sphi 0, %s275
      %s293 = sphi 0, %s293
      %s295 = sphi 0, %s293
      %s296 = sphi 0, %s295
      %s310 = sphi 0, %s296
      %s314 = sphi 0, %s314
      %s316 = sphi 0, %s314
      %s317 = sphi 0, %s316
      %s331 = sphi 0, %s317
      %s335 = sphi 0, %s335
      %s337 = sphi 0, %s335
      %s338 = sphi 0, %s337
      %s352 = sphi 0, %s338
      %s356 = sphi 0, %s356
      %s358 = sphi 0, %s356
      %s359 = sphi 0, %s358
      %s373 = sphi 0, %s359
      %s377 = sphi 0, %s377
      %s379 = sphi 0, %s377
      %s380 = sphi 0, %s379
      %s394 = sphi 0, %s380
      %s400 = sphi 0, %s402
      %s403 = sphi 0, %s400
      %s404 = sphi 0, %s403
      %s420 = sphi 0, %s404
    $region4: #{_lambda_.5} parent=1 // loop_header_branch
      %31 = sbr.rel (%p29) target = $region8
    $region5: #{_lambda_.5} parent=1 // loop_body
      %s33 = ssub.s32 %s28, 1
      %s34 = ssub.s32 %s28, 2
      %s35 = sadd.s32 %s28, 1
      %s36 = ssub.s32 %s28, %s35
      %p37 = scmp.eq.s32.totalorder %s36, 0
      %s39 = sadd.s32 %s38, 1
      %s40 = scalar_select %p37, %s38, %s39
      %p43 = pneg %p37
      %p44 = scmp.eq.s32.totalorder %s28, 1
      %p45 = por %p43, %p44
      %p46 = scmp.ne.s32.totalorder %s38, %s41
      %p47 = scmp.eq.s32.totalorder %s28, 0
      %p48 = por %p46, %p47
      %p49 = scmp.ne.s32.totalorder %s38, %s41
      %p50 = scmp.eq.s32.totalorder %s33, 1
      %p51 = por %p49, %p50
      %p52 = scmp.ne.s32.totalorder %s41, %s42
      %p53 = scmp.eq.s32.totalorder %s33, 0
      %p54 = por %p52, %p53
      %p55 = scmp.ne.s32.totalorder %s41, %s42
      %p56 = scmp.eq.s32.totalorder %s34, 1
      %p57 = por %p55, %p56
      %p59 = scmp.ne.s32.totalorder %s42, %s58
      %p60 = scmp.eq.s32.totalorder %s34, 0
      %p61 = por %p59, %p60
      %s63 = sadd.s32 %s62, 1
      %p66 = scmp.eq.s32.totalorder %s28, 1
      %p67 = scmp.ne.s32.totalorder %s62, %s64
      %p68 = scmp.eq.s32.totalorder %s28, 0
      %p69 = por %p67, %p68
      %p70 = scmp.ne.s32.totalorder %s62, %s64
      %p71 = scmp.eq.s32.totalorder %s33, 1
      %p72 = por %p70, %p71
      %p73 = scmp.ne.s32.totalorder %s64, %s65
      %p74 = scmp.eq.s32.totalorder %s33, 0
      %p75 = por %p73, %p74
      %p76 = scmp.ne.s32.totalorder %s64, %s65
      %p77 = scmp.eq.s32.totalorder %s34, 1
      %p78 = por %p76, %p77
      %p80 = scmp.ne.s32.totalorder %s65, %s79
      %p81 = scmp.eq.s32.totalorder %s34, 0
      %p82 = por %p80, %p81
      %s84 = sadd.s32 %s83, 1
      %p87 = scmp.eq.s32.totalorder %s28, 1
      %p88 = scmp.ne.s32.totalorder %s83, %s85
      %p89 = scmp.eq.s32.totalorder %s28, 0
      %p90 = por %p88, %p89
      %p91 = scmp.ne.s32.totalorder %s83, %s85
      %p92 = scmp.eq.s32.totalorder %s33, 1
      %p93 = por %p91, %p92
      %p94 = scmp.ne.s32.totalorder %s85, %s86
      %p95 = scmp.eq.s32.totalorder %s33, 0
      %p96 = por %p94, %p95
      %p97 = scmp.ne.s32.totalorder %s85, %s86
      %p98 = scmp.eq.s32.totalorder %s34, 1
      %p99 = por %p97, %p98
      %p101 = scmp.ne.s32.totalorder %s86, %s100
      %p102 = scmp.eq.s32.totalorder %s34, 0
      %p103 = por %p101, %p102
      %s105 = sadd.s32 %s104, 1
      %p108 = scmp.eq.s32.totalorder %s28, 1
      %p109 = scmp.ne.s32.totalorder %s104, %s106
      %p110 = scmp.eq.s32.totalorder %s28, 0
      %p111 = por %p109, %p110
      %p112 = scmp.ne.s32.totalorder %s104, %s106
      %p113 = scmp.eq.s32.totalorder %s33, 1
      %p114 = por %p112, %p113
      %p115 = scmp.ne.s32.totalorder %s106, %s107
      %p116 = scmp.eq.s32.totalorder %s33, 0
      %p117 = por %p115, %p116
      %p118 = scmp.ne.s32.totalorder %s106, %s107
      %p119 = scmp.eq.s32.totalorder %s34, 1
      %p120 = por %p118, %p119
      %p122 = scmp.ne.s32.totalorder %s107, %s121
      %p123 = scmp.eq.s32.totalorder %s34, 0
      %p124 = por %p122, %p123
      %s126 = sadd.s32 %s125, 1
      %p129 = scmp.eq.s32.totalorder %s28, 1
      %p130 = scmp.ne.s32.totalorder %s125, %s127
      %p131 = scmp.eq.s32.totalorder %s28, 0
      %p132 = por %p130, %p131
      %p133 = scmp.ne.s32.totalorder %s125, %s127
      %p134 = scmp.eq.s32.totalorder %s33, 1
      %p135 = por %p133, %p134
      %p136 = scmp.ne.s32.totalorder %s127, %s128
      %p137 = scmp.eq.s32.totalorder %s33, 0
      %p138 = por %p136, %p137
      %p139 = scmp.ne.s32.totalorder %s127, %s128
      %p140 = scmp.eq.s32.totalorder %s34, 1
      %p141 = por %p139, %p140
      %p143 = scmp.ne.s32.totalorder %s128, %s142
      %p144 = scmp.eq.s32.totalorder %s34, 0
      %p145 = por %p143, %p144
      %s147 = sadd.s32 %s146, 1
      %p150 = scmp.eq.s32.totalorder %s28, 1
      %p151 = scmp.ne.s32.totalorder %s146, %s148
      %p152 = scmp.eq.s32.totalorder %s28, 0
      %p153 = por %p151, %p152
      %p154 = scmp.ne.s32.totalorder %s146, %s148
      %p155 = scmp.eq.s32.totalorder %s33, 1
      %p156 = por %p154, %p155
      %p157 = scmp.ne.s32.totalorder %s148, %s149
      %p158 = scmp.eq.s32.totalorder %s33, 0
      %p159 = por %p157, %p158
      %p160 = scmp.ne.s32.totalorder %s148, %s149
      %p161 = scmp.eq.s32.totalorder %s34, 1
      %p162 = por %p160, %p161
      %p164 = scmp.ne.s32.totalorder %s149, %s163
      %p165 = scmp.eq.s32.totalorder %s34, 0
      %p166 = por %p164, %p165
      %s168 = sadd.s32 %s167, 1
      %p171 = scmp.eq.s32.totalorder %s28, 1
      %p172 = scmp.ne.s32.totalorder %s167, %s169
      %p173 = scmp.eq.s32.totalorder %s28, 0
      %p174 = por %p172, %p173
      %p175 = scmp.ne.s32.totalorder %s167, %s169
      %p176 = scmp.eq.s32.totalorder %s33, 1
      %p177 = por %p175, %p176
      %p178 = scmp.ne.s32.totalorder %s169, %s170
      %p179 = scmp.eq.s32.totalorder %s33, 0
      %p180 = por %p178, %p179
      %p181 = scmp.ne.s32.totalorder %s169, %s170
      %p182 = scmp.eq.s32.totalorder %s34, 1
      %p183 = por %p181, %p182
      %p185 = scmp.ne.s32.totalorder %s170, %s184
      %p186 = scmp.eq.s32.totalorder %s34, 0
      %p187 = por %p185, %p186
      %s189 = sadd.s32 %s188, 1
      %p192 = scmp.eq.s32.totalorder %s28, 1
      %p193 = scmp.ne.s32.totalorder %s188, %s190
      %p194 = scmp.eq.s32.totalorder %s28, 0
      %p195 = por %p193, %p194
      %p196 = scmp.ne.s32.totalorder %s188, %s190
      %p197 = scmp.eq.s32.totalorder %s33, 1
      %p198 = por %p196, %p197
      %p199 = scmp.ne.s32.totalorder %s190, %s191
      %p200 = scmp.eq.s32.totalorder %s33, 0
      %p201 = por %p199, %p200
      %p202 = scmp.ne.s32.totalorder %s190, %s191
      %p203 = scmp.eq.s32.totalorder %s34, 1
      %p204 = por %p202, %p203
      %p206 = scmp.ne.s32.totalorder %s191, %s205
      %p207 = scmp.eq.s32.totalorder %s34, 0
      %p208 = por %p206, %p207
      %s210 = sadd.s32 %s209, 1
      %p213 = scmp.eq.s32.totalorder %s28, 1
      %p214 = scmp.ne.s32.totalorder %s209, %s211
      %p215 = scmp.eq.s32.totalorder %s28, 0
      %p216 = por %p214, %p215
      %p217 = scmp.ne.s32.totalorder %s209, %s211
      %p218 = scmp.eq.s32.totalorder %s33, 1
      %p219 = por %p217, %p218
      %p220 = scmp.ne.s32.totalorder %s211, %s212
      %p221 = scmp.eq.s32.totalorder %s33, 0
      %p222 = por %p220, %p221
      %p223 = scmp.ne.s32.totalorder %s211, %s212
      %p224 = scmp.eq.s32.totalorder %s34, 1
      %p225 = por %p223, %p224
      %p227 = scmp.ne.s32.totalorder %s212, %s226
      %p228 = scmp.eq.s32.totalorder %s34, 0
      %p229 = por %p227, %p228
      %s231 = sadd.s32 %s230, 1
      %p234 = scmp.eq.s32.totalorder %s28, 1
      %p235 = scmp.ne.s32.totalorder %s230, %s232
      %p236 = scmp.eq.s32.totalorder %s28, 0
      %p237 = por %p235, %p236
      %p238 = scmp.ne.s32.totalorder %s230, %s232
      %p239 = scmp.eq.s32.totalorder %s33, 1
      %p240 = por %p238, %p239
      %p241 = scmp.ne.s32.totalorder %s232, %s233
      %p242 = scmp.eq.s32.totalorder %s33, 0
      %p243 = por %p241, %p242
      %p244 = scmp.ne.s32.totalorder %s232, %s233
      %p245 = scmp.eq.s32.totalorder %s34, 1
      %p246 = por %p244, %p245
      %p248 = scmp.ne.s32.totalorder %s233, %s247
      %p249 = scmp.eq.s32.totalorder %s34, 0
      %p250 = por %p248, %p249
      %s252 = sadd.s32 %s251, 1
      %p255 = scmp.eq.s32.totalorder %s28, 1
      %p256 = scmp.ne.s32.totalorder %s251, %s253
      %p257 = scmp.eq.s32.totalorder %s28, 0
      %p258 = por %p256, %p257
      %p259 = scmp.ne.s32.totalorder %s251, %s253
      %p260 = scmp.eq.s32.totalorder %s33, 1
      %p261 = por %p259, %p260
      %p262 = scmp.ne.s32.totalorder %s253, %s254
      %p263 = scmp.eq.s32.totalorder %s33, 0
      %p264 = por %p262, %p263
      %p265 = scmp.ne.s32.totalorder %s253, %s254
      %p266 = scmp.eq.s32.totalorder %s34, 1
      %p267 = por %p265, %p266
      %p269 = scmp.ne.s32.totalorder %s254, %s268
      %p270 = scmp.eq.s32.totalorder %s34, 0
      %p271 = por %p269, %p270
      %s273 = sadd.s32 %s272, 1
      %p276 = scmp.eq.s32.totalorder %s28, 1
      %p277 = scmp.ne.s32.totalorder %s272, %s274
      %p278 = scmp.eq.s32.totalorder %s28, 0
      %p279 = por %p277, %p278
      %p280 = scmp.ne.s32.totalorder %s272, %s274
      %p281 = scmp.eq.s32.totalorder %s33, 1
      %p282 = por %p280, %p281
      %p283 = scmp.ne.s32.totalorder %s274, %s275
      %p284 = scmp.eq.s32.totalorder %s33, 0
      %p285 = por %p283, %p284
      %p286 = scmp.ne.s32.totalorder %s274, %s275
      %p287 = scmp.eq.s32.totalorder %s34, 1
      %p288 = por %p286, %p287
      %p290 = scmp.ne.s32.totalorder %s275, %s289
      %p291 = scmp.eq.s32.totalorder %s34, 0
      %p292 = por %p290, %p291
      %s294 = sadd.s32 %s293, 1
      %p297 = scmp.eq.s32.totalorder %s28, 1
      %p298 = scmp.ne.s32.totalorder %s293, %s295
      %p299 = scmp.eq.s32.totalorder %s28, 0
      %p300 = por %p298, %p299
      %p301 = scmp.ne.s32.totalorder %s293, %s295
      %p302 = scmp.eq.s32.totalorder %s33, 1
      %p303 = por %p301, %p302
      %p304 = scmp.ne.s32.totalorder %s295, %s296
      %p305 = scmp.eq.s32.totalorder %s33, 0
      %p306 = por %p304, %p305
      %p307 = scmp.ne.s32.totalorder %s295, %s296
      %p308 = scmp.eq.s32.totalorder %s34, 1
      %p309 = por %p307, %p308
      %p311 = scmp.ne.s32.totalorder %s296, %s310
      %p312 = scmp.eq.s32.totalorder %s34, 0
      %p313 = por %p311, %p312
      %s315 = sadd.s32 %s314, 1
      %p318 = scmp.eq.s32.totalorder %s28, 1
      %p319 = scmp.ne.s32.totalorder %s314, %s316
      %p320 = scmp.eq.s32.totalorder %s28, 0
      %p321 = por %p319, %p320
      %p322 = scmp.ne.s32.totalorder %s314, %s316
      %p323 = scmp.eq.s32.totalorder %s33, 1
      %p324 = por %p322, %p323
      %p325 = scmp.ne.s32.totalorder %s316, %s317
      %p326 = scmp.eq.s32.totalorder %s33, 0
      %p327 = por %p325, %p326
      %p328 = scmp.ne.s32.totalorder %s316, %s317
      %p329 = scmp.eq.s32.totalorder %s34, 1
      %p330 = por %p328, %p329
      %p332 = scmp.ne.s32.totalorder %s317, %s331
      %p333 = scmp.eq.s32.totalorder %s34, 0
      %p334 = por %p332, %p333
      %s336 = sadd.s32 %s335, 1
      %p339 = scmp.eq.s32.totalorder %s28, 1
      %p340 = scmp.ne.s32.totalorder %s335, %s337
      %p341 = scmp.eq.s32.totalorder %s28, 0
      %p342 = por %p340, %p341
      %p343 = scmp.ne.s32.totalorder %s335, %s337
      %p344 = scmp.eq.s32.totalorder %s33, 1
      %p345 = por %p343, %p344
      %p346 = scmp.ne.s32.totalorder %s337, %s338
      %p347 = scmp.eq.s32.totalorder %s33, 0
      %p348 = por %p346, %p347
      %p349 = scmp.ne.s32.totalorder %s337, %s338
      %p350 = scmp.eq.s32.totalorder %s34, 1
      %p351 = por %p349, %p350
      %p353 = scmp.ne.s32.totalorder %s338, %s352
      %p354 = scmp.eq.s32.totalorder %s34, 0
      %p355 = por %p353, %p354
      %s357 = sadd.s32 %s356, 1
      %p360 = scmp.eq.s32.totalorder %s28, 1
      %p361 = scmp.ne.s32.totalorder %s356, %s358
      %p362 = scmp.eq.s32.totalorder %s28, 0
      %p363 = por %p361, %p362
      %p364 = scmp.ne.s32.totalorder %s356, %s358
      %p365 = scmp.eq.s32.totalorder %s33, 1
      %p366 = por %p364, %p365
      %p367 = scmp.ne.s32.totalorder %s358, %s359
      %p368 = scmp.eq.s32.totalorder %s33, 0
      %p369 = por %p367, %p368
      %p370 = scmp.ne.s32.totalorder %s358, %s359
      %p371 = scmp.eq.s32.totalorder %s34, 1
      %p372 = por %p370, %p371
      %p374 = scmp.ne.s32.totalorder %s359, %s373
      %p375 = scmp.eq.s32.totalorder %s34, 0
      %p376 = por %p374, %p375
      %s378 = sadd.s32 %s377, 1
      %p381 = scmp.eq.s32.totalorder %s28, 1
      %p382 = scmp.ne.s32.totalorder %s377, %s379
      %p383 = scmp.eq.s32.totalorder %s28, 0
      %p384 = por %p382, %p383
      %p385 = scmp.ne.s32.totalorder %s377, %s379
      %p386 = scmp.eq.s32.totalorder %s33, 1
      %p387 = por %p385, %p386
      %p388 = scmp.ne.s32.totalorder %s379, %s380
      %p389 = scmp.eq.s32.totalorder %s33, 0
      %p390 = por %p388, %p389
      %p391 = scmp.ne.s32.totalorder %s379, %s380
      %p392 = scmp.eq.s32.totalorder %s34, 1
      %p393 = por %p391, %p392
      %p395 = scmp.ne.s32.totalorder %s380, %s394
      %p396 = scmp.eq.s32.totalorder %s34, 0
      %p397 = por %p395, %p396
      %s398 = ssub.s32 %s28, %s35
      %p399 = scmp.eq.s32.totalorder %s398, 0
      %s401 = sadd.s32 %s400, 1
      %s402 = scalar_select %p399, %s400, %s401
      %p405 = pneg %p399
      %p406 = scmp.eq.s32.totalorder %s28, 1
      %p407 = por %p405, %p406
      %p408 = scmp.ne.s32.totalorder %s400, %s403
      %p409 = scmp.eq.s32.totalorder %s28, 0
      %p410 = por %p408, %p409
      %p411 = scmp.ne.s32.totalorder %s400, %s403
      %p412 = scmp.eq.s32.totalorder %s33, 1
      %p413 = por %p411, %p412
      %p414 = scmp.ne.s32.totalorder %s403, %s404
      %p415 = scmp.eq.s32.totalorder %s33, 0
      %p416 = por %p414, %p415
      %p417 = scmp.ne.s32.totalorder %s403, %s404
      %p418 = scmp.eq.s32.totalorder %s34, 1
      %p419 = por %p417, %p418
      %p421 = scmp.ne.s32.totalorder %s404, %s420
      %p422 = scmp.eq.s32.totalorder %s34, 0
      %p423 = por %p421, %p422
      %p424 = scmp.le.s32.totalorder 1, %s28
      %p425 = scmp.lt.s32.totalorder %s28, 3
      %p426 = pnand %p424, %p425
      %p427 = pneg %p426
      // Predicated region
      $region9: #{_lambda_.5} parent=5 // pred_check
        _
      $region10: #{_lambda_.5} parent=5 // pred_check_branch
        %429 = sbr.rel (%p426) target = $region12
      $region11: #{_lambda_.5} parent=5 // pred_region
        %s430 = ssub.s32 %s28, 1
        // Predicated region
        $region13: #{_lambda_.5} parent=11 // pred_check
          %p431 = pneg %p75
        $region14: #{_lambda_.5} parent=11 // pred_check_branch
          %433 = sbr.rel (%p431) target = $region16
        $region15: #{_lambda_.5} parent=11 // pred_region
          _
        $region16: #{_lambda_.5} parent=11 // pred_fallthru
          _
        // Predicated region
        $region17: #{_lambda_.5} parent=11 // pred_check
          %p434 = pneg %p96
        $region18: #{_lambda_.5} parent=11 // pred_check_branch
          %436 = sbr.rel (%p434) target = $region20
        $region19: #{_lambda_.5} parent=11 // pred_region
          _
        $region20: #{_lambda_.5} parent=11 // pred_fallthru
          _
        // Predicated region
        $region21: #{_lambda_.5} parent=11 // pred_check
          %p437 = pneg %p117
        $region22: #{_lambda_.5} parent=11 // pred_check_branch
          %439 = sbr.rel (%p437) target = $region24
        $region23: #{_lambda_.5} parent=11 // pred_region
          _
        $region24: #{_lambda_.5} parent=11 // pred_fallthru
          _
        // Predicated region
        $region25: #{_lambda_.5} parent=11 // pred_check
          %p440 = pneg %p138
        $region26: #{_lambda_.5} parent=11 // pred_check_branch
          %442 = sbr.rel (%p440) target = $region28
        $region27: #{_lambda_.5} parent=11 // pred_region
          _
        $region28: #{_lambda_.5} parent=11 // pred_fallthru
          _
        // Predicated region
        $region29: #{_lambda_.5} parent=11 // pred_check
          %p443 = pneg %p159
        $region30: #{_lambda_.5} parent=11 // pred_check_branch
          %445 = sbr.rel (%p443) target = $region32
        $region31: #{_lambda_.5} parent=11 // pred_region
          _
        $region32: #{_lambda_.5} parent=11 // pred_fallthru
          _
        // Predicated region
        $region33: #{_lambda_.5} parent=11 // pred_check
          %p446 = pneg %p180
        $region34: #{_lambda_.5} parent=11 // pred_check_branch
          %448 = sbr.rel (%p446) target = $region36
        $region35: #{_lambda_.5} parent=11 // pred_region
          _
        $region36: #{_lambda_.5} parent=11 // pred_fallthru
          _
        // Predicated region
        $region37: #{_lambda_.5} parent=11 // pred_check
          %p449 = pneg %p201
        $region38: #{_lambda_.5} parent=11 // pred_check_branch
          %451 = sbr.rel (%p449) target = $region40
        $region39: #{_lambda_.5} parent=11 // pred_region
          %453 = vsyncadd [#allocation3], 0
          %s454 = sshll.u32 %s7, 4
          %s455 = int_to_ptr.hbm [resolvable:$true] %s454
          %s456 = sshll.u32 [#allocation2], 4
          %s457 = int_to_ptr.vmem [resolvable:$true] %s456
          %462 = dma.hbm_to_vmem [thread:$0]  %s455, 512, %s457, [#allocation3], 64, 64, 4
        $region40: #{_lambda_.5} parent=11 // pred_fallthru
          _
        // Predicated region
        $region41: #{_lambda_.5} parent=11 // pred_check
          %p463 = pneg %p222
        $region42: #{_lambda_.5} parent=11 // pred_check_branch
          %465 = sbr.rel (%p463) target = $region44
        $region43: #{_lambda_.5} parent=11 // pred_region
          %467 = vsyncadd [#allocation5], 0
          %s469 = sshll.u32 %s8, 4
          %s470 = int_to_ptr.hbm [resolvable:$true] %s469
          %s471 = sshll.u32 [#allocation4], 4
          %s472 = int_to_ptr.vmem [resolvable:$true] %s471
          %474 = dma.hbm_to_vmem [thread:$0]  %s470, 16, %s472, [#allocation5]
        $region44: #{_lambda_.5} parent=11 // pred_fallthru
          _
        // Predicated region
        $region45: #{_lambda_.5} parent=11 // pred_check
          %p475 = pneg %p243
        $region46: #{_lambda_.5} parent=11 // pred_check_branch
          %477 = sbr.rel (%p475) target = $region48
        $region47: #{_lambda_.5} parent=11 // pred_region
          %479 = vsyncadd [#allocation5], 0
          %s481 = sshll.u32 %s9, 4
          %s482 = int_to_ptr.hbm [resolvable:$true] %s481
          %s483 = sshll.u32 [#allocation6], 4
          %s484 = int_to_ptr.vmem [resolvable:$true] %s483
          %486 = dma.hbm_to_vmem [thread:$0]  %s482, 16, %s484, [#allocation5]
        $region48: #{_lambda_.5} parent=11 // pred_fallthru
          _
        // Predicated region
        $region49: #{_lambda_.5} parent=11 // pred_check
          %p487 = pneg %p264
        $region50: #{_lambda_.5} parent=11 // pred_check_branch
          %489 = sbr.rel (%p487) target = $region52
        $region51: #{_lambda_.5} parent=11 // pred_region
          %491 = vsyncadd [#allocation8], 0
          %s493 = sshll.u32 %s10, 4
          %s494 = int_to_ptr.hbm [resolvable:$true] %s493
          %s495 = sshll.u32 [#allocation7], 4
          %s496 = int_to_ptr.vmem [resolvable:$true] %s495
          %498 = dma.hbm_to_vmem [thread:$0]  %s494, 16, %s496, [#allocation8]
        $region52: #{_lambda_.5} parent=11 // pred_fallthru
          _
        // Predicated region
        $region53: #{_lambda_.5} parent=11 // pred_check
          %p499 = pneg %p285
        $region54: #{_lambda_.5} parent=11 // pred_check_branch
          %501 = sbr.rel (%p499) target = $region56
        $region55: #{_lambda_.5} parent=11 // pred_region
          %503 = vsyncadd [#allocation8], 0
          %s504 = sshll.u32 %s11, 4
          %s505 = int_to_ptr.hbm [resolvable:$true] %s504
          %s506 = sshll.u32 [#allocation9], 4
          %s507 = int_to_ptr.vmem [resolvable:$true] %s506
          %512 = dma.hbm_to_vmem [thread:$0]  %s505, 512, %s507, [#allocation8], 128, 128, 8
        $region56: #{_lambda_.5} parent=11 // pred_fallthru
          _
        // Predicated region
        $region57: #{_lambda_.5} parent=11 // pred_check
          %p513 = pneg %p306
        $region58: #{_lambda_.5} parent=11 // pred_check_branch
          %515 = sbr.rel (%p513) target = $region60
        $region59: #{_lambda_.5} parent=11 // pred_region
          %517 = vsyncadd [#allocation11], 0
          %s519 = sshll.u32 %s12, 4
          %s520 = int_to_ptr.hbm [resolvable:$true] %s519
          %s521 = sshll.u32 [#allocation10], 4
          %s522 = int_to_ptr.vmem [resolvable:$true] %s521
          %524 = dma.hbm_to_vmem [thread:$0]  %s520, 16, %s522, [#allocation11]
        $region60: #{_lambda_.5} parent=11 // pred_fallthru
          _
        // Predicated region
        $region61: #{_lambda_.5} parent=11 // pred_check
          %p525 = pneg %p327
        $region62: #{_lambda_.5} parent=11 // pred_check_branch
          %527 = sbr.rel (%p525) target = $region64
        $region63: #{_lambda_.5} parent=11 // pred_region
          _
        $region64: #{_lambda_.5} parent=11 // pred_fallthru
          _
        // Predicated region
        $region65: #{_lambda_.5} parent=11 // pred_check
          %p528 = pneg %p348
        $region66: #{_lambda_.5} parent=11 // pred_check_branch
          %530 = sbr.rel (%p528) target = $region68
        $region67: #{_lambda_.5} parent=11 // pred_region
          %532 = vsyncadd [#allocation11], 0
          %s534 = sshll.u32 %s14, 4
          %s535 = int_to_ptr.hbm [resolvable:$true] %s534
          %s536 = sshll.u32 [#allocation12], 4
          %s537 = int_to_ptr.vmem [resolvable:$true] %s536
          %539 = dma.hbm_to_vmem [thread:$0]  %s535, 16, %s537, [#allocation11]
        $region68: #{_lambda_.5} parent=11 // pred_fallthru
          _
        // Predicated region
        $region69: #{_lambda_.5} parent=11 // pred_check
          %p540 = pneg %p369
        $region70: #{_lambda_.5} parent=11 // pred_check_branch
          %542 = sbr.rel (%p540) target = $region72
        $region71: #{_lambda_.5} parent=11 // pred_region
          %544 = vsyncadd [#allocation14], 0
          %s546 = sshll.u32 %s15, 4
          %s547 = int_to_ptr.hbm [resolvable:$true] %s546
          %s548 = sshll.u32 [#allocation13], 4
          %s549 = int_to_ptr.vmem [resolvable:$true] %s548
          %551 = dma.hbm_to_vmem [thread:$0]  %s547, 16, %s549, [#allocation14]
        $region72: #{_lambda_.5} parent=11 // pred_fallthru
          _
        // Predicated region
        $region73: #{_lambda_.5} parent=11 // pred_check
          %p552 = pneg %p390
        $region74: #{_lambda_.5} parent=11 // pred_check_branch
          %554 = sbr.rel (%p552) target = $region76
        $region75: #{_lambda_.5} parent=11 // pred_region
          %556 = vsyncadd [#allocation14], 0
          %s558 = sshll.u32 %s16, 4
          %s559 = int_to_ptr.hbm [resolvable:$true] %s558
          %s560 = sshll.u32 [#allocation15], 4
          %s561 = int_to_ptr.vmem [resolvable:$true] %s560
          %563 = dma.hbm_to_vmem [thread:$0]  %s559, 16, %s561, [#allocation14]
        $region76: #{_lambda_.5} parent=11 // pred_fallthru
          _
      $region12: #{_lambda_.5} parent=5 // pred_fallthru
        _
      %p564 = scmp.lt.s32.totalorder %s28, 2
      // Predicated region
      $region77: #{_lambda_.5} parent=5 // pred_check
        %p565 = pneg %p564
      $region78: #{_lambda_.5} parent=5 // pred_check_branch
        %567 = sbr.rel (%p565) target = $region80
      $region79: #{_lambda_.5} parent=5 // pred_region
        // Predicated region
        $region81: #{_lambda_.5} parent=79 // pred_check
          %p568 = pneg %p48
        $region82: #{_lambda_.5} parent=79 // pred_check_branch
          %570 = sbr.rel (%p568) target = $region84
        $region83: #{_lambda_.5} parent=79 // pred_region
          %p571 = scmp.lt.s32.totalorder %s28, 1
          %s572 = scalar_select %p571, %s28, 1
          %s573 = smul.addr %s572, 3
          %s574 = smul.addr %s573, 8
          %s575 = scalar_lea.vmem %s0, %s574
        $region84: #{_lambda_.5} parent=79 // pred_fallthru
          _
      $region80: #{_lambda_.5} parent=5 // pred_fallthru
        _
      %p576 = scmp.le.s32.totalorder 1, %s28
      %p577 = scmp.lt.s32.totalorder %s28, 3
      %p578 = pnand %p576, %p577
      %p579 = pneg %p578
      // Predicated region
      $region85: #{_lambda_.5} parent=5 // pred_check
        _
      $region86: #{_lambda_.5} parent=5 // pred_check_branch
        %581 = sbr.rel (%p578) target = $region88
      $region87: #{_lambda_.5} parent=5 // pred_region
        %s582 = ssub.s32 %s28, 1
        // Predicated region
        $region89: #{_lambda_.5} parent=87 // pred_check
          %p583 = pneg %p201
        $region90: #{_lambda_.5} parent=87 // pred_check_branch
          %585 = sbr.rel (%p583) target = $region92
        $region91: #{_lambda_.5} parent=87 // pred_region
          %587 = dma.done [#allocation3], 512
        $region92: #{_lambda_.5} parent=87 // pred_fallthru
          _
        // Predicated region
        $region93: #{_lambda_.5} parent=87 // pred_check
          %p588 = pneg %p222
        $region94: #{_lambda_.5} parent=87 // pred_check_branch
          %590 = sbr.rel (%p588) target = $region96
        $region95: #{_lambda_.5} parent=87 // pred_region
          %592 = dma.done [#allocation5], 16
        $region96: #{_lambda_.5} parent=87 // pred_fallthru
          _
        // Predicated region
        $region97: #{_lambda_.5} parent=87 // pred_check
          %p593 = pneg %p243
        $region98: #{_lambda_.5} parent=87 // pred_check_branch
          %595 = sbr.rel (%p593) target = $region100
        $region99: #{_lambda_.5} parent=87 // pred_region
          %597 = dma.done [#allocation5], 16
        $region100: #{_lambda_.5} parent=87 // pred_fallthru
          _
        // Predicated region
        $region101: #{_lambda_.5} parent=87 // pred_check
          %p598 = pneg %p264
        $region102: #{_lambda_.5} parent=87 // pred_check_branch
          %600 = sbr.rel (%p598) target = $region104
        $region103: #{_lambda_.5} parent=87 // pred_region
          %602 = dma.done [#allocation8], 16
        $region104: #{_lambda_.5} parent=87 // pred_fallthru
          _
        // Predicated region
        $region105: #{_lambda_.5} parent=87 // pred_check
          %p603 = pneg %p285
        $region106: #{_lambda_.5} parent=87 // pred_check_branch
          %605 = sbr.rel (%p603) target = $region108
        $region107: #{_lambda_.5} parent=87 // pred_region
          %607 = dma.done [#allocation8], 512
        $region108: #{_lambda_.5} parent=87 // pred_fallthru
          _
        // Predicated region
        $region109: #{_lambda_.5} parent=87 // pred_check
          %p608 = pneg %p306
        $region110: #{_lambda_.5} parent=87 // pred_check_branch
          %610 = sbr.rel (%p608) target = $region112
        $region111: #{_lambda_.5} parent=87 // pred_region
          %612 = dma.done [#allocation11], 16
        $region112: #{_lambda_.5} parent=87 // pred_fallthru
          _
        // Predicated region
        $region113: #{_lambda_.5} parent=87 // pred_check
          %p613 = pneg %p348
        $region114: #{_lambda_.5} parent=87 // pred_check_branch
          %615 = sbr.rel (%p613) target = $region116
        $region115: #{_lambda_.5} parent=87 // pred_region
          %617 = dma.done [#allocation11], 16
        $region116: #{_lambda_.5} parent=87 // pred_fallthru
          _
        // Predicated region
        $region117: #{_lambda_.5} parent=87 // pred_check
          %p618 = pneg %p369
        $region118: #{_lambda_.5} parent=87 // pred_check_branch
          %620 = sbr.rel (%p618) target = $region120
        $region119: #{_lambda_.5} parent=87 // pred_region
          %622 = dma.done [#allocation14], 16
        $region120: #{_lambda_.5} parent=87 // pred_fallthru
          _
        // Predicated region
        $region121: #{_lambda_.5} parent=87 // pred_check
          %p623 = pneg %p390
        $region122: #{_lambda_.5} parent=87 // pred_check_branch
          %625 = sbr.rel (%p623) target = $region124
        $region123: #{_lambda_.5} parent=87 // pred_region
          %627 = dma.done [#allocation14], 16
        $region124: #{_lambda_.5} parent=87 // pred_fallthru
          _
        %p628 = scmp.lt.s32.totalorder %s33, 1
        %s629 = scalar_select %p628, %s33, 1
        %s630 = smul.addr %s629, 3
        %s631 = smul.addr %s630, 8
        %s632 = scalar_lea.vmem %s0, %s631
        %p633 = pneg %p54
        %p634 = pneg %p51
        %p635 = pneg %p75
        %p636 = pneg %p72
        %p637 = pneg %p96
        %p638 = pneg %p93
        %p639 = pneg %p117
        %p640 = pneg %p114
        %p641 = pneg %p138
        %p642 = pneg %p135
        %p643 = pneg %p159
        %p644 = pneg %p156
        %p645 = pneg %p180
        %p646 = pneg %p177
        %p647 = pneg %p201
        %p648 = pneg %p198
        %p649 = pneg %p222
        %p650 = pneg %p219
        %p651 = pneg %p243
        %p652 = pneg %p240
        %p653 = pneg %p264
        %p654 = pneg %p261
        %p655 = pneg %p285
        %p656 = pneg %p282
        %p657 = pneg %p306
        %p658 = pneg %p303
        %p659 = pneg %p327
        %p660 = pneg %p324
        %p661 = pneg %p348
        %p662 = pneg %p345
        %p663 = pneg %p369
        %p664 = pneg %p366
        %p665 = pneg %p390
        %p666 = pneg %p387
        %p667 = pneg %p416
        %p668 = pneg %p413
        %p669 = scmp.lt.s32.totalorder %s33, 1
        %s670 = scalar_select %p669, %s33, 1
        %s671 = smul.addr %s670, 3
        %s672 = smul.addr %s671, 8
        %s673 = scalar_lea.vmem %s17, %s672
        %p674 = scmp.lt.s32.totalorder %s33, 1
        %s675 = scalar_select %p674, %s33, 1
        %s676 = smul.addr %s675, 3
        %s677 = smul.addr %s676, 8
        %s678 = scalar_lea.vmem %s0, %s677
        %p679 = scmp.lt.s32.totalorder %s33, 1
        %s680 = scalar_select %p679, %s33, 1
        %s681 = smul.addr %s680, 3
        %s682 = smul.addr %s681, 8
        %s683 = scalar_lea.vmem %s17, %s682
        %v684 = vld [vmem:[%s678] sm:$0xff]
        %v685 = vld [vmem:[%s678 + $0x8] sm:$0xff]
        %v686 = vld [vmem:[%s678 + $0x10] sm:$0x1]
        %v687 = vld [vmem:[%s1] sm:$0xff]
        %v688 = vld [vmem:[%s1 + $0x8] sm:$0xff]
        %v689 = vld [vmem:[%s1 + $0x10] sm:$0xff]
        %v690 = vld [vmem:[%s1 + $0x18] sm:$0xff]
        %v691 = vld [vmem:[%s2] sm:$0x1]
        %v693 = vperm.slane %v691, 0
        %vm695 = vcmask 261120
        %v697 = vsel %vm695, %v684, 0
        %v700 = vsel %vm695, %v685, 0
        %v703 = vsel %vm695, %v686, 0
        %705 = vmatpush.msra.mxu0 0.0
        %706 = vmatpush.msra.mxu0 0.0
        %707 = vmatpush.msra.mxu0 0.0
        %708 = vmatpush.msra.mxu0 0.0
        %709 = vmatpush.msra.mxu0 0.0
        %710 = vmatpush.msra.mxu0 0.0
        %711 = vmatpush.msra.mxu0 0.0
        %712 = vmatpush.msra.mxu0 0.0
        %713 = vmatpush.msra.mxu0 0.0
        %714 = vmatpush.msra.mxu0 0.0
        %715 = vmatpush.msra.mxu0 0.0
        %716 = vmatpush.msra.mxu0 0.0
        %717 = vmatpush.msra.mxu0 %v690
        %718 = vmatpush.msra.mxu0 %v689
        %719 = vmatpush.msra.mxu0 %v688
        %720 = vmatpush.msra.mxu0 %v687
        %721 = vmatmul.f32.gmra.mxu0 %v697
        %v722 = vpop.f32.mrf.mxu0
        %v723 = vadd.f32 %v693, %v722
        %724 = vmatmul.f32.gmra.mxu0 %v700
        %v725 = vpop.f32.mrf.mxu0
        %v726 = vadd.f32 %v693, %v725
        %727 = vmatmul.f32.gmra.mxu0 %v703
        %v728 = vpop.f32.mrf.mxu0
        %v729 = vadd.f32 %v693, %v728
        %730 = vdwg.mxu0
        %v731 = vld [vmem:[%s3] sm:$0xff]
        %v732 = vld [vmem:[%s3 + $0x8] sm:$0xff]
        %v733 = vld [vmem:[%s3 + $0x10] sm:$0xff]
        %v734 = vld [vmem:[%s3 + $0x18] sm:$0xff]
        %v735 = vld [vmem:[%s4] sm:$0x1]
        %v737 = vperm.slane %v735, 0
        %739 = vmatpush.msra.mxu0 0.0
        %740 = vmatpush.msra.mxu0 0.0
        %741 = vmatpush.msra.mxu0 0.0
        %742 = vmatpush.msra.mxu0 0.0
        %743 = vmatpush.msra.mxu0 0.0
        %744 = vmatpush.msra.mxu0 0.0
        %745 = vmatpush.msra.mxu0 0.0
        %746 = vmatpush.msra.mxu0 0.0
        %747 = vmatpush.msra.mxu0 0.0
        %748 = vmatpush.msra.mxu0 0.0
        %749 = vmatpush.msra.mxu0 0.0
        %750 = vmatpush.msra.mxu0 0.0
        %751 = vmatpush.msra.mxu0 %v734
        %752 = vmatpush.msra.mxu0 %v733
        %753 = vmatpush.msra.mxu0 %v732
        %754 = vmatpush.msra.mxu0 %v731
        %755 = vmatmul.f32.gmra.mxu0 %v697
        %v756 = vpop.f32.mrf.mxu0
        %v757 = vadd.f32 %v737, %v756
        %758 = vmatmul.f32.gmra.mxu0 %v700
        %v759 = vpop.f32.mrf.mxu0
        %v760 = vadd.f32 %v737, %v759
        %761 = vmatmul.f32.gmra.mxu0 %v703
        %v762 = vpop.f32.mrf.mxu0
        %v763 = vadd.f32 %v737, %v762
        %764 = vdwg.mxu0
        %v765 = vld [vmem:[%s5] sm:$0xff]
        %v766 = vld [vmem:[%s5 + $0x8] sm:$0xff]
        %v767 = vld [vmem:[%s5 + $0x10] sm:$0xff]
        %v768 = vld [vmem:[%s5 + $0x18] sm:$0xff]
        %v769 = vld [vmem:[%s6] sm:$0x1]
        %v771 = vperm.slane %v769, 0
        %773 = vmatpush.msra.mxu0 0.0
        %774 = vmatpush.msra.mxu0 0.0
        %775 = vmatpush.msra.mxu0 0.0
        %776 = vmatpush.msra.mxu0 0.0
        %777 = vmatpush.msra.mxu0 0.0
        %778 = vmatpush.msra.mxu0 0.0
        %779 = vmatpush.msra.mxu0 0.0
        %780 = vmatpush.msra.mxu0 0.0
        %781 = vmatpush.msra.mxu0 0.0
        %782 = vmatpush.msra.mxu0 0.0
        %783 = vmatpush.msra.mxu0 0.0
        %784 = vmatpush.msra.mxu0 0.0
        %785 = vmatpush.msra.mxu0 %v768
        %786 = vmatpush.msra.mxu0 %v767
        %787 = vmatpush.msra.mxu0 %v766
        %788 = vmatpush.msra.mxu0 %v765
        %789 = vmatmul.f32.gmra.mxu0 %v697
        %v790 = vpop.f32.mrf.mxu0
        %v791 = vadd.f32 %v771, %v790
        %792 = vmatmul.f32.gmra.mxu0 %v700
        %v793 = vpop.f32.mrf.mxu0
        %v794 = vadd.f32 %v771, %v793
        %795 = vmatmul.f32.gmra.mxu0 %v703
        %v796 = vpop.f32.mrf.mxu0
        %v797 = vadd.f32 %v771, %v796
        %798 = vdwg.mxu0
        %vm799 = vcmask 31744
        %v801 = vsel %vm799, %v723, 0
        %v804 = vsel %vm799, %v726, 0
        %v807 = vsel %vm799, %v729, 0
        %v810 = vsel %vm799, %v757, 0
        %v813 = vsel %vm799, %v760, 0
        %v816 = vsel %vm799, %v763, 0
        %818 = vmatpush.xpose.msra.mxu0 0.0
        %819 = vmatpush.xpose.msra.mxu0 0.0
        %820 = vmatpush.xpose.msra.mxu0 0.0
        %821 = vmatpush.xpose.msra.mxu0 0.0
        %822 = vmatpush.xpose.msra.mxu0 0.0
        %823 = vmatpush.xpose.msra.mxu0 0.0
        %824 = vmatpush.xpose.msra.mxu0 0.0
        %825 = vmatpush.xpose.msra.mxu0 0.0
        %826 = vmatpush.xpose.msra.mxu0 0.0
        %827 = vmatpush.xpose.msra.mxu0 0.0
        %828 = vmatpush.xpose.msra.mxu0 0.0
        %829 = vmatpush.xpose.msra.mxu0 0.0
        %830 = vmatpush.xpose.msra.mxu0 0.0
        %831 = vmatpush.xpose.msra.mxu0 %v816
        %832 = vmatpush.xpose.msra.mxu0 %v813
        %833 = vmatpush.xpose.msra.mxu0 %v810
        %834 = vmatmul.f32.gmra.mxu0 %v801
        %v835 = vpop.f32.mrf.mxu0
        %v836 = vadd.f32 0.0, %v835
        %837 = vmatmul.f32.gmra.mxu0 %v804
        %v838 = vpop.f32.mrf.mxu0
        %v839 = vadd.f32 0.0, %v838
        %840 = vmatmul.f32.gmra.mxu0 %v807
        %v841 = vpop.f32.mrf.mxu0
        %v842 = vadd.f32 0.0, %v841
        %843 = vdwg.mxu0
        %v844 = vmul.f32 %v836, 0.5
        %v845 = vmul.f32 %v839, 0.5
        %v846 = vmul.f32 %v842, 0.5
        %vm847 = vcmask 138240
        %v848 = vsel %vm847, %v844, -inf
        %849 = vmax.xlane.f32.xlu0 %v848
        %v850 = vpop.xlane.xlu0 %849
        %v851 = vsel %vm847, %v845, -inf
        %852 = vmax.xlane.f32.xlu0 %v851
        %v853 = vpop.xlane.xlu0 %852
        %vm854 = vcmask 131072
        %v855 = vsel %vm854, %v846, -inf
        %856 = vmax.xlane.f32.xlu0 %v855
        %v857 = vpop.xlane.xlu0 %856
        %v858 = vsub.f32 %v844, %v850
        %v859 = vsub.f32 %v845, %v853
        %v860 = vsub.f32 %v846, %v857
        %v861 = vmul.f32 %v858, 1.442695
        %v862 = vpow.pop %v861
        %v863 = vmul.f32 %v859, 1.442695
        %v864 = vpow.pop %v863
        %v865 = vmul.f32 %v860, 1.442695
        %v866 = vpow.pop %v865
        %v867 = vsel %vm847, %v862, 0.0
        %868 = vadd.xlane.f32.xlu0 %v867
        %v869 = vpop.xlane.xlu0 %868
        %v870 = vsel %vm847, %v864, 0.0
        %871 = vadd.xlane.f32.xlu0 %v870
        %v872 = vpop.xlane.xlu0 %871
        %v873 = vsel %vm854, %v866, 0.0
        %874 = vadd.xlane.f32.xlu0 %v873
        %v875 = vpop.xlane.xlu0 %874
        %v876 = vrcp.pop %v869
        %v877 = vmul.f32 %v869, %v876
        %v878 = vsub.f32 1.0, %v877
        %v879 = vmul.f32 %v876, %v878
        %v880 = vadd.f32 %v876, %v879
        %vm881 = vweird.f32 %v869
        %vm882 = vweird.f32 %v876
        %vm883 = vmor %vm881, %vm882
        %v884 = vsel %vm883, %v876, %v880
        %v885 = vand.u32 2147483647, %v869
        %vm886 = vcmp.eq.f32.partialorder %v885, 8.507059e+37
        %v887 = vand.u32 %v869, 2147483648
        %v888 = vor.u32 1.1754944e-38, %v887
        %v889 = vsel %vm886, %v888, %v884
        %v890 = vmul.f32 %v862, %v889
        %v891 = vrcp.pop %v872
        %v892 = vmul.f32 %v872, %v891
        %v893 = vsub.f32 1.0, %v892
        %v894 = vmul.f32 %v891, %v893
        %v895 = vadd.f32 %v891, %v894
        %vm896 = vweird.f32 %v872
        %vm897 = vweird.f32 %v891
        %vm898 = vmor %vm896, %vm897
        %v899 = vsel %vm898, %v891, %v895
        %v900 = vand.u32 2147483647, %v872
        %vm901 = vcmp.eq.f32.partialorder %v900, 8.507059e+37
        %v902 = vand.u32 %v872, 2147483648
        %v903 = vor.u32 1.1754944e-38, %v902
        %v904 = vsel %vm901, %v903, %v899
        %v905 = vmul.f32 %v864, %v904
        %v906 = vrcp.pop %v875
        %v907 = vmul.f32 %v875, %v906
        %v908 = vsub.f32 1.0, %v907
        %v909 = vmul.f32 %v906, %v908
        %v910 = vadd.f32 %v906, %v909
        %vm911 = vweird.f32 %v875
        %vm912 = vweird.f32 %v906
        %vm913 = vmor %vm911, %vm912
        %v914 = vsel %vm913, %v906, %v910
        %v915 = vand.u32 2147483647, %v875
        %vm916 = vcmp.eq.f32.partialorder %v915, 8.507059e+37
        %v917 = vand.u32 %v875, 2147483648
        %v918 = vor.u32 1.1754944e-38, %v917
        %v919 = vsel %vm916, %v918, %v914
        %v920 = vmul.f32 %v866, %v919
        %v922 = vsel %vm847, %v890, 0
        %v925 = vsel %vm847, %v905, 0
        %v928 = vsel %vm847, %v920, 0
        %vm930 = vcmask 1040384
        %v932 = vsel %vm930, %v797, 0
        %934 = vmatpush.msra.mxu0 0.0
        %935 = vmatpush.msra.mxu0 0.0
        %936 = vmatpush.msra.mxu0 0.0
        %937 = vmatpush.msra.mxu0 0.0
        %938 = vmatpush.msra.mxu0 0.0
        %939 = vmatpush.msra.mxu0 0.0
        %940 = vmatpush.msra.mxu0 0.0
        %941 = vmatpush.msra.mxu0 0.0
        %942 = vmatpush.msra.mxu0 0.0
        %943 = vmatpush.msra.mxu0 0.0
        %944 = vmatpush.msra.mxu0 0.0
        %945 = vmatpush.msra.mxu0 0.0
        %946 = vmatpush.msra.mxu0 0.0
        %947 = vmatpush.msra.mxu0 %v932
        %948 = vmatpush.msra.mxu0 %v794
        %949 = vmatpush.msra.mxu0 %v791
        %950 = vmatmul.f32.gmra.mxu0 %v922
        %v951 = vpop.f32.mrf.mxu0
        %v952 = vadd.f32 0.0, %v951
        %953 = vmatmul.f32.gmra.mxu0 %v925
        %v954 = vpop.f32.mrf.mxu0
        %v955 = vadd.f32 0.0, %v954
        %956 = vmatmul.f32.gmra.mxu0 %v928
        %v957 = vpop.f32.mrf.mxu0
        %v958 = vadd.f32 0.0, %v957
        %959 = vdwg.mxu0
        %v960 = vld [vmem:[#allocation2] sm:$0xf]
        %s961 = scalar_lea.vmem %s1, 32
        %v962 = vld [vmem:[%s961] sm:$0xff]
        %v963 = vld [vmem:[%s961 + $0x8] sm:$0xff]
        %v964 = vld [vmem:[%s961 + $0x10] sm:$0xff]
        %v965 = vld [vmem:[%s961 + $0x18] sm:$0xff]
        %s966 = scalar_lea.vmem %s2, 1
        %v967 = vld [vmem:[%s966] sm:$0x1]
        %v969 = vperm.slane %v967, 0
        %971 = vmatpush.msra.mxu0 0.0
        %972 = vmatpush.msra.mxu0 0.0
        %973 = vmatpush.msra.mxu0 0.0
        %974 = vmatpush.msra.mxu0 0.0
        %975 = vmatpush.msra.mxu0 0.0
        %976 = vmatpush.msra.mxu0 0.0
        %977 = vmatpush.msra.mxu0 0.0
        %978 = vmatpush.msra.mxu0 0.0
        %979 = vmatpush.msra.mxu0 0.0
        %980 = vmatpush.msra.mxu0 0.0
        %981 = vmatpush.msra.mxu0 0.0
        %982 = vmatpush.msra.mxu0 0.0
        %983 = vmatpush.msra.mxu0 %v965
        %984 = vmatpush.msra.mxu0 %v964
        %985 = vmatpush.msra.mxu0 %v963
        %986 = vmatpush.msra.mxu0 %v962
        %987 = vmatmul.f32.gmra.mxu0 %v697
        %v988 = vpop.f32.mrf.mxu0
        %v989 = vadd.f32 %v969, %v988
        %990 = vmatmul.f32.gmra.mxu0 %v700
        %v991 = vpop.f32.mrf.mxu0
        %v992 = vadd.f32 %v969, %v991
        %993 = vmatmul.f32.gmra.mxu0 %v703
        %v994 = vpop.f32.mrf.mxu0
        %v995 = vadd.f32 %v969, %v994
        %996 = vdwg.mxu0
        %s997 = scalar_lea.vmem %s3, 32
        %v998 = vld [vmem:[%s997] sm:$0xff]
        %v999 = vld [vmem:[%s997 + $0x8] sm:$0xff]
        %v1000 = vld [vmem:[%s997 + $0x10] sm:$0xff]
        %v1001 = vld [vmem:[%s997 + $0x18] sm:$0xff]
        %s1002 = scalar_lea.vmem %s4, 1
        %v1003 = vld [vmem:[%s1002] sm:$0x1]
        %v1005 = vperm.slane %v1003, 0
        %1007 = vmatpush.msra.mxu0 0.0
        %1008 = vmatpush.msra.mxu0 0.0
        %1009 = vmatpush.msra.mxu0 0.0
        %1010 = vmatpush.msra.mxu0 0.0
        %1011 = vmatpush.msra.mxu0 0.0
        %1012 = vmatpush.msra.mxu0 0.0
        %1013 = vmatpush.msra.mxu0 0.0
        %1014 = vmatpush.msra.mxu0 0.0
        %1015 = vmatpush.msra.mxu0 0.0
        %1016 = vmatpush.msra.mxu0 0.0
        %1017 = vmatpush.msra.mxu0 0.0
        %1018 = vmatpush.msra.mxu0 0.0
        %1019 = vmatpush.msra.mxu0 %v1001
        %1020 = vmatpush.msra.mxu0 %v1000
        %1021 = vmatpush.msra.mxu0 %v999
        %1022 = vmatpush.msra.mxu0 %v998
        %1023 = vmatmul.f32.gmra.mxu0 %v697
        %v1024 = vpop.f32.mrf.mxu0
        %v1025 = vadd.f32 %v1005, %v1024
        %1026 = vmatmul.f32.gmra.mxu0 %v700
        %v1027 = vpop.f32.mrf.mxu0
        %v1028 = vadd.f32 %v1005, %v1027
        %1029 = vmatmul.f32.gmra.mxu0 %v703
        %v1030 = vpop.f32.mrf.mxu0
        %v1031 = vadd.f32 %v1005, %v1030
        %1032 = vdwg.mxu0
        %s1033 = scalar_lea.vmem %s5, 32
        %v1034 = vld [vmem:[%s1033] sm:$0xff]
        %v1035 = vld [vmem:[%s1033 + $0x8] sm:$0xff]
        %v1036 = vld [vmem:[%s1033 + $0x10] sm:$0xff]
        %v1037 = vld [vmem:[%s1033 + $0x18] sm:$0xff]
        %s1038 = scalar_lea.vmem %s6, 1
        %v1039 = vld [vmem:[%s1038] sm:$0x1]
        %v1041 = vperm.slane %v1039, 0
        %1043 = vmatpush.msra.mxu0 0.0
        %1044 = vmatpush.msra.mxu0 0.0
        %1045 = vmatpush.msra.mxu0 0.0
        %1046 = vmatpush.msra.mxu0 0.0
        %1047 = vmatpush.msra.mxu0 0.0
        %1048 = vmatpush.msra.mxu0 0.0
        %1049 = vmatpush.msra.mxu0 0.0
        %1050 = vmatpush.msra.mxu0 0.0
        %1051 = vmatpush.msra.mxu0 0.0
        %1052 = vmatpush.msra.mxu0 0.0
        %1053 = vmatpush.msra.mxu0 0.0
        %1054 = vmatpush.msra.mxu0 0.0
        %1055 = vmatpush.msra.mxu0 %v1037
        %1056 = vmatpush.msra.mxu0 %v1036
        %1057 = vmatpush.msra.mxu0 %v1035
        %1058 = vmatpush.msra.mxu0 %v1034
        %1059 = vmatmul.f32.gmra.mxu0 %v697
        %v1060 = vpop.f32.mrf.mxu0
        %v1061 = vadd.f32 %v1041, %v1060
        %1062 = vmatmul.f32.gmra.mxu0 %v700
        %v1063 = vpop.f32.mrf.mxu0
        %v1064 = vadd.f32 %v1041, %v1063
        %1065 = vmatmul.f32.gmra.mxu0 %v703
        %v1066 = vpop.f32.mrf.mxu0
        %v1067 = vadd.f32 %v1041, %v1066
        %1068 = vdwg.mxu0
        %v1070 = vsel %vm799, %v989, 0
        %v1073 = vsel %vm799, %v992, 0
        %v1076 = vsel %vm799, %v995, 0
        %v1079 = vsel %vm799, %v1025, 0
        %v1082 = vsel %vm799, %v1028, 0
        %v1085 = vsel %vm799, %v1031, 0
        %1087 = vmatpush.xpose.msra.mxu0 0.0
        %1088 = vmatpush.xpose.msra.mxu0 0.0
        %1089 = vmatpush.xpose.msra.mxu0 0.0
        %1090 = vmatpush.xpose.msra.mxu0 0.0
        %1091 = vmatpush.xpose.msra.mxu0 0.0
        %1092 = vmatpush.xpose.msra.mxu0 0.0
        %1093 = vmatpush.xpose.msra.mxu0 0.0
        %1094 = vmatpush.xpose.msra.mxu0 0.0
        %1095 = vmatpush.xpose.msra.mxu0 0.0
        %1096 = vmatpush.xpose.msra.mxu0 0.0
        %1097 = vmatpush.xpose.msra.mxu0 0.0
        %1098 = vmatpush.xpose.msra.mxu0 0.0
        %1099 = vmatpush.xpose.msra.mxu0 0.0
        %1100 = vmatpush.xpose.msra.mxu0 %v1085
        %1101 = vmatpush.xpose.msra.mxu0 %v1082
        %1102 = vmatpush.xpose.msra.mxu0 %v1079
        %1103 = vmatmul.f32.gmra.mxu0 %v1070
        %v1104 = vpop.f32.mrf.mxu0
        %v1105 = vadd.f32 0.0, %v1104
        %1106 = vmatmul.f32.gmra.mxu0 %v1073
        %v1107 = vpop.f32.mrf.mxu0
        %v1108 = vadd.f32 0.0, %v1107
        %1109 = vmatmul.f32.gmra.mxu0 %v1076
        %v1110 = vpop.f32.mrf.mxu0
        %v1111 = vadd.f32 0.0, %v1110
        %1112 = vdwg.mxu0
        %v1113 = vmul.f32 %v1105, 0.5
        %v1114 = vmul.f32 %v1108, 0.5
        %v1115 = vmul.f32 %v1111, 0.5
        %v1116 = vsel %vm847, %v1113, -inf
        %1117 = vmax.xlane.f32.xlu0 %v1116
        %v1118 = vpop.xlane.xlu0 %1117
        %v1119 = vsel %vm847, %v1114, -inf
        %1120 = vmax.xlane.f32.xlu0 %v1119
        %v1121 = vpop.xlane.xlu0 %1120
        %v1122 = vsel %vm854, %v1115, -inf
        %1123 = vmax.xlane.f32.xlu0 %v1122
        %v1124 = vpop.xlane.xlu0 %1123
        %v1125 = vsub.f32 %v1113, %v1118
        %v1126 = vsub.f32 %v1114, %v1121
        %v1127 = vsub.f32 %v1115, %v1124
        %v1128 = vmul.f32 %v1125, 1.442695
        %v1129 = vpow.pop %v1128
        %v1130 = vmul.f32 %v1126, 1.442695
        %v1131 = vpow.pop %v1130
        %v1132 = vmul.f32 %v1127, 1.442695
        %v1133 = vpow.pop %v1132
        %v1134 = vsel %vm847, %v1129, 0.0
        %1135 = vadd.xlane.f32.xlu0 %v1134
        %v1136 = vpop.xlane.xlu0 %1135
        %v1137 = vsel %vm847, %v1131, 0.0
        %1138 = vadd.xlane.f32.xlu0 %v1137
        %v1139 = vpop.xlane.xlu0 %1138
        %v1140 = vsel %vm854, %v1133, 0.0
        %1141 = vadd.xlane.f32.xlu0 %v1140
        %v1142 = vpop.xlane.xlu0 %1141
        %v1143 = vrcp.pop %v1136
        %v1144 = vmul.f32 %v1136, %v1143
        %v1145 = vsub.f32 1.0, %v1144
        %v1146 = vmul.f32 %v1143, %v1145
        %v1147 = vadd.f32 %v1143, %v1146
        %vm1148 = vweird.f32 %v1136
        %vm1149 = vweird.f32 %v1143
        %vm1150 = vmor %vm1148, %vm1149
        %v1151 = vsel %vm1150, %v1143, %v1147
        %v1152 = vand.u32 2147483647, %v1136
        %vm1153 = vcmp.eq.f32.partialorder %v1152, 8.507059e+37
        %v1154 = vand.u32 %v1136, 2147483648
        %v1155 = vor.u32 1.1754944e-38, %v1154
        %v1156 = vsel %vm1153, %v1155, %v1151
        %v1157 = vmul.f32 %v1129, %v1156
        %v1158 = vrcp.pop %v1139
        %v1159 = vmul.f32 %v1139, %v1158
        %v1160 = vsub.f32 1.0, %v1159
        %v1161 = vmul.f32 %v1158, %v1160
        %v1162 = vadd.f32 %v1158, %v1161
        %vm1163 = vweird.f32 %v1139
        %vm1164 = vweird.f32 %v1158
        %vm1165 = vmor %vm1163, %vm1164
        %v1166 = vsel %vm1165, %v1158, %v1162
        %v1167 = vand.u32 2147483647, %v1139
        %vm1168 = vcmp.eq.f32.partialorder %v1167, 8.507059e+37
        %v1169 = vand.u32 %v1139, 2147483648
        %v1170 = vor.u32 1.1754944e-38, %v1169
        %v1171 = vsel %vm1168, %v1170, %v1166
        %v1172 = vmul.f32 %v1131, %v1171
        %v1173 = vrcp.pop %v1142
        %v1174 = vmul.f32 %v1142, %v1173
        %v1175 = vsub.f32 1.0, %v1174
        %v1176 = vmul.f32 %v1173, %v1175
        %v1177 = vadd.f32 %v1173, %v1176
        %vm1178 = vweird.f32 %v1142
        %vm1179 = vweird.f32 %v1173
        %vm1180 = vmor %vm1178, %vm1179
        %v1181 = vsel %vm1180, %v1173, %v1177
        %v1182 = vand.u32 2147483647, %v1142
        %vm1183 = vcmp.eq.f32.partialorder %v1182, 8.507059e+37
        %v1184 = vand.u32 %v1142, 2147483648
        %v1185 = vor.u32 1.1754944e-38, %v1184
        %v1186 = vsel %vm1183, %v1185, %v1181
        %v1187 = vmul.f32 %v1133, %v1186
        %v1189 = vsel %vm847, %v1157, 0
        %v1192 = vsel %vm847, %v1172, 0
        %v1195 = vsel %vm847, %v1187, 0
        %v1198 = vsel %vm930, %v1067, 0
        %1200 = vmatpush.msra.mxu0 0.0
        %1201 = vmatpush.msra.mxu0 0.0
        %1202 = vmatpush.msra.mxu0 0.0
        %1203 = vmatpush.msra.mxu0 0.0
        %1204 = vmatpush.msra.mxu0 0.0
        %1205 = vmatpush.msra.mxu0 0.0
        %1206 = vmatpush.msra.mxu0 0.0
        %1207 = vmatpush.msra.mxu0 0.0
        %1208 = vmatpush.msra.mxu0 0.0
        %1209 = vmatpush.msra.mxu0 0.0
        %1210 = vmatpush.msra.mxu0 0.0
        %1211 = vmatpush.msra.mxu0 0.0
        %1212 = vmatpush.msra.mxu0 0.0
        %1213 = vmatpush.msra.mxu0 %v1198
        %1214 = vmatpush.msra.mxu0 %v1064
        %1215 = vmatpush.msra.mxu0 %v1061
        %1216 = vmatmul.f32.gmra.mxu0 %v1189
        %v1217 = vpop.f32.mrf.mxu0
        %v1218 = vadd.f32 0.0, %v1217
        %1219 = vmatmul.f32.gmra.mxu0 %v1192
        %v1220 = vpop.f32.mrf.mxu0
        %v1221 = vadd.f32 0.0, %v1220
        %1222 = vmatmul.f32.gmra.mxu0 %v1195
        %v1223 = vpop.f32.mrf.mxu0
        %v1224 = vadd.f32 0.0, %v1223
        %1225 = vdwg.mxu0
        %s1226 = scalar_lea.vmem [#allocation2], 4
        %v1227 = vld [vmem:[%s1226] sm:$0xf]
        %v1229 = vsel %vm799, %v1218, 0
        %v1232 = vsel %vm799, %v1221, 0
        %v1235 = vsel %vm799, %v1224, 0
        %vm1237 = vcmask 1043456
        %v1239 = vsel %vm1237, %v1227, 0
        %1241 = vmatpush.msra.mxu0 0.0
        %1242 = vmatpush.msra.mxu0 0.0
        %1243 = vmatpush.msra.mxu0 0.0
        %1244 = vmatpush.msra.mxu0 0.0
        %1245 = vmatpush.msra.mxu0 0.0
        %1246 = vmatpush.msra.mxu0 0.0
        %1247 = vmatpush.msra.mxu0 0.0
        %1248 = vmatpush.msra.mxu0 0.0
        %1249 = vmatpush.msra.mxu0 0.0
        %1250 = vmatpush.msra.mxu0 0.0
        %1251 = vmatpush.msra.mxu0 0.0
        %1252 = vmatpush.msra.mxu0 0.0
        %1253 = vmatpush.msra.mxu0 0.0
        %1254 = vmatpush.msra.mxu0 0.0
        %1255 = vmatpush.msra.mxu0 0.0
        %1256 = vmatpush.msra.mxu0 %v1239
        %1257 = vmatmul.f32.gmra.mxu0 %v1229
        %v1258 = vpop.f32.mrf.mxu0
        %v1259 = vadd.f32 0.0, %v1258
        %1260 = vmatmul.f32.gmra.mxu0 %v1232
        %v1261 = vpop.f32.mrf.mxu0
        %v1262 = vadd.f32 0.0, %v1261
        %1263 = vmatmul.f32.gmra.mxu0 %v1235
        %v1264 = vpop.f32.mrf.mxu0
        %v1265 = vadd.f32 0.0, %v1264
        %1266 = vdwg.mxu0
        %v1268 = vsel %vm799, %v952, 0
        %v1271 = vsel %vm799, %v955, 0
        %v1274 = vsel %vm799, %v958, 0
        %v1277 = vsel %vm1237, %v960, 0
        %1279 = vmatpush.msra.mxu0 0.0
        %1280 = vmatpush.msra.mxu0 0.0
        %1281 = vmatpush.msra.mxu0 0.0
        %1282 = vmatpush.msra.mxu0 0.0
        %1283 = vmatpush.msra.mxu0 0.0
        %1284 = vmatpush.msra.mxu0 0.0
        %1285 = vmatpush.msra.mxu0 0.0
        %1286 = vmatpush.msra.mxu0 0.0
        %1287 = vmatpush.msra.mxu0 0.0
        %1288 = vmatpush.msra.mxu0 0.0
        %1289 = vmatpush.msra.mxu0 0.0
        %1290 = vmatpush.msra.mxu0 0.0
        %1291 = vmatpush.msra.mxu0 0.0
        %1292 = vmatpush.msra.mxu0 0.0
        %1293 = vmatpush.msra.mxu0 0.0
        %1294 = vmatpush.msra.mxu0 %v1277
        %1295 = vmatmul.f32.gmra.mxu0 %v1268
        %v1296 = vpop.f32.mrf.mxu0
        %v1297 = vadd.f32 %v1259, %v1296
        %1298 = vmatmul.f32.gmra.mxu0 %v1271
        %v1299 = vpop.f32.mrf.mxu0
        %v1300 = vadd.f32 %v1262, %v1299
        %1301 = vmatmul.f32.gmra.mxu0 %v1274
        %v1302 = vpop.f32.mrf.mxu0
        %v1303 = vadd.f32 %v1265, %v1302
        %1304 = vdwg.mxu0
        %s1305 = scalar_lea.vmem %s1, 64
        %v1306 = vld [vmem:[%s1305] sm:$0xff]
        %v1307 = vld [vmem:[%s1305 + $0x8] sm:$0xff]
        %v1308 = vld [vmem:[%s1305 + $0x10] sm:$0xff]
        %v1309 = vld [vmem:[%s1305 + $0x18] sm:$0xff]
        %s1310 = scalar_lea.vmem %s2, 2
        %v1311 = vld [vmem:[%s1310] sm:$0x1]
        %v1313 = vperm.slane %v1311, 0
        %1315 = vmatpush.msra.mxu0 0.0
        %1316 = vmatpush.msra.mxu0 0.0
        %1317 = vmatpush.msra.mxu0 0.0
        %1318 = vmatpush.msra.mxu0 0.0
        %1319 = vmatpush.msra.mxu0 0.0
        %1320 = vmatpush.msra.mxu0 0.0
        %1321 = vmatpush.msra.mxu0 0.0
        %1322 = vmatpush.msra.mxu0 0.0
        %1323 = vmatpush.msra.mxu0 0.0
        %1324 = vmatpush.msra.mxu0 0.0
        %1325 = vmatpush.msra.mxu0 0.0
        %1326 = vmatpush.msra.mxu0 0.0
        %1327 = vmatpush.msra.mxu0 %v1309
        %1328 = vmatpush.msra.mxu0 %v1308
        %1329 = vmatpush.msra.mxu0 %v1307
        %1330 = vmatpush.msra.mxu0 %v1306
        %1331 = vmatmul.f32.gmra.mxu0 %v697
        %v1332 = vpop.f32.mrf.mxu0
        %v1333 = vadd.f32 %v1313, %v1332
        %1334 = vmatmul.f32.gmra.mxu0 %v700
        %v1335 = vpop.f32.mrf.mxu0
        %v1336 = vadd.f32 %v1313, %v1335
        %1337 = vmatmul.f32.gmra.mxu0 %v703
        %v1338 = vpop.f32.mrf.mxu0
        %v1339 = vadd.f32 %v1313, %v1338
        %1340 = vdwg.mxu0
        %s1341 = scalar_lea.vmem %s3, 64
        %v1342 = vld [vmem:[%s1341] sm:$0xff]
        %v1343 = vld [vmem:[%s1341 + $0x8] sm:$0xff]
        %v1344 = vld [vmem:[%s1341 + $0x10] sm:$0xff]
        %v1345 = vld [vmem:[%s1341 + $0x18] sm:$0xff]
        %s1346 = scalar_lea.vmem %s4, 2
        %v1347 = vld [vmem:[%s1346] sm:$0x1]
        %v1349 = vperm.slane %v1347, 0
        %1351 = vmatpush.msra.mxu0 0.0
        %1352 = vmatpush.msra.mxu0 0.0
        %1353 = vmatpush.msra.mxu0 0.0
        %1354 = vmatpush.msra.mxu0 0.0
        %1355 = vmatpush.msra.mxu0 0.0
        %1356 = vmatpush.msra.mxu0 0.0
        %1357 = vmatpush.msra.mxu0 0.0
        %1358 = vmatpush.msra.mxu0 0.0
        %1359 = vmatpush.msra.mxu0 0.0
        %1360 = vmatpush.msra.mxu0 0.0
        %1361 = vmatpush.msra.mxu0 0.0
        %1362 = vmatpush.msra.mxu0 0.0
        %1363 = vmatpush.msra.mxu0 %v1345
        %1364 = vmatpush.msra.mxu0 %v1344
        %1365 = vmatpush.msra.mxu0 %v1343
        %1366 = vmatpush.msra.mxu0 %v1342
        %1367 = vmatmul.f32.gmra.mxu0 %v697
        %v1368 = vpop.f32.mrf.mxu0
        %v1369 = vadd.f32 %v1349, %v1368
        %1370 = vmatmul.f32.gmra.mxu0 %v700
        %v1371 = vpop.f32.mrf.mxu0
        %v1372 = vadd.f32 %v1349, %v1371
        %1373 = vmatmul.f32.gmra.mxu0 %v703
        %v1374 = vpop.f32.mrf.mxu0
        %v1375 = vadd.f32 %v1349, %v1374
        %1376 = vdwg.mxu0
        %s1377 = scalar_lea.vmem %s5, 64
        %v1378 = vld [vmem:[%s1377] sm:$0xff]
        %v1379 = vld [vmem:[%s1377 + $0x8] sm:$0xff]
        %v1380 = vld [vmem:[%s1377 + $0x10] sm:$0xff]
        %v1381 = vld [vmem:[%s1377 + $0x18] sm:$0xff]
        %s1382 = scalar_lea.vmem %s6, 2
        %v1383 = vld [vmem:[%s1382] sm:$0x1]
        %v1385 = vperm.slane %v1383, 0
        %1387 = vmatpush.msra.mxu0 0.0
        %1388 = vmatpush.msra.mxu0 0.0
        %1389 = vmatpush.msra.mxu0 0.0
        %1390 = vmatpush.msra.mxu0 0.0
        %1391 = vmatpush.msra.mxu0 0.0
        %1392 = vmatpush.msra.mxu0 0.0
        %1393 = vmatpush.msra.mxu0 0.0
        %1394 = vmatpush.msra.mxu0 0.0
        %1395 = vmatpush.msra.mxu0 0.0
        %1396 = vmatpush.msra.mxu0 0.0
        %1397 = vmatpush.msra.mxu0 0.0
        %1398 = vmatpush.msra.mxu0 0.0
        %1399 = vmatpush.msra.mxu0 %v1381
        %1400 = vmatpush.msra.mxu0 %v1380
        %1401 = vmatpush.msra.mxu0 %v1379
        %1402 = vmatpush.msra.mxu0 %v1378
        %1403 = vmatmul.f32.gmra.mxu0 %v697
        %v1404 = vpop.f32.mrf.mxu0
        %v1405 = vadd.f32 %v1385, %v1404
        %1406 = vmatmul.f32.gmra.mxu0 %v700
        %v1407 = vpop.f32.mrf.mxu0
        %v1408 = vadd.f32 %v1385, %v1407
        %1409 = vmatmul.f32.gmra.mxu0 %v703
        %v1410 = vpop.f32.mrf.mxu0
        %v1411 = vadd.f32 %v1385, %v1410
        %1412 = vdwg.mxu0
        %v1414 = vsel %vm799, %v1333, 0
        %v1417 = vsel %vm799, %v1336, 0
        %v1420 = vsel %vm799, %v1339, 0
        %v1423 = vsel %vm799, %v1369, 0
        %v1426 = vsel %vm799, %v1372, 0
        %v1429 = vsel %vm799, %v1375, 0
        %1431 = vmatpush.xpose.msra.mxu0 0.0
        %1432 = vmatpush.xpose.msra.mxu0 0.0
        %1433 = vmatpush.xpose.msra.mxu0 0.0
        %1434 = vmatpush.xpose.msra.mxu0 0.0
        %1435 = vmatpush.xpose.msra.mxu0 0.0
        %1436 = vmatpush.xpose.msra.mxu0 0.0
        %1437 = vmatpush.xpose.msra.mxu0 0.0
        %1438 = vmatpush.xpose.msra.mxu0 0.0
        %1439 = vmatpush.xpose.msra.mxu0 0.0
        %1440 = vmatpush.xpose.msra.mxu0 0.0
        %1441 = vmatpush.xpose.msra.mxu0 0.0
        %1442 = vmatpush.xpose.msra.mxu0 0.0
        %1443 = vmatpush.xpose.msra.mxu0 0.0
        %1444 = vmatpush.xpose.msra.mxu0 %v1429
        %1445 = vmatpush.xpose.msra.mxu0 %v1426
        %1446 = vmatpush.xpose.msra.mxu0 %v1423
        %1447 = vmatmul.f32.gmra.mxu0 %v1414
        %v1448 = vpop.f32.mrf.mxu0
        %v1449 = vadd.f32 0.0, %v1448
        %1450 = vmatmul.f32.gmra.mxu0 %v1417
        %v1451 = vpop.f32.mrf.mxu0
        %v1452 = vadd.f32 0.0, %v1451
        %1453 = vmatmul.f32.gmra.mxu0 %v1420
        %v1454 = vpop.f32.mrf.mxu0
        %v1455 = vadd.f32 0.0, %v1454
        %1456 = vdwg.mxu0
        %v1457 = vmul.f32 %v1449, 0.5
        %v1458 = vmul.f32 %v1452, 0.5
        %v1459 = vmul.f32 %v1455, 0.5
        %v1460 = vsel %vm847, %v1457, -inf
        %1461 = vmax.xlane.f32.xlu0 %v1460
        %v1462 = vpop.xlane.xlu0 %1461
        %v1463 = vsel %vm847, %v1458, -inf
        %1464 = vmax.xlane.f32.xlu0 %v1463
        %v1465 = vpop.xlane.xlu0 %1464
        %v1466 = vsel %vm854, %v1459, -inf
        %1467 = vmax.xlane.f32.xlu0 %v1466
        %v1468 = vpop.xlane.xlu0 %1467
        %v1469 = vsub.f32 %v1457, %v1462
        %v1470 = vsub.f32 %v1458, %v1465
        %v1471 = vsub.f32 %v1459, %v1468
        %v1472 = vmul.f32 %v1469, 1.442695
        %v1473 = vpow.pop %v1472
        %v1474 = vmul.f32 %v1470, 1.442695
        %v1475 = vpow.pop %v1474
        %v1476 = vmul.f32 %v1471, 1.442695
        %v1477 = vpow.pop %v1476
        %v1478 = vsel %vm847, %v1473, 0.0
        %1479 = vadd.xlane.f32.xlu0 %v1478
        %v1480 = vpop.xlane.xlu0 %1479
        %v1481 = vsel %vm847, %v1475, 0.0
        %1482 = vadd.xlane.f32.xlu0 %v1481
        %v1483 = vpop.xlane.xlu0 %1482
        %v1484 = vsel %vm854, %v1477, 0.0
        %1485 = vadd.xlane.f32.xlu0 %v1484
        %v1486 = vpop.xlane.xlu0 %1485
        %v1487 = vrcp.pop %v1480
        %v1488 = vmul.f32 %v1480, %v1487
        %v1489 = vsub.f32 1.0, %v1488
        %v1490 = vmul.f32 %v1487, %v1489
        %v1491 = vadd.f32 %v1487, %v1490
        %vm1492 = vweird.f32 %v1480
        %vm1493 = vweird.f32 %v1487
        %vm1494 = vmor %vm1492, %vm1493
        %v1495 = vsel %vm1494, %v1487, %v1491
        %v1496 = vand.u32 2147483647, %v1480
        %vm1497 = vcmp.eq.f32.partialorder %v1496, 8.507059e+37
        %v1498 = vand.u32 %v1480, 2147483648
        %v1499 = vor.u32 1.1754944e-38, %v1498
        %v1500 = vsel %vm1497, %v1499, %v1495
        %v1501 = vmul.f32 %v1473, %v1500
        %v1502 = vrcp.pop %v1483
        %v1503 = vmul.f32 %v1483, %v1502
        %v1504 = vsub.f32 1.0, %v1503
        %v1505 = vmul.f32 %v1502, %v1504
        %v1506 = vadd.f32 %v1502, %v1505
        %vm1507 = vweird.f32 %v1483
        %vm1508 = vweird.f32 %v1502
        %vm1509 = vmor %vm1507, %vm1508
        %v1510 = vsel %vm1509, %v1502, %v1506
        %v1511 = vand.u32 2147483647, %v1483
        %vm1512 = vcmp.eq.f32.partialorder %v1511, 8.507059e+37
        %v1513 = vand.u32 %v1483, 2147483648
        %v1514 = vor.u32 1.1754944e-38, %v1513
        %v1515 = vsel %vm1512, %v1514, %v1510
        %v1516 = vmul.f32 %v1475, %v1515
        %v1517 = vrcp.pop %v1486
        %v1518 = vmul.f32 %v1486, %v1517
        %v1519 = vsub.f32 1.0, %v1518
        %v1520 = vmul.f32 %v1517, %v1519
        %v1521 = vadd.f32 %v1517, %v1520
        %vm1522 = vweird.f32 %v1486
        %vm1523 = vweird.f32 %v1517
        %vm1524 = vmor %vm1522, %vm1523
        %v1525 = vsel %vm1524, %v1517, %v1521
        %v1526 = vand.u32 2147483647, %v1486
        %vm1527 = vcmp.eq.f32.partialorder %v1526, 8.507059e+37
        %v1528 = vand.u32 %v1486, 2147483648
        %v1529 = vor.u32 1.1754944e-38, %v1528
        %v1530 = vsel %vm1527, %v1529, %v1525
        %v1531 = vmul.f32 %v1477, %v1530
        %v1533 = vsel %vm847, %v1501, 0
        %v1536 = vsel %vm847, %v1516, 0
        %v1539 = vsel %vm847, %v1531, 0
        %v1542 = vsel %vm930, %v1411, 0
        %1544 = vmatpush.msra.mxu0 0.0
        %1545 = vmatpush.msra.mxu0 0.0
        %1546 = vmatpush.msra.mxu0 0.0
        %1547 = vmatpush.msra.mxu0 0.0
        %1548 = vmatpush.msra.mxu0 0.0
        %1549 = vmatpush.msra.mxu0 0.0
        %1550 = vmatpush.msra.mxu0 0.0
        %1551 = vmatpush.msra.mxu0 0.0
        %1552 = vmatpush.msra.mxu0 0.0
        %1553 = vmatpush.msra.mxu0 0.0
        %1554 = vmatpush.msra.mxu0 0.0
        %1555 = vmatpush.msra.mxu0 0.0
        %1556 = vmatpush.msra.mxu0 0.0
        %1557 = vmatpush.msra.mxu0 %v1542
        %1558 = vmatpush.msra.mxu0 %v1408
        %1559 = vmatpush.msra.mxu0 %v1405
        %1560 = vmatmul.f32.gmra.mxu0 %v1533
        %v1561 = vpop.f32.mrf.mxu0
        %v1562 = vadd.f32 0.0, %v1561
        %1563 = vmatmul.f32.gmra.mxu0 %v1536
        %v1564 = vpop.f32.mrf.mxu0
        %v1565 = vadd.f32 0.0, %v1564
        %1566 = vmatmul.f32.gmra.mxu0 %v1539
        %v1567 = vpop.f32.mrf.mxu0
        %v1568 = vadd.f32 0.0, %v1567
        %1569 = vdwg.mxu0
        %s1570 = scalar_lea.vmem [#allocation2], 8
        %v1571 = vld [vmem:[%s1570] sm:$0xf]
        %v1573 = vsel %vm799, %v1562, 0
        %v1576 = vsel %vm799, %v1565, 0
        %v1579 = vsel %vm799, %v1568, 0
        %v1582 = vsel %vm1237, %v1571, 0
        %1584 = vmatpush.msra.mxu0 0.0
        %1585 = vmatpush.msra.mxu0 0.0
        %1586 = vmatpush.msra.mxu0 0.0
        %1587 = vmatpush.msra.mxu0 0.0
        %1588 = vmatpush.msra.mxu0 0.0
        %1589 = vmatpush.msra.mxu0 0.0
        %1590 = vmatpush.msra.mxu0 0.0
        %1591 = vmatpush.msra.mxu0 0.0
        %1592 = vmatpush.msra.mxu0 0.0
        %1593 = vmatpush.msra.mxu0 0.0
        %1594 = vmatpush.msra.mxu0 0.0
        %1595 = vmatpush.msra.mxu0 0.0
        %1596 = vmatpush.msra.mxu0 0.0
        %1597 = vmatpush.msra.mxu0 0.0
        %1598 = vmatpush.msra.mxu0 0.0
        %1599 = vmatpush.msra.mxu0 %v1582
        %1600 = vmatmul.f32.gmra.mxu0 %v1573
        %v1601 = vpop.f32.mrf.mxu0
        %v1602 = vadd.f32 0.0, %v1601
        %1603 = vmatmul.f32.gmra.mxu0 %v1576
        %v1604 = vpop.f32.mrf.mxu0
        %v1605 = vadd.f32 0.0, %v1604
        %1606 = vmatmul.f32.gmra.mxu0 %v1579
        %v1607 = vpop.f32.mrf.mxu0
        %v1608 = vadd.f32 0.0, %v1607
        %1609 = vdwg.mxu0
        %v1610 = vadd.f32 %v1297, %v1602
        %v1611 = vadd.f32 %v1300, %v1605
        %v1612 = vadd.f32 %v1303, %v1608
        %s1613 = scalar_lea.vmem %s1, 96
        %v1614 = vld [vmem:[%s1613] sm:$0xff]
        %v1615 = vld [vmem:[%s1613 + $0x8] sm:$0xff]
        %v1616 = vld [vmem:[%s1613 + $0x10] sm:$0xff]
        %v1617 = vld [vmem:[%s1613 + $0x18] sm:$0xff]
        %s1618 = scalar_lea.vmem %s2, 3
        %v1619 = vld [vmem:[%s1618] sm:$0x1]
        %v1621 = vperm.slane %v1619, 0
        %1623 = vmatpush.msra.mxu0 0.0
        %1624 = vmatpush.msra.mxu0 0.0
        %1625 = vmatpush.msra.mxu0 0.0
        %1626 = vmatpush.msra.mxu0 0.0
        %1627 = vmatpush.msra.mxu0 0.0
        %1628 = vmatpush.msra.mxu0 0.0
        %1629 = vmatpush.msra.mxu0 0.0
        %1630 = vmatpush.msra.mxu0 0.0
        %1631 = vmatpush.msra.mxu0 0.0
        %1632 = vmatpush.msra.mxu0 0.0
        %1633 = vmatpush.msra.mxu0 0.0
        %1634 = vmatpush.msra.mxu0 0.0
        %1635 = vmatpush.msra.mxu0 %v1617
        %1636 = vmatpush.msra.mxu0 %v1616
        %1637 = vmatpush.msra.mxu0 %v1615
        %1638 = vmatpush.msra.mxu0 %v1614
        %1639 = vmatmul.f32.gmra.mxu0 %v697
        %v1640 = vpop.f32.mrf.mxu0
        %v1641 = vadd.f32 %v1621, %v1640
        %1642 = vmatmul.f32.gmra.mxu0 %v700
        %v1643 = vpop.f32.mrf.mxu0
        %v1644 = vadd.f32 %v1621, %v1643
        %1645 = vmatmul.f32.gmra.mxu0 %v703
        %v1646 = vpop.f32.mrf.mxu0
        %v1647 = vadd.f32 %v1621, %v1646
        %1648 = vdwg.mxu0
        %s1649 = scalar_lea.vmem %s3, 96
        %v1650 = vld [vmem:[%s1649] sm:$0xff]
        %v1651 = vld [vmem:[%s1649 + $0x8] sm:$0xff]
        %v1652 = vld [vmem:[%s1649 + $0x10] sm:$0xff]
        %v1653 = vld [vmem:[%s1649 + $0x18] sm:$0xff]
        %s1654 = scalar_lea.vmem %s4, 3
        %v1655 = vld [vmem:[%s1654] sm:$0x1]
        %v1657 = vperm.slane %v1655, 0
        %1659 = vmatpush.msra.mxu0 0.0
        %1660 = vmatpush.msra.mxu0 0.0
        %1661 = vmatpush.msra.mxu0 0.0
        %1662 = vmatpush.msra.mxu0 0.0
        %1663 = vmatpush.msra.mxu0 0.0
        %1664 = vmatpush.msra.mxu0 0.0
        %1665 = vmatpush.msra.mxu0 0.0
        %1666 = vmatpush.msra.mxu0 0.0
        %1667 = vmatpush.msra.mxu0 0.0
        %1668 = vmatpush.msra.mxu0 0.0
        %1669 = vmatpush.msra.mxu0 0.0
        %1670 = vmatpush.msra.mxu0 0.0
        %1671 = vmatpush.msra.mxu0 %v1653
        %1672 = vmatpush.msra.mxu0 %v1652
        %1673 = vmatpush.msra.mxu0 %v1651
        %1674 = vmatpush.msra.mxu0 %v1650
        %1675 = vmatmul.f32.gmra.mxu0 %v697
        %v1676 = vpop.f32.mrf.mxu0
        %v1677 = vadd.f32 %v1657, %v1676
        %1678 = vmatmul.f32.gmra.mxu0 %v700
        %v1679 = vpop.f32.mrf.mxu0
        %v1680 = vadd.f32 %v1657, %v1679
        %1681 = vmatmul.f32.gmra.mxu0 %v703
        %v1682 = vpop.f32.mrf.mxu0
        %v1683 = vadd.f32 %v1657, %v1682
        %1684 = vdwg.mxu0
        %s1685 = scalar_lea.vmem %s5, 96
        %v1686 = vld [vmem:[%s1685] sm:$0xff]
        %v1687 = vld [vmem:[%s1685 + $0x8] sm:$0xff]
        %v1688 = vld [vmem:[%s1685 + $0x10] sm:$0xff]
        %v1689 = vld [vmem:[%s1685 + $0x18] sm:$0xff]
        %s1690 = scalar_lea.vmem %s6, 3
        %v1691 = vld [vmem:[%s1690] sm:$0x1]
        %v1693 = vperm.slane %v1691, 0
        %1695 = vmatpush.msra.mxu0 0.0
        %1696 = vmatpush.msra.mxu0 0.0
        %1697 = vmatpush.msra.mxu0 0.0
        %1698 = vmatpush.msra.mxu0 0.0
        %1699 = vmatpush.msra.mxu0 0.0
        %1700 = vmatpush.msra.mxu0 0.0
        %1701 = vmatpush.msra.mxu0 0.0
        %1702 = vmatpush.msra.mxu0 0.0
        %1703 = vmatpush.msra.mxu0 0.0
        %1704 = vmatpush.msra.mxu0 0.0
        %1705 = vmatpush.msra.mxu0 0.0
        %1706 = vmatpush.msra.mxu0 0.0
        %1707 = vmatpush.msra.mxu0 %v1689
        %1708 = vmatpush.msra.mxu0 %v1688
        %1709 = vmatpush.msra.mxu0 %v1687
        %1710 = vmatpush.msra.mxu0 %v1686
        %1711 = vmatmul.f32.gmra.mxu0 %v697
        %v1712 = vpop.f32.mrf.mxu0
        %v1713 = vadd.f32 %v1693, %v1712
        %1714 = vmatmul.f32.gmra.mxu0 %v700
        %v1715 = vpop.f32.mrf.mxu0
        %v1716 = vadd.f32 %v1693, %v1715
        %1717 = vmatmul.f32.gmra.mxu0 %v703
        %v1718 = vpop.f32.mrf.mxu0
        %v1719 = vadd.f32 %v1693, %v1718
        %1720 = vdwg.mxu0
        %v1722 = vsel %vm799, %v1641, 0
        %v1725 = vsel %vm799, %v1644, 0
        %v1728 = vsel %vm799, %v1647, 0
        %v1731 = vsel %vm799, %v1677, 0
        %v1734 = vsel %vm799, %v1680, 0
        %v1737 = vsel %vm799, %v1683, 0
        %1739 = vmatpush.xpose.msra.mxu0 0.0
        %1740 = vmatpush.xpose.msra.mxu0 0.0
        %1741 = vmatpush.xpose.msra.mxu0 0.0
        %1742 = vmatpush.xpose.msra.mxu0 0.0
        %1743 = vmatpush.xpose.msra.mxu0 0.0
        %1744 = vmatpush.xpose.msra.mxu0 0.0
        %1745 = vmatpush.xpose.msra.mxu0 0.0
        %1746 = vmatpush.xpose.msra.mxu0 0.0
        %1747 = vmatpush.xpose.msra.mxu0 0.0
        %1748 = vmatpush.xpose.msra.mxu0 0.0
        %1749 = vmatpush.xpose.msra.mxu0 0.0
        %1750 = vmatpush.xpose.msra.mxu0 0.0
        %1751 = vmatpush.xpose.msra.mxu0 0.0
        %1752 = vmatpush.xpose.msra.mxu0 %v1737
        %1753 = vmatpush.xpose.msra.mxu0 %v1734
        %1754 = vmatpush.xpose.msra.mxu0 %v1731
        %1755 = vmatmul.f32.gmra.mxu0 %v1722
        %v1756 = vpop.f32.mrf.mxu0
        %v1757 = vadd.f32 0.0, %v1756
        %1758 = vmatmul.f32.gmra.mxu0 %v1725
        %v1759 = vpop.f32.mrf.mxu0
        %v1760 = vadd.f32 0.0, %v1759
        %1761 = vmatmul.f32.gmra.mxu0 %v1728
        %v1762 = vpop.f32.mrf.mxu0
        %v1763 = vadd.f32 0.0, %v1762
        %1764 = vdwg.mxu0
        %v1765 = vmul.f32 %v1757, 0.5
        %v1766 = vmul.f32 %v1760, 0.5
        %v1767 = vmul.f32 %v1763, 0.5
        %v1768 = vsel %vm847, %v1765, -inf
        %1769 = vmax.xlane.f32.xlu0 %v1768
        %v1770 = vpop.xlane.xlu0 %1769
        %v1771 = vsel %vm847, %v1766, -inf
        %1772 = vmax.xlane.f32.xlu0 %v1771
        %v1773 = vpop.xlane.xlu0 %1772
        %v1774 = vsel %vm854, %v1767, -inf
        %1775 = vmax.xlane.f32.xlu0 %v1774
        %v1776 = vpop.xlane.xlu0 %1775
        %v1777 = vsub.f32 %v1765, %v1770
        %v1778 = vsub.f32 %v1766, %v1773
        %v1779 = vsub.f32 %v1767, %v1776
        %v1780 = vmul.f32 %v1777, 1.442695
        %v1781 = vpow.pop %v1780
        %v1782 = vmul.f32 %v1778, 1.442695
        %v1783 = vpow.pop %v1782
        %v1784 = vmul.f32 %v1779, 1.442695
        %v1785 = vpow.pop %v1784
        %v1786 = vsel %vm847, %v1781, 0.0
        %1787 = vadd.xlane.f32.xlu0 %v1786
        %v1788 = vpop.xlane.xlu0 %1787
        %v1789 = vsel %vm847, %v1783, 0.0
        %1790 = vadd.xlane.f32.xlu0 %v1789
        %v1791 = vpop.xlane.xlu0 %1790
        %v1792 = vsel %vm854, %v1785, 0.0
        %1793 = vadd.xlane.f32.xlu0 %v1792
        %v1794 = vpop.xlane.xlu0 %1793
        %v1795 = vrcp.pop %v1788
        %v1796 = vmul.f32 %v1788, %v1795
        %v1797 = vsub.f32 1.0, %v1796
        %v1798 = vmul.f32 %v1795, %v1797
        %v1799 = vadd.f32 %v1795, %v1798
        %vm1800 = vweird.f32 %v1788
        %vm1801 = vweird.f32 %v1795
        %vm1802 = vmor %vm1800, %vm1801
        %v1803 = vsel %vm1802, %v1795, %v1799
        %v1804 = vand.u32 2147483647, %v1788
        %vm1805 = vcmp.eq.f32.partialorder %v1804, 8.507059e+37
        %v1806 = vand.u32 %v1788, 2147483648
        %v1807 = vor.u32 1.1754944e-38, %v1806
        %v1808 = vsel %vm1805, %v1807, %v1803
        %v1809 = vmul.f32 %v1781, %v1808
        %v1810 = vrcp.pop %v1791
        %v1811 = vmul.f32 %v1791, %v1810
        %v1812 = vsub.f32 1.0, %v1811
        %v1813 = vmul.f32 %v1810, %v1812
        %v1814 = vadd.f32 %v1810, %v1813
        %vm1815 = vweird.f32 %v1791
        %vm1816 = vweird.f32 %v1810
        %vm1817 = vmor %vm1815, %vm1816
        %v1818 = vsel %vm1817, %v1810, %v1814
        %v1819 = vand.u32 2147483647, %v1791
        %vm1820 = vcmp.eq.f32.partialorder %v1819, 8.507059e+37
        %v1821 = vand.u32 %v1791, 2147483648
        %v1822 = vor.u32 1.1754944e-38, %v1821
        %v1823 = vsel %vm1820, %v1822, %v1818
        %v1824 = vmul.f32 %v1783, %v1823
        %v1825 = vrcp.pop %v1794
        %v1826 = vmul.f32 %v1794, %v1825
        %v1827 = vsub.f32 1.0, %v1826
        %v1828 = vmul.f32 %v1825, %v1827
        %v1829 = vadd.f32 %v1825, %v1828
        %vm1830 = vweird.f32 %v1794
        %vm1831 = vweird.f32 %v1825
        %vm1832 = vmor %vm1830, %vm1831
        %v1833 = vsel %vm1832, %v1825, %v1829
        %v1834 = vand.u32 2147483647, %v1794
        %vm1835 = vcmp.eq.f32.partialorder %v1834, 8.507059e+37
        %v1836 = vand.u32 %v1794, 2147483648
        %v1837 = vor.u32 1.1754944e-38, %v1836
        %v1838 = vsel %vm1835, %v1837, %v1833
        %v1839 = vmul.f32 %v1785, %v1838
        %v1841 = vsel %vm847, %v1809, 0
        %v1844 = vsel %vm847, %v1824, 0
        %v1847 = vsel %vm847, %v1839, 0
        %v1850 = vsel %vm930, %v1719, 0
        %1852 = vmatpush.msra.mxu0 0.0
        %1853 = vmatpush.msra.mxu0 0.0
        %1854 = vmatpush.msra.mxu0 0.0
        %1855 = vmatpush.msra.mxu0 0.0
        %1856 = vmatpush.msra.mxu0 0.0
        %1857 = vmatpush.msra.mxu0 0.0
        %1858 = vmatpush.msra.mxu0 0.0
        %1859 = vmatpush.msra.mxu0 0.0
        %1860 = vmatpush.msra.mxu0 0.0
        %1861 = vmatpush.msra.mxu0 0.0
        %1862 = vmatpush.msra.mxu0 0.0
        %1863 = vmatpush.msra.mxu0 0.0
        %1864 = vmatpush.msra.mxu0 0.0
        %1865 = vmatpush.msra.mxu0 %v1850
        %1866 = vmatpush.msra.mxu0 %v1716
        %1867 = vmatpush.msra.mxu0 %v1713
        %1868 = vmatmul.f32.gmra.mxu0 %v1841
        %v1869 = vpop.f32.mrf.mxu0
        %v1870 = vadd.f32 0.0, %v1869
        %1871 = vmatmul.f32.gmra.mxu0 %v1844
        %v1872 = vpop.f32.mrf.mxu0
        %v1873 = vadd.f32 0.0, %v1872
        %1874 = vmatmul.f32.gmra.mxu0 %v1847
        %v1875 = vpop.f32.mrf.mxu0
        %v1876 = vadd.f32 0.0, %v1875
        %1877 = vdwg.mxu0
        %s1878 = scalar_lea.vmem [#allocation2], 12
        %v1879 = vld [vmem:[%s1878] sm:$0xf]
        %v1881 = vsel %vm799, %v1870, 0
        %v1884 = vsel %vm799, %v1873, 0
        %v1887 = vsel %vm799, %v1876, 0
        %v1890 = vsel %vm1237, %v1879, 0
        %1892 = vmatpush.msra.mxu0 0.0
        %1893 = vmatpush.msra.mxu0 0.0
        %1894 = vmatpush.msra.mxu0 0.0
        %1895 = vmatpush.msra.mxu0 0.0
        %1896 = vmatpush.msra.mxu0 0.0
        %1897 = vmatpush.msra.mxu0 0.0
        %1898 = vmatpush.msra.mxu0 0.0
        %1899 = vmatpush.msra.mxu0 0.0
        %1900 = vmatpush.msra.mxu0 0.0
        %1901 = vmatpush.msra.mxu0 0.0
        %1902 = vmatpush.msra.mxu0 0.0
        %1903 = vmatpush.msra.mxu0 0.0
        %1904 = vmatpush.msra.mxu0 0.0
        %1905 = vmatpush.msra.mxu0 0.0
        %1906 = vmatpush.msra.mxu0 0.0
        %1907 = vmatpush.msra.mxu0 %v1890
        %1908 = vmatmul.f32.gmra.mxu0 %v1881
        %v1909 = vpop.f32.mrf.mxu0
        %v1910 = vadd.f32 0.0, %v1909
        %1911 = vmatmul.f32.gmra.mxu0 %v1884
        %v1912 = vpop.f32.mrf.mxu0
        %v1913 = vadd.f32 0.0, %v1912
        %1914 = vmatmul.f32.gmra.mxu0 %v1887
        %v1915 = vpop.f32.mrf.mxu0
        %v1916 = vadd.f32 0.0, %v1915
        %1917 = vdwg.mxu0
        %v1918 = vadd.f32 %v1610, %v1910
        %v1919 = vadd.f32 %v1611, %v1913
        %v1920 = vadd.f32 %v1612, %v1916
        %s1921 = scalar_lea.vmem %s1, 128
        %v1922 = vld [vmem:[%s1921] sm:$0xff]
        %v1923 = vld [vmem:[%s1921 + $0x8] sm:$0xff]
        %v1924 = vld [vmem:[%s1921 + $0x10] sm:$0xff]
        %v1925 = vld [vmem:[%s1921 + $0x18] sm:$0xff]
        %s1926 = scalar_lea.vmem %s2, 4
        %v1927 = vld [vmem:[%s1926] sm:$0x1]
        %v1929 = vperm.slane %v1927, 0
        %1931 = vmatpush.msra.mxu0 0.0
        %1932 = vmatpush.msra.mxu0 0.0
        %1933 = vmatpush.msra.mxu0 0.0
        %1934 = vmatpush.msra.mxu0 0.0
        %1935 = vmatpush.msra.mxu0 0.0
        %1936 = vmatpush.msra.mxu0 0.0
        %1937 = vmatpush.msra.mxu0 0.0
        %1938 = vmatpush.msra.mxu0 0.0
        %1939 = vmatpush.msra.mxu0 0.0
        %1940 = vmatpush.msra.mxu0 0.0
        %1941 = vmatpush.msra.mxu0 0.0
        %1942 = vmatpush.msra.mxu0 0.0
        %1943 = vmatpush.msra.mxu0 %v1925
        %1944 = vmatpush.msra.mxu0 %v1924
        %1945 = vmatpush.msra.mxu0 %v1923
        %1946 = vmatpush.msra.mxu0 %v1922
        %1947 = vmatmul.f32.gmra.mxu0 %v697
        %v1948 = vpop.f32.mrf.mxu0
        %v1949 = vadd.f32 %v1929, %v1948
        %1950 = vmatmul.f32.gmra.mxu0 %v700
        %v1951 = vpop.f32.mrf.mxu0
        %v1952 = vadd.f32 %v1929, %v1951
        %1953 = vmatmul.f32.gmra.mxu0 %v703
        %v1954 = vpop.f32.mrf.mxu0
        %v1955 = vadd.f32 %v1929, %v1954
        %1956 = vdwg.mxu0
        %s1957 = scalar_lea.vmem %s3, 128
        %v1958 = vld [vmem:[%s1957] sm:$0xff]
        %v1959 = vld [vmem:[%s1957 + $0x8] sm:$0xff]
        %v1960 = vld [vmem:[%s1957 + $0x10] sm:$0xff]
        %v1961 = vld [vmem:[%s1957 + $0x18] sm:$0xff]
        %s1962 = scalar_lea.vmem %s4, 4
        %v1963 = vld [vmem:[%s1962] sm:$0x1]
        %v1965 = vperm.slane %v1963, 0
        %1967 = vmatpush.msra.mxu0 0.0
        %1968 = vmatpush.msra.mxu0 0.0
        %1969 = vmatpush.msra.mxu0 0.0
        %1970 = vmatpush.msra.mxu0 0.0
        %1971 = vmatpush.msra.mxu0 0.0
        %1972 = vmatpush.msra.mxu0 0.0
        %1973 = vmatpush.msra.mxu0 0.0
        %1974 = vmatpush.msra.mxu0 0.0
        %1975 = vmatpush.msra.mxu0 0.0
        %1976 = vmatpush.msra.mxu0 0.0
        %1977 = vmatpush.msra.mxu0 0.0
        %1978 = vmatpush.msra.mxu0 0.0
        %1979 = vmatpush.msra.mxu0 %v1961
        %1980 = vmatpush.msra.mxu0 %v1960
        %1981 = vmatpush.msra.mxu0 %v1959
        %1982 = vmatpush.msra.mxu0 %v1958
        %1983 = vmatmul.f32.gmra.mxu0 %v697
        %v1984 = vpop.f32.mrf.mxu0
        %v1985 = vadd.f32 %v1965, %v1984
        %1986 = vmatmul.f32.gmra.mxu0 %v700
        %v1987 = vpop.f32.mrf.mxu0
        %v1988 = vadd.f32 %v1965, %v1987
        %1989 = vmatmul.f32.gmra.mxu0 %v703
        %v1990 = vpop.f32.mrf.mxu0
        %v1991 = vadd.f32 %v1965, %v1990
        %1992 = vdwg.mxu0
        %s1993 = scalar_lea.vmem %s5, 128
        %v1994 = vld [vmem:[%s1993] sm:$0xff]
        %v1995 = vld [vmem:[%s1993 + $0x8] sm:$0xff]
        %v1996 = vld [vmem:[%s1993 + $0x10] sm:$0xff]
        %v1997 = vld [vmem:[%s1993 + $0x18] sm:$0xff]
        %s1998 = scalar_lea.vmem %s6, 4
        %v1999 = vld [vmem:[%s1998] sm:$0x1]
        %v2001 = vperm.slane %v1999, 0
        %2003 = vmatpush.msra.mxu0 0.0
        %2004 = vmatpush.msra.mxu0 0.0
        %2005 = vmatpush.msra.mxu0 0.0
        %2006 = vmatpush.msra.mxu0 0.0
        %2007 = vmatpush.msra.mxu0 0.0
        %2008 = vmatpush.msra.mxu0 0.0
        %2009 = vmatpush.msra.mxu0 0.0
        %2010 = vmatpush.msra.mxu0 0.0
        %2011 = vmatpush.msra.mxu0 0.0
        %2012 = vmatpush.msra.mxu0 0.0
        %2013 = vmatpush.msra.mxu0 0.0
        %2014 = vmatpush.msra.mxu0 0.0
        %2015 = vmatpush.msra.mxu0 %v1997
        %2016 = vmatpush.msra.mxu0 %v1996
        %2017 = vmatpush.msra.mxu0 %v1995
        %2018 = vmatpush.msra.mxu0 %v1994
        %2019 = vmatmul.f32.gmra.mxu0 %v697
        %v2020 = vpop.f32.mrf.mxu0
        %v2021 = vadd.f32 %v2001, %v2020
        %2022 = vmatmul.f32.gmra.mxu0 %v700
        %v2023 = vpop.f32.mrf.mxu0
        %v2024 = vadd.f32 %v2001, %v2023
        %2025 = vmatmul.f32.gmra.mxu0 %v703
        %v2026 = vpop.f32.mrf.mxu0
        %v2027 = vadd.f32 %v2001, %v2026
        %2028 = vdwg.mxu0
        %v2030 = vsel %vm799, %v1949, 0
        %v2033 = vsel %vm799, %v1952, 0
        %v2036 = vsel %vm799, %v1955, 0
        %v2039 = vsel %vm799, %v1985, 0
        %v2042 = vsel %vm799, %v1988, 0
        %v2045 = vsel %vm799, %v1991, 0
        %2047 = vmatpush.xpose.msra.mxu0 0.0
        %2048 = vmatpush.xpose.msra.mxu0 0.0
        %2049 = vmatpush.xpose.msra.mxu0 0.0
        %2050 = vmatpush.xpose.msra.mxu0 0.0
        %2051 = vmatpush.xpose.msra.mxu0 0.0
        %2052 = vmatpush.xpose.msra.mxu0 0.0
        %2053 = vmatpush.xpose.msra.mxu0 0.0
        %2054 = vmatpush.xpose.msra.mxu0 0.0
        %2055 = vmatpush.xpose.msra.mxu0 0.0
        %2056 = vmatpush.xpose.msra.mxu0 0.0
        %2057 = vmatpush.xpose.msra.mxu0 0.0
        %2058 = vmatpush.xpose.msra.mxu0 0.0
        %2059 = vmatpush.xpose.msra.mxu0 0.0
        %2060 = vmatpush.xpose.msra.mxu0 %v2045
        %2061 = vmatpush.xpose.msra.mxu0 %v2042
        %2062 = vmatpush.xpose.msra.mxu0 %v2039
        %2063 = vmatmul.f32.gmra.mxu0 %v2030
        %v2064 = vpop.f32.mrf.mxu0
        %v2065 = vadd.f32 0.0, %v2064
        %2066 = vmatmul.f32.gmra.mxu0 %v2033
        %v2067 = vpop.f32.mrf.mxu0
        %v2068 = vadd.f32 0.0, %v2067
        %2069 = vmatmul.f32.gmra.mxu0 %v2036
        %v2070 = vpop.f32.mrf.mxu0
        %v2071 = vadd.f32 0.0, %v2070
        %2072 = vdwg.mxu0
        %v2073 = vmul.f32 %v2065, 0.5
        %v2074 = vmul.f32 %v2068, 0.5
        %v2075 = vmul.f32 %v2071, 0.5
        %v2076 = vsel %vm847, %v2073, -inf
        %2077 = vmax.xlane.f32.xlu0 %v2076
        %v2078 = vpop.xlane.xlu0 %2077
        %v2079 = vsel %vm847, %v2074, -inf
        %2080 = vmax.xlane.f32.xlu0 %v2079
        %v2081 = vpop.xlane.xlu0 %2080
        %v2082 = vsel %vm854, %v2075, -inf
        %2083 = vmax.xlane.f32.xlu0 %v2082
        %v2084 = vpop.xlane.xlu0 %2083
        %v2085 = vsub.f32 %v2073, %v2078
        %v2086 = vsub.f32 %v2074, %v2081
        %v2087 = vsub.f32 %v2075, %v2084
        %v2088 = vmul.f32 %v2085, 1.442695
        %v2089 = vpow.pop %v2088
        %v2090 = vmul.f32 %v2086, 1.442695
        %v2091 = vpow.pop %v2090
        %v2092 = vmul.f32 %v2087, 1.442695
        %v2093 = vpow.pop %v2092
        %v2094 = vsel %vm847, %v2089, 0.0
        %2095 = vadd.xlane.f32.xlu0 %v2094
        %v2096 = vpop.xlane.xlu0 %2095
        %v2097 = vsel %vm847, %v2091, 0.0
        %2098 = vadd.xlane.f32.xlu0 %v2097
        %v2099 = vpop.xlane.xlu0 %2098
        %v2100 = vsel %vm854, %v2093, 0.0
        %2101 = vadd.xlane.f32.xlu0 %v2100
        %v2102 = vpop.xlane.xlu0 %2101
        %v2103 = vrcp.pop %v2096
        %v2104 = vmul.f32 %v2096, %v2103
        %v2105 = vsub.f32 1.0, %v2104
        %v2106 = vmul.f32 %v2103, %v2105
        %v2107 = vadd.f32 %v2103, %v2106
        %vm2108 = vweird.f32 %v2096
        %vm2109 = vweird.f32 %v2103
        %vm2110 = vmor %vm2108, %vm2109
        %v2111 = vsel %vm2110, %v2103, %v2107
        %v2112 = vand.u32 2147483647, %v2096
        %vm2113 = vcmp.eq.f32.partialorder %v2112, 8.507059e+37
        %v2114 = vand.u32 %v2096, 2147483648
        %v2115 = vor.u32 1.1754944e-38, %v2114
        %v2116 = vsel %vm2113, %v2115, %v2111
        %v2117 = vmul.f32 %v2089, %v2116
        %v2118 = vrcp.pop %v2099
        %v2119 = vmul.f32 %v2099, %v2118
        %v2120 = vsub.f32 1.0, %v2119
        %v2121 = vmul.f32 %v2118, %v2120
        %v2122 = vadd.f32 %v2118, %v2121
        %vm2123 = vweird.f32 %v2099
        %vm2124 = vweird.f32 %v2118
        %vm2125 = vmor %vm2123, %vm2124
        %v2126 = vsel %vm2125, %v2118, %v2122
        %v2127 = vand.u32 2147483647, %v2099
        %vm2128 = vcmp.eq.f32.partialorder %v2127, 8.507059e+37
        %v2129 = vand.u32 %v2099, 2147483648
        %v2130 = vor.u32 1.1754944e-38, %v2129
        %v2131 = vsel %vm2128, %v2130, %v2126
        %v2132 = vmul.f32 %v2091, %v2131
        %v2133 = vrcp.pop %v2102
        %v2134 = vmul.f32 %v2102, %v2133
        %v2135 = vsub.f32 1.0, %v2134
        %v2136 = vmul.f32 %v2133, %v2135
        %v2137 = vadd.f32 %v2133, %v2136
        %vm2138 = vweird.f32 %v2102
        %vm2139 = vweird.f32 %v2133
        %vm2140 = vmor %vm2138, %vm2139
        %v2141 = vsel %vm2140, %v2133, %v2137
        %v2142 = vand.u32 2147483647, %v2102
        %vm2143 = vcmp.eq.f32.partialorder %v2142, 8.507059e+37
        %v2144 = vand.u32 %v2102, 2147483648
        %v2145 = vor.u32 1.1754944e-38, %v2144
        %v2146 = vsel %vm2143, %v2145, %v2141
        %v2147 = vmul.f32 %v2093, %v2146
        %v2149 = vsel %vm847, %v2117, 0
        %v2152 = vsel %vm847, %v2132, 0
        %v2155 = vsel %vm847, %v2147, 0
        %v2158 = vsel %vm930, %v2027, 0
        %2160 = vmatpush.msra.mxu0 0.0
        %2161 = vmatpush.msra.mxu0 0.0
        %2162 = vmatpush.msra.mxu0 0.0
        %2163 = vmatpush.msra.mxu0 0.0
        %2164 = vmatpush.msra.mxu0 0.0
        %2165 = vmatpush.msra.mxu0 0.0
        %2166 = vmatpush.msra.mxu0 0.0
        %2167 = vmatpush.msra.mxu0 0.0
        %2168 = vmatpush.msra.mxu0 0.0
        %2169 = vmatpush.msra.mxu0 0.0
        %2170 = vmatpush.msra.mxu0 0.0
        %2171 = vmatpush.msra.mxu0 0.0
        %2172 = vmatpush.msra.mxu0 0.0
        %2173 = vmatpush.msra.mxu0 %v2158
        %2174 = vmatpush.msra.mxu0 %v2024
        %2175 = vmatpush.msra.mxu0 %v2021
        %2176 = vmatmul.f32.gmra.mxu0 %v2149
        %v2177 = vpop.f32.mrf.mxu0
        %v2178 = vadd.f32 0.0, %v2177
        %2179 = vmatmul.f32.gmra.mxu0 %v2152
        %v2180 = vpop.f32.mrf.mxu0
        %v2181 = vadd.f32 0.0, %v2180
        %2182 = vmatmul.f32.gmra.mxu0 %v2155
        %v2183 = vpop.f32.mrf.mxu0
        %v2184 = vadd.f32 0.0, %v2183
        %2185 = vdwg.mxu0
        %s2186 = scalar_lea.vmem [#allocation2], 16
        %v2187 = vld [vmem:[%s2186] sm:$0xf]
        %v2189 = vsel %vm799, %v2178, 0
        %v2192 = vsel %vm799, %v2181, 0
        %v2195 = vsel %vm799, %v2184, 0
        %v2198 = vsel %vm1237, %v2187, 0
        %2200 = vmatpush.msra.mxu0 0.0
        %2201 = vmatpush.msra.mxu0 0.0
        %2202 = vmatpush.msra.mxu0 0.0
        %2203 = vmatpush.msra.mxu0 0.0
        %2204 = vmatpush.msra.mxu0 0.0
        %2205 = vmatpush.msra.mxu0 0.0
        %2206 = vmatpush.msra.mxu0 0.0
        %2207 = vmatpush.msra.mxu0 0.0
        %2208 = vmatpush.msra.mxu0 0.0
        %2209 = vmatpush.msra.mxu0 0.0
        %2210 = vmatpush.msra.mxu0 0.0
        %2211 = vmatpush.msra.mxu0 0.0
        %2212 = vmatpush.msra.mxu0 0.0
        %2213 = vmatpush.msra.mxu0 0.0
        %2214 = vmatpush.msra.mxu0 0.0
        %2215 = vmatpush.msra.mxu0 %v2198
        %2216 = vmatmul.f32.gmra.mxu0 %v2189
        %v2217 = vpop.f32.mrf.mxu0
        %v2218 = vadd.f32 0.0, %v2217
        %2219 = vmatmul.f32.gmra.mxu0 %v2192
        %v2220 = vpop.f32.mrf.mxu0
        %v2221 = vadd.f32 0.0, %v2220
        %2222 = vmatmul.f32.gmra.mxu0 %v2195
        %v2223 = vpop.f32.mrf.mxu0
        %v2224 = vadd.f32 0.0, %v2223
        %2225 = vdwg.mxu0
        %v2226 = vadd.f32 %v1918, %v2218
        %v2227 = vadd.f32 %v1919, %v2221
        %v2228 = vadd.f32 %v1920, %v2224
        %s2229 = scalar_lea.vmem %s1, 160
        %v2230 = vld [vmem:[%s2229] sm:$0xff]
        %v2231 = vld [vmem:[%s2229 + $0x8] sm:$0xff]
        %v2232 = vld [vmem:[%s2229 + $0x10] sm:$0xff]
        %v2233 = vld [vmem:[%s2229 + $0x18] sm:$0xff]
        %s2234 = scalar_lea.vmem %s2, 5
        %v2235 = vld [vmem:[%s2234] sm:$0x1]
        %v2237 = vperm.slane %v2235, 0
        %2239 = vmatpush.msra.mxu0 0.0
        %2240 = vmatpush.msra.mxu0 0.0
        %2241 = vmatpush.msra.mxu0 0.0
        %2242 = vmatpush.msra.mxu0 0.0
        %2243 = vmatpush.msra.mxu0 0.0
        %2244 = vmatpush.msra.mxu0 0.0
        %2245 = vmatpush.msra.mxu0 0.0
        %2246 = vmatpush.msra.mxu0 0.0
        %2247 = vmatpush.msra.mxu0 0.0
        %2248 = vmatpush.msra.mxu0 0.0
        %2249 = vmatpush.msra.mxu0 0.0
        %2250 = vmatpush.msra.mxu0 0.0
        %2251 = vmatpush.msra.mxu0 %v2233
        %2252 = vmatpush.msra.mxu0 %v2232
        %2253 = vmatpush.msra.mxu0 %v2231
        %2254 = vmatpush.msra.mxu0 %v2230
        %2255 = vmatmul.f32.gmra.mxu0 %v697
        %v2256 = vpop.f32.mrf.mxu0
        %v2257 = vadd.f32 %v2237, %v2256
        %2258 = vmatmul.f32.gmra.mxu0 %v700
        %v2259 = vpop.f32.mrf.mxu0
        %v2260 = vadd.f32 %v2237, %v2259
        %2261 = vmatmul.f32.gmra.mxu0 %v703
        %v2262 = vpop.f32.mrf.mxu0
        %v2263 = vadd.f32 %v2237, %v2262
        %2264 = vdwg.mxu0
        %s2265 = scalar_lea.vmem %s3, 160
        %v2266 = vld [vmem:[%s2265] sm:$0xff]
        %v2267 = vld [vmem:[%s2265 + $0x8] sm:$0xff]
        %v2268 = vld [vmem:[%s2265 + $0x10] sm:$0xff]
        %v2269 = vld [vmem:[%s2265 + $0x18] sm:$0xff]
        %s2270 = scalar_lea.vmem %s4, 5
        %v2271 = vld [vmem:[%s2270] sm:$0x1]
        %v2273 = vperm.slane %v2271, 0
        %2275 = vmatpush.msra.mxu0 0.0
        %2276 = vmatpush.msra.mxu0 0.0
        %2277 = vmatpush.msra.mxu0 0.0
        %2278 = vmatpush.msra.mxu0 0.0
        %2279 = vmatpush.msra.mxu0 0.0
        %2280 = vmatpush.msra.mxu0 0.0
        %2281 = vmatpush.msra.mxu0 0.0
        %2282 = vmatpush.msra.mxu0 0.0
        %2283 = vmatpush.msra.mxu0 0.0
        %2284 = vmatpush.msra.mxu0 0.0
        %2285 = vmatpush.msra.mxu0 0.0
        %2286 = vmatpush.msra.mxu0 0.0
        %2287 = vmatpush.msra.mxu0 %v2269
        %2288 = vmatpush.msra.mxu0 %v2268
        %2289 = vmatpush.msra.mxu0 %v2267
        %2290 = vmatpush.msra.mxu0 %v2266
        %2291 = vmatmul.f32.gmra.mxu0 %v697
        %v2292 = vpop.f32.mrf.mxu0
        %v2293 = vadd.f32 %v2273, %v2292
        %2294 = vmatmul.f32.gmra.mxu0 %v700
        %v2295 = vpop.f32.mrf.mxu0
        %v2296 = vadd.f32 %v2273, %v2295
        %2297 = vmatmul.f32.gmra.mxu0 %v703
        %v2298 = vpop.f32.mrf.mxu0
        %v2299 = vadd.f32 %v2273, %v2298
        %2300 = vdwg.mxu0
        %s2301 = scalar_lea.vmem %s5, 160
        %v2302 = vld [vmem:[%s2301] sm:$0xff]
        %v2303 = vld [vmem:[%s2301 + $0x8] sm:$0xff]
        %v2304 = vld [vmem:[%s2301 + $0x10] sm:$0xff]
        %v2305 = vld [vmem:[%s2301 + $0x18] sm:$0xff]
        %s2306 = scalar_lea.vmem %s6, 5
        %v2307 = vld [vmem:[%s2306] sm:$0x1]
        %v2309 = vperm.slane %v2307, 0
        %2311 = vmatpush.msra.mxu0 0.0
        %2312 = vmatpush.msra.mxu0 0.0
        %2313 = vmatpush.msra.mxu0 0.0
        %2314 = vmatpush.msra.mxu0 0.0
        %2315 = vmatpush.msra.mxu0 0.0
        %2316 = vmatpush.msra.mxu0 0.0
        %2317 = vmatpush.msra.mxu0 0.0
        %2318 = vmatpush.msra.mxu0 0.0
        %2319 = vmatpush.msra.mxu0 0.0
        %2320 = vmatpush.msra.mxu0 0.0
        %2321 = vmatpush.msra.mxu0 0.0
        %2322 = vmatpush.msra.mxu0 0.0
        %2323 = vmatpush.msra.mxu0 %v2305
        %2324 = vmatpush.msra.mxu0 %v2304
        %2325 = vmatpush.msra.mxu0 %v2303
        %2326 = vmatpush.msra.mxu0 %v2302
        %2327 = vmatmul.f32.gmra.mxu0 %v697
        %v2328 = vpop.f32.mrf.mxu0
        %v2329 = vadd.f32 %v2309, %v2328
        %2330 = vmatmul.f32.gmra.mxu0 %v700
        %v2331 = vpop.f32.mrf.mxu0
        %v2332 = vadd.f32 %v2309, %v2331
        %2333 = vmatmul.f32.gmra.mxu0 %v703
        %v2334 = vpop.f32.mrf.mxu0
        %v2335 = vadd.f32 %v2309, %v2334
        %2336 = vdwg.mxu0
        %v2338 = vsel %vm799, %v2257, 0
        %v2341 = vsel %vm799, %v2260, 0
        %v2344 = vsel %vm799, %v2263, 0
        %v2347 = vsel %vm799, %v2293, 0
        %v2350 = vsel %vm799, %v2296, 0
        %v2353 = vsel %vm799, %v2299, 0
        %2355 = vmatpush.xpose.msra.mxu0 0.0
        %2356 = vmatpush.xpose.msra.mxu0 0.0
        %2357 = vmatpush.xpose.msra.mxu0 0.0
        %2358 = vmatpush.xpose.msra.mxu0 0.0
        %2359 = vmatpush.xpose.msra.mxu0 0.0
        %2360 = vmatpush.xpose.msra.mxu0 0.0
        %2361 = vmatpush.xpose.msra.mxu0 0.0
        %2362 = vmatpush.xpose.msra.mxu0 0.0
        %2363 = vmatpush.xpose.msra.mxu0 0.0
        %2364 = vmatpush.xpose.msra.mxu0 0.0
        %2365 = vmatpush.xpose.msra.mxu0 0.0
        %2366 = vmatpush.xpose.msra.mxu0 0.0
        %2367 = vmatpush.xpose.msra.mxu0 0.0
        %2368 = vmatpush.xpose.msra.mxu0 %v2353
        %2369 = vmatpush.xpose.msra.mxu0 %v2350
        %2370 = vmatpush.xpose.msra.mxu0 %v2347
        %2371 = vmatmul.f32.gmra.mxu0 %v2338
        %v2372 = vpop.f32.mrf.mxu0
        %v2373 = vadd.f32 0.0, %v2372
        %2374 = vmatmul.f32.gmra.mxu0 %v2341
        %v2375 = vpop.f32.mrf.mxu0
        %v2376 = vadd.f32 0.0, %v2375
        %2377 = vmatmul.f32.gmra.mxu0 %v2344
        %v2378 = vpop.f32.mrf.mxu0
        %v2379 = vadd.f32 0.0, %v2378
        %2380 = vdwg.mxu0
        %v2381 = vmul.f32 %v2373, 0.5
        %v2382 = vmul.f32 %v2376, 0.5
        %v2383 = vmul.f32 %v2379, 0.5
        %v2384 = vsel %vm847, %v2381, -inf
        %2385 = vmax.xlane.f32.xlu0 %v2384
        %v2386 = vpop.xlane.xlu0 %2385
        %v2387 = vsel %vm847, %v2382, -inf
        %2388 = vmax.xlane.f32.xlu0 %v2387
        %v2389 = vpop.xlane.xlu0 %2388
        %v2390 = vsel %vm854, %v2383, -inf
        %2391 = vmax.xlane.f32.xlu0 %v2390
        %v2392 = vpop.xlane.xlu0 %2391
        %v2393 = vsub.f32 %v2381, %v2386
        %v2394 = vsub.f32 %v2382, %v2389
        %v2395 = vsub.f32 %v2383, %v2392
        %v2396 = vmul.f32 %v2393, 1.442695
        %v2397 = vpow.pop %v2396
        %v2398 = vmul.f32 %v2394, 1.442695
        %v2399 = vpow.pop %v2398
        %v2400 = vmul.f32 %v2395, 1.442695
        %v2401 = vpow.pop %v2400
        %v2402 = vsel %vm847, %v2397, 0.0
        %2403 = vadd.xlane.f32.xlu0 %v2402
        %v2404 = vpop.xlane.xlu0 %2403
        %v2405 = vsel %vm847, %v2399, 0.0
        %2406 = vadd.xlane.f32.xlu0 %v2405
        %v2407 = vpop.xlane.xlu0 %2406
        %v2408 = vsel %vm854, %v2401, 0.0
        %2409 = vadd.xlane.f32.xlu0 %v2408
        %v2410 = vpop.xlane.xlu0 %2409
        %v2411 = vrcp.pop %v2404
        %v2412 = vmul.f32 %v2404, %v2411
        %v2413 = vsub.f32 1.0, %v2412
        %v2414 = vmul.f32 %v2411, %v2413
        %v2415 = vadd.f32 %v2411, %v2414
        %vm2416 = vweird.f32 %v2404
        %vm2417 = vweird.f32 %v2411
        %vm2418 = vmor %vm2416, %vm2417
        %v2419 = vsel %vm2418, %v2411, %v2415
        %v2420 = vand.u32 2147483647, %v2404
        %vm2421 = vcmp.eq.f32.partialorder %v2420, 8.507059e+37
        %v2422 = vand.u32 %v2404, 2147483648
        %v2423 = vor.u32 1.1754944e-38, %v2422
        %v2424 = vsel %vm2421, %v2423, %v2419
        %v2425 = vmul.f32 %v2397, %v2424
        %v2426 = vrcp.pop %v2407
        %v2427 = vmul.f32 %v2407, %v2426
        %v2428 = vsub.f32 1.0, %v2427
        %v2429 = vmul.f32 %v2426, %v2428
        %v2430 = vadd.f32 %v2426, %v2429
        %vm2431 = vweird.f32 %v2407
        %vm2432 = vweird.f32 %v2426
        %vm2433 = vmor %vm2431, %vm2432
        %v2434 = vsel %vm2433, %v2426, %v2430
        %v2435 = vand.u32 2147483647, %v2407
        %vm2436 = vcmp.eq.f32.partialorder %v2435, 8.507059e+37
        %v2437 = vand.u32 %v2407, 2147483648
        %v2438 = vor.u32 1.1754944e-38, %v2437
        %v2439 = vsel %vm2436, %v2438, %v2434
        %v2440 = vmul.f32 %v2399, %v2439
        %v2441 = vrcp.pop %v2410
        %v2442 = vmul.f32 %v2410, %v2441
        %v2443 = vsub.f32 1.0, %v2442
        %v2444 = vmul.f32 %v2441, %v2443
        %v2445 = vadd.f32 %v2441, %v2444
        %vm2446 = vweird.f32 %v2410
        %vm2447 = vweird.f32 %v2441
        %vm2448 = vmor %vm2446, %vm2447
        %v2449 = vsel %vm2448, %v2441, %v2445
        %v2450 = vand.u32 2147483647, %v2410
        %vm2451 = vcmp.eq.f32.partialorder %v2450, 8.507059e+37
        %v2452 = vand.u32 %v2410, 2147483648
        %v2453 = vor.u32 1.1754944e-38, %v2452
        %v2454 = vsel %vm2451, %v2453, %v2449
        %v2455 = vmul.f32 %v2401, %v2454
        %v2457 = vsel %vm847, %v2425, 0
        %v2460 = vsel %vm847, %v2440, 0
        %v2463 = vsel %vm847, %v2455, 0
        %v2466 = vsel %vm930, %v2335, 0
        %2468 = vmatpush.msra.mxu0 0.0
        %2469 = vmatpush.msra.mxu0 0.0
        %2470 = vmatpush.msra.mxu0 0.0
        %2471 = vmatpush.msra.mxu0 0.0
        %2472 = vmatpush.msra.mxu0 0.0
        %2473 = vmatpush.msra.mxu0 0.0
        %2474 = vmatpush.msra.mxu0 0.0
        %2475 = vmatpush.msra.mxu0 0.0
        %2476 = vmatpush.msra.mxu0 0.0
        %2477 = vmatpush.msra.mxu0 0.0
        %2478 = vmatpush.msra.mxu0 0.0
        %2479 = vmatpush.msra.mxu0 0.0
        %2480 = vmatpush.msra.mxu0 0.0
        %2481 = vmatpush.msra.mxu0 %v2466
        %2482 = vmatpush.msra.mxu0 %v2332
        %2483 = vmatpush.msra.mxu0 %v2329
        %2484 = vmatmul.f32.gmra.mxu0 %v2457
        %v2485 = vpop.f32.mrf.mxu0
        %v2486 = vadd.f32 0.0, %v2485
        %2487 = vmatmul.f32.gmra.mxu0 %v2460
        %v2488 = vpop.f32.mrf.mxu0
        %v2489 = vadd.f32 0.0, %v2488
        %2490 = vmatmul.f32.gmra.mxu0 %v2463
        %v2491 = vpop.f32.mrf.mxu0
        %v2492 = vadd.f32 0.0, %v2491
        %2493 = vdwg.mxu0
        %s2494 = scalar_lea.vmem [#allocation2], 20
        %v2495 = vld [vmem:[%s2494] sm:$0xf]
        %v2497 = vsel %vm799, %v2486, 0
        %v2500 = vsel %vm799, %v2489, 0
        %v2503 = vsel %vm799, %v2492, 0
        %v2506 = vsel %vm1237, %v2495, 0
        %2508 = vmatpush.msra.mxu0 0.0
        %2509 = vmatpush.msra.mxu0 0.0
        %2510 = vmatpush.msra.mxu0 0.0
        %2511 = vmatpush.msra.mxu0 0.0
        %2512 = vmatpush.msra.mxu0 0.0
        %2513 = vmatpush.msra.mxu0 0.0
        %2514 = vmatpush.msra.mxu0 0.0
        %2515 = vmatpush.msra.mxu0 0.0
        %2516 = vmatpush.msra.mxu0 0.0
        %2517 = vmatpush.msra.mxu0 0.0
        %2518 = vmatpush.msra.mxu0 0.0
        %2519 = vmatpush.msra.mxu0 0.0
        %2520 = vmatpush.msra.mxu0 0.0
        %2521 = vmatpush.msra.mxu0 0.0
        %2522 = vmatpush.msra.mxu0 0.0
        %2523 = vmatpush.msra.mxu0 %v2506
        %2524 = vmatmul.f32.gmra.mxu0 %v2497
        %v2525 = vpop.f32.mrf.mxu0
        %v2526 = vadd.f32 0.0, %v2525
        %2527 = vmatmul.f32.gmra.mxu0 %v2500
        %v2528 = vpop.f32.mrf.mxu0
        %v2529 = vadd.f32 0.0, %v2528
        %2530 = vmatmul.f32.gmra.mxu0 %v2503
        %v2531 = vpop.f32.mrf.mxu0
        %v2532 = vadd.f32 0.0, %v2531
        %2533 = vdwg.mxu0
        %v2534 = vadd.f32 %v2226, %v2526
        %v2535 = vadd.f32 %v2227, %v2529
        %v2536 = vadd.f32 %v2228, %v2532
        %s2537 = scalar_lea.vmem %s1, 192
        %v2538 = vld [vmem:[%s2537] sm:$0xff]
        %v2539 = vld [vmem:[%s2537 + $0x8] sm:$0xff]
        %v2540 = vld [vmem:[%s2537 + $0x10] sm:$0xff]
        %v2541 = vld [vmem:[%s2537 + $0x18] sm:$0xff]
        %s2542 = scalar_lea.vmem %s2, 6
        %v2543 = vld [vmem:[%s2542] sm:$0x1]
        %v2545 = vperm.slane %v2543, 0
        %2547 = vmatpush.msra.mxu0 0.0
        %2548 = vmatpush.msra.mxu0 0.0
        %2549 = vmatpush.msra.mxu0 0.0
        %2550 = vmatpush.msra.mxu0 0.0
        %2551 = vmatpush.msra.mxu0 0.0
        %2552 = vmatpush.msra.mxu0 0.0
        %2553 = vmatpush.msra.mxu0 0.0
        %2554 = vmatpush.msra.mxu0 0.0
        %2555 = vmatpush.msra.mxu0 0.0
        %2556 = vmatpush.msra.mxu0 0.0
        %2557 = vmatpush.msra.mxu0 0.0
        %2558 = vmatpush.msra.mxu0 0.0
        %2559 = vmatpush.msra.mxu0 %v2541
        %2560 = vmatpush.msra.mxu0 %v2540
        %2561 = vmatpush.msra.mxu0 %v2539
        %2562 = vmatpush.msra.mxu0 %v2538
        %2563 = vmatmul.f32.gmra.mxu0 %v697
        %v2564 = vpop.f32.mrf.mxu0
        %v2565 = vadd.f32 %v2545, %v2564
        %2566 = vmatmul.f32.gmra.mxu0 %v700
        %v2567 = vpop.f32.mrf.mxu0
        %v2568 = vadd.f32 %v2545, %v2567
        %2569 = vmatmul.f32.gmra.mxu0 %v703
        %v2570 = vpop.f32.mrf.mxu0
        %v2571 = vadd.f32 %v2545, %v2570
        %2572 = vdwg.mxu0
        %s2573 = scalar_lea.vmem %s3, 192
        %v2574 = vld [vmem:[%s2573] sm:$0xff]
        %v2575 = vld [vmem:[%s2573 + $0x8] sm:$0xff]
        %v2576 = vld [vmem:[%s2573 + $0x10] sm:$0xff]
        %v2577 = vld [vmem:[%s2573 + $0x18] sm:$0xff]
        %s2578 = scalar_lea.vmem %s4, 6
        %v2579 = vld [vmem:[%s2578] sm:$0x1]
        %v2581 = vperm.slane %v2579, 0
        %2583 = vmatpush.msra.mxu0 0.0
        %2584 = vmatpush.msra.mxu0 0.0
        %2585 = vmatpush.msra.mxu0 0.0
        %2586 = vmatpush.msra.mxu0 0.0
        %2587 = vmatpush.msra.mxu0 0.0
        %2588 = vmatpush.msra.mxu0 0.0
        %2589 = vmatpush.msra.mxu0 0.0
        %2590 = vmatpush.msra.mxu0 0.0
        %2591 = vmatpush.msra.mxu0 0.0
        %2592 = vmatpush.msra.mxu0 0.0
        %2593 = vmatpush.msra.mxu0 0.0
        %2594 = vmatpush.msra.mxu0 0.0
        %2595 = vmatpush.msra.mxu0 %v2577
        %2596 = vmatpush.msra.mxu0 %v2576
        %2597 = vmatpush.msra.mxu0 %v2575
        %2598 = vmatpush.msra.mxu0 %v2574
        %2599 = vmatmul.f32.gmra.mxu0 %v697
        %v2600 = vpop.f32.mrf.mxu0
        %v2601 = vadd.f32 %v2581, %v2600
        %2602 = vmatmul.f32.gmra.mxu0 %v700
        %v2603 = vpop.f32.mrf.mxu0
        %v2604 = vadd.f32 %v2581, %v2603
        %2605 = vmatmul.f32.gmra.mxu0 %v703
        %v2606 = vpop.f32.mrf.mxu0
        %v2607 = vadd.f32 %v2581, %v2606
        %2608 = vdwg.mxu0
        %s2609 = scalar_lea.vmem %s5, 192
        %v2610 = vld [vmem:[%s2609] sm:$0xff]
        %v2611 = vld [vmem:[%s2609 + $0x8] sm:$0xff]
        %v2612 = vld [vmem:[%s2609 + $0x10] sm:$0xff]
        %v2613 = vld [vmem:[%s2609 + $0x18] sm:$0xff]
        %s2614 = scalar_lea.vmem %s6, 6
        %v2615 = vld [vmem:[%s2614] sm:$0x1]
        %v2617 = vperm.slane %v2615, 0
        %2619 = vmatpush.msra.mxu0 0.0
        %2620 = vmatpush.msra.mxu0 0.0
        %2621 = vmatpush.msra.mxu0 0.0
        %2622 = vmatpush.msra.mxu0 0.0
        %2623 = vmatpush.msra.mxu0 0.0
        %2624 = vmatpush.msra.mxu0 0.0
        %2625 = vmatpush.msra.mxu0 0.0
        %2626 = vmatpush.msra.mxu0 0.0
        %2627 = vmatpush.msra.mxu0 0.0
        %2628 = vmatpush.msra.mxu0 0.0
        %2629 = vmatpush.msra.mxu0 0.0
        %2630 = vmatpush.msra.mxu0 0.0
        %2631 = vmatpush.msra.mxu0 %v2613
        %2632 = vmatpush.msra.mxu0 %v2612
        %2633 = vmatpush.msra.mxu0 %v2611
        %2634 = vmatpush.msra.mxu0 %v2610
        %2635 = vmatmul.f32.gmra.mxu0 %v697
        %v2636 = vpop.f32.mrf.mxu0
        %v2637 = vadd.f32 %v2617, %v2636
        %2638 = vmatmul.f32.gmra.mxu0 %v700
        %v2639 = vpop.f32.mrf.mxu0
        %v2640 = vadd.f32 %v2617, %v2639
        %2641 = vmatmul.f32.gmra.mxu0 %v703
        %v2642 = vpop.f32.mrf.mxu0
        %v2643 = vadd.f32 %v2617, %v2642
        %2644 = vdwg.mxu0
        %v2646 = vsel %vm799, %v2565, 0
        %v2649 = vsel %vm799, %v2568, 0
        %v2652 = vsel %vm799, %v2571, 0
        %v2655 = vsel %vm799, %v2601, 0
        %v2658 = vsel %vm799, %v2604, 0
        %v2661 = vsel %vm799, %v2607, 0
        %2663 = vmatpush.xpose.msra.mxu0 0.0
        %2664 = vmatpush.xpose.msra.mxu0 0.0
        %2665 = vmatpush.xpose.msra.mxu0 0.0
        %2666 = vmatpush.xpose.msra.mxu0 0.0
        %2667 = vmatpush.xpose.msra.mxu0 0.0
        %2668 = vmatpush.xpose.msra.mxu0 0.0
        %2669 = vmatpush.xpose.msra.mxu0 0.0
        %2670 = vmatpush.xpose.msra.mxu0 0.0
        %2671 = vmatpush.xpose.msra.mxu0 0.0
        %2672 = vmatpush.xpose.msra.mxu0 0.0
        %2673 = vmatpush.xpose.msra.mxu0 0.0
        %2674 = vmatpush.xpose.msra.mxu0 0.0
        %2675 = vmatpush.xpose.msra.mxu0 0.0
        %2676 = vmatpush.xpose.msra.mxu0 %v2661
        %2677 = vmatpush.xpose.msra.mxu0 %v2658
        %2678 = vmatpush.xpose.msra.mxu0 %v2655
        %2679 = vmatmul.f32.gmra.mxu0 %v2646
        %v2680 = vpop.f32.mrf.mxu0
        %v2681 = vadd.f32 0.0, %v2680
        %2682 = vmatmul.f32.gmra.mxu0 %v2649
        %v2683 = vpop.f32.mrf.mxu0
        %v2684 = vadd.f32 0.0, %v2683
        %2685 = vmatmul.f32.gmra.mxu0 %v2652
        %v2686 = vpop.f32.mrf.mxu0
        %v2687 = vadd.f32 0.0, %v2686
        %2688 = vdwg.mxu0
        %v2689 = vmul.f32 %v2681, 0.5
        %v2690 = vmul.f32 %v2684, 0.5
        %v2691 = vmul.f32 %v2687, 0.5
        %v2692 = vsel %vm847, %v2689, -inf
        %2693 = vmax.xlane.f32.xlu0 %v2692
        %v2694 = vpop.xlane.xlu0 %2693
        %v2695 = vsel %vm847, %v2690, -inf
        %2696 = vmax.xlane.f32.xlu0 %v2695
        %v2697 = vpop.xlane.xlu0 %2696
        %v2698 = vsel %vm854, %v2691, -inf
        %2699 = vmax.xlane.f32.xlu0 %v2698
        %v2700 = vpop.xlane.xlu0 %2699
        %v2701 = vsub.f32 %v2689, %v2694
        %v2702 = vsub.f32 %v2690, %v2697
        %v2703 = vsub.f32 %v2691, %v2700
        %v2704 = vmul.f32 %v2701, 1.442695
        %v2705 = vpow.pop %v2704
        %v2706 = vmul.f32 %v2702, 1.442695
        %v2707 = vpow.pop %v2706
        %v2708 = vmul.f32 %v2703, 1.442695
        %v2709 = vpow.pop %v2708
        %v2710 = vsel %vm847, %v2705, 0.0
        %2711 = vadd.xlane.f32.xlu0 %v2710
        %v2712 = vpop.xlane.xlu0 %2711
        %v2713 = vsel %vm847, %v2707, 0.0
        %2714 = vadd.xlane.f32.xlu0 %v2713
        %v2715 = vpop.xlane.xlu0 %2714
        %v2716 = vsel %vm854, %v2709, 0.0
        %2717 = vadd.xlane.f32.xlu0 %v2716
        %v2718 = vpop.xlane.xlu0 %2717
        %v2719 = vrcp.pop %v2712
        %v2720 = vmul.f32 %v2712, %v2719
        %v2721 = vsub.f32 1.0, %v2720
        %v2722 = vmul.f32 %v2719, %v2721
        %v2723 = vadd.f32 %v2719, %v2722
        %vm2724 = vweird.f32 %v2712
        %vm2725 = vweird.f32 %v2719
        %vm2726 = vmor %vm2724, %vm2725
        %v2727 = vsel %vm2726, %v2719, %v2723
        %v2728 = vand.u32 2147483647, %v2712
        %vm2729 = vcmp.eq.f32.partialorder %v2728, 8.507059e+37
        %v2730 = vand.u32 %v2712, 2147483648
        %v2731 = vor.u32 1.1754944e-38, %v2730
        %v2732 = vsel %vm2729, %v2731, %v2727
        %v2733 = vmul.f32 %v2705, %v2732
        %v2734 = vrcp.pop %v2715
        %v2735 = vmul.f32 %v2715, %v2734
        %v2736 = vsub.f32 1.0, %v2735
        %v2737 = vmul.f32 %v2734, %v2736
        %v2738 = vadd.f32 %v2734, %v2737
        %vm2739 = vweird.f32 %v2715
        %vm2740 = vweird.f32 %v2734
        %vm2741 = vmor %vm2739, %vm2740
        %v2742 = vsel %vm2741, %v2734, %v2738
        %v2743 = vand.u32 2147483647, %v2715
        %vm2744 = vcmp.eq.f32.partialorder %v2743, 8.507059e+37
        %v2745 = vand.u32 %v2715, 2147483648
        %v2746 = vor.u32 1.1754944e-38, %v2745
        %v2747 = vsel %vm2744, %v2746, %v2742
        %v2748 = vmul.f32 %v2707, %v2747
        %v2749 = vrcp.pop %v2718
        %v2750 = vmul.f32 %v2718, %v2749
        %v2751 = vsub.f32 1.0, %v2750
        %v2752 = vmul.f32 %v2749, %v2751
        %v2753 = vadd.f32 %v2749, %v2752
        %vm2754 = vweird.f32 %v2718
        %vm2755 = vweird.f32 %v2749
        %vm2756 = vmor %vm2754, %vm2755
        %v2757 = vsel %vm2756, %v2749, %v2753
        %v2758 = vand.u32 2147483647, %v2718
        %vm2759 = vcmp.eq.f32.partialorder %v2758, 8.507059e+37
        %v2760 = vand.u32 %v2718, 2147483648
        %v2761 = vor.u32 1.1754944e-38, %v2760
        %v2762 = vsel %vm2759, %v2761, %v2757
        %v2763 = vmul.f32 %v2709, %v2762
        %v2765 = vsel %vm847, %v2733, 0
        %v2768 = vsel %vm847, %v2748, 0
        %v2771 = vsel %vm847, %v2763, 0
        %v2774 = vsel %vm930, %v2643, 0
        %2776 = vmatpush.msra.mxu0 0.0
        %2777 = vmatpush.msra.mxu0 0.0
        %2778 = vmatpush.msra.mxu0 0.0
        %2779 = vmatpush.msra.mxu0 0.0
        %2780 = vmatpush.msra.mxu0 0.0
        %2781 = vmatpush.msra.mxu0 0.0
        %2782 = vmatpush.msra.mxu0 0.0
        %2783 = vmatpush.msra.mxu0 0.0
        %2784 = vmatpush.msra.mxu0 0.0
        %2785 = vmatpush.msra.mxu0 0.0
        %2786 = vmatpush.msra.mxu0 0.0
        %2787 = vmatpush.msra.mxu0 0.0
        %2788 = vmatpush.msra.mxu0 0.0
        %2789 = vmatpush.msra.mxu0 %v2774
        %2790 = vmatpush.msra.mxu0 %v2640
        %2791 = vmatpush.msra.mxu0 %v2637
        %2792 = vmatmul.f32.gmra.mxu0 %v2765
        %v2793 = vpop.f32.mrf.mxu0
        %v2794 = vadd.f32 0.0, %v2793
        %2795 = vmatmul.f32.gmra.mxu0 %v2768
        %v2796 = vpop.f32.mrf.mxu0
        %v2797 = vadd.f32 0.0, %v2796
        %2798 = vmatmul.f32.gmra.mxu0 %v2771
        %v2799 = vpop.f32.mrf.mxu0
        %v2800 = vadd.f32 0.0, %v2799
        %2801 = vdwg.mxu0
        %s2802 = scalar_lea.vmem [#allocation2], 24
        %v2803 = vld [vmem:[%s2802] sm:$0xf]
        %v2805 = vsel %vm799, %v2794, 0
        %v2808 = vsel %vm799, %v2797, 0
        %v2811 = vsel %vm799, %v2800, 0
        %v2814 = vsel %vm1237, %v2803, 0
        %2816 = vmatpush.msra.mxu0 0.0
        %2817 = vmatpush.msra.mxu0 0.0
        %2818 = vmatpush.msra.mxu0 0.0
        %2819 = vmatpush.msra.mxu0 0.0
        %2820 = vmatpush.msra.mxu0 0.0
        %2821 = vmatpush.msra.mxu0 0.0
        %2822 = vmatpush.msra.mxu0 0.0
        %2823 = vmatpush.msra.mxu0 0.0
        %2824 = vmatpush.msra.mxu0 0.0
        %2825 = vmatpush.msra.mxu0 0.0
        %2826 = vmatpush.msra.mxu0 0.0
        %2827 = vmatpush.msra.mxu0 0.0
        %2828 = vmatpush.msra.mxu0 0.0
        %2829 = vmatpush.msra.mxu0 0.0
        %2830 = vmatpush.msra.mxu0 0.0
        %2831 = vmatpush.msra.mxu0 %v2814
        %2832 = vmatmul.f32.gmra.mxu0 %v2805
        %v2833 = vpop.f32.mrf.mxu0
        %v2834 = vadd.f32 0.0, %v2833
        %2835 = vmatmul.f32.gmra.mxu0 %v2808
        %v2836 = vpop.f32.mrf.mxu0
        %v2837 = vadd.f32 0.0, %v2836
        %2838 = vmatmul.f32.gmra.mxu0 %v2811
        %v2839 = vpop.f32.mrf.mxu0
        %v2840 = vadd.f32 0.0, %v2839
        %2841 = vdwg.mxu0
        %v2842 = vadd.f32 %v2534, %v2834
        %v2843 = vadd.f32 %v2535, %v2837
        %v2844 = vadd.f32 %v2536, %v2840
        %s2845 = scalar_lea.vmem %s1, 224
        %v2846 = vld [vmem:[%s2845] sm:$0xff]
        %v2847 = vld [vmem:[%s2845 + $0x8] sm:$0xff]
        %v2848 = vld [vmem:[%s2845 + $0x10] sm:$0xff]
        %v2849 = vld [vmem:[%s2845 + $0x18] sm:$0xff]
        %s2850 = scalar_lea.vmem %s2, 7
        %v2851 = vld [vmem:[%s2850] sm:$0x1]
        %v2853 = vperm.slane %v2851, 0
        %2855 = vmatpush.msra.mxu0 0.0
        %2856 = vmatpush.msra.mxu0 0.0
        %2857 = vmatpush.msra.mxu0 0.0
        %2858 = vmatpush.msra.mxu0 0.0
        %2859 = vmatpush.msra.mxu0 0.0
        %2860 = vmatpush.msra.mxu0 0.0
        %2861 = vmatpush.msra.mxu0 0.0
        %2862 = vmatpush.msra.mxu0 0.0
        %2863 = vmatpush.msra.mxu0 0.0
        %2864 = vmatpush.msra.mxu0 0.0
        %2865 = vmatpush.msra.mxu0 0.0
        %2866 = vmatpush.msra.mxu0 0.0
        %2867 = vmatpush.msra.mxu0 %v2849
        %2868 = vmatpush.msra.mxu0 %v2848
        %2869 = vmatpush.msra.mxu0 %v2847
        %2870 = vmatpush.msra.mxu0 %v2846
        %2871 = vmatmul.f32.gmra.mxu0 %v697
        %v2872 = vpop.f32.mrf.mxu0
        %v2873 = vadd.f32 %v2853, %v2872
        %2874 = vmatmul.f32.gmra.mxu0 %v700
        %v2875 = vpop.f32.mrf.mxu0
        %v2876 = vadd.f32 %v2853, %v2875
        %2877 = vmatmul.f32.gmra.mxu0 %v703
        %v2878 = vpop.f32.mrf.mxu0
        %v2879 = vadd.f32 %v2853, %v2878
        %2880 = vdwg.mxu0
        %s2881 = scalar_lea.vmem %s3, 224
        %v2882 = vld [vmem:[%s2881] sm:$0xff]
        %v2883 = vld [vmem:[%s2881 + $0x8] sm:$0xff]
        %v2884 = vld [vmem:[%s2881 + $0x10] sm:$0xff]
        %v2885 = vld [vmem:[%s2881 + $0x18] sm:$0xff]
        %s2886 = scalar_lea.vmem %s4, 7
        %v2887 = vld [vmem:[%s2886] sm:$0x1]
        %v2889 = vperm.slane %v2887, 0
        %2891 = vmatpush.msra.mxu0 0.0
        %2892 = vmatpush.msra.mxu0 0.0
        %2893 = vmatpush.msra.mxu0 0.0
        %2894 = vmatpush.msra.mxu0 0.0
        %2895 = vmatpush.msra.mxu0 0.0
        %2896 = vmatpush.msra.mxu0 0.0
        %2897 = vmatpush.msra.mxu0 0.0
        %2898 = vmatpush.msra.mxu0 0.0
        %2899 = vmatpush.msra.mxu0 0.0
        %2900 = vmatpush.msra.mxu0 0.0
        %2901 = vmatpush.msra.mxu0 0.0
        %2902 = vmatpush.msra.mxu0 0.0
        %2903 = vmatpush.msra.mxu0 %v2885
        %2904 = vmatpush.msra.mxu0 %v2884
        %2905 = vmatpush.msra.mxu0 %v2883
        %2906 = vmatpush.msra.mxu0 %v2882
        %2907 = vmatmul.f32.gmra.mxu0 %v697
        %v2908 = vpop.f32.mrf.mxu0
        %v2909 = vadd.f32 %v2889, %v2908
        %2910 = vmatmul.f32.gmra.mxu0 %v700
        %v2911 = vpop.f32.mrf.mxu0
        %v2912 = vadd.f32 %v2889, %v2911
        %2913 = vmatmul.f32.gmra.mxu0 %v703
        %v2914 = vpop.f32.mrf.mxu0
        %v2915 = vadd.f32 %v2889, %v2914
        %2916 = vdwg.mxu0
        %s2917 = scalar_lea.vmem %s5, 224
        %v2918 = vld [vmem:[%s2917] sm:$0xff]
        %v2919 = vld [vmem:[%s2917 + $0x8] sm:$0xff]
        %v2920 = vld [vmem:[%s2917 + $0x10] sm:$0xff]
        %v2921 = vld [vmem:[%s2917 + $0x18] sm:$0xff]
        %s2922 = scalar_lea.vmem %s6, 7
        %v2923 = vld [vmem:[%s2922] sm:$0x1]
        %v2925 = vperm.slane %v2923, 0
        %2927 = vmatpush.msra.mxu0 0.0
        %2928 = vmatpush.msra.mxu0 0.0
        %2929 = vmatpush.msra.mxu0 0.0
        %2930 = vmatpush.msra.mxu0 0.0
        %2931 = vmatpush.msra.mxu0 0.0
        %2932 = vmatpush.msra.mxu0 0.0
        %2933 = vmatpush.msra.mxu0 0.0
        %2934 = vmatpush.msra.mxu0 0.0
        %2935 = vmatpush.msra.mxu0 0.0
        %2936 = vmatpush.msra.mxu0 0.0
        %2937 = vmatpush.msra.mxu0 0.0
        %2938 = vmatpush.msra.mxu0 0.0
        %2939 = vmatpush.msra.mxu0 %v2921
        %2940 = vmatpush.msra.mxu0 %v2920
        %2941 = vmatpush.msra.mxu0 %v2919
        %2942 = vmatpush.msra.mxu0 %v2918
        %2943 = vmatmul.f32.gmra.mxu0 %v697
        %v2944 = vpop.f32.mrf.mxu0
        %v2945 = vadd.f32 %v2925, %v2944
        %2946 = vmatmul.f32.gmra.mxu0 %v700
        %v2947 = vpop.f32.mrf.mxu0
        %v2948 = vadd.f32 %v2925, %v2947
        %2949 = vmatmul.f32.gmra.mxu0 %v703
        %v2950 = vpop.f32.mrf.mxu0
        %v2951 = vadd.f32 %v2925, %v2950
        %2952 = vdwg.mxu0
        %v2954 = vsel %vm799, %v2873, 0
        %v2957 = vsel %vm799, %v2876, 0
        %v2960 = vsel %vm799, %v2879, 0
        %v2963 = vsel %vm799, %v2909, 0
        %v2966 = vsel %vm799, %v2912, 0
        %v2969 = vsel %vm799, %v2915, 0
        %2971 = vmatpush.xpose.msra.mxu0 0.0
        %2972 = vmatpush.xpose.msra.mxu0 0.0
        %2973 = vmatpush.xpose.msra.mxu0 0.0
        %2974 = vmatpush.xpose.msra.mxu0 0.0
        %2975 = vmatpush.xpose.msra.mxu0 0.0
        %2976 = vmatpush.xpose.msra.mxu0 0.0
        %2977 = vmatpush.xpose.msra.mxu0 0.0
        %2978 = vmatpush.xpose.msra.mxu0 0.0
        %2979 = vmatpush.xpose.msra.mxu0 0.0
        %2980 = vmatpush.xpose.msra.mxu0 0.0
        %2981 = vmatpush.xpose.msra.mxu0 0.0
        %2982 = vmatpush.xpose.msra.mxu0 0.0
        %2983 = vmatpush.xpose.msra.mxu0 0.0
        %2984 = vmatpush.xpose.msra.mxu0 %v2969
        %2985 = vmatpush.xpose.msra.mxu0 %v2966
        %2986 = vmatpush.xpose.msra.mxu0 %v2963
        %2987 = vmatmul.f32.gmra.mxu0 %v2954
        %v2988 = vpop.f32.mrf.mxu0
        %v2989 = vadd.f32 0.0, %v2988
        %2990 = vmatmul.f32.gmra.mxu0 %v2957
        %v2991 = vpop.f32.mrf.mxu0
        %v2992 = vadd.f32 0.0, %v2991
        %2993 = vmatmul.f32.gmra.mxu0 %v2960
        %v2994 = vpop.f32.mrf.mxu0
        %v2995 = vadd.f32 0.0, %v2994
        %2996 = vdwg.mxu0
        %v2997 = vmul.f32 %v2989, 0.5
        %v2998 = vmul.f32 %v2992, 0.5
        %v2999 = vmul.f32 %v2995, 0.5
        %v3000 = vsel %vm847, %v2997, -inf
        %3001 = vmax.xlane.f32.xlu0 %v3000
        %v3002 = vpop.xlane.xlu0 %3001
        %v3003 = vsel %vm847, %v2998, -inf
        %3004 = vmax.xlane.f32.xlu0 %v3003
        %v3005 = vpop.xlane.xlu0 %3004
        %v3006 = vsel %vm854, %v2999, -inf
        %3007 = vmax.xlane.f32.xlu0 %v3006
        %v3008 = vpop.xlane.xlu0 %3007
        %v3009 = vsub.f32 %v2997, %v3002
        %v3010 = vsub.f32 %v2998, %v3005
        %v3011 = vsub.f32 %v2999, %v3008
        %v3012 = vmul.f32 %v3009, 1.442695
        %v3013 = vpow.pop %v3012
        %v3014 = vmul.f32 %v3010, 1.442695
        %v3015 = vpow.pop %v3014
        %v3016 = vmul.f32 %v3011, 1.442695
        %v3017 = vpow.pop %v3016
        %v3018 = vsel %vm847, %v3013, 0.0
        %3019 = vadd.xlane.f32.xlu0 %v3018
        %v3020 = vpop.xlane.xlu0 %3019
        %v3021 = vsel %vm847, %v3015, 0.0
        %3022 = vadd.xlane.f32.xlu0 %v3021
        %v3023 = vpop.xlane.xlu0 %3022
        %v3024 = vsel %vm854, %v3017, 0.0
        %3025 = vadd.xlane.f32.xlu0 %v3024
        %v3026 = vpop.xlane.xlu0 %3025
        %v3027 = vrcp.pop %v3020
        %v3028 = vmul.f32 %v3020, %v3027
        %v3029 = vsub.f32 1.0, %v3028
        %v3030 = vmul.f32 %v3027, %v3029
        %v3031 = vadd.f32 %v3027, %v3030
        %vm3032 = vweird.f32 %v3020
        %vm3033 = vweird.f32 %v3027
        %vm3034 = vmor %vm3032, %vm3033
        %v3035 = vsel %vm3034, %v3027, %v3031
        %v3036 = vand.u32 2147483647, %v3020
        %vm3037 = vcmp.eq.f32.partialorder %v3036, 8.507059e+37
        %v3038 = vand.u32 %v3020, 2147483648
        %v3039 = vor.u32 1.1754944e-38, %v3038
        %v3040 = vsel %vm3037, %v3039, %v3035
        %v3041 = vmul.f32 %v3013, %v3040
        %v3042 = vrcp.pop %v3023
        %v3043 = vmul.f32 %v3023, %v3042
        %v3044 = vsub.f32 1.0, %v3043
        %v3045 = vmul.f32 %v3042, %v3044
        %v3046 = vadd.f32 %v3042, %v3045
        %vm3047 = vweird.f32 %v3023
        %vm3048 = vweird.f32 %v3042
        %vm3049 = vmor %vm3047, %vm3048
        %v3050 = vsel %vm3049, %v3042, %v3046
        %v3051 = vand.u32 2147483647, %v3023
        %vm3052 = vcmp.eq.f32.partialorder %v3051, 8.507059e+37
        %v3053 = vand.u32 %v3023, 2147483648
        %v3054 = vor.u32 1.1754944e-38, %v3053
        %v3055 = vsel %vm3052, %v3054, %v3050
        %v3056 = vmul.f32 %v3015, %v3055
        %v3057 = vrcp.pop %v3026
        %v3058 = vmul.f32 %v3026, %v3057
        %v3059 = vsub.f32 1.0, %v3058
        %v3060 = vmul.f32 %v3057, %v3059
        %v3061 = vadd.f32 %v3057, %v3060
        %vm3062 = vweird.f32 %v3026
        %vm3063 = vweird.f32 %v3057
        %vm3064 = vmor %vm3062, %vm3063
        %v3065 = vsel %vm3064, %v3057, %v3061
        %v3066 = vand.u32 2147483647, %v3026
        %vm3067 = vcmp.eq.f32.partialorder %v3066, 8.507059e+37
        %v3068 = vand.u32 %v3026, 2147483648
        %v3069 = vor.u32 1.1754944e-38, %v3068
        %v3070 = vsel %vm3067, %v3069, %v3065
        %v3071 = vmul.f32 %v3017, %v3070
        %v3073 = vsel %vm847, %v3041, 0
        %v3076 = vsel %vm847, %v3056, 0
        %v3079 = vsel %vm847, %v3071, 0
        %v3082 = vsel %vm930, %v2951, 0
        %3084 = vmatpush.msra.mxu0 0.0
        %3085 = vmatpush.msra.mxu0 0.0
        %3086 = vmatpush.msra.mxu0 0.0
        %3087 = vmatpush.msra.mxu0 0.0
        %3088 = vmatpush.msra.mxu0 0.0
        %3089 = vmatpush.msra.mxu0 0.0
        %3090 = vmatpush.msra.mxu0 0.0
        %3091 = vmatpush.msra.mxu0 0.0
        %3092 = vmatpush.msra.mxu0 0.0
        %3093 = vmatpush.msra.mxu0 0.0
        %3094 = vmatpush.msra.mxu0 0.0
        %3095 = vmatpush.msra.mxu0 0.0
        %3096 = vmatpush.msra.mxu0 0.0
        %3097 = vmatpush.msra.mxu0 %v3082
        %3098 = vmatpush.msra.mxu0 %v2948
        %3099 = vmatpush.msra.mxu0 %v2945
        %3100 = vmatmul.f32.gmra.mxu0 %v3073
        %v3101 = vpop.f32.mrf.mxu0
        %v3102 = vadd.f32 0.0, %v3101
        %3103 = vmatmul.f32.gmra.mxu0 %v3076
        %v3104 = vpop.f32.mrf.mxu0
        %v3105 = vadd.f32 0.0, %v3104
        %3106 = vmatmul.f32.gmra.mxu0 %v3079
        %v3107 = vpop.f32.mrf.mxu0
        %v3108 = vadd.f32 0.0, %v3107
        %3109 = vdwg.mxu0
        %s3110 = scalar_lea.vmem [#allocation2], 28
        %v3111 = vld [vmem:[%s3110] sm:$0xf]
        %v3113 = vsel %vm799, %v3102, 0
        %v3116 = vsel %vm799, %v3105, 0
        %v3119 = vsel %vm799, %v3108, 0
        %v3122 = vsel %vm1237, %v3111, 0
        %3124 = vmatpush.msra.mxu0 0.0
        %3125 = vmatpush.msra.mxu0 0.0
        %3126 = vmatpush.msra.mxu0 0.0
        %3127 = vmatpush.msra.mxu0 0.0
        %3128 = vmatpush.msra.mxu0 0.0
        %3129 = vmatpush.msra.mxu0 0.0
        %3130 = vmatpush.msra.mxu0 0.0
        %3131 = vmatpush.msra.mxu0 0.0
        %3132 = vmatpush.msra.mxu0 0.0
        %3133 = vmatpush.msra.mxu0 0.0
        %3134 = vmatpush.msra.mxu0 0.0
        %3135 = vmatpush.msra.mxu0 0.0
        %3136 = vmatpush.msra.mxu0 0.0
        %3137 = vmatpush.msra.mxu0 0.0
        %3138 = vmatpush.msra.mxu0 0.0
        %3139 = vmatpush.msra.mxu0 %v3122
        %3140 = vmatmul.f32.gmra.mxu0 %v3113
        %v3141 = vpop.f32.mrf.mxu0
        %v3142 = vadd.f32 0.0, %v3141
        %3143 = vmatmul.f32.gmra.mxu0 %v3116
        %v3144 = vpop.f32.mrf.mxu0
        %v3145 = vadd.f32 0.0, %v3144
        %3146 = vmatmul.f32.gmra.mxu0 %v3119
        %v3147 = vpop.f32.mrf.mxu0
        %v3148 = vadd.f32 0.0, %v3147
        %3149 = vdwg.mxu0
        %v3150 = vadd.f32 %v2842, %v3142
        %v3151 = vadd.f32 %v2843, %v3145
        %v3152 = vadd.f32 %v2844, %v3148
        %v3153 = vld [vmem:[#allocation4] sm:$0x1]
        %v3155 = vperm.slane %v3153, 0
        %v3157 = vadd.f32 %v3150, %v3155
        %v3158 = vadd.f32 %v3151, %v3155
        %v3159 = vadd.f32 %v3152, %v3155
        %v3160 = vadd.f32 %v684, %v3157
        %v3161 = vadd.f32 %v685, %v3158
        %v3162 = vadd.f32 %v686, %v3159
        %v3163 = vsel %vm695, %v3160, 0.0
        %3164 = vadd.xlane.f32.xlu0 %v3163
        %v3165 = vpop.xlane.xlu0 %3164
        %v3166 = vsel %vm695, %v3161, 0.0
        %3167 = vadd.xlane.f32.xlu0 %v3166
        %v3168 = vpop.xlane.xlu0 %3167
        %vm3169 = vcmask 253952
        %v3170 = vsel %vm3169, %v3162, 0.0
        %3171 = vadd.xlane.f32.xlu0 %v3170
        %v3172 = vpop.xlane.xlu0 %3171
        %v3173 = vrcp.pop 32.0
        %v3174 = vmul.f32 32.0, %v3173
        %v3175 = vsub.f32 1.0, %v3174
        %v3176 = vmul.f32 %v3173, %v3175
        %v3177 = vadd.f32 %v3173, %v3176
        %vm3178 = vweird.f32 %v3173
        %v3179 = vsel %vm3178, %v3173, %v3177
        %v3180 = vmul.f32 %v3165, %v3179
        %v3181 = vmul.f32 %v3168, %v3179
        %v3182 = vmul.f32 %v3172, %v3179
        %v3183 = vsub.f32 %v3160, %v3180
        %v3184 = vsub.f32 %v3161, %v3181
        %v3185 = vsub.f32 %v3162, %v3182
        %v3186 = vmul.f32 %v3183, %v3183
        %v3187 = vmul.f32 %v3184, %v3184
        %v3188 = vmul.f32 %v3185, %v3185
        %v3189 = vsel %vm695, %v3186, 0.0
        %3190 = vadd.xlane.f32.xlu0 %v3189
        %v3191 = vpop.xlane.xlu0 %3190
        %v3192 = vsel %vm695, %v3187, 0.0
        %3193 = vadd.xlane.f32.xlu0 %v3192
        %v3194 = vpop.xlane.xlu0 %3193
        %v3195 = vsel %vm3169, %v3188, 0.0
        %3196 = vadd.xlane.f32.xlu0 %v3195
        %v3197 = vpop.xlane.xlu0 %3196
        %v3198 = vmul.f32 %v3191, %v3179
        %v3199 = vmul.f32 %v3194, %v3179
        %v3200 = vmul.f32 %v3197, %v3179
        %v3201 = vadd.f32 %v3198, 1e-05
        %v3202 = vadd.f32 %v3199, 1e-05
        %v3203 = vadd.f32 %v3200, 1e-05
        %v3204 = vrsqrt.pop %v3201
        %v3205 = vmul.f32 %v3204, %v3201
        %v3206 = vmul.f32 %v3205, %v3204
        %v3207 = vmul.f32 0.5, %v3206
        %v3208 = vsub.f32 1.5, %v3207
        %v3209 = vmul.f32 %v3204, %v3208
        %vm3210 = vweird.f32 %v3201
        %vm3211 = vweird.f32 %v3204
        %vm3212 = vmor %vm3210, %vm3211
        %v3213 = vsel %vm3212, %v3204, %v3209
        %v3214 = vrsqrt.pop %v3202
        %v3215 = vmul.f32 %v3214, %v3202
        %v3216 = vmul.f32 %v3215, %v3214
        %v3217 = vmul.f32 0.5, %v3216
        %v3218 = vsub.f32 1.5, %v3217
        %v3219 = vmul.f32 %v3214, %v3218
        %vm3220 = vweird.f32 %v3202
        %vm3221 = vweird.f32 %v3214
        %vm3222 = vmor %vm3220, %vm3221
        %v3223 = vsel %vm3222, %v3214, %v3219
        %v3224 = vrsqrt.pop %v3203
        %v3225 = vmul.f32 %v3224, %v3203
        %v3226 = vmul.f32 %v3225, %v3224
        %v3227 = vmul.f32 0.5, %v3226
        %v3228 = vsub.f32 1.5, %v3227
        %v3229 = vmul.f32 %v3224, %v3228
        %vm3230 = vweird.f32 %v3203
        %vm3231 = vweird.f32 %v3224
        %vm3232 = vmor %vm3230, %vm3231
        %v3233 = vsel %vm3232, %v3224, %v3229
        %v3234 = vmul.f32 %v3183, %v3213
        %v3235 = vmul.f32 %v3184, %v3223
        %v3236 = vmul.f32 %v3185, %v3233
        %v3237 = vld [vmem:[#allocation6] sm:$0x1]
        %v3239 = vperm.slane %v3237, 0
        %v3241 = vmul.f32 %v3234, %v3239
        %v3242 = vmul.f32 %v3235, %v3239
        %v3243 = vmul.f32 %v3236, %v3239
        %v3244 = vld [vmem:[#allocation7] sm:$0x1]
        %v3246 = vperm.slane %v3244, 0
        %v3248 = vadd.f32 %v3241, %v3246
        %v3249 = vadd.f32 %v3242, %v3246
        %v3250 = vadd.f32 %v3243, %v3246
        %v3251 = vld [vmem:[#allocation9] sm:$0xff]
        %v3252 = vld [vmem:[#allocation9 + $0x8] sm:$0xff]
        %v3253 = vld [vmem:[#allocation9 + $0x10] sm:$0xff]
        %v3254 = vld [vmem:[#allocation9 + $0x18] sm:$0xff]
        %v3255 = vld [vmem:[#allocation10] sm:$0x1]
        %v3257 = vperm.slane %v3255, 0
        %v3260 = vsel %vm695, %v3248, 0
        %v3263 = vsel %vm695, %v3249, 0
        %v3266 = vsel %vm695, %v3250, 0
        %3268 = vmatpush.msra.mxu0 0.0
        %3269 = vmatpush.msra.mxu0 0.0
        %3270 = vmatpush.msra.mxu0 0.0
        %3271 = vmatpush.msra.mxu0 0.0
        %3272 = vmatpush.msra.mxu0 0.0
        %3273 = vmatpush.msra.mxu0 0.0
        %3274 = vmatpush.msra.mxu0 0.0
        %3275 = vmatpush.msra.mxu0 0.0
        %3276 = vmatpush.msra.mxu0 0.0
        %3277 = vmatpush.msra.mxu0 0.0
        %3278 = vmatpush.msra.mxu0 0.0
        %3279 = vmatpush.msra.mxu0 0.0
        %3280 = vmatpush.msra.mxu0 %v3254
        %3281 = vmatpush.msra.mxu0 %v3253
        %3282 = vmatpush.msra.mxu0 %v3252
        %3283 = vmatpush.msra.mxu0 %v3251
        %3284 = vmatmul.f32.gmra.mxu0 %v3260
        %v3285 = vpop.f32.mrf.mxu0
        %v3286 = vadd.f32 %v3257, %v3285
        %3287 = vmatmul.f32.gmra.mxu0 %v3263
        %v3288 = vpop.f32.mrf.mxu0
        %v3289 = vadd.f32 %v3257, %v3288
        %3290 = vmatmul.f32.gmra.mxu0 %v3266
        %v3291 = vpop.f32.mrf.mxu0
        %v3292 = vadd.f32 %v3257, %v3291
        %3293 = vdwg.mxu0
        %v3294 = vmax.f32 %v3286, 0.0
        %v3295 = vmax.f32 %v3289, 0.0
        %v3296 = vmax.f32 %v3292, 0.0
        %v3297 = vld [vmem:[%s13] sm:$0xff]
        %v3298 = vld [vmem:[%s13 + $0x8] sm:$0xff]
        %v3299 = vld [vmem:[%s13 + $0x10] sm:$0xff]
        %v3300 = vld [vmem:[%s13 + $0x18] sm:$0xff]
        %v3301 = vld [vmem:[%s13 + $0x20] sm:$0xff]
        %v3302 = vld [vmem:[%s13 + $0x28] sm:$0xff]
        %v3303 = vld [vmem:[%s13 + $0x30] sm:$0xff]
        %v3304 = vld [vmem:[%s13 + $0x38] sm:$0xff]
        %v3305 = vld [vmem:[%s13 + $0x40] sm:$0xff]
        %v3306 = vld [vmem:[%s13 + $0x48] sm:$0xff]
        %v3307 = vld [vmem:[%s13 + $0x50] sm:$0xff]
        %v3308 = vld [vmem:[%s13 + $0x58] sm:$0xff]
        %v3309 = vld [vmem:[%s13 + $0x60] sm:$0xff]
        %v3310 = vld [vmem:[%s13 + $0x68] sm:$0xff]
        %v3311 = vld [vmem:[%s13 + $0x70] sm:$0xff]
        %v3312 = vld [vmem:[%s13 + $0x78] sm:$0xff]
        %v3313 = vld [vmem:[#allocation12] sm:$0x1]
        %v3315 = vperm.slane %v3313, 0
        %3317 = vmatpush.msra.mxu0 %v3312
        %3318 = vmatpush.msra.mxu0 %v3311
        %3319 = vmatpush.msra.mxu0 %v3310
        %3320 = vmatpush.msra.mxu0 %v3309
        %3321 = vmatpush.msra.mxu0 %v3308
        %3322 = vmatpush.msra.mxu0 %v3307
        %3323 = vmatpush.msra.mxu0 %v3306
        %3324 = vmatpush.msra.mxu0 %v3305
        %3325 = vmatpush.msra.mxu0 %v3304
        %3326 = vmatpush.msra.mxu0 %v3303
        %3327 = vmatpush.msra.mxu0 %v3302
        %3328 = vmatpush.msra.mxu0 %v3301
        %3329 = vmatpush.msra.mxu0 %v3300
        %3330 = vmatpush.msra.mxu0 %v3299
        %3331 = vmatpush.msra.mxu0 %v3298
        %3332 = vmatpush.msra.mxu0 %v3297
        %3333 = vmatmul.f32.gmra.mxu0 %v3294
        %v3334 = vpop.f32.mrf.mxu0
        %v3335 = vadd.f32 %v3315, %v3334
        %3336 = vmatmul.f32.gmra.mxu0 %v3295
        %v3337 = vpop.f32.mrf.mxu0
        %v3338 = vadd.f32 %v3315, %v3337
        %3339 = vmatmul.f32.gmra.mxu0 %v3296
        %v3340 = vpop.f32.mrf.mxu0
        %v3341 = vadd.f32 %v3315, %v3340
        %3342 = vdwg.mxu0
        %v3343 = vadd.f32 %v3248, %v3335
        %v3344 = vadd.f32 %v3249, %v3338
        %v3345 = vadd.f32 %v3250, %v3341
        %v3346 = vsel %vm695, %v3343, 0.0
        %3347 = vadd.xlane.f32.xlu0 %v3346
        %v3348 = vpop.xlane.xlu0 %3347
        %v3349 = vsel %vm695, %v3344, 0.0
        %3350 = vadd.xlane.f32.xlu0 %v3349
        %v3351 = vpop.xlane.xlu0 %3350
        %v3352 = vsel %vm3169, %v3345, 0.0
        %3353 = vadd.xlane.f32.xlu0 %v3352
        %v3354 = vpop.xlane.xlu0 %3353
        %v3355 = vmul.f32 %v3348, %v3179
        %v3356 = vmul.f32 %v3351, %v3179
        %v3357 = vmul.f32 %v3354, %v3179
        %v3358 = vsub.f32 %v3343, %v3355
        %v3359 = vsub.f32 %v3344, %v3356
        %v3360 = vsub.f32 %v3345, %v3357
        %v3361 = vmul.f32 %v3358, %v3358
        %v3362 = vmul.f32 %v3359, %v3359
        %v3363 = vmul.f32 %v3360, %v3360
        %v3364 = vsel %vm695, %v3361, 0.0
        %3365 = vadd.xlane.f32.xlu0 %v3364
        %v3366 = vpop.xlane.xlu0 %3365
        %v3367 = vsel %vm695, %v3362, 0.0
        %3368 = vadd.xlane.f32.xlu0 %v3367
        %v3369 = vpop.xlane.xlu0 %3368
        %v3370 = vsel %vm3169, %v3363, 0.0
        %3371 = vadd.xlane.f32.xlu0 %v3370
        %v3372 = vpop.xlane.xlu0 %3371
        %v3373 = vmul.f32 %v3366, %v3179
        %v3374 = vmul.f32 %v3369, %v3179
        %v3375 = vmul.f32 %v3372, %v3179
        %v3376 = vadd.f32 %v3373, 1e-05
        %v3377 = vadd.f32 %v3374, 1e-05
        %v3378 = vadd.f32 %v3375, 1e-05
        %v3379 = vrsqrt.pop %v3376
        %v3380 = vmul.f32 %v3379, %v3376
        %v3381 = vmul.f32 %v3380, %v3379
        %v3382 = vmul.f32 0.5, %v3381
        %v3383 = vsub.f32 1.5, %v3382
        %v3384 = vmul.f32 %v3379, %v3383
        %vm3385 = vweird.f32 %v3376
        %vm3386 = vweird.f32 %v3379
        %vm3387 = vmor %vm3385, %vm3386
        %v3388 = vsel %vm3387, %v3379, %v3384
        %v3389 = vrsqrt.pop %v3377
        %v3390 = vmul.f32 %v3389, %v3377
        %v3391 = vmul.f32 %v3390, %v3389
        %v3392 = vmul.f32 0.5, %v3391
        %v3393 = vsub.f32 1.5, %v3392
        %v3394 = vmul.f32 %v3389, %v3393
        %vm3395 = vweird.f32 %v3377
        %vm3396 = vweird.f32 %v3389
        %vm3397 = vmor %vm3395, %vm3396
        %v3398 = vsel %vm3397, %v3389, %v3394
        %v3399 = vrsqrt.pop %v3378
        %v3400 = vmul.f32 %v3399, %v3378
        %v3401 = vmul.f32 %v3400, %v3399
        %v3402 = vmul.f32 0.5, %v3401
        %v3403 = vsub.f32 1.5, %v3402
        %v3404 = vmul.f32 %v3399, %v3403
        %vm3405 = vweird.f32 %v3378
        %vm3406 = vweird.f32 %v3399
        %vm3407 = vmor %vm3405, %vm3406
        %v3408 = vsel %vm3407, %v3399, %v3404
        %v3409 = vmul.f32 %v3358, %v3388
        %v3410 = vmul.f32 %v3359, %v3398
        %v3411 = vmul.f32 %v3360, %v3408
        %v3412 = vld [vmem:[#allocation13] sm:$0x1]
        %v3414 = vperm.slane %v3412, 0
        %v3416 = vmul.f32 %v3409, %v3414
        %v3417 = vmul.f32 %v3410, %v3414
        %v3418 = vmul.f32 %v3411, %v3414
        %v3419 = vld [vmem:[#allocation15] sm:$0x1]
        %v3421 = vperm.slane %v3419, 0
        %v3423 = vadd.f32 %v3416, %v3421
        %v3424 = vadd.f32 %v3417, %v3421
        %v3425 = vadd.f32 %v3418, %v3421
        %3426 = vst.msk [vmem:[%s683] sm:$0xff] %vm695, %v3423
        %3427 = vst.msk [vmem:[%s683 + $0x8] sm:$0xff] %vm695, %v3424
        %3428 = vst.msk [vmem:[%s683 + $0x10] sm:$0x1] %vm3169, %v3425
        %p3429 = scmp.lt.s32.totalorder %s33, 1
        %s3430 = scalar_select %p3429, %s33, 1
        %s3431 = smul.addr %s3430, 3
        %s3432 = smul.addr %s3431, 8
        %s3433 = scalar_lea.vmem %s17, %s3432
        // Predicated region
        $region125: #{_lambda_.5} parent=87 // pred_check
          %p3434 = pneg %p413
        $region126: #{_lambda_.5} parent=87 // pred_check_branch
          %3436 = sbr.rel (%p3434) target = $region128
        $region127: #{_lambda_.5} parent=87 // pred_region
          _
        $region128: #{_lambda_.5} parent=87 // pred_fallthru
          _
      $region88: #{_lambda_.5} parent=5 // pred_fallthru
        _
      %p3437 = scmp.le.s32.totalorder 2, %s28
      // Predicated region
      $region129: #{_lambda_.5} parent=5 // pred_check
        %p3438 = pneg %p3437
      $region130: #{_lambda_.5} parent=5 // pred_check_branch
        %3440 = sbr.rel (%p3438) target = $region132
      $region131: #{_lambda_.5} parent=5 // pred_region
        %s3441 = ssub.s32 %s28, 2
        // Predicated region
        $region133: #{_lambda_.5} parent=131 // pred_check
          %p3442 = pneg %p419
        $region134: #{_lambda_.5} parent=131 // pred_check_branch
          %3444 = sbr.rel (%p3442) target = $region136
        $region135: #{_lambda_.5} parent=131 // pred_region
          %p3445 = scmp.lt.s32.totalorder %s34, 1
          %s3446 = scalar_select %p3445, %s34, 1
          %s3447 = smul.addr %s3446, 3
          %s3448 = smul.addr %s3447, 8
          %s3449 = scalar_lea.vmem %s17, %s3448
        $region136: #{_lambda_.5} parent=131 // pred_fallthru
          _
      $region132: #{_lambda_.5} parent=5 // pred_fallthru
        _
    $region6: #{_lambda_.5} parent=1 // loop_footer
      %s32 = sadd.s32 1, %s28
    $region7: #{_lambda_.5} parent=1 // loop_footer_branch
      %27 = sbr.rel target = $region3
    $region8: #{_lambda_.5} parent=1 // loop_exit
      _
    %3450 = vsyncpa [#allocation3], 1
    %s3451 = scalar_lea.sflag [#allocation3], 1
    %3452 = vsyncpa %s3451, 1
    %3453 = vsyncpa [#allocation5], 1
    %3454 = vsyncpa [#allocation8], 1
    %3455 = vsyncpa [#allocation11], 1
    %3456 = vsyncpa [#allocation14], 1

// kernel: _lambda_.7
$region0: #{_lambda_.7}
  #allocation0 [shape = 'u32[]', space=smem, size = 0x4, offset = 0x4, fixed_abs, tag = 'smem constant byte address 0x4 - core index']
  #allocation1 [shape = 'u32[72,128]{1,0:T(1,128)}', space=vmem, size = 0x9000, scoped, tag = 'internal scratch']
  #allocation2 [shape = 'f32[2,2048]{1,0:T(2,128)}', space=vmem, size = 0x4000, scoped, tag = 'scratch operand']
  #allocation3 [shape = 'f32[2,10]{1,0:T(2,128)}', space=vmem, size = 0x400, scoped, tag = 'scratch operand']
  %s0 = inlined_call_operand.vmem [shape: f32[2,32], index: 0, kind: input, shape index: {}]
  %s1 = inlined_call_operand.hbm [shape: bf16[32,2048], index: 1, kind: input, shape index: {}]
  %s2 = inlined_call_operand.hbm [shape: f32[1,2048], index: 2, kind: input, shape index: {}]
  %s3 = inlined_call_operand.hbm [shape: bf16[2048,2048], index: 3, kind: input, shape index: {}]
  %s4 = inlined_call_operand.hbm [shape: f32[1,2048], index: 4, kind: input, shape index: {}]
  %s5 = inlined_call_operand.vmem [shape: bf16[2048,10], index: 5, kind: input, shape index: {}]
  %s6 = inlined_call_operand.hbm [shape: f32[1,10], index: 6, kind: input, shape index: {}]
  %s7 = inlined_call_operand.hbm [shape: f32[2,10], index: 7, kind: output, shape index: {}]
  %s8 = sld [smem:[#allocation0]]
  $region89: #{_lambda_.7} parent=0
    _
  %s10 = ssub.s32 1, %s8
  %s11 = scalar_select 0, %s10, %s8
  $region1: #{_lambda_.7} parent=0
    #allocation4 [shape = 'u8[131072]{0}', space=vmem, size = 0x20000, scoped, tag = 'input window, operand 1, single buffered']
    #allocation5 [shape = 's32[2]{0}', space=sflag, size = 0x8, scoped, tag = 'scoped memory for _lambda_.7']
    #allocation6 [shape = 's32[2]{0}', space=sflag, size = 0x8, scoped, tag = 'scoped memory for _lambda_.7']
    #allocation7 [shape = 'u8[8192]{0}', space=vmem, size = 0x2000, scoped, tag = 'input window, operand 2, single buffered']
    #allocation8 [shape = 's32[1]{0}', space=sflag, size = 0x4, scoped, tag = 'scoped memory for _lambda_.7']
    #allocation9 [shape = 'u8[4194304]{0}', space=vmem, size = 0x400000, scoped, tag = 'input window, operand 3']
    #allocation10 [shape = 'u8[4096]{0}', space=vmem, size = 0x1000, scoped, tag = 'input window, operand 4']
    #allocation11 [shape = 'u8[512]{0}', space=vmem, size = 0x400, scoped, tag = 'input window, operand 6, single buffered']
    #allocation12 [shape = 'u8[1024]{0}', space=vmem, size = 0x400, scoped, tag = 'output window, operand 0, single buffered']
    %12 = vsyncpa [#allocation5], 0
    %13 = vsyncpa [#allocation8], 0
    %14 = vsyncpa [#allocation6], 0
    loop: start=0, step=1, limit=6
    $region2: #{_lambda_.7} parent=1 // loop_pre_header
      _
    $region3: #{_lambda_.7} parent=1 // loop_header
      %s16 = sphi 0, %s20
      %p17 = scmp.ge.s32.totalorder %s16, 6
      %s24 = sphi 0, %s24
      %s26 = sphi 0, %s24
      %s27 = sphi 0, %s26
      %s41 = sphi 0, %s27
      %s45 = sphi 0, %s45
      %s47 = sphi 0, %s45
      %s48 = sphi 0, %s47
      %s62 = sphi 0, %s48
      %s66 = sphi 0, %s66
      %s68 = sphi 0, %s66
      %s69 = sphi 0, %s68
      %s83 = sphi 0, %s69
      %s89 = sphi 0, %s91
      %s92 = sphi 0, %s89
      %s93 = sphi 0, %s92
      %s109 = sphi 0, %s93
      %s115 = sphi 0, %s117
      %s118 = sphi 0, %s115
      %s119 = sphi 0, %s118
      %s135 = sphi 0, %s119
      %s141 = sphi 0, %s143
      %s144 = sphi 0, %s141
      %s145 = sphi 0, %s144
      %s161 = sphi 0, %s145
      %s165 = sphi 0, %s165
      %s167 = sphi 0, %s165
      %s168 = sphi 0, %s167
      %s182 = sphi 0, %s168
      %s186 = sphi 0, %s186
      %s188 = sphi 0, %s186
      %s189 = sphi 0, %s188
      %s203 = sphi 0, %s189
    $region4: #{_lambda_.7} parent=1 // loop_header_branch
      %19 = sbr.rel (%p17) target = $region8
    $region5: #{_lambda_.7} parent=1 // loop_body
      %s21 = ssub.s32 %s16, 1
      %s22 = ssub.s32 %s16, 2
      %s23 = sadd.s32 %s16, 1
      %s25 = sadd.s32 %s24, 1
      %p28 = scmp.eq.s32.totalorder %s16, 3
      %p29 = scmp.ne.s32.totalorder %s24, %s26
      %p30 = scmp.eq.s32.totalorder %s16, 0
      %p31 = por %p29, %p30
      %p32 = scmp.ne.s32.totalorder %s24, %s26
      %p33 = scmp.eq.s32.totalorder %s21, 3
      %p34 = por %p32, %p33
      %p35 = scmp.ne.s32.totalorder %s26, %s27
      %p36 = scmp.eq.s32.totalorder %s21, 0
      %p37 = por %p35, %p36
      %p38 = scmp.ne.s32.totalorder %s26, %s27
      %p39 = scmp.eq.s32.totalorder %s22, 3
      %p40 = por %p38, %p39
      %p42 = scmp.ne.s32.totalorder %s27, %s41
      %p43 = scmp.eq.s32.totalorder %s22, 0
      %p44 = por %p42, %p43
      %s46 = sadd.s32 %s45, 1
      %p49 = scmp.eq.s32.totalorder %s16, 3
      %p50 = scmp.ne.s32.totalorder %s45, %s47
      %p51 = scmp.eq.s32.totalorder %s16, 0
      %p52 = por %p50, %p51
      %p53 = scmp.ne.s32.totalorder %s45, %s47
      %p54 = scmp.eq.s32.totalorder %s21, 3
      %p55 = por %p53, %p54
      %p56 = scmp.ne.s32.totalorder %s47, %s48
      %p57 = scmp.eq.s32.totalorder %s21, 0
      %p58 = por %p56, %p57
      %p59 = scmp.ne.s32.totalorder %s47, %s48
      %p60 = scmp.eq.s32.totalorder %s22, 3
      %p61 = por %p59, %p60
      %p63 = scmp.ne.s32.totalorder %s48, %s62
      %p64 = scmp.eq.s32.totalorder %s22, 0
      %p65 = por %p63, %p64
      %s67 = sadd.s32 %s66, 1
      %p70 = scmp.eq.s32.totalorder %s16, 3
      %p71 = scmp.ne.s32.totalorder %s66, %s68
      %p72 = scmp.eq.s32.totalorder %s16, 0
      %p73 = por %p71, %p72
      %p74 = scmp.ne.s32.totalorder %s66, %s68
      %p75 = scmp.eq.s32.totalorder %s21, 3
      %p76 = por %p74, %p75
      %p77 = scmp.ne.s32.totalorder %s68, %s69
      %p78 = scmp.eq.s32.totalorder %s21, 0
      %p79 = por %p77, %p78
      %p80 = scmp.ne.s32.totalorder %s68, %s69
      %p81 = scmp.eq.s32.totalorder %s22, 3
      %p82 = por %p80, %p81
      %p84 = scmp.ne.s32.totalorder %s69, %s83
      %p85 = scmp.eq.s32.totalorder %s22, 0
      %p86 = por %p84, %p85
      %s87 = ssub.s32 %s16, %s23
      %p88 = scmp.eq.s32.totalorder %s87, 0
      %s90 = sadd.s32 %s89, 1
      %s91 = scalar_select %p88, %s89, %s90
      %p94 = pneg %p88
      %p95 = scmp.eq.s32.totalorder %s16, 3
      %p96 = por %p94, %p95
      %p97 = scmp.ne.s32.totalorder %s89, %s92
      %p98 = scmp.eq.s32.totalorder %s16, 0
      %p99 = por %p97, %p98
      %p100 = scmp.ne.s32.totalorder %s89, %s92
      %p101 = scmp.eq.s32.totalorder %s21, 3
      %p102 = por %p100, %p101
      %p103 = scmp.ne.s32.totalorder %s92, %s93
      %p104 = scmp.eq.s32.totalorder %s21, 0
      %p105 = por %p103, %p104
      %p106 = scmp.ne.s32.totalorder %s92, %s93
      %p107 = scmp.eq.s32.totalorder %s22, 3
      %p108 = por %p106, %p107
      %p110 = scmp.ne.s32.totalorder %s93, %s109
      %p111 = scmp.eq.s32.totalorder %s22, 0
      %p112 = por %p110, %p111
      %s113 = ssub.s32 %s16, %s23
      %p114 = scmp.eq.s32.totalorder %s113, 0
      %s116 = sadd.s32 %s115, 1
      %s117 = scalar_select %p114, %s115, %s116
      %p120 = pneg %p114
      %p121 = scmp.eq.s32.totalorder %s16, 3
      %p122 = por %p120, %p121
      %p123 = scmp.ne.s32.totalorder %s115, %s118
      %p124 = scmp.eq.s32.totalorder %s16, 0
      %p125 = por %p123, %p124
      %p126 = scmp.ne.s32.totalorder %s115, %s118
      %p127 = scmp.eq.s32.totalorder %s21, 3
      %p128 = por %p126, %p127
      %p129 = scmp.ne.s32.totalorder %s118, %s119
      %p130 = scmp.eq.s32.totalorder %s21, 0
      %p131 = por %p129, %p130
      %p132 = scmp.ne.s32.totalorder %s118, %s119
      %p133 = scmp.eq.s32.totalorder %s22, 3
      %p134 = por %p132, %p133
      %p136 = scmp.ne.s32.totalorder %s119, %s135
      %p137 = scmp.eq.s32.totalorder %s22, 0
      %p138 = por %p136, %p137
      %s139 = ssub.s32 %s16, %s23
      %p140 = scmp.eq.s32.totalorder %s139, 0
      %s142 = sadd.s32 %s141, 1
      %s143 = scalar_select %p140, %s141, %s142
      %p146 = pneg %p140
      %p147 = scmp.eq.s32.totalorder %s16, 3
      %p148 = por %p146, %p147
      %p149 = scmp.ne.s32.totalorder %s141, %s144
      %p150 = scmp.eq.s32.totalorder %s16, 0
      %p151 = por %p149, %p150
      %p152 = scmp.ne.s32.totalorder %s141, %s144
      %p153 = scmp.eq.s32.totalorder %s21, 3
      %p154 = por %p152, %p153
      %p155 = scmp.ne.s32.totalorder %s144, %s145
      %p156 = scmp.eq.s32.totalorder %s21, 0
      %p157 = por %p155, %p156
      %p158 = scmp.ne.s32.totalorder %s144, %s145
      %p159 = scmp.eq.s32.totalorder %s22, 3
      %p160 = por %p158, %p159
      %p162 = scmp.ne.s32.totalorder %s145, %s161
      %p163 = scmp.eq.s32.totalorder %s22, 0
      %p164 = por %p162, %p163
      %s166 = sadd.s32 %s165, 1
      %p169 = scmp.eq.s32.totalorder %s16, 3
      %p170 = scmp.ne.s32.totalorder %s165, %s167
      %p171 = scmp.eq.s32.totalorder %s16, 0
      %p172 = por %p170, %p171
      %p173 = scmp.ne.s32.totalorder %s165, %s167
      %p174 = scmp.eq.s32.totalorder %s21, 3
      %p175 = por %p173, %p174
      %p176 = scmp.ne.s32.totalorder %s167, %s168
      %p177 = scmp.eq.s32.totalorder %s21, 0
      %p178 = por %p176, %p177
      %p179 = scmp.ne.s32.totalorder %s167, %s168
      %p180 = scmp.eq.s32.totalorder %s22, 3
      %p181 = por %p179, %p180
      %p183 = scmp.ne.s32.totalorder %s168, %s182
      %p184 = scmp.eq.s32.totalorder %s22, 0
      %p185 = por %p183, %p184
      %s187 = sadd.s32 %s186, 1
      %p190 = scmp.eq.s32.totalorder %s16, 3
      %p191 = scmp.ne.s32.totalorder %s186, %s188
      %p192 = scmp.eq.s32.totalorder %s16, 0
      %p193 = por %p191, %p192
      %p194 = scmp.ne.s32.totalorder %s186, %s188
      %p195 = scmp.eq.s32.totalorder %s21, 3
      %p196 = por %p194, %p195
      %p197 = scmp.ne.s32.totalorder %s188, %s189
      %p198 = scmp.eq.s32.totalorder %s21, 0
      %p199 = por %p197, %p198
      %p200 = scmp.ne.s32.totalorder %s188, %s189
      %p201 = scmp.eq.s32.totalorder %s22, 3
      %p202 = por %p200, %p201
      %p204 = scmp.ne.s32.totalorder %s189, %s203
      %p205 = scmp.eq.s32.totalorder %s22, 0
      %p206 = por %p204, %p205
      %p207 = scmp.le.s32.totalorder 1, %s16
      %p208 = scmp.lt.s32.totalorder %s16, 5
      %p209 = pnand %p207, %p208
      %p210 = pneg %p209
      // Predicated region
      $region9: #{_lambda_.7} parent=5 // pred_check
        _
      $region10: #{_lambda_.7} parent=5 // pred_check_branch
        %212 = sbr.rel (%p209) target = $region12
      $region11: #{_lambda_.7} parent=5 // pred_region
        %s213 = ssub.s32 %s16, 1
        // Predicated region
        $region13: #{_lambda_.7} parent=11 // pred_check
          %p214 = pneg %p37
        $region14: #{_lambda_.7} parent=11 // pred_check_branch
          %216 = sbr.rel (%p214) target = $region16
        $region15: #{_lambda_.7} parent=11 // pred_region
          _
        $region16: #{_lambda_.7} parent=11 // pred_fallthru
          _
        // Predicated region
        $region17: #{_lambda_.7} parent=11 // pred_check
          %p217 = pneg %p58
        $region18: #{_lambda_.7} parent=11 // pred_check_branch
          %219 = sbr.rel (%p217) target = $region20
        $region19: #{_lambda_.7} parent=11 // pred_region
          %221 = vsyncadd [#allocation5], 0
          %s222 = sshll.u32 %s1, 4
          %s223 = int_to_ptr.hbm [resolvable:$true] %s222
          %s224 = sshll.u32 [#allocation4], 4
          %s225 = int_to_ptr.vmem [resolvable:$true] %s224
          %230 = dma.hbm_to_vmem [thread:$0]  %s223, 4096, %s225, [#allocation5], 1024, 1024, 64
        $region20: #{_lambda_.7} parent=11 // pred_fallthru
          _
        // Predicated region
        $region21: #{_lambda_.7} parent=11 // pred_check
          %p231 = pneg %p79
        $region22: #{_lambda_.7} parent=11 // pred_check_branch
          %233 = sbr.rel (%p231) target = $region24
        $region23: #{_lambda_.7} parent=11 // pred_region
          %235 = vsyncadd [#allocation8], 0
          %s237 = sshll.u32 %s2, 4
          %s238 = int_to_ptr.hbm [resolvable:$true] %s237
          %s239 = sshll.u32 [#allocation7], 4
          %s240 = int_to_ptr.vmem [resolvable:$true] %s239
          %242 = dma.hbm_to_vmem [thread:$0]  %s238, 256, %s240, [#allocation8]
        $region24: #{_lambda_.7} parent=11 // pred_fallthru
          _
        // Predicated region
        $region25: #{_lambda_.7} parent=11 // pred_check
          %p243 = pneg %p178
        $region26: #{_lambda_.7} parent=11 // pred_check_branch
          %245 = sbr.rel (%p243) target = $region28
        $region27: #{_lambda_.7} parent=11 // pred_region
          %247 = vsyncadd [#allocation8], 0
          %s249 = sshll.u32 %s6, 4
          %s250 = int_to_ptr.hbm [resolvable:$true] %s249
          %s251 = sshll.u32 [#allocation11], 4
          %s252 = int_to_ptr.vmem [resolvable:$true] %s251
          %254 = dma.hbm_to_vmem [thread:$0]  %s250, 16, %s252, [#allocation8]
        $region28: #{_lambda_.7} parent=11 // pred_fallthru
          _
      $region12: #{_lambda_.7} parent=5 // pred_fallthru
        _
      %p255 = scmp.lt.s32.totalorder %s16, 4
      // Predicated region
      $region29: #{_lambda_.7} parent=5 // pred_check
        %p256 = pneg %p255
      $region30: #{_lambda_.7} parent=5 // pred_check_branch
        %258 = sbr.rel (%p256) target = $region32
      $region31: #{_lambda_.7} parent=5 // pred_region
        // Predicated region
        $region33: #{_lambda_.7} parent=31 // pred_check
          %p259 = pneg %p99
        $region34: #{_lambda_.7} parent=31 // pred_check_branch
          %261 = sbr.rel (%p259) target = $region36
        $region35: #{_lambda_.7} parent=31 // pred_region
          %s262 = sand.u32 %s16, 1
          %s263 = scalar_lea.sflag [#allocation5], %s262
          %s264 = sand.u32 %s89, 1
          %s265 = smul.addr %s264, 4096
          %s266 = scalar_lea.vmem [#allocation9], %s265
          %s267 = smul.u32 4, %s16
          %269 = vsyncadd %s263, 0
          %s270 = smul.addr %s267, 4
          %s271 = scalar_lea.hbm %s3, %s270
          %s272 = sshll.u32 %s271, 4
          %s273 = int_to_ptr.hbm [resolvable:$true] %s272
          %s274 = sshll.u32 %s266, 4
          %s275 = int_to_ptr.vmem [resolvable:$true] %s274
          %280 = dma.hbm_to_vmem [thread:$0]  %s273, 65536, %s275, %s263, 1024, 256, 16
        $region36: #{_lambda_.7} parent=31 // pred_fallthru
          _
        // Predicated region
        $region37: #{_lambda_.7} parent=31 // pred_check
          %p281 = pneg %p125
        $region38: #{_lambda_.7} parent=31 // pred_check_branch
          %283 = sbr.rel (%p281) target = $region40
        $region39: #{_lambda_.7} parent=31 // pred_region
          %s284 = sand.u32 %s16, 1
          %s285 = scalar_lea.sflag [#allocation5], %s284
          %s286 = sand.u32 %s115, 1
          %s287 = smul.addr %s286, 4
          %s288 = scalar_lea.vmem [#allocation10], %s287
          %s289 = smul.u32 4, %s16
          %291 = vsyncadd %s285, 0
          %s292 = scalar_lea.hbm %s4, %s289
          %s294 = sshll.u32 %s292, 4
          %s295 = int_to_ptr.hbm [resolvable:$true] %s294
          %s296 = sshll.u32 %s288, 4
          %s297 = int_to_ptr.vmem [resolvable:$true] %s296
          %299 = dma.hbm_to_vmem [thread:$0]  %s295, 64, %s297, %s285
        $region40: #{_lambda_.7} parent=31 // pred_fallthru
          _
        // Predicated region
        $region41: #{_lambda_.7} parent=31 // pred_check
          %p300 = pneg %p151
        $region42: #{_lambda_.7} parent=31 // pred_check_branch
          %302 = sbr.rel (%p300) target = $region44
        $region43: #{_lambda_.7} parent=31 // pred_region
          %s303 = smul.u32 64, %s16
          %p304 = scmp.lt.s32.totalorder %s303, 255
          %s305 = scalar_select %p304, %s303, 255
          %s306 = smul.addr %s305, 4
          %s307 = scalar_lea.vmem %s5, %s306
          %s308 = smul.u32 64, %s16
        $region44: #{_lambda_.7} parent=31 // pred_fallthru
          _
      $region32: #{_lambda_.7} parent=5 // pred_fallthru
        _
      %p309 = scmp.le.s32.totalorder 1, %s16
      %p310 = scmp.lt.s32.totalorder %s16, 5
      %p311 = pnand %p309, %p310
      %p312 = pneg %p311
      // Predicated region
      $region45: #{_lambda_.7} parent=5 // pred_check
        _
      $region46: #{_lambda_.7} parent=5 // pred_check_branch
        %314 = sbr.rel (%p311) target = $region48
      $region47: #{_lambda_.7} parent=5 // pred_region
        %s315 = ssub.s32 %s16, 1
        // Predicated region
        $region49: #{_lambda_.7} parent=47 // pred_check
          %p316 = pneg %p58
        $region50: #{_lambda_.7} parent=47 // pred_check_branch
          %318 = sbr.rel (%p316) target = $region52
        $region51: #{_lambda_.7} parent=47 // pred_region
          %320 = dma.done [#allocation5], 4096
        $region52: #{_lambda_.7} parent=47 // pred_fallthru
          _
        // Predicated region
        $region53: #{_lambda_.7} parent=47 // pred_check
          %p321 = pneg %p79
        $region54: #{_lambda_.7} parent=47 // pred_check_branch
          %323 = sbr.rel (%p321) target = $region56
        $region55: #{_lambda_.7} parent=47 // pred_region
          %325 = dma.done [#allocation8], 256
        $region56: #{_lambda_.7} parent=47 // pred_fallthru
          _
        %s326 = sand.u32 %s21, 1
        %s327 = scalar_lea.sflag [#allocation5], %s326
        %s328 = sand.u32 %s92, 1
        %s329 = smul.addr %s328, 4096
        %s330 = scalar_lea.vmem [#allocation9], %s329
        // Predicated region
        $region57: #{_lambda_.7} parent=47 // pred_check
          %p331 = pneg %p105
        $region58: #{_lambda_.7} parent=47 // pred_check_branch
          %333 = sbr.rel (%p331) target = $region60
        $region59: #{_lambda_.7} parent=47 // pred_region
          %335 = dma.done %s327, 65536
        $region60: #{_lambda_.7} parent=47 // pred_fallthru
          _
        %s336 = sand.u32 %s21, 1
        %s337 = scalar_lea.sflag [#allocation5], %s336
        %s338 = sand.u32 %s118, 1
        %s339 = smul.addr %s338, 4
        %s340 = scalar_lea.vmem [#allocation10], %s339
        // Predicated region
        $region61: #{_lambda_.7} parent=47 // pred_check
          %p341 = pneg %p131
        $region62: #{_lambda_.7} parent=47 // pred_check_branch
          %343 = sbr.rel (%p341) target = $region64
        $region63: #{_lambda_.7} parent=47 // pred_region
          %345 = dma.done %s337, 64
        $region64: #{_lambda_.7} parent=47 // pred_fallthru
          _
        // Predicated region
        $region65: #{_lambda_.7} parent=47 // pred_check
          %p346 = pneg %p178
        $region66: #{_lambda_.7} parent=47 // pred_check_branch
          %348 = sbr.rel (%p346) target = $region68
        $region67: #{_lambda_.7} parent=47 // pred_region
          %350 = dma.done [#allocation8], 16
        $region68: #{_lambda_.7} parent=47 // pred_fallthru
          _
        %p351 = pneg %p37
        %p352 = pneg %p34
        %p353 = pneg %p58
        %p354 = pneg %p55
        %p355 = pneg %p79
        %p356 = pneg %p76
        %s357 = sand.u32 %s21, 1
        %s358 = scalar_lea.sflag [#allocation5], %s357
        %s359 = sand.u32 %s92, 1
        %s360 = smul.addr %s359, 4096
        %s361 = scalar_lea.vmem [#allocation9], %s360
        %p362 = pneg %p105
        %p363 = pneg %p102
        %s364 = sand.u32 %s21, 1
        %s365 = scalar_lea.sflag [#allocation5], %s364
        %s366 = sand.u32 %s118, 1
        %s367 = smul.addr %s366, 4
        %s368 = scalar_lea.vmem [#allocation10], %s367
        %p369 = pneg %p131
        %p370 = pneg %p128
        %s371 = smul.u32 64, %s21
        %p372 = scmp.lt.s32.totalorder %s371, 255
        %s373 = scalar_select %p372, %s371, 255
        %s374 = smul.addr %s373, 4
        %s375 = scalar_lea.vmem %s5, %s374
        %p376 = pneg %p157
        %p377 = pneg %p154
        %p378 = pneg %p178
        %p379 = pneg %p175
        %p380 = pneg %p199
        %p381 = pneg %p196
        %s382 = smul.u32 4, %s21
        %s383 = smul.u32 4, %s21
        %s384 = smul.u32 64, %s21
        %p385 = scmp.lt.s32.totalorder %s384, 255
        %s386 = scalar_select %p385, %s384, 255
        %s387 = smul.addr %s386, 4
        %s388 = scalar_lea.vmem %s5, %s387
        %s389 = smul.u32 64, %s21
        %p391 = scmp.eq.s32.totalorder %s21, 0
        // Predicated region
        $region69: #{_lambda_.7} parent=47 // pred_check
          %p392 = pneg %p391
        $region70: #{_lambda_.7} parent=47 // pred_check_branch
          %394 = sbr.rel (%p392) target = $region72
        $region71: #{_lambda_.7} parent=47 // pred_region
          %v395 = vld [vmem:[%s0] sm:$0x3]
          %v396 = vpack.c.bf16 %v395, %v395
          %v397 = vld [vmem:[#allocation4] sm:$0xff]
          %v398 = vld [vmem:[#allocation4 + $0x8] sm:$0xff]
          %v399 = vld [vmem:[#allocation4 + $0x10] sm:$0xff]
          %v400 = vld [vmem:[#allocation4 + $0x18] sm:$0xff]
          %v401 = vld [vmem:[#allocation4 + $0x20] sm:$0xff]
          %v402 = vld [vmem:[#allocation4 + $0x28] sm:$0xff]
          %v403 = vld [vmem:[#allocation4 + $0x30] sm:$0xff]
          %v404 = vld [vmem:[#allocation4 + $0x38] sm:$0xff]
          %v405 = vld [vmem:[#allocation4 + $0x40] sm:$0xff]
          %v406 = vld [vmem:[#allocation4 + $0x48] sm:$0xff]
          %v407 = vld [vmem:[#allocation4 + $0x50] sm:$0xff]
          %v408 = vld [vmem:[#allocation4 + $0x58] sm:$0xff]
          %v409 = vld [vmem:[#allocation4 + $0x60] sm:$0xff]
          %v410 = vld [vmem:[#allocation4 + $0x68] sm:$0xff]
          %v411 = vld [vmem:[#allocation4 + $0x70] sm:$0xff]
          %v412 = vld [vmem:[#allocation4 + $0x78] sm:$0xff]
          %v413 = vld [vmem:[#allocation4 + $0x80] sm:$0xff]
          %v414 = vld [vmem:[#allocation4 + $0x88] sm:$0xff]
          %v415 = vld [vmem:[#allocation4 + $0x90] sm:$0xff]
          %v416 = vld [vmem:[#allocation4 + $0x98] sm:$0xff]
          %v417 = vld [vmem:[#allocation4 + $0xa0] sm:$0xff]
          %v418 = vld [vmem:[#allocation4 + $0xa8] sm:$0xff]
          %v419 = vld [vmem:[#allocation4 + $0xb0] sm:$0xff]
          %v420 = vld [vmem:[#allocation4 + $0xb8] sm:$0xff]
          %v421 = vld [vmem:[#allocation4 + $0xc0] sm:$0xff]
          %v422 = vld [vmem:[#allocation4 + $0xc8] sm:$0xff]
          %v423 = vld [vmem:[#allocation4 + $0xd0] sm:$0xff]
          %v424 = vld [vmem:[#allocation4 + $0xd8] sm:$0xff]
          %v425 = vld [vmem:[#allocation4 + $0xe0] sm:$0xff]
          %v426 = vld [vmem:[#allocation4 + $0xe8] sm:$0xff]
          %v427 = vld [vmem:[#allocation4 + $0xf0] sm:$0xff]
          %v428 = vld [vmem:[#allocation4 + $0xf8] sm:$0xff]
          %v429 = vld [vmem:[#allocation7] sm:$0xff]
          %v430 = vld [vmem:[#allocation7 + $0x8] sm:$0xff]
          %v433 = vperm.slane %v429, 0
          %v434 = vperm.slane %v429, 1
          %v435 = vperm.slane %v429, 2
          %v436 = vperm.slane %v429, 3
          %v437 = vperm.slane %v429, 4
          %v438 = vperm.slane %v429, 5
          %v439 = vperm.slane %v429, 6
          %v440 = vperm.slane %v429, 7
          %v441 = vperm.slane %v430, 0
          %v442 = vperm.slane %v430, 1
          %v443 = vperm.slane %v430, 2
          %v444 = vperm.slane %v430, 3
          %v445 = vperm.slane %v430, 4
          %v446 = vperm.slane %v430, 5
          %v447 = vperm.slane %v430, 6
          %v448 = vperm.slane %v430, 7
          %v497 = vunpack.c.l.b16 %v397
          %v498 = vunpack.c.h.b16 %v397
          %v499 = vunpack.c.l.b16 %v398
          %v500 = vunpack.c.h.b16 %v398
          %v501 = vunpack.c.l.b16 %v399
          %v502 = vunpack.c.h.b16 %v399
          %v503 = vunpack.c.l.b16 %v400
          %v504 = vunpack.c.h.b16 %v400
          %v505 = vunpack.c.l.b16 %v401
          %v506 = vunpack.c.h.b16 %v401
          %v507 = vunpack.c.l.b16 %v402
          %v508 = vunpack.c.h.b16 %v402
          %v509 = vunpack.c.l.b16 %v403
          %v510 = vunpack.c.h.b16 %v403
          %v511 = vunpack.c.l.b16 %v404
          %v512 = vunpack.c.h.b16 %v404
          %v513 = vunpack.c.l.b16 %v405
          %v514 = vunpack.c.h.b16 %v405
          %v515 = vunpack.c.l.b16 %v406
          %v516 = vunpack.c.h.b16 %v406
          %v517 = vunpack.c.l.b16 %v407
          %v518 = vunpack.c.h.b16 %v407
          %v519 = vunpack.c.l.b16 %v408
          %v520 = vunpack.c.h.b16 %v408
          %v521 = vunpack.c.l.b16 %v409
          %v522 = vunpack.c.h.b16 %v409
          %v523 = vunpack.c.l.b16 %v410
          %v524 = vunpack.c.h.b16 %v410
          %v525 = vunpack.c.l.b16 %v411
          %v526 = vunpack.c.h.b16 %v411
          %v527 = vunpack.c.l.b16 %v412
          %v528 = vunpack.c.h.b16 %v412
          %v529 = vunpack.c.l.b16 %v413
          %v530 = vunpack.c.h.b16 %v413
          %v531 = vunpack.c.l.b16 %v414
          %v532 = vunpack.c.h.b16 %v414
          %v533 = vunpack.c.l.b16 %v415
          %v534 = vunpack.c.h.b16 %v415
          %v535 = vunpack.c.l.b16 %v416
          %v536 = vunpack.c.h.b16 %v416
          %v537 = vunpack.c.l.b16 %v417
          %v538 = vunpack.c.h.b16 %v417
          %v539 = vunpack.c.l.b16 %v418
          %v540 = vunpack.c.h.b16 %v418
          %v541 = vunpack.c.l.b16 %v419
          %v542 = vunpack.c.h.b16 %v419
          %v543 = vunpack.c.l.b16 %v420
          %v544 = vunpack.c.h.b16 %v420
          %v545 = vunpack.c.l.b16 %v421
          %v546 = vunpack.c.h.b16 %v421
          %v547 = vunpack.c.l.b16 %v422
          %v548 = vunpack.c.h.b16 %v422
          %v549 = vunpack.c.l.b16 %v423
          %v550 = vunpack.c.h.b16 %v423
          %v551 = vunpack.c.l.b16 %v424
          %v552 = vunpack.c.h.b16 %v424
          %v553 = vunpack.c.l.b16 %v425
          %v554 = vunpack.c.h.b16 %v425
          %v555 = vunpack.c.l.b16 %v426
          %v556 = vunpack.c.h.b16 %v426
          %v557 = vunpack.c.l.b16 %v427
          %v558 = vunpack.c.h.b16 %v427
          %v559 = vunpack.c.l.b16 %v428
          %v560 = vunpack.c.h.b16 %v428
          %v561 = vpack.c.b16 %v513, %v497
          %v562 = vpack.c.b16 %v514, %v498
          %v563 = vpack.c.b16 %v515, %v499
          %v564 = vpack.c.b16 %v516, %v500
          %v565 = vpack.c.b16 %v517, %v501
          %v566 = vpack.c.b16 %v518, %v502
          %v567 = vpack.c.b16 %v519, %v503
          %v568 = vpack.c.b16 %v520, %v504
          %v569 = vpack.c.b16 %v521, %v505
          %v570 = vpack.c.b16 %v522, %v506
          %v571 = vpack.c.b16 %v523, %v507
          %v572 = vpack.c.b16 %v524, %v508
          %v573 = vpack.c.b16 %v525, %v509
          %v574 = vpack.c.b16 %v526, %v510
          %v575 = vpack.c.b16 %v527, %v511
          %v576 = vpack.c.b16 %v528, %v512
          %v577 = vpack.c.b16 %v545, %v529
          %v578 = vpack.c.b16 %v546, %v530
          %v579 = vpack.c.b16 %v547, %v531
          %v580 = vpack.c.b16 %v548, %v532
          %v581 = vpack.c.b16 %v549, %v533
          %v582 = vpack.c.b16 %v550, %v534
          %v583 = vpack.c.b16 %v551, %v535
          %v584 = vpack.c.b16 %v552, %v536
          %v585 = vpack.c.b16 %v553, %v537
          %v586 = vpack.c.b16 %v554, %v538
          %v587 = vpack.c.b16 %v555, %v539
          %v588 = vpack.c.b16 %v556, %v540
          %v589 = vpack.c.b16 %v557, %v541
          %v590 = vpack.c.b16 %v558, %v542
          %v591 = vpack.c.b16 %v559, %v543
          %v592 = vpack.c.b16 %v560, %v544
          %vm625 = vcmask 261120
          %v627 = vsel %vm625, %v396, 0
          %629 = vmatpush.bf16.msra.mxu0 0
          %630 = vmatpush.bf16.msra.mxu0 0
          %631 = vmatpush.bf16.msra.mxu0 0
          %632 = vmatpush.bf16.msra.mxu0 0
          %633 = vmatpush.bf16.msra.mxu0 0
          %634 = vmatpush.bf16.msra.mxu0 0
          %635 = vmatpush.bf16.msra.mxu0 %v577
          %636 = vmatpush.bf16.msra.mxu0 %v561
          %637 = vmatmul.bf16.gmra.mxu0 %v627
          %v638 = vpop.f32.mrf.mxu0
          %v639 = vadd.f32 %v433, %v638
          %v640 = vpop.f32.mrf.mxu0
          %641 = vdwg.mxu0
          %642 = vmatpush.bf16.msra.mxu0 0
          %643 = vmatpush.bf16.msra.mxu0 0
          %644 = vmatpush.bf16.msra.mxu0 0
          %645 = vmatpush.bf16.msra.mxu0 0
          %646 = vmatpush.bf16.msra.mxu0 0
          %647 = vmatpush.bf16.msra.mxu0 0
          %648 = vmatpush.bf16.msra.mxu0 %v578
          %649 = vmatpush.bf16.msra.mxu0 %v562
          %650 = vmatmul.bf16.gmra.mxu0 %v627
          %v651 = vpop.f32.mrf.mxu0
          %v652 = vadd.f32 %v434, %v651
          %v653 = vpop.f32.mrf.mxu0
          %654 = vdwg.mxu0
          %655 = vmatpush.bf16.msra.mxu0 0
          %656 = vmatpush.bf16.msra.mxu0 0
          %657 = vmatpush.bf16.msra.mxu0 0
          %658 = vmatpush.bf16.msra.mxu0 0
          %659 = vmatpush.bf16.msra.mxu0 0
          %660 = vmatpush.bf16.msra.mxu0 0
          %661 = vmatpush.bf16.msra.mxu0 %v579
          %662 = vmatpush.bf16.msra.mxu0 %v563
          %663 = vmatmul.bf16.gmra.mxu0 %v627
          %v664 = vpop.f32.mrf.mxu0
          %v665 = vadd.f32 %v435, %v664
          %v666 = vpop.f32.mrf.mxu0
          %667 = vdwg.mxu0
          %668 = vmatpush.bf16.msra.mxu0 0
          %669 = vmatpush.bf16.msra.mxu0 0
          %670 = vmatpush.bf16.msra.mxu0 0
          %671 = vmatpush.bf16.msra.mxu0 0
          %672 = vmatpush.bf16.msra.mxu0 0
          %673 = vmatpush.bf16.msra.mxu0 0
          %674 = vmatpush.bf16.msra.mxu0 %v580
          %675 = vmatpush.bf16.msra.mxu0 %v564
          %676 = vmatmul.bf16.gmra.mxu0 %v627
          %v677 = vpop.f32.mrf.mxu0
          %v678 = vadd.f32 %v436, %v677
          %v679 = vpop.f32.mrf.mxu0
          %680 = vdwg.mxu0
          %681 = vmatpush.bf16.msra.mxu0 0
          %682 = vmatpush.bf16.msra.mxu0 0
          %683 = vmatpush.bf16.msra.mxu0 0
          %684 = vmatpush.bf16.msra.mxu0 0
          %685 = vmatpush.bf16.msra.mxu0 0
          %686 = vmatpush.bf16.msra.mxu0 0
          %687 = vmatpush.bf16.msra.mxu0 %v581
          %688 = vmatpush.bf16.msra.mxu0 %v565
          %689 = vmatmul.bf16.gmra.mxu0 %v627
          %v690 = vpop.f32.mrf.mxu0
          %v691 = vadd.f32 %v437, %v690
          %v692 = vpop.f32.mrf.mxu0
          %693 = vdwg.mxu0
          %694 = vmatpush.bf16.msra.mxu0 0
          %695 = vmatpush.bf16.msra.mxu0 0
          %696 = vmatpush.bf16.msra.mxu0 0
          %697 = vmatpush.bf16.msra.mxu0 0
          %698 = vmatpush.bf16.msra.mxu0 0
          %699 = vmatpush.bf16.msra.mxu0 0
          %700 = vmatpush.bf16.msra.mxu0 %v582
          %701 = vmatpush.bf16.msra.mxu0 %v566
          %702 = vmatmul.bf16.gmra.mxu0 %v627
          %v703 = vpop.f32.mrf.mxu0
          %v704 = vadd.f32 %v438, %v703
          %v705 = vpop.f32.mrf.mxu0
          %706 = vdwg.mxu0
          %707 = vmatpush.bf16.msra.mxu0 0
          %708 = vmatpush.bf16.msra.mxu0 0
          %709 = vmatpush.bf16.msra.mxu0 0
          %710 = vmatpush.bf16.msra.mxu0 0
          %711 = vmatpush.bf16.msra.mxu0 0
          %712 = vmatpush.bf16.msra.mxu0 0
          %713 = vmatpush.bf16.msra.mxu0 %v583
          %714 = vmatpush.bf16.msra.mxu0 %v567
          %715 = vmatmul.bf16.gmra.mxu0 %v627
          %v716 = vpop.f32.mrf.mxu0
          %v717 = vadd.f32 %v439, %v716
          %v718 = vpop.f32.mrf.mxu0
          %719 = vdwg.mxu0
          %720 = vmatpush.bf16.msra.mxu0 0
          %721 = vmatpush.bf16.msra.mxu0 0
          %722 = vmatpush.bf16.msra.mxu0 0
          %723 = vmatpush.bf16.msra.mxu0 0
          %724 = vmatpush.bf16.msra.mxu0 0
          %725 = vmatpush.bf16.msra.mxu0 0
          %726 = vmatpush.bf16.msra.mxu0 %v584
          %727 = vmatpush.bf16.msra.mxu0 %v568
          %728 = vmatmul.bf16.gmra.mxu0 %v627
          %v729 = vpop.f32.mrf.mxu0
          %v730 = vadd.f32 %v440, %v729
          %v731 = vpop.f32.mrf.mxu0
          %732 = vdwg.mxu0
          %733 = vmatpush.bf16.msra.mxu0 0
          %734 = vmatpush.bf16.msra.mxu0 0
          %735 = vmatpush.bf16.msra.mxu0 0
          %736 = vmatpush.bf16.msra.mxu0 0
          %737 = vmatpush.bf16.msra.mxu0 0
          %738 = vmatpush.bf16.msra.mxu0 0
          %739 = vmatpush.bf16.msra.mxu0 %v585
          %740 = vmatpush.bf16.msra.mxu0 %v569
          %741 = vmatmul.bf16.gmra.mxu0 %v627
          %v742 = vpop.f32.mrf.mxu0
          %v743 = vadd.f32 %v441, %v742
          %v744 = vpop.f32.mrf.mxu0
          %745 = vdwg.mxu0
          %746 = vmatpush.bf16.msra.mxu0 0
          %747 = vmatpush.bf16.msra.mxu0 0
          %748 = vmatpush.bf16.msra.mxu0 0
          %749 = vmatpush.bf16.msra.mxu0 0
          %750 = vmatpush.bf16.msra.mxu0 0
          %751 = vmatpush.bf16.msra.mxu0 0
          %752 = vmatpush.bf16.msra.mxu0 %v586
          %753 = vmatpush.bf16.msra.mxu0 %v570
          %754 = vmatmul.bf16.gmra.mxu0 %v627
          %v755 = vpop.f32.mrf.mxu0
          %v756 = vadd.f32 %v442, %v755
          %v757 = vpop.f32.mrf.mxu0
          %758 = vdwg.mxu0
          %759 = vmatpush.bf16.msra.mxu0 0
          %760 = vmatpush.bf16.msra.mxu0 0
          %761 = vmatpush.bf16.msra.mxu0 0
          %762 = vmatpush.bf16.msra.mxu0 0
          %763 = vmatpush.bf16.msra.mxu0 0
          %764 = vmatpush.bf16.msra.mxu0 0
          %765 = vmatpush.bf16.msra.mxu0 %v587
          %766 = vmatpush.bf16.msra.mxu0 %v571
          %767 = vmatmul.bf16.gmra.mxu0 %v627
          %v768 = vpop.f32.mrf.mxu0
          %v769 = vadd.f32 %v443, %v768
          %v770 = vpop.f32.mrf.mxu0
          %771 = vdwg.mxu0
          %772 = vmatpush.bf16.msra.mxu0 0
          %773 = vmatpush.bf16.msra.mxu0 0
          %774 = vmatpush.bf16.msra.mxu0 0
          %775 = vmatpush.bf16.msra.mxu0 0
          %776 = vmatpush.bf16.msra.mxu0 0
          %777 = vmatpush.bf16.msra.mxu0 0
          %778 = vmatpush.bf16.msra.mxu0 %v588
          %779 = vmatpush.bf16.msra.mxu0 %v572
          %780 = vmatmul.bf16.gmra.mxu0 %v627
          %v781 = vpop.f32.mrf.mxu0
          %v782 = vadd.f32 %v444, %v781
          %v783 = vpop.f32.mrf.mxu0
          %784 = vdwg.mxu0
          %785 = vmatpush.bf16.msra.mxu0 0
          %786 = vmatpush.bf16.msra.mxu0 0
          %787 = vmatpush.bf16.msra.mxu0 0
          %788 = vmatpush.bf16.msra.mxu0 0
          %789 = vmatpush.bf16.msra.mxu0 0
          %790 = vmatpush.bf16.msra.mxu0 0
          %791 = vmatpush.bf16.msra.mxu0 %v589
          %792 = vmatpush.bf16.msra.mxu0 %v573
          %793 = vmatmul.bf16.gmra.mxu0 %v627
          %v794 = vpop.f32.mrf.mxu0
          %v795 = vadd.f32 %v445, %v794
          %v796 = vpop.f32.mrf.mxu0
          %797 = vdwg.mxu0
          %798 = vmatpush.bf16.msra.mxu0 0
          %799 = vmatpush.bf16.msra.mxu0 0
          %800 = vmatpush.bf16.msra.mxu0 0
          %801 = vmatpush.bf16.msra.mxu0 0
          %802 = vmatpush.bf16.msra.mxu0 0
          %803 = vmatpush.bf16.msra.mxu0 0
          %804 = vmatpush.bf16.msra.mxu0 %v590
          %805 = vmatpush.bf16.msra.mxu0 %v574
          %806 = vmatmul.bf16.gmra.mxu0 %v627
          %v807 = vpop.f32.mrf.mxu0
          %v808 = vadd.f32 %v446, %v807
          %v809 = vpop.f32.mrf.mxu0
          %810 = vdwg.mxu0
          %811 = vmatpush.bf16.msra.mxu0 0
          %812 = vmatpush.bf16.msra.mxu0 0
          %813 = vmatpush.bf16.msra.mxu0 0
          %814 = vmatpush.bf16.msra.mxu0 0
          %815 = vmatpush.bf16.msra.mxu0 0
          %816 = vmatpush.bf16.msra.mxu0 0
          %817 = vmatpush.bf16.msra.mxu0 %v591
          %818 = vmatpush.bf16.msra.mxu0 %v575
          %819 = vmatmul.bf16.gmra.mxu0 %v627
          %v820 = vpop.f32.mrf.mxu0
          %v821 = vadd.f32 %v447, %v820
          %v822 = vpop.f32.mrf.mxu0
          %823 = vdwg.mxu0
          %824 = vmatpush.bf16.msra.mxu0 0
          %825 = vmatpush.bf16.msra.mxu0 0
          %826 = vmatpush.bf16.msra.mxu0 0
          %827 = vmatpush.bf16.msra.mxu0 0
          %828 = vmatpush.bf16.msra.mxu0 0
          %829 = vmatpush.bf16.msra.mxu0 0
          %830 = vmatpush.bf16.msra.mxu0 %v592
          %831 = vmatpush.bf16.msra.mxu0 %v576
          %832 = vmatmul.bf16.gmra.mxu0 %v627
          %v833 = vpop.f32.mrf.mxu0
          %v834 = vadd.f32 %v448, %v833
          %v835 = vpop.f32.mrf.mxu0
          %836 = vdwg.mxu0
          %v837 = vmax.f32 %v639, 0.0
          %v838 = vmax.f32 %v652, 0.0
          %v839 = vmax.f32 %v665, 0.0
          %v840 = vmax.f32 %v678, 0.0
          %v841 = vmax.f32 %v691, 0.0
          %v842 = vmax.f32 %v704, 0.0
          %v843 = vmax.f32 %v717, 0.0
          %v844 = vmax.f32 %v730, 0.0
          %v845 = vmax.f32 %v743, 0.0
          %v846 = vmax.f32 %v756, 0.0
          %v847 = vmax.f32 %v769, 0.0
          %v848 = vmax.f32 %v782, 0.0
          %v849 = vmax.f32 %v795, 0.0
          %v850 = vmax.f32 %v808, 0.0
          %v851 = vmax.f32 %v821, 0.0
          %v852 = vmax.f32 %v834, 0.0
          %v869 = vrot.slane %v838, 6
          %v870 = vrot.slane %v839, 4
          %v871 = vrot.slane %v840, 2
          %v872 = vrot.slane %v842, 6
          %v873 = vrot.slane %v843, 4
          %v874 = vrot.slane %v844, 2
          %v875 = vrot.slane %v846, 6
          %v876 = vrot.slane %v847, 4
          %v877 = vrot.slane %v848, 2
          %v878 = vrot.slane %v850, 6
          %v879 = vrot.slane %v851, 4
          %v880 = vrot.slane %v852, 2
          %vm881 = vcmask 1041408
          %v882 = vsel %vm881, %v837, %v869
          %vm883 = vcmask 1045508
          %v884 = vsel %vm883, %v870, %v871
          %vm885 = vcmask 1043456
          %v886 = vsel %vm885, %v882, %v884
          %v887 = vsel %vm881, %v841, %v872
          %v888 = vsel %vm883, %v873, %v874
          %v889 = vsel %vm885, %v887, %v888
          %v890 = vsel %vm881, %v845, %v875
          %v891 = vsel %vm883, %v876, %v877
          %v892 = vsel %vm885, %v890, %v891
          %v893 = vsel %vm881, %v849, %v878
          %v894 = vsel %vm883, %v879, %v880
          %v895 = vsel %vm885, %v893, %v894
          %900 = vst [vmem:[#allocation2] sm:$0xff] %v886
          %901 = vst [vmem:[#allocation2 + $0x8] sm:$0xff] %v889
          %902 = vst [vmem:[#allocation2 + $0x10] sm:$0xff] %v892
          %903 = vst [vmem:[#allocation2 + $0x18] sm:$0xff] %v895
          %vm904 = vcmask 74752
          %905 = vst.msk [vmem:[#allocation3] sm:$0x3] %vm904, 0.0
        $region72: #{_lambda_.7} parent=47 // pred_fallthru
          _
        %v906 = vld [vmem:[#allocation2] sm:$0xff]
        %v907 = vld [vmem:[#allocation2 + $0x8] sm:$0xff]
        %v908 = vld [vmem:[#allocation2 + $0x10] sm:$0xff]
        %v909 = vld [vmem:[#allocation2 + $0x18] sm:$0xff]
        %914 = vst [vmem:[#allocation1] ss:$4 sm:$0xff] %v906
        %s915 = scalar_lea.vmem [#allocation1], 32
        %916 = vst [vmem:[%s915] ss:$4 sm:$0xff] %v907
        %v917 = vld.sshfl [vmem:[#allocation1] sm:$0xff pattern:$0x73625140]
        %v918 = vld.sshfl [vmem:[#allocation1 + $0x8] sm:$0xff pattern:$0x73625140]
        %v919 = vld.sshfl [vmem:[#allocation1 + $0x10] sm:$0xff pattern:$0x73625140]
        %v920 = vld.sshfl [vmem:[#allocation1 + $0x18] sm:$0xff pattern:$0x73625140]
        %v921 = vld.sshfl [vmem:[#allocation1 + $0x20] sm:$0xff pattern:$0x73625140]
        %v922 = vld.sshfl [vmem:[#allocation1 + $0x28] sm:$0xff pattern:$0x73625140]
        %v923 = vld.sshfl [vmem:[#allocation1 + $0x30] sm:$0xff pattern:$0x73625140]
        %v924 = vld.sshfl [vmem:[#allocation1 + $0x38] sm:$0xff pattern:$0x73625140]
        %925 = vst [vmem:[#allocation1] ss:$4 sm:$0xff] %v908
        %926 = vst [vmem:[%s915] ss:$4 sm:$0xff] %v909
        %v927 = vld.sshfl [vmem:[#allocation1] sm:$0xff pattern:$0x73625140]
        %v928 = vld.sshfl [vmem:[#allocation1 + $0x8] sm:$0xff pattern:$0x73625140]
        %v929 = vld.sshfl [vmem:[#allocation1 + $0x10] sm:$0xff pattern:$0x73625140]
        %v930 = vld.sshfl [vmem:[#allocation1 + $0x18] sm:$0xff pattern:$0x73625140]
        %v931 = vld.sshfl [vmem:[#allocation1 + $0x20] sm:$0xff pattern:$0x73625140]
        %v932 = vld.sshfl [vmem:[#allocation1 + $0x28] sm:$0xff pattern:$0x73625140]
        %v933 = vld.sshfl [vmem:[#allocation1 + $0x30] sm:$0xff pattern:$0x73625140]
        %v934 = vld.sshfl [vmem:[#allocation1 + $0x38] sm:$0xff pattern:$0x73625140]
        %v951 = vpack.c.bf16 %v917, %v917
        %v952 = vpack.c.bf16 %v918, %v918
        %v953 = vpack.c.bf16 %v919, %v919
        %v954 = vpack.c.bf16 %v920, %v920
        %v955 = vpack.c.bf16 %v921, %v921
        %v956 = vpack.c.bf16 %v922, %v922
        %v957 = vpack.c.bf16 %v923, %v923
        %v958 = vpack.c.bf16 %v924, %v924
        %v959 = vpack.c.bf16 %v927, %v927
        %v960 = vpack.c.bf16 %v928, %v928
        %v961 = vpack.c.bf16 %v929, %v929
        %v962 = vpack.c.bf16 %v930, %v930
        %v963 = vpack.c.bf16 %v931, %v931
        %v964 = vpack.c.bf16 %v932, %v932
        %v965 = vpack.c.bf16 %v933, %v933
        %v966 = vpack.c.bf16 %v934, %v934
        %v967 = vld [vmem:[%s330] sm:$0xff]
        %v968 = vld [vmem:[%s330 + $0x8] sm:$0xff]
        %v969 = vld [vmem:[%s330 + $0x10] sm:$0xff]
        %v970 = vld [vmem:[%s330 + $0x18] sm:$0xff]
        %v971 = vld [vmem:[%s330 + $0x20] sm:$0xff]
        %v972 = vld [vmem:[%s330 + $0x28] sm:$0xff]
        %v973 = vld [vmem:[%s330 + $0x30] sm:$0xff]
        %v974 = vld [vmem:[%s330 + $0x38] sm:$0xff]
        %v975 = vld [vmem:[%s330 + $0x40] sm:$0xff]
        %v976 = vld [vmem:[%s330 + $0x48] sm:$0xff]
        %v977 = vld [vmem:[%s330 + $0x50] sm:$0xff]
        %v978 = vld [vmem:[%s330 + $0x58] sm:$0xff]
        %v979 = vld [vmem:[%s330 + $0x60] sm:$0xff]
        %v980 = vld [vmem:[%s330 + $0x68] sm:$0xff]
        %v981 = vld [vmem:[%s330 + $0x70] sm:$0xff]
        %v982 = vld [vmem:[%s330 + $0x78] sm:$0xff]
        %v983 = vld [vmem:[%s330 + $0x80] sm:$0xff]
        %v984 = vld [vmem:[%s330 + $0x88] sm:$0xff]
        %v985 = vld [vmem:[%s330 + $0x90] sm:$0xff]
        %v986 = vld [vmem:[%s330 + $0x98] sm:$0xff]
        %v987 = vld [vmem:[%s330 + $0xa0] sm:$0xff]
        %v988 = vld [vmem:[%s330 + $0xa8] sm:$0xff]
        %v989 = vld [vmem:[%s330 + $0xb0] sm:$0xff]
        %v990 = vld [vmem:[%s330 + $0xb8] sm:$0xff]
        %v991 = vld [vmem:[%s330 + $0xc0] sm:$0xff]
        %v992 = vld [vmem:[%s330 + $0xc8] sm:$0xff]
        %v993 = vld [vmem:[%s330 + $0xd0] sm:$0xff]
        %v994 = vld [vmem:[%s330 + $0xd8] sm:$0xff]
        %v995 = vld [vmem:[%s330 + $0xe0] sm:$0xff]
        %v996 = vld [vmem:[%s330 + $0xe8] sm:$0xff]
        %v997 = vld [vmem:[%s330 + $0xf0] sm:$0xff]
        %v998 = vld [vmem:[%s330 + $0xf8] sm:$0xff]
        %v999 = vld [vmem:[%s330 + $0x100] sm:$0xff]
        %v1000 = vld [vmem:[%s330 + $0x108] sm:$0xff]
        %v1001 = vld [vmem:[%s330 + $0x110] sm:$0xff]
        %v1002 = vld [vmem:[%s330 + $0x118] sm:$0xff]
        %v1003 = vld [vmem:[%s330 + $0x120] sm:$0xff]
        %v1004 = vld [vmem:[%s330 + $0x128] sm:$0xff]
        %v1005 = vld [vmem:[%s330 + $0x130] sm:$0xff]
        %v1006 = vld [vmem:[%s330 + $0x138] sm:$0xff]
        %v1007 = vld [vmem:[%s330 + $0x140] sm:$0xff]
        %v1008 = vld [vmem:[%s330 + $0x148] sm:$0xff]
        %v1009 = vld [vmem:[%s330 + $0x150] sm:$0xff]
        %v1010 = vld [vmem:[%s330 + $0x158] sm:$0xff]
        %v1011 = vld [vmem:[%s330 + $0x160] sm:$0xff]
        %v1012 = vld [vmem:[%s330 + $0x168] sm:$0xff]
        %v1013 = vld [vmem:[%s330 + $0x170] sm:$0xff]
        %v1014 = vld [vmem:[%s330 + $0x178] sm:$0xff]
        %v1015 = vld [vmem:[%s330 + $0x180] sm:$0xff]
        %v1016 = vld [vmem:[%s330 + $0x188] sm:$0xff]
        %v1017 = vld [vmem:[%s330 + $0x190] sm:$0xff]
        %v1018 = vld [vmem:[%s330 + $0x198] sm:$0xff]
        %v1019 = vld [vmem:[%s330 + $0x1a0] sm:$0xff]
        %v1020 = vld [vmem:[%s330 + $0x1a8] sm:$0xff]
        %v1021 = vld [vmem:[%s330 + $0x1b0] sm:$0xff]
        %v1022 = vld [vmem:[%s330 + $0x1b8] sm:$0xff]
        %v1023 = vld [vmem:[%s330 + $0x1c0] sm:$0xff]
        %v1024 = vld [vmem:[%s330 + $0x1c8] sm:$0xff]
        %v1025 = vld [vmem:[%s330 + $0x1d0] sm:$0xff]
        %v1026 = vld [vmem:[%s330 + $0x1d8] sm:$0xff]
        %v1027 = vld [vmem:[%s330 + $0x1e0] sm:$0xff]
        %v1028 = vld [vmem:[%s330 + $0x1e8] sm:$0xff]
        %v1029 = vld [vmem:[%s330 + $0x1f0] sm:$0xff]
        %v1030 = vld [vmem:[%s330 + $0x1f8] sm:$0xff]
        %v1031 = vld [vmem:[%s330 + $0x200] sm:$0xff]
        %v1032 = vld [vmem:[%s330 + $0x208] sm:$0xff]
        %v1033 = vld [vmem:[%s330 + $0x210] sm:$0xff]
        %v1034 = vld [vmem:[%s330 + $0x218] sm:$0xff]
        %v1035 = vld [vmem:[%s330 + $0x220] sm:$0xff]
        %v1036 = vld [vmem:[%s330 + $0x228] sm:$0xff]
        %v1037 = vld [vmem:[%s330 + $0x230] sm:$0xff]
        %v1038 = vld [vmem:[%s330 + $0x238] sm:$0xff]
        %v1039 = vld [vmem:[%s330 + $0x240] sm:$0xff]
        %v1040 = vld [vmem:[%s330 + $0x248] sm:$0xff]
        %v1041 = vld [vmem:[%s330 + $0x250] sm:$0xff]
        %v1042 = vld [vmem:[%s330 + $0x258] sm:$0xff]
        %v1043 = vld [vmem:[%s330 + $0x260] sm:$0xff]
        %v1044 = vld [vmem:[%s330 + $0x268] sm:$0xff]
        %v1045 = vld [vmem:[%s330 + $0x270] sm:$0xff]
        %v1046 = vld [vmem:[%s330 + $0x278] sm:$0xff]
        %v1047 = vld [vmem:[%s330 + $0x280] sm:$0xff]
        %v1048 = vld [vmem:[%s330 + $0x288] sm:$0xff]
        %v1049 = vld [vmem:[%s330 + $0x290] sm:$0xff]
        %v1050 = vld [vmem:[%s330 + $0x298] sm:$0xff]
        %v1051 = vld [vmem:[%s330 + $0x2a0] sm:$0xff]
        %v1052 = vld [vmem:[%s330 + $0x2a8] sm:$0xff]
        %v1053 = vld [vmem:[%s330 + $0x2b0] sm:$0xff]
        %v1054 = vld [vmem:[%s330 + $0x2b8] sm:$0xff]
        %v1055 = vld [vmem:[%s330 + $0x2c0] sm:$0xff]
        %v1056 = vld [vmem:[%s330 + $0x2c8] sm:$0xff]
        %v1057 = vld [vmem:[%s330 + $0x2d0] sm:$0xff]
        %v1058 = vld [vmem:[%s330 + $0x2d8] sm:$0xff]
        %v1059 = vld [vmem:[%s330 + $0x2e0] sm:$0xff]
        %v1060 = vld [vmem:[%s330 + $0x2e8] sm:$0xff]
        %v1061 = vld [vmem:[%s330 + $0x2f0] sm:$0xff]
        %v1062 = vld [vmem:[%s330 + $0x2f8] sm:$0xff]
        %v1063 = vld [vmem:[%s330 + $0x300] sm:$0xff]
        %v1064 = vld [vmem:[%s330 + $0x308] sm:$0xff]
        %v1065 = vld [vmem:[%s330 + $0x310] sm:$0xff]
        %v1066 = vld [vmem:[%s330 + $0x318] sm:$0xff]
        %v1067 = vld [vmem:[%s330 + $0x320] sm:$0xff]
        %v1068 = vld [vmem:[%s330 + $0x328] sm:$0xff]
        %v1069 = vld [vmem:[%s330 + $0x330] sm:$0xff]
        %v1070 = vld [vmem:[%s330 + $0x338] sm:$0xff]
        %v1071 = vld [vmem:[%s330 + $0x340] sm:$0xff]
        %v1072 = vld [vmem:[%s330 + $0x348] sm:$0xff]
        %v1073 = vld [vmem:[%s330 + $0x350] sm:$0xff]
        %v1074 = vld [vmem:[%s330 + $0x358] sm:$0xff]
        %v1075 = vld [vmem:[%s330 + $0x360] sm:$0xff]
        %v1076 = vld [vmem:[%s330 + $0x368] sm:$0xff]
        %v1077 = vld [vmem:[%s330 + $0x370] sm:$0xff]
        %v1078 = vld [vmem:[%s330 + $0x378] sm:$0xff]
        %v1079 = vld [vmem:[%s330 + $0x380] sm:$0xff]
        %v1080 = vld [vmem:[%s330 + $0x388] sm:$0xff]
        %v1081 = vld [vmem:[%s330 + $0x390] sm:$0xff]
        %v1082 = vld [vmem:[%s330 + $0x398] sm:$0xff]
        %v1083 = vld [vmem:[%s330 + $0x3a0] sm:$0xff]
        %v1084 = vld [vmem:[%s330 + $0x3a8] sm:$0xff]
        %v1085 = vld [vmem:[%s330 + $0x3b0] sm:$0xff]
        %v1086 = vld [vmem:[%s330 + $0x3b8] sm:$0xff]
        %v1087 = vld [vmem:[%s330 + $0x3c0] sm:$0xff]
        %v1088 = vld [vmem:[%s330 + $0x3c8] sm:$0xff]
        %v1089 = vld [vmem:[%s330 + $0x3d0] sm:$0xff]
        %v1090 = vld [vmem:[%s330 + $0x3d8] sm:$0xff]
        %v1091 = vld [vmem:[%s330 + $0x3e0] sm:$0xff]
        %v1092 = vld [vmem:[%s330 + $0x3e8] sm:$0xff]
        %v1093 = vld [vmem:[%s330 + $0x3f0] sm:$0xff]
        %v1094 = vld [vmem:[%s330 + $0x3f8] sm:$0xff]
        %v1095 = vld [vmem:[%s330 + $0x400] sm:$0xff]
        %v1096 = vld [vmem:[%s330 + $0x408] sm:$0xff]
        %v1097 = vld [vmem:[%s330 + $0x410] sm:$0xff]
        %v1098 = vld [vmem:[%s330 + $0x418] sm:$0xff]
        %v1099 = vld [vmem:[%s330 + $0x420] sm:$0xff]
        %v1100 = vld [vmem:[%s330 + $0x428] sm:$0xff]
        %v1101 = vld [vmem:[%s330 + $0x430] sm:$0xff]
        %v1102 = vld [vmem:[%s330 + $0x438] sm:$0xff]
        %v1103 = vld [vmem:[%s330 + $0x440] sm:$0xff]
        %v1104 = vld [vmem:[%s330 + $0x448] sm:$0xff]
        %v1105 = vld [vmem:[%s330 + $0x450] sm:$0xff]
        %v1106 = vld [vmem:[%s330 + $0x458] sm:$0xff]
        %v1107 = vld [vmem:[%s330 + $0x460] sm:$0xff]
        %v1108 = vld [vmem:[%s330 + $0x468] sm:$0xff]
        %v1109 = vld [vmem:[%s330 + $0x470] sm:$0xff]
        %v1110 = vld [vmem:[%s330 + $0x478] sm:$0xff]
        %v1111 = vld [vmem:[%s330 + $0x480] sm:$0xff]
        %v1112 = vld [vmem:[%s330 + $0x488] sm:$0xff]
        %v1113 = vld [vmem:[%s330 + $0x490] sm:$0xff]
        %v1114 = vld [vmem:[%s330 + $0x498] sm:$0xff]
        %v1115 = vld [vmem:[%s330 + $0x4a0] sm:$0xff]
        %v1116 = vld [vmem:[%s330 + $0x4a8] sm:$0xff]
        %v1117 = vld [vmem:[%s330 + $0x4b0] sm:$0xff]
        %v1118 = vld [vmem:[%s330 + $0x4b8] sm:$0xff]
        %v1119 = vld [vmem:[%s330 + $0x4c0] sm:$0xff]
        %v1120 = vld [vmem:[%s330 + $0x4c8] sm:$0xff]
        %v1121 = vld [vmem:[%s330 + $0x4d0] sm:$0xff]
        %v1122 = vld [vmem:[%s330 + $0x4d8] sm:$0xff]
        %v1123 = vld [vmem:[%s330 + $0x4e0] sm:$0xff]
        %v1124 = vld [vmem:[%s330 + $0x4e8] sm:$0xff]
        %v1125 = vld [vmem:[%s330 + $0x4f0] sm:$0xff]
        %v1126 = vld [vmem:[%s330 + $0x4f8] sm:$0xff]
        %v1127 = vld [vmem:[%s330 + $0x500] sm:$0xff]
        %v1128 = vld [vmem:[%s330 + $0x508] sm:$0xff]
        %v1129 = vld [vmem:[%s330 + $0x510] sm:$0xff]
        %v1130 = vld [vmem:[%s330 + $0x518] sm:$0xff]
        %v1131 = vld [vmem:[%s330 + $0x520] sm:$0xff]
        %v1132 = vld [vmem:[%s330 + $0x528] sm:$0xff]
        %v1133 = vld [vmem:[%s330 + $0x530] sm:$0xff]
        %v1134 = vld [vmem:[%s330 + $0x538] sm:$0xff]
        %v1135 = vld [vmem:[%s330 + $0x540] sm:$0xff]
        %v1136 = vld [vmem:[%s330 + $0x548] sm:$0xff]
        %v1137 = vld [vmem:[%s330 + $0x550] sm:$0xff]
        %v1138 = vld [vmem:[%s330 + $0x558] sm:$0xff]
        %v1139 = vld [vmem:[%s330 + $0x560] sm:$0xff]
        %v1140 = vld [vmem:[%s330 + $0x568] sm:$0xff]
        %v1141 = vld [vmem:[%s330 + $0x570] sm:$0xff]
        %v1142 = vld [vmem:[%s330 + $0x578] sm:$0xff]
        %v1143 = vld [vmem:[%s330 + $0x580] sm:$0xff]
        %v1144 = vld [vmem:[%s330 + $0x588] sm:$0xff]
        %v1145 = vld [vmem:[%s330 + $0x590] sm:$0xff]
        %v1146 = vld [vmem:[%s330 + $0x598] sm:$0xff]
        %v1147 = vld [vmem:[%s330 + $0x5a0] sm:$0xff]
        %v1148 = vld [vmem:[%s330 + $0x5a8] sm:$0xff]
        %v1149 = vld [vmem:[%s330 + $0x5b0] sm:$0xff]
        %v1150 = vld [vmem:[%s330 + $0x5b8] sm:$0xff]
        %v1151 = vld [vmem:[%s330 + $0x5c0] sm:$0xff]
        %v1152 = vld [vmem:[%s330 + $0x5c8] sm:$0xff]
        %v1153 = vld [vmem:[%s330 + $0x5d0] sm:$0xff]
        %v1154 = vld [vmem:[%s330 + $0x5d8] sm:$0xff]
        %v1155 = vld [vmem:[%s330 + $0x5e0] sm:$0xff]
        %v1156 = vld [vmem:[%s330 + $0x5e8] sm:$0xff]
        %v1157 = vld [vmem:[%s330 + $0x5f0] sm:$0xff]
        %v1158 = vld [vmem:[%s330 + $0x5f8] sm:$0xff]
        %v1159 = vld [vmem:[%s330 + $0x600] sm:$0xff]
        %v1160 = vld [vmem:[%s330 + $0x608] sm:$0xff]
        %v1161 = vld [vmem:[%s330 + $0x610] sm:$0xff]
        %v1162 = vld [vmem:[%s330 + $0x618] sm:$0xff]
        %v1163 = vld [vmem:[%s330 + $0x620] sm:$0xff]
        %v1164 = vld [vmem:[%s330 + $0x628] sm:$0xff]
        %v1165 = vld [vmem:[%s330 + $0x630] sm:$0xff]
        %v1166 = vld [vmem:[%s330 + $0x638] sm:$0xff]
        %v1167 = vld [vmem:[%s330 + $0x640] sm:$0xff]
        %v1168 = vld [vmem:[%s330 + $0x648] sm:$0xff]
        %v1169 = vld [vmem:[%s330 + $0x650] sm:$0xff]
        %v1170 = vld [vmem:[%s330 + $0x658] sm:$0xff]
        %v1171 = vld [vmem:[%s330 + $0x660] sm:$0xff]
        %v1172 = vld [vmem:[%s330 + $0x668] sm:$0xff]
        %v1173 = vld [vmem:[%s330 + $0x670] sm:$0xff]
        %v1174 = vld [vmem:[%s330 + $0x678] sm:$0xff]
        %v1175 = vld [vmem:[%s330 + $0x680] sm:$0xff]
        %v1176 = vld [vmem:[%s330 + $0x688] sm:$0xff]
        %v1177 = vld [vmem:[%s330 + $0x690] sm:$0xff]
        %v1178 = vld [vmem:[%s330 + $0x698] sm:$0xff]
        %v1179 = vld [vmem:[%s330 + $0x6a0] sm:$0xff]
        %v1180 = vld [vmem:[%s330 + $0x6a8] sm:$0xff]
        %v1181 = vld [vmem:[%s330 + $0x6b0] sm:$0xff]
        %v1182 = vld [vmem:[%s330 + $0x6b8] sm:$0xff]
        %v1183 = vld [vmem:[%s330 + $0x6c0] sm:$0xff]
        %v1184 = vld [vmem:[%s330 + $0x6c8] sm:$0xff]
        %v1185 = vld [vmem:[%s330 + $0x6d0] sm:$0xff]
        %v1186 = vld [vmem:[%s330 + $0x6d8] sm:$0xff]
        %v1187 = vld [vmem:[%s330 + $0x6e0] sm:$0xff]
        %v1188 = vld [vmem:[%s330 + $0x6e8] sm:$0xff]
        %v1189 = vld [vmem:[%s330 + $0x6f0] sm:$0xff]
        %v1190 = vld [vmem:[%s330 + $0x6f8] sm:$0xff]
        %v1191 = vld [vmem:[%s330 + $0x700] sm:$0xff]
        %v1192 = vld [vmem:[%s330 + $0x708] sm:$0xff]
        %v1193 = vld [vmem:[%s330 + $0x710] sm:$0xff]
        %v1194 = vld [vmem:[%s330 + $0x718] sm:$0xff]
        %v1195 = vld [vmem:[%s330 + $0x720] sm:$0xff]
        %v1196 = vld [vmem:[%s330 + $0x728] sm:$0xff]
        %v1197 = vld [vmem:[%s330 + $0x730] sm:$0xff]
        %v1198 = vld [vmem:[%s330 + $0x738] sm:$0xff]
        %v1199 = vld [vmem:[%s330 + $0x740] sm:$0xff]
        %v1200 = vld [vmem:[%s330 + $0x748] sm:$0xff]
        %v1201 = vld [vmem:[%s330 + $0x750] sm:$0xff]
        %v1202 = vld [vmem:[%s330 + $0x758] sm:$0xff]
        %v1203 = vld [vmem:[%s330 + $0x760] sm:$0xff]
        %v1204 = vld [vmem:[%s330 + $0x768] sm:$0xff]
        %v1205 = vld [vmem:[%s330 + $0x770] sm:$0xff]
        %v1206 = vld [vmem:[%s330 + $0x778] sm:$0xff]
        %v1207 = vld [vmem:[%s330 + $0x780] sm:$0xff]
        %v1208 = vld [vmem:[%s330 + $0x788] sm:$0xff]
        %v1209 = vld [vmem:[%s330 + $0x790] sm:$0xff]
        %v1210 = vld [vmem:[%s330 + $0x798] sm:$0xff]
        %v1211 = vld [vmem:[%s330 + $0x7a0] sm:$0xff]
        %v1212 = vld [vmem:[%s330 + $0x7a8] sm:$0xff]
        %v1213 = vld [vmem:[%s330 + $0x7b0] sm:$0xff]
        %v1214 = vld [vmem:[%s330 + $0x7b8] sm:$0xff]
        %v1215 = vld [vmem:[%s330 + $0x7c0] sm:$0xff]
        %v1216 = vld [vmem:[%s330 + $0x7c8] sm:$0xff]
        %v1217 = vld [vmem:[%s330 + $0x7d0] sm:$0xff]
        %v1218 = vld [vmem:[%s330 + $0x7d8] sm:$0xff]
        %v1219 = vld [vmem:[%s330 + $0x7e0] sm:$0xff]
        %v1220 = vld [vmem:[%s330 + $0x7e8] sm:$0xff]
        %v1221 = vld [vmem:[%s330 + $0x7f0] sm:$0xff]
        %v1222 = vld [vmem:[%s330 + $0x7f8] sm:$0xff]
        %v1223 = vld [vmem:[%s330 + $0x800] sm:$0xff]
        %v1224 = vld [vmem:[%s330 + $0x808] sm:$0xff]
        %v1225 = vld [vmem:[%s330 + $0x810] sm:$0xff]
        %v1226 = vld [vmem:[%s330 + $0x818] sm:$0xff]
        %v1227 = vld [vmem:[%s330 + $0x820] sm:$0xff]
        %v1228 = vld [vmem:[%s330 + $0x828] sm:$0xff]
        %v1229 = vld [vmem:[%s330 + $0x830] sm:$0xff]
        %v1230 = vld [vmem:[%s330 + $0x838] sm:$0xff]
        %v1231 = vld [vmem:[%s330 + $0x840] sm:$0xff]
        %v1232 = vld [vmem:[%s330 + $0x848] sm:$0xff]
        %v1233 = vld [vmem:[%s330 + $0x850] sm:$0xff]
        %v1234 = vld [vmem:[%s330 + $0x858] sm:$0xff]
        %v1235 = vld [vmem:[%s330 + $0x860] sm:$0xff]
        %v1236 = vld [vmem:[%s330 + $0x868] sm:$0xff]
        %v1237 = vld [vmem:[%s330 + $0x870] sm:$0xff]
        %v1238 = vld [vmem:[%s330 + $0x878] sm:$0xff]
        %v1239 = vld [vmem:[%s330 + $0x880] sm:$0xff]
        %v1240 = vld [vmem:[%s330 + $0x888] sm:$0xff]
        %v1241 = vld [vmem:[%s330 + $0x890] sm:$0xff]
        %v1242 = vld [vmem:[%s330 + $0x898] sm:$0xff]
        %v1243 = vld [vmem:[%s330 + $0x8a0] sm:$0xff]
        %v1244 = vld [vmem:[%s330 + $0x8a8] sm:$0xff]
        %v1245 = vld [vmem:[%s330 + $0x8b0] sm:$0xff]
        %v1246 = vld [vmem:[%s330 + $0x8b8] sm:$0xff]
        %v1247 = vld [vmem:[%s330 + $0x8c0] sm:$0xff]
        %v1248 = vld [vmem:[%s330 + $0x8c8] sm:$0xff]
        %v1249 = vld [vmem:[%s330 + $0x8d0] sm:$0xff]
        %v1250 = vld [vmem:[%s330 + $0x8d8] sm:$0xff]
        %v1251 = vld [vmem:[%s330 + $0x8e0] sm:$0xff]
        %v1252 = vld [vmem:[%s330 + $0x8e8] sm:$0xff]
        %v1253 = vld [vmem:[%s330 + $0x8f0] sm:$0xff]
        %v1254 = vld [vmem:[%s330 + $0x8f8] sm:$0xff]
        %v1255 = vld [vmem:[%s330 + $0x900] sm:$0xff]
        %v1256 = vld [vmem:[%s330 + $0x908] sm:$0xff]
        %v1257 = vld [vmem:[%s330 + $0x910] sm:$0xff]
        %v1258 = vld [vmem:[%s330 + $0x918] sm:$0xff]
        %v1259 = vld [vmem:[%s330 + $0x920] sm:$0xff]
        %v1260 = vld [vmem:[%s330 + $0x928] sm:$0xff]
        %v1261 = vld [vmem:[%s330 + $0x930] sm:$0xff]
        %v1262 = vld [vmem:[%s330 + $0x938] sm:$0xff]
        %v1263 = vld [vmem:[%s330 + $0x940] sm:$0xff]
        %v1264 = vld [vmem:[%s330 + $0x948] sm:$0xff]
        %v1265 = vld [vmem:[%s330 + $0x950] sm:$0xff]
        %v1266 = vld [vmem:[%s330 + $0x958] sm:$0xff]
        %v1267 = vld [vmem:[%s330 + $0x960] sm:$0xff]
        %v1268 = vld [vmem:[%s330 + $0x968] sm:$0xff]
        %v1269 = vld [vmem:[%s330 + $0x970] sm:$0xff]
        %v1270 = vld [vmem:[%s330 + $0x978] sm:$0xff]
        %v1271 = vld [vmem:[%s330 + $0x980] sm:$0xff]
        %v1272 = vld [vmem:[%s330 + $0x988] sm:$0xff]
        %v1273 = vld [vmem:[%s330 + $0x990] sm:$0xff]
        %v1274 = vld [vmem:[%s330 + $0x998] sm:$0xff]
        %v1275 = vld [vmem:[%s330 + $0x9a0] sm:$0xff]
        %v1276 = vld [vmem:[%s330 + $0x9a8] sm:$0xff]
        %v1277 = vld [vmem:[%s330 + $0x9b0] sm:$0xff]
        %v1278 = vld [vmem:[%s330 + $0x9b8] sm:$0xff]
        %v1279 = vld [vmem:[%s330 + $0x9c0] sm:$0xff]
        %v1280 = vld [vmem:[%s330 + $0x9c8] sm:$0xff]
        %v1281 = vld [vmem:[%s330 + $0x9d0] sm:$0xff]
        %v1282 = vld [vmem:[%s330 + $0x9d8] sm:$0xff]
        %v1283 = vld [vmem:[%s330 + $0x9e0] sm:$0xff]
        %v1284 = vld [vmem:[%s330 + $0x9e8] sm:$0xff]
        %v1285 = vld [vmem:[%s330 + $0x9f0] sm:$0xff]
        %v1286 = vld [vmem:[%s330 + $0x9f8] sm:$0xff]
        %v1287 = vld [vmem:[%s330 + $0xa00] sm:$0xff]
        %v1288 = vld [vmem:[%s330 + $0xa08] sm:$0xff]
        %v1289 = vld [vmem:[%s330 + $0xa10] sm:$0xff]
        %v1290 = vld [vmem:[%s330 + $0xa18] sm:$0xff]
        %v1291 = vld [vmem:[%s330 + $0xa20] sm:$0xff]
        %v1292 = vld [vmem:[%s330 + $0xa28] sm:$0xff]
        %v1293 = vld [vmem:[%s330 + $0xa30] sm:$0xff]
        %v1294 = vld [vmem:[%s330 + $0xa38] sm:$0xff]
        %v1295 = vld [vmem:[%s330 + $0xa40] sm:$0xff]
        %v1296 = vld [vmem:[%s330 + $0xa48] sm:$0xff]
        %v1297 = vld [vmem:[%s330 + $0xa50] sm:$0xff]
        %v1298 = vld [vmem:[%s330 + $0xa58] sm:$0xff]
        %v1299 = vld [vmem:[%s330 + $0xa60] sm:$0xff]
        %v1300 = vld [vmem:[%s330 + $0xa68] sm:$0xff]
        %v1301 = vld [vmem:[%s330 + $0xa70] sm:$0xff]
        %v1302 = vld [vmem:[%s330 + $0xa78] sm:$0xff]
        %v1303 = vld [vmem:[%s330 + $0xa80] sm:$0xff]
        %v1304 = vld [vmem:[%s330 + $0xa88] sm:$0xff]
        %v1305 = vld [vmem:[%s330 + $0xa90] sm:$0xff]
        %v1306 = vld [vmem:[%s330 + $0xa98] sm:$0xff]
        %v1307 = vld [vmem:[%s330 + $0xaa0] sm:$0xff]
        %v1308 = vld [vmem:[%s330 + $0xaa8] sm:$0xff]
        %v1309 = vld [vmem:[%s330 + $0xab0] sm:$0xff]
        %v1310 = vld [vmem:[%s330 + $0xab8] sm:$0xff]
        %v1311 = vld [vmem:[%s330 + $0xac0] sm:$0xff]
        %v1312 = vld [vmem:[%s330 + $0xac8] sm:$0xff]
        %v1313 = vld [vmem:[%s330 + $0xad0] sm:$0xff]
        %v1314 = vld [vmem:[%s330 + $0xad8] sm:$0xff]
        %v1315 = vld [vmem:[%s330 + $0xae0] sm:$0xff]
        %v1316 = vld [vmem:[%s330 + $0xae8] sm:$0xff]
        %v1317 = vld [vmem:[%s330 + $0xaf0] sm:$0xff]
        %v1318 = vld [vmem:[%s330 + $0xaf8] sm:$0xff]
        %v1319 = vld [vmem:[%s330 + $0xb00] sm:$0xff]
        %v1320 = vld [vmem:[%s330 + $0xb08] sm:$0xff]
        %v1321 = vld [vmem:[%s330 + $0xb10] sm:$0xff]
        %v1322 = vld [vmem:[%s330 + $0xb18] sm:$0xff]
        %v1323 = vld [vmem:[%s330 + $0xb20] sm:$0xff]
        %v1324 = vld [vmem:[%s330 + $0xb28] sm:$0xff]
        %v1325 = vld [vmem:[%s330 + $0xb30] sm:$0xff]
        %v1326 = vld [vmem:[%s330 + $0xb38] sm:$0xff]
        %v1327 = vld [vmem:[%s330 + $0xb40] sm:$0xff]
        %v1328 = vld [vmem:[%s330 + $0xb48] sm:$0xff]
        %v1329 = vld [vmem:[%s330 + $0xb50] sm:$0xff]
        %v1330 = vld [vmem:[%s330 + $0xb58] sm:$0xff]
        %v1331 = vld [vmem:[%s330 + $0xb60] sm:$0xff]
        %v1332 = vld [vmem:[%s330 + $0xb68] sm:$0xff]
        %v1333 = vld [vmem:[%s330 + $0xb70] sm:$0xff]
        %v1334 = vld [vmem:[%s330 + $0xb78] sm:$0xff]
        %v1335 = vld [vmem:[%s330 + $0xb80] sm:$0xff]
        %v1336 = vld [vmem:[%s330 + $0xb88] sm:$0xff]
        %v1337 = vld [vmem:[%s330 + $0xb90] sm:$0xff]
        %v1338 = vld [vmem:[%s330 + $0xb98] sm:$0xff]
        %v1339 = vld [vmem:[%s330 + $0xba0] sm:$0xff]
        %v1340 = vld [vmem:[%s330 + $0xba8] sm:$0xff]
        %v1341 = vld [vmem:[%s330 + $0xbb0] sm:$0xff]
        %v1342 = vld [vmem:[%s330 + $0xbb8] sm:$0xff]
        %v1343 = vld [vmem:[%s330 + $0xbc0] sm:$0xff]
        %v1344 = vld [vmem:[%s330 + $0xbc8] sm:$0xff]
        %v1345 = vld [vmem:[%s330 + $0xbd0] sm:$0xff]
        %v1346 = vld [vmem:[%s330 + $0xbd8] sm:$0xff]
        %v1347 = vld [vmem:[%s330 + $0xbe0] sm:$0xff]
        %v1348 = vld [vmem:[%s330 + $0xbe8] sm:$0xff]
        %v1349 = vld [vmem:[%s330 + $0xbf0] sm:$0xff]
        %v1350 = vld [vmem:[%s330 + $0xbf8] sm:$0xff]
        %v1351 = vld [vmem:[%s330 + $0xc00] sm:$0xff]
        %v1352 = vld [vmem:[%s330 + $0xc08] sm:$0xff]
        %v1353 = vld [vmem:[%s330 + $0xc10] sm:$0xff]
        %v1354 = vld [vmem:[%s330 + $0xc18] sm:$0xff]
        %v1355 = vld [vmem:[%s330 + $0xc20] sm:$0xff]
        %v1356 = vld [vmem:[%s330 + $0xc28] sm:$0xff]
        %v1357 = vld [vmem:[%s330 + $0xc30] sm:$0xff]
        %v1358 = vld [vmem:[%s330 + $0xc38] sm:$0xff]
        %v1359 = vld [vmem:[%s330 + $0xc40] sm:$0xff]
        %v1360 = vld [vmem:[%s330 + $0xc48] sm:$0xff]
        %v1361 = vld [vmem:[%s330 + $0xc50] sm:$0xff]
        %v1362 = vld [vmem:[%s330 + $0xc58] sm:$0xff]
        %v1363 = vld [vmem:[%s330 + $0xc60] sm:$0xff]
        %v1364 = vld [vmem:[%s330 + $0xc68] sm:$0xff]
        %v1365 = vld [vmem:[%s330 + $0xc70] sm:$0xff]
        %v1366 = vld [vmem:[%s330 + $0xc78] sm:$0xff]
        %v1367 = vld [vmem:[%s330 + $0xc80] sm:$0xff]
        %v1368 = vld [vmem:[%s330 + $0xc88] sm:$0xff]
        %v1369 = vld [vmem:[%s330 + $0xc90] sm:$0xff]
        %v1370 = vld [vmem:[%s330 + $0xc98] sm:$0xff]
        %v1371 = vld [vmem:[%s330 + $0xca0] sm:$0xff]
        %v1372 = vld [vmem:[%s330 + $0xca8] sm:$0xff]
        %v1373 = vld [vmem:[%s330 + $0xcb0] sm:$0xff]
        %v1374 = vld [vmem:[%s330 + $0xcb8] sm:$0xff]
        %v1375 = vld [vmem:[%s330 + $0xcc0] sm:$0xff]
        %v1376 = vld [vmem:[%s330 + $0xcc8] sm:$0xff]
        %v1377 = vld [vmem:[%s330 + $0xcd0] sm:$0xff]
        %v1378 = vld [vmem:[%s330 + $0xcd8] sm:$0xff]
        %v1379 = vld [vmem:[%s330 + $0xce0] sm:$0xff]
        %v1380 = vld [vmem:[%s330 + $0xce8] sm:$0xff]
        %v1381 = vld [vmem:[%s330 + $0xcf0] sm:$0xff]
        %v1382 = vld [vmem:[%s330 + $0xcf8] sm:$0xff]
        %v1383 = vld [vmem:[%s330 + $0xd00] sm:$0xff]
        %v1384 = vld [vmem:[%s330 + $0xd08] sm:$0xff]
        %v1385 = vld [vmem:[%s330 + $0xd10] sm:$0xff]
        %v1386 = vld [vmem:[%s330 + $0xd18] sm:$0xff]
        %v1387 = vld [vmem:[%s330 + $0xd20] sm:$0xff]
        %v1388 = vld [vmem:[%s330 + $0xd28] sm:$0xff]
        %v1389 = vld [vmem:[%s330 + $0xd30] sm:$0xff]
        %v1390 = vld [vmem:[%s330 + $0xd38] sm:$0xff]
        %v1391 = vld [vmem:[%s330 + $0xd40] sm:$0xff]
        %v1392 = vld [vmem:[%s330 + $0xd48] sm:$0xff]
        %v1393 = vld [vmem:[%s330 + $0xd50] sm:$0xff]
        %v1394 = vld [vmem:[%s330 + $0xd58] sm:$0xff]
        %v1395 = vld [vmem:[%s330 + $0xd60] sm:$0xff]
        %v1396 = vld [vmem:[%s330 + $0xd68] sm:$0xff]
        %v1397 = vld [vmem:[%s330 + $0xd70] sm:$0xff]
        %v1398 = vld [vmem:[%s330 + $0xd78] sm:$0xff]
        %v1399 = vld [vmem:[%s330 + $0xd80] sm:$0xff]
        %v1400 = vld [vmem:[%s330 + $0xd88] sm:$0xff]
        %v1401 = vld [vmem:[%s330 + $0xd90] sm:$0xff]
        %v1402 = vld [vmem:[%s330 + $0xd98] sm:$0xff]
        %v1403 = vld [vmem:[%s330 + $0xda0] sm:$0xff]
        %v1404 = vld [vmem:[%s330 + $0xda8] sm:$0xff]
        %v1405 = vld [vmem:[%s330 + $0xdb0] sm:$0xff]
        %v1406 = vld [vmem:[%s330 + $0xdb8] sm:$0xff]
        %v1407 = vld [vmem:[%s330 + $0xdc0] sm:$0xff]
        %v1408 = vld [vmem:[%s330 + $0xdc8] sm:$0xff]
        %v1409 = vld [vmem:[%s330 + $0xdd0] sm:$0xff]
        %v1410 = vld [vmem:[%s330 + $0xdd8] sm:$0xff]
        %v1411 = vld [vmem:[%s330 + $0xde0] sm:$0xff]
        %v1412 = vld [vmem:[%s330 + $0xde8] sm:$0xff]
        %v1413 = vld [vmem:[%s330 + $0xdf0] sm:$0xff]
        %v1414 = vld [vmem:[%s330 + $0xdf8] sm:$0xff]
        %v1415 = vld [vmem:[%s330 + $0xe00] sm:$0xff]
        %v1416 = vld [vmem:[%s330 + $0xe08] sm:$0xff]
        %v1417 = vld [vmem:[%s330 + $0xe10] sm:$0xff]
        %v1418 = vld [vmem:[%s330 + $0xe18] sm:$0xff]
        %v1419 = vld [vmem:[%s330 + $0xe20] sm:$0xff]
        %v1420 = vld [vmem:[%s330 + $0xe28] sm:$0xff]
        %v1421 = vld [vmem:[%s330 + $0xe30] sm:$0xff]
        %v1422 = vld [vmem:[%s330 + $0xe38] sm:$0xff]
        %v1423 = vld [vmem:[%s330 + $0xe40] sm:$0xff]
        %v1424 = vld [vmem:[%s330 + $0xe48] sm:$0xff]
        %v1425 = vld [vmem:[%s330 + $0xe50] sm:$0xff]
        %v1426 = vld [vmem:[%s330 + $0xe58] sm:$0xff]
        %v1427 = vld [vmem:[%s330 + $0xe60] sm:$0xff]
        %v1428 = vld [vmem:[%s330 + $0xe68] sm:$0xff]
        %v1429 = vld [vmem:[%s330 + $0xe70] sm:$0xff]
        %v1430 = vld [vmem:[%s330 + $0xe78] sm:$0xff]
        %v1431 = vld [vmem:[%s330 + $0xe80] sm:$0xff]
        %v1432 = vld [vmem:[%s330 + $0xe88] sm:$0xff]
        %v1433 = vld [vmem:[%s330 + $0xe90] sm:$0xff]
        %v1434 = vld [vmem:[%s330 + $0xe98] sm:$0xff]
        %v1435 = vld [vmem:[%s330 + $0xea0] sm:$0xff]
        %v1436 = vld [vmem:[%s330 + $0xea8] sm:$0xff]
        %v1437 = vld [vmem:[%s330 + $0xeb0] sm:$0xff]
        %v1438 = vld [vmem:[%s330 + $0xeb8] sm:$0xff]
        %v1439 = vld [vmem:[%s330 + $0xec0] sm:$0xff]
        %v1440 = vld [vmem:[%s330 + $0xec8] sm:$0xff]
        %v1441 = vld [vmem:[%s330 + $0xed0] sm:$0xff]
        %v1442 = vld [vmem:[%s330 + $0xed8] sm:$0xff]
        %v1443 = vld [vmem:[%s330 + $0xee0] sm:$0xff]
        %v1444 = vld [vmem:[%s330 + $0xee8] sm:$0xff]
        %v1445 = vld [vmem:[%s330 + $0xef0] sm:$0xff]
        %v1446 = vld [vmem:[%s330 + $0xef8] sm:$0xff]
        %v1447 = vld [vmem:[%s330 + $0xf00] sm:$0xff]
        %v1448 = vld [vmem:[%s330 + $0xf08] sm:$0xff]
        %v1449 = vld [vmem:[%s330 + $0xf10] sm:$0xff]
        %v1450 = vld [vmem:[%s330 + $0xf18] sm:$0xff]
        %v1451 = vld [vmem:[%s330 + $0xf20] sm:$0xff]
        %v1452 = vld [vmem:[%s330 + $0xf28] sm:$0xff]
        %v1453 = vld [vmem:[%s330 + $0xf30] sm:$0xff]
        %v1454 = vld [vmem:[%s330 + $0xf38] sm:$0xff]
        %v1455 = vld [vmem:[%s330 + $0xf40] sm:$0xff]
        %v1456 = vld [vmem:[%s330 + $0xf48] sm:$0xff]
        %v1457 = vld [vmem:[%s330 + $0xf50] sm:$0xff]
        %v1458 = vld [vmem:[%s330 + $0xf58] sm:$0xff]
        %v1459 = vld [vmem:[%s330 + $0xf60] sm:$0xff]
        %v1460 = vld [vmem:[%s330 + $0xf68] sm:$0xff]
        %v1461 = vld [vmem:[%s330 + $0xf70] sm:$0xff]
        %v1462 = vld [vmem:[%s330 + $0xf78] sm:$0xff]
        %v1463 = vld [vmem:[%s330 + $0xf80] sm:$0xff]
        %v1464 = vld [vmem:[%s330 + $0xf88] sm:$0xff]
        %v1465 = vld [vmem:[%s330 + $0xf90] sm:$0xff]
        %v1466 = vld [vmem:[%s330 + $0xf98] sm:$0xff]
        %v1467 = vld [vmem:[%s330 + $0xfa0] sm:$0xff]
        %v1468 = vld [vmem:[%s330 + $0xfa8] sm:$0xff]
        %v1469 = vld [vmem:[%s330 + $0xfb0] sm:$0xff]
        %v1470 = vld [vmem:[%s330 + $0xfb8] sm:$0xff]
        %v1471 = vld [vmem:[%s330 + $0xfc0] sm:$0xff]
        %v1472 = vld [vmem:[%s330 + $0xfc8] sm:$0xff]
        %v1473 = vld [vmem:[%s330 + $0xfd0] sm:$0xff]
        %v1474 = vld [vmem:[%s330 + $0xfd8] sm:$0xff]
        %v1475 = vld [vmem:[%s330 + $0xfe0] sm:$0xff]
        %v1476 = vld [vmem:[%s330 + $0xfe8] sm:$0xff]
        %v1477 = vld [vmem:[%s330 + $0xff0] sm:$0xff]
        %v1478 = vld [vmem:[%s330 + $0xff8] sm:$0xff]
        %v1479 = vld [vmem:[%s340] sm:$0xf]
        %v1481 = vperm.slane %v1479, 0
        %v1482 = vperm.slane %v1479, 1
        %v1483 = vperm.slane %v1479, 2
        %v1484 = vperm.slane %v1479, 3
        %v2001 = vunpack.c.l.b16 %v967
        %v2002 = vunpack.c.h.b16 %v967
        %v2003 = vunpack.c.l.b16 %v968
        %v2004 = vunpack.c.h.b16 %v968
        %v2005 = vunpack.c.l.b16 %v969
        %v2006 = vunpack.c.h.b16 %v969
        %v2007 = vunpack.c.l.b16 %v970
        %v2008 = vunpack.c.h.b16 %v970
        %v2009 = vunpack.c.l.b16 %v971
        %v2010 = vunpack.c.h.b16 %v971
        %v2011 = vunpack.c.l.b16 %v972
        %v2012 = vunpack.c.h.b16 %v972
        %v2013 = vunpack.c.l.b16 %v973
        %v2014 = vunpack.c.h.b16 %v973
        %v2015 = vunpack.c.l.b16 %v974
        %v2016 = vunpack.c.h.b16 %v974
        %v2017 = vunpack.c.l.b16 %v975
        %v2018 = vunpack.c.h.b16 %v975
        %v2019 = vunpack.c.l.b16 %v976
        %v2020 = vunpack.c.h.b16 %v976
        %v2021 = vunpack.c.l.b16 %v977
        %v2022 = vunpack.c.h.b16 %v977
        %v2023 = vunpack.c.l.b16 %v978
        %v2024 = vunpack.c.h.b16 %v978
        %v2025 = vunpack.c.l.b16 %v979
        %v2026 = vunpack.c.h.b16 %v979
        %v2027 = vunpack.c.l.b16 %v980
        %v2028 = vunpack.c.h.b16 %v980
        %v2029 = vunpack.c.l.b16 %v981
        %v2030 = vunpack.c.h.b16 %v981
        %v2031 = vunpack.c.l.b16 %v982
        %v2032 = vunpack.c.h.b16 %v982
        %v2033 = vunpack.c.l.b16 %v983
        %v2034 = vunpack.c.h.b16 %v983
        %v2035 = vunpack.c.l.b16 %v984
        %v2036 = vunpack.c.h.b16 %v984
        %v2037 = vunpack.c.l.b16 %v985
        %v2038 = vunpack.c.h.b16 %v985
        %v2039 = vunpack.c.l.b16 %v986
        %v2040 = vunpack.c.h.b16 %v986
        %v2041 = vunpack.c.l.b16 %v987
        %v2042 = vunpack.c.h.b16 %v987
        %v2043 = vunpack.c.l.b16 %v988
        %v2044 = vunpack.c.h.b16 %v988
        %v2045 = vunpack.c.l.b16 %v989
        %v2046 = vunpack.c.h.b16 %v989
        %v2047 = vunpack.c.l.b16 %v990
        %v2048 = vunpack.c.h.b16 %v990
        %v2049 = vunpack.c.l.b16 %v991
        %v2050 = vunpack.c.h.b16 %v991
        %v2051 = vunpack.c.l.b16 %v992
        %v2052 = vunpack.c.h.b16 %v992
        %v2053 = vunpack.c.l.b16 %v993
        %v2054 = vunpack.c.h.b16 %v993
        %v2055 = vunpack.c.l.b16 %v994
        %v2056 = vunpack.c.h.b16 %v994
        %v2057 = vunpack.c.l.b16 %v995
        %v2058 = vunpack.c.h.b16 %v995
        %v2059 = vunpack.c.l.b16 %v996
        %v2060 = vunpack.c.h.b16 %v996
        %v2061 = vunpack.c.l.b16 %v997
        %v2062 = vunpack.c.h.b16 %v997
        %v2063 = vunpack.c.l.b16 %v998
        %v2064 = vunpack.c.h.b16 %v998
        %v2065 = vunpack.c.l.b16 %v999
        %v2066 = vunpack.c.h.b16 %v999
        %v2067 = vunpack.c.l.b16 %v1000
        %v2068 = vunpack.c.h.b16 %v1000
        %v2069 = vunpack.c.l.b16 %v1001
        %v2070 = vunpack.c.h.b16 %v1001
        %v2071 = vunpack.c.l.b16 %v1002
        %v2072 = vunpack.c.h.b16 %v1002
        %v2073 = vunpack.c.l.b16 %v1003
        %v2074 = vunpack.c.h.b16 %v1003
        %v2075 = vunpack.c.l.b16 %v1004
        %v2076 = vunpack.c.h.b16 %v1004
        %v2077 = vunpack.c.l.b16 %v1005
        %v2078 = vunpack.c.h.b16 %v1005
        %v2079 = vunpack.c.l.b16 %v1006
        %v2080 = vunpack.c.h.b16 %v1006
        %v2081 = vunpack.c.l.b16 %v1007
        %v2082 = vunpack.c.h.b16 %v1007
        %v2083 = vunpack.c.l.b16 %v1008
        %v2084 = vunpack.c.h.b16 %v1008
        %v2085 = vunpack.c.l.b16 %v1009
        %v2086 = vunpack.c.h.b16 %v1009
        %v2087 = vunpack.c.l.b16 %v1010
        %v2088 = vunpack.c.h.b16 %v1010
        %v2089 = vunpack.c.l.b16 %v1011
        %v2090 = vunpack.c.h.b16 %v1011
        %v2091 = vunpack.c.l.b16 %v1012
        %v2092 = vunpack.c.h.b16 %v1012
        %v2093 = vunpack.c.l.b16 %v1013
        %v2094 = vunpack.c.h.b16 %v1013
        %v2095 = vunpack.c.l.b16 %v1014
        %v2096 = vunpack.c.h.b16 %v1014
        %v2097 = vunpack.c.l.b16 %v1015
        %v2098 = vunpack.c.h.b16 %v1015
        %v2099 = vunpack.c.l.b16 %v1016
        %v2100 = vunpack.c.h.b16 %v1016
        %v2101 = vunpack.c.l.b16 %v1017
        %v2102 = vunpack.c.h.b16 %v1017
        %v2103 = vunpack.c.l.b16 %v1018
        %v2104 = vunpack.c.h.b16 %v1018
        %v2105 = vunpack.c.l.b16 %v1019
        %v2106 = vunpack.c.h.b16 %v1019
        %v2107 = vunpack.c.l.b16 %v1020
        %v2108 = vunpack.c.h.b16 %v1020
        %v2109 = vunpack.c.l.b16 %v1021
        %v2110 = vunpack.c.h.b16 %v1021
        %v2111 = vunpack.c.l.b16 %v1022
        %v2112 = vunpack.c.h.b16 %v1022
        %v2113 = vunpack.c.l.b16 %v1023
        %v2114 = vunpack.c.h.b16 %v1023
        %v2115 = vunpack.c.l.b16 %v1024
        %v2116 = vunpack.c.h.b16 %v1024
        %v2117 = vunpack.c.l.b16 %v1025
        %v2118 = vunpack.c.h.b16 %v1025
        %v2119 = vunpack.c.l.b16 %v1026
        %v2120 = vunpack.c.h.b16 %v1026
        %v2121 = vunpack.c.l.b16 %v1027
        %v2122 = vunpack.c.h.b16 %v1027
        %v2123 = vunpack.c.l.b16 %v1028
        %v2124 = vunpack.c.h.b16 %v1028
        %v2125 = vunpack.c.l.b16 %v1029
        %v2126 = vunpack.c.h.b16 %v1029
        %v2127 = vunpack.c.l.b16 %v1030
        %v2128 = vunpack.c.h.b16 %v1030
        %v2129 = vunpack.c.l.b16 %v1031
        %v2130 = vunpack.c.h.b16 %v1031
        %v2131 = vunpack.c.l.b16 %v1032
        %v2132 = vunpack.c.h.b16 %v1032
        %v2133 = vunpack.c.l.b16 %v1033
        %v2134 = vunpack.c.h.b16 %v1033
        %v2135 = vunpack.c.l.b16 %v1034
        %v2136 = vunpack.c.h.b16 %v1034
        %v2137 = vunpack.c.l.b16 %v1035
        %v2138 = vunpack.c.h.b16 %v1035
        %v2139 = vunpack.c.l.b16 %v1036
        %v2140 = vunpack.c.h.b16 %v1036
        %v2141 = vunpack.c.l.b16 %v1037
        %v2142 = vunpack.c.h.b16 %v1037
        %v2143 = vunpack.c.l.b16 %v1038
        %v2144 = vunpack.c.h.b16 %v1038
        %v2145 = vunpack.c.l.b16 %v1039
        %v2146 = vunpack.c.h.b16 %v1039
        %v2147 = vunpack.c.l.b16 %v1040
        %v2148 = vunpack.c.h.b16 %v1040
        %v2149 = vunpack.c.l.b16 %v1041
        %v2150 = vunpack.c.h.b16 %v1041
        %v2151 = vunpack.c.l.b16 %v1042
        %v2152 = vunpack.c.h.b16 %v1042
        %v2153 = vunpack.c.l.b16 %v1043
        %v2154 = vunpack.c.h.b16 %v1043
        %v2155 = vunpack.c.l.b16 %v1044
        %v2156 = vunpack.c.h.b16 %v1044
        %v2157 = vunpack.c.l.b16 %v1045
        %v2158 = vunpack.c.h.b16 %v1045
        %v2159 = vunpack.c.l.b16 %v1046
        %v2160 = vunpack.c.h.b16 %v1046
        %v2161 = vunpack.c.l.b16 %v1047
        %v2162 = vunpack.c.h.b16 %v1047
        %v2163 = vunpack.c.l.b16 %v1048
        %v2164 = vunpack.c.h.b16 %v1048
        %v2165 = vunpack.c.l.b16 %v1049
        %v2166 = vunpack.c.h.b16 %v1049
        %v2167 = vunpack.c.l.b16 %v1050
        %v2168 = vunpack.c.h.b16 %v1050
        %v2169 = vunpack.c.l.b16 %v1051
        %v2170 = vunpack.c.h.b16 %v1051
        %v2171 = vunpack.c.l.b16 %v1052
        %v2172 = vunpack.c.h.b16 %v1052
        %v2173 = vunpack.c.l.b16 %v1053
        %v2174 = vunpack.c.h.b16 %v1053
        %v2175 = vunpack.c.l.b16 %v1054
        %v2176 = vunpack.c.h.b16 %v1054
        %v2177 = vunpack.c.l.b16 %v1055
        %v2178 = vunpack.c.h.b16 %v1055
        %v2179 = vunpack.c.l.b16 %v1056
        %v2180 = vunpack.c.h.b16 %v1056
        %v2181 = vunpack.c.l.b16 %v1057
        %v2182 = vunpack.c.h.b16 %v1057
        %v2183 = vunpack.c.l.b16 %v1058
        %v2184 = vunpack.c.h.b16 %v1058
        %v2185 = vunpack.c.l.b16 %v1059
        %v2186 = vunpack.c.h.b16 %v1059
        %v2187 = vunpack.c.l.b16 %v1060
        %v2188 = vunpack.c.h.b16 %v1060
        %v2189 = vunpack.c.l.b16 %v1061
        %v2190 = vunpack.c.h.b16 %v1061
        %v2191 = vunpack.c.l.b16 %v1062
        %v2192 = vunpack.c.h.b16 %v1062
        %v2193 = vunpack.c.l.b16 %v1063
        %v2194 = vunpack.c.h.b16 %v1063
        %v2195 = vunpack.c.l.b16 %v1064
        %v2196 = vunpack.c.h.b16 %v1064
        %v2197 = vunpack.c.l.b16 %v1065
        %v2198 = vunpack.c.h.b16 %v1065
        %v2199 = vunpack.c.l.b16 %v1066
        %v2200 = vunpack.c.h.b16 %v1066
        %v2201 = vunpack.c.l.b16 %v1067
        %v2202 = vunpack.c.h.b16 %v1067
        %v2203 = vunpack.c.l.b16 %v1068
        %v2204 = vunpack.c.h.b16 %v1068
        %v2205 = vunpack.c.l.b16 %v1069
        %v2206 = vunpack.c.h.b16 %v1069
        %v2207 = vunpack.c.l.b16 %v1070
        %v2208 = vunpack.c.h.b16 %v1070
        %v2209 = vunpack.c.l.b16 %v1071
        %v2210 = vunpack.c.h.b16 %v1071
        %v2211 = vunpack.c.l.b16 %v1072
        %v2212 = vunpack.c.h.b16 %v1072
        %v2213 = vunpack.c.l.b16 %v1073
        %v2214 = vunpack.c.h.b16 %v1073
        %v2215 = vunpack.c.l.b16 %v1074
        %v2216 = vunpack.c.h.b16 %v1074
        %v2217 = vunpack.c.l.b16 %v1075
        %v2218 = vunpack.c.h.b16 %v1075
        %v2219 = vunpack.c.l.b16 %v1076
        %v2220 = vunpack.c.h.b16 %v1076
        %v2221 = vunpack.c.l.b16 %v1077
        %v2222 = vunpack.c.h.b16 %v1077
        %v2223 = vunpack.c.l.b16 %v1078
        %v2224 = vunpack.c.h.b16 %v1078
        %v2225 = vunpack.c.l.b16 %v1079
        %v2226 = vunpack.c.h.b16 %v1079
        %v2227 = vunpack.c.l.b16 %v1080
        %v2228 = vunpack.c.h.b16 %v1080
        %v2229 = vunpack.c.l.b16 %v1081
        %v2230 = vunpack.c.h.b16 %v1081
        %v2231 = vunpack.c.l.b16 %v1082
        %v2232 = vunpack.c.h.b16 %v1082
        %v2233 = vunpack.c.l.b16 %v1083
        %v2234 = vunpack.c.h.b16 %v1083
        %v2235 = vunpack.c.l.b16 %v1084
        %v2236 = vunpack.c.h.b16 %v1084
        %v2237 = vunpack.c.l.b16 %v1085
        %v2238 = vunpack.c.h.b16 %v1085
        %v2239 = vunpack.c.l.b16 %v1086
        %v2240 = vunpack.c.h.b16 %v1086
        %v2241 = vunpack.c.l.b16 %v1087
        %v2242 = vunpack.c.h.b16 %v1087
        %v2243 = vunpack.c.l.b16 %v1088
        %v2244 = vunpack.c.h.b16 %v1088
        %v2245 = vunpack.c.l.b16 %v1089
        %v2246 = vunpack.c.h.b16 %v1089
        %v2247 = vunpack.c.l.b16 %v1090
        %v2248 = vunpack.c.h.b16 %v1090
        %v2249 = vunpack.c.l.b16 %v1091
        %v2250 = vunpack.c.h.b16 %v1091
        %v2251 = vunpack.c.l.b16 %v1092
        %v2252 = vunpack.c.h.b16 %v1092
        %v2253 = vunpack.c.l.b16 %v1093
        %v2254 = vunpack.c.h.b16 %v1093
        %v2255 = vunpack.c.l.b16 %v1094
        %v2256 = vunpack.c.h.b16 %v1094
        %v2257 = vunpack.c.l.b16 %v1095
        %v2258 = vunpack.c.h.b16 %v1095
        %v2259 = vunpack.c.l.b16 %v1096
        %v2260 = vunpack.c.h.b16 %v1096
        %v2261 = vunpack.c.l.b16 %v1097
        %v2262 = vunpack.c.h.b16 %v1097
        %v2263 = vunpack.c.l.b16 %v1098
        %v2264 = vunpack.c.h.b16 %v1098
        %v2265 = vunpack.c.l.b16 %v1099
        %v2266 = vunpack.c.h.b16 %v1099
        %v2267 = vunpack.c.l.b16 %v1100
        %v2268 = vunpack.c.h.b16 %v1100
        %v2269 = vunpack.c.l.b16 %v1101
        %v2270 = vunpack.c.h.b16 %v1101
        %v2271 = vunpack.c.l.b16 %v1102
        %v2272 = vunpack.c.h.b16 %v1102
        %v2273 = vunpack.c.l.b16 %v1103
        %v2274 = vunpack.c.h.b16 %v1103
        %v2275 = vunpack.c.l.b16 %v1104
        %v2276 = vunpack.c.h.b16 %v1104
        %v2277 = vunpack.c.l.b16 %v1105
        %v2278 = vunpack.c.h.b16 %v1105
        %v2279 = vunpack.c.l.b16 %v1106
        %v2280 = vunpack.c.h.b16 %v1106
        %v2281 = vunpack.c.l.b16 %v1107
        %v2282 = vunpack.c.h.b16 %v1107
        %v2283 = vunpack.c.l.b16 %v1108
        %v2284 = vunpack.c.h.b16 %v1108
        %v2285 = vunpack.c.l.b16 %v1109
        %v2286 = vunpack.c.h.b16 %v1109
        %v2287 = vunpack.c.l.b16 %v1110
        %v2288 = vunpack.c.h.b16 %v1110
        %v2289 = vunpack.c.l.b16 %v1111
        %v2290 = vunpack.c.h.b16 %v1111
        %v2291 = vunpack.c.l.b16 %v1112
        %v2292 = vunpack.c.h.b16 %v1112
        %v2293 = vunpack.c.l.b16 %v1113
        %v2294 = vunpack.c.h.b16 %v1113
        %v2295 = vunpack.c.l.b16 %v1114
        %v2296 = vunpack.c.h.b16 %v1114
        %v2297 = vunpack.c.l.b16 %v1115
        %v2298 = vunpack.c.h.b16 %v1115
        %v2299 = vunpack.c.l.b16 %v1116
        %v2300 = vunpack.c.h.b16 %v1116
        %v2301 = vunpack.c.l.b16 %v1117
        %v2302 = vunpack.c.h.b16 %v1117
        %v2303 = vunpack.c.l.b16 %v1118
        %v2304 = vunpack.c.h.b16 %v1118
        %v2305 = vunpack.c.l.b16 %v1119
        %v2306 = vunpack.c.h.b16 %v1119
        %v2307 = vunpack.c.l.b16 %v1120
        %v2308 = vunpack.c.h.b16 %v1120
        %v2309 = vunpack.c.l.b16 %v1121
        %v2310 = vunpack.c.h.b16 %v1121
        %v2311 = vunpack.c.l.b16 %v1122
        %v2312 = vunpack.c.h.b16 %v1122
        %v2313 = vunpack.c.l.b16 %v1123
        %v2314 = vunpack.c.h.b16 %v1123
        %v2315 = vunpack.c.l.b16 %v1124
        %v2316 = vunpack.c.h.b16 %v1124
        %v2317 = vunpack.c.l.b16 %v1125
        %v2318 = vunpack.c.h.b16 %v1125
        %v2319 = vunpack.c.l.b16 %v1126
        %v2320 = vunpack.c.h.b16 %v1126
        %v2321 = vunpack.c.l.b16 %v1127
        %v2322 = vunpack.c.h.b16 %v1127
        %v2323 = vunpack.c.l.b16 %v1128
        %v2324 = vunpack.c.h.b16 %v1128
        %v2325 = vunpack.c.l.b16 %v1129
        %v2326 = vunpack.c.h.b16 %v1129
        %v2327 = vunpack.c.l.b16 %v1130
        %v2328 = vunpack.c.h.b16 %v1130
        %v2329 = vunpack.c.l.b16 %v1131
        %v2330 = vunpack.c.h.b16 %v1131
        %v2331 = vunpack.c.l.b16 %v1132
        %v2332 = vunpack.c.h.b16 %v1132
        %v2333 = vunpack.c.l.b16 %v1133
        %v2334 = vunpack.c.h.b16 %v1133
        %v2335 = vunpack.c.l.b16 %v1134
        %v2336 = vunpack.c.h.b16 %v1134
        %v2337 = vunpack.c.l.b16 %v1135
        %v2338 = vunpack.c.h.b16 %v1135
        %v2339 = vunpack.c.l.b16 %v1136
        %v2340 = vunpack.c.h.b16 %v1136
        %v2341 = vunpack.c.l.b16 %v1137
        %v2342 = vunpack.c.h.b16 %v1137
        %v2343 = vunpack.c.l.b16 %v1138
        %v2344 = vunpack.c.h.b16 %v1138
        %v2345 = vunpack.c.l.b16 %v1139
        %v2346 = vunpack.c.h.b16 %v1139
        %v2347 = vunpack.c.l.b16 %v1140
        %v2348 = vunpack.c.h.b16 %v1140
        %v2349 = vunpack.c.l.b16 %v1141
        %v2350 = vunpack.c.h.b16 %v1141
        %v2351 = vunpack.c.l.b16 %v1142
        %v2352 = vunpack.c.h.b16 %v1142
        %v2353 = vunpack.c.l.b16 %v1143
        %v2354 = vunpack.c.h.b16 %v1143
        %v2355 = vunpack.c.l.b16 %v1144
        %v2356 = vunpack.c.h.b16 %v1144
        %v2357 = vunpack.c.l.b16 %v1145
        %v2358 = vunpack.c.h.b16 %v1145
        %v2359 = vunpack.c.l.b16 %v1146
        %v2360 = vunpack.c.h.b16 %v1146
        %v2361 = vunpack.c.l.b16 %v1147
        %v2362 = vunpack.c.h.b16 %v1147
        %v2363 = vunpack.c.l.b16 %v1148
        %v2364 = vunpack.c.h.b16 %v1148
        %v2365 = vunpack.c.l.b16 %v1149
        %v2366 = vunpack.c.h.b16 %v1149
        %v2367 = vunpack.c.l.b16 %v1150
        %v2368 = vunpack.c.h.b16 %v1150
        %v2369 = vunpack.c.l.b16 %v1151
        %v2370 = vunpack.c.h.b16 %v1151
        %v2371 = vunpack.c.l.b16 %v1152
        %v2372 = vunpack.c.h.b16 %v1152
        %v2373 = vunpack.c.l.b16 %v1153
        %v2374 = vunpack.c.h.b16 %v1153
        %v2375 = vunpack.c.l.b16 %v1154
        %v2376 = vunpack.c.h.b16 %v1154
        %v2377 = vunpack.c.l.b16 %v1155
        %v2378 = vunpack.c.h.b16 %v1155
        %v2379 = vunpack.c.l.b16 %v1156
        %v2380 = vunpack.c.h.b16 %v1156
        %v2381 = vunpack.c.l.b16 %v1157
        %v2382 = vunpack.c.h.b16 %v1157
        %v2383 = vunpack.c.l.b16 %v1158
        %v2384 = vunpack.c.h.b16 %v1158
        %v2385 = vunpack.c.l.b16 %v1159
        %v2386 = vunpack.c.h.b16 %v1159
        %v2387 = vunpack.c.l.b16 %v1160
        %v2388 = vunpack.c.h.b16 %v1160
        %v2389 = vunpack.c.l.b16 %v1161
        %v2390 = vunpack.c.h.b16 %v1161
        %v2391 = vunpack.c.l.b16 %v1162
        %v2392 = vunpack.c.h.b16 %v1162
        %v2393 = vunpack.c.l.b16 %v1163
        %v2394 = vunpack.c.h.b16 %v1163
        %v2395 = vunpack.c.l.b16 %v1164
        %v2396 = vunpack.c.h.b16 %v1164
        %v2397 = vunpack.c.l.b16 %v1165
        %v2398 = vunpack.c.h.b16 %v1165
        %v2399 = vunpack.c.l.b16 %v1166
        %v2400 = vunpack.c.h.b16 %v1166
        %v2401 = vunpack.c.l.b16 %v1167
        %v2402 = vunpack.c.h.b16 %v1167
        %v2403 = vunpack.c.l.b16 %v1168
        %v2404 = vunpack.c.h.b16 %v1168
        %v2405 = vunpack.c.l.b16 %v1169
        %v2406 = vunpack.c.h.b16 %v1169
        %v2407 = vunpack.c.l.b16 %v1170
        %v2408 = vunpack.c.h.b16 %v1170
        %v2409 = vunpack.c.l.b16 %v1171
        %v2410 = vunpack.c.h.b16 %v1171
        %v2411 = vunpack.c.l.b16 %v1172
        %v2412 = vunpack.c.h.b16 %v1172
        %v2413 = vunpack.c.l.b16 %v1173
        %v2414 = vunpack.c.h.b16 %v1173
        %v2415 = vunpack.c.l.b16 %v1174
        %v2416 = vunpack.c.h.b16 %v1174
        %v2417 = vunpack.c.l.b16 %v1175
        %v2418 = vunpack.c.h.b16 %v1175
        %v2419 = vunpack.c.l.b16 %v1176
        %v2420 = vunpack.c.h.b16 %v1176
        %v2421 = vunpack.c.l.b16 %v1177
        %v2422 = vunpack.c.h.b16 %v1177
        %v2423 = vunpack.c.l.b16 %v1178
        %v2424 = vunpack.c.h.b16 %v1178
        %v2425 = vunpack.c.l.b16 %v1179
        %v2426 = vunpack.c.h.b16 %v1179
        %v2427 = vunpack.c.l.b16 %v1180
        %v2428 = vunpack.c.h.b16 %v1180
        %v2429 = vunpack.c.l.b16 %v1181
        %v2430 = vunpack.c.h.b16 %v1181
        %v2431 = vunpack.c.l.b16 %v1182
        %v2432 = vunpack.c.h.b16 %v1182
        %v2433 = vunpack.c.l.b16 %v1183
        %v2434 = vunpack.c.h.b16 %v1183
        %v2435 = vunpack.c.l.b16 %v1184
        %v2436 = vunpack.c.h.b16 %v1184
        %v2437 = vunpack.c.l.b16 %v1185
        %v2438 = vunpack.c.h.b16 %v1185
        %v2439 = vunpack.c.l.b16 %v1186
        %v2440 = vunpack.c.h.b16 %v1186
        %v2441 = vunpack.c.l.b16 %v1187
        %v2442 = vunpack.c.h.b16 %v1187
        %v2443 = vunpack.c.l.b16 %v1188
        %v2444 = vunpack.c.h.b16 %v1188
        %v2445 = vunpack.c.l.b16 %v1189
        %v2446 = vunpack.c.h.b16 %v1189
        %v2447 = vunpack.c.l.b16 %v1190
        %v2448 = vunpack.c.h.b16 %v1190
        %v2449 = vunpack.c.l.b16 %v1191
        %v2450 = vunpack.c.h.b16 %v1191
        %v2451 = vunpack.c.l.b16 %v1192
        %v2452 = vunpack.c.h.b16 %v1192
        %v2453 = vunpack.c.l.b16 %v1193
        %v2454 = vunpack.c.h.b16 %v1193
        %v2455 = vunpack.c.l.b16 %v1194
        %v2456 = vunpack.c.h.b16 %v1194
        %v2457 = vunpack.c.l.b16 %v1195
        %v2458 = vunpack.c.h.b16 %v1195
        %v2459 = vunpack.c.l.b16 %v1196
        %v2460 = vunpack.c.h.b16 %v1196
        %v2461 = vunpack.c.l.b16 %v1197
        %v2462 = vunpack.c.h.b16 %v1197
        %v2463 = vunpack.c.l.b16 %v1198
        %v2464 = vunpack.c.h.b16 %v1198
        %v2465 = vunpack.c.l.b16 %v1199
        %v2466 = vunpack.c.h.b16 %v1199
        %v2467 = vunpack.c.l.b16 %v1200
        %v2468 = vunpack.c.h.b16 %v1200
        %v2469 = vunpack.c.l.b16 %v1201
        %v2470 = vunpack.c.h.b16 %v1201
        %v2471 = vunpack.c.l.b16 %v1202
        %v2472 = vunpack.c.h.b16 %v1202
        %v2473 = vunpack.c.l.b16 %v1203
        %v2474 = vunpack.c.h.b16 %v1203
        %v2475 = vunpack.c.l.b16 %v1204
        %v2476 = vunpack.c.h.b16 %v1204
        %v2477 = vunpack.c.l.b16 %v1205
        %v2478 = vunpack.c.h.b16 %v1205
        %v2479 = vunpack.c.l.b16 %v1206
        %v2480 = vunpack.c.h.b16 %v1206
        %v2481 = vunpack.c.l.b16 %v1207
        %v2482 = vunpack.c.h.b16 %v1207
        %v2483 = vunpack.c.l.b16 %v1208
        %v2484 = vunpack.c.h.b16 %v1208
        %v2485 = vunpack.c.l.b16 %v1209
        %v2486 = vunpack.c.h.b16 %v1209
        %v2487 = vunpack.c.l.b16 %v1210
        %v2488 = vunpack.c.h.b16 %v1210
        %v2489 = vunpack.c.l.b16 %v1211
        %v2490 = vunpack.c.h.b16 %v1211
        %v2491 = vunpack.c.l.b16 %v1212
        %v2492 = vunpack.c.h.b16 %v1212
        %v2493 = vunpack.c.l.b16 %v1213
        %v2494 = vunpack.c.h.b16 %v1213
        %v2495 = vunpack.c.l.b16 %v1214
        %v2496 = vunpack.c.h.b16 %v1214
        %v2497 = vunpack.c.l.b16 %v1215
        %v2498 = vunpack.c.h.b16 %v1215
        %v2499 = vunpack.c.l.b16 %v1216
        %v2500 = vunpack.c.h.b16 %v1216
        %v2501 = vunpack.c.l.b16 %v1217
        %v2502 = vunpack.c.h.b16 %v1217
        %v2503 = vunpack.c.l.b16 %v1218
        %v2504 = vunpack.c.h.b16 %v1218
        %v2505 = vunpack.c.l.b16 %v1219
        %v2506 = vunpack.c.h.b16 %v1219
        %v2507 = vunpack.c.l.b16 %v1220
        %v2508 = vunpack.c.h.b16 %v1220
        %v2509 = vunpack.c.l.b16 %v1221
        %v2510 = vunpack.c.h.b16 %v1221
        %v2511 = vunpack.c.l.b16 %v1222
        %v2512 = vunpack.c.h.b16 %v1222
        %v2513 = vunpack.c.l.b16 %v1223
        %v2514 = vunpack.c.h.b16 %v1223
        %v2515 = vunpack.c.l.b16 %v1224
        %v2516 = vunpack.c.h.b16 %v1224
        %v2517 = vunpack.c.l.b16 %v1225
        %v2518 = vunpack.c.h.b16 %v1225
        %v2519 = vunpack.c.l.b16 %v1226
        %v2520 = vunpack.c.h.b16 %v1226
        %v2521 = vunpack.c.l.b16 %v1227
        %v2522 = vunpack.c.h.b16 %v1227
        %v2523 = vunpack.c.l.b16 %v1228
        %v2524 = vunpack.c.h.b16 %v1228
        %v2525 = vunpack.c.l.b16 %v1229
        %v2526 = vunpack.c.h.b16 %v1229
        %v2527 = vunpack.c.l.b16 %v1230
        %v2528 = vunpack.c.h.b16 %v1230
        %v2529 = vunpack.c.l.b16 %v1231
        %v2530 = vunpack.c.h.b16 %v1231
        %v2531 = vunpack.c.l.b16 %v1232
        %v2532 = vunpack.c.h.b16 %v1232
        %v2533 = vunpack.c.l.b16 %v1233
        %v2534 = vunpack.c.h.b16 %v1233
        %v2535 = vunpack.c.l.b16 %v1234
        %v2536 = vunpack.c.h.b16 %v1234
        %v2537 = vunpack.c.l.b16 %v1235
        %v2538 = vunpack.c.h.b16 %v1235
        %v2539 = vunpack.c.l.b16 %v1236
        %v2540 = vunpack.c.h.b16 %v1236
        %v2541 = vunpack.c.l.b16 %v1237
        %v2542 = vunpack.c.h.b16 %v1237
        %v2543 = vunpack.c.l.b16 %v1238
        %v2544 = vunpack.c.h.b16 %v1238
        %v2545 = vunpack.c.l.b16 %v1239
        %v2546 = vunpack.c.h.b16 %v1239
        %v2547 = vunpack.c.l.b16 %v1240
        %v2548 = vunpack.c.h.b16 %v1240
        %v2549 = vunpack.c.l.b16 %v1241
        %v2550 = vunpack.c.h.b16 %v1241
        %v2551 = vunpack.c.l.b16 %v1242
        %v2552 = vunpack.c.h.b16 %v1242
        %v2553 = vunpack.c.l.b16 %v1243
        %v2554 = vunpack.c.h.b16 %v1243
        %v2555 = vunpack.c.l.b16 %v1244
        %v2556 = vunpack.c.h.b16 %v1244
        %v2557 = vunpack.c.l.b16 %v1245
        %v2558 = vunpack.c.h.b16 %v1245
        %v2559 = vunpack.c.l.b16 %v1246
        %v2560 = vunpack.c.h.b16 %v1246
        %v2561 = vunpack.c.l.b16 %v1247
        %v2562 = vunpack.c.h.b16 %v1247
        %v2563 = vunpack.c.l.b16 %v1248
        %v2564 = vunpack.c.h.b16 %v1248
        %v2565 = vunpack.c.l.b16 %v1249
        %v2566 = vunpack.c.h.b16 %v1249
        %v2567 = vunpack.c.l.b16 %v1250
        %v2568 = vunpack.c.h.b16 %v1250
        %v2569 = vunpack.c.l.b16 %v1251
        %v2570 = vunpack.c.h.b16 %v1251
        %v2571 = vunpack.c.l.b16 %v1252
        %v2572 = vunpack.c.h.b16 %v1252
        %v2573 = vunpack.c.l.b16 %v1253
        %v2574 = vunpack.c.h.b16 %v1253
        %v2575 = vunpack.c.l.b16 %v1254
        %v2576 = vunpack.c.h.b16 %v1254
        %v2577 = vunpack.c.l.b16 %v1255
        %v2578 = vunpack.c.h.b16 %v1255
        %v2579 = vunpack.c.l.b16 %v1256
        %v2580 = vunpack.c.h.b16 %v1256
        %v2581 = vunpack.c.l.b16 %v1257
        %v2582 = vunpack.c.h.b16 %v1257
        %v2583 = vunpack.c.l.b16 %v1258
        %v2584 = vunpack.c.h.b16 %v1258
        %v2585 = vunpack.c.l.b16 %v1259
        %v2586 = vunpack.c.h.b16 %v1259
        %v2587 = vunpack.c.l.b16 %v1260
        %v2588 = vunpack.c.h.b16 %v1260
        %v2589 = vunpack.c.l.b16 %v1261
        %v2590 = vunpack.c.h.b16 %v1261
        %v2591 = vunpack.c.l.b16 %v1262
        %v2592 = vunpack.c.h.b16 %v1262
        %v2593 = vunpack.c.l.b16 %v1263
        %v2594 = vunpack.c.h.b16 %v1263
        %v2595 = vunpack.c.l.b16 %v1264
        %v2596 = vunpack.c.h.b16 %v1264
        %v2597 = vunpack.c.l.b16 %v1265
        %v2598 = vunpack.c.h.b16 %v1265
        %v2599 = vunpack.c.l.b16 %v1266
        %v2600 = vunpack.c.h.b16 %v1266
        %v2601 = vunpack.c.l.b16 %v1267
        %v2602 = vunpack.c.h.b16 %v1267
        %v2603 = vunpack.c.l.b16 %v1268
        %v2604 = vunpack.c.h.b16 %v1268
        %v2605 = vunpack.c.l.b16 %v1269
        %v2606 = vunpack.c.h.b16 %v1269
        %v2607 = vunpack.c.l.b16 %v1270
        %v2608 = vunpack.c.h.b16 %v1270
        %v2609 = vunpack.c.l.b16 %v1271
        %v2610 = vunpack.c.h.b16 %v1271
        %v2611 = vunpack.c.l.b16 %v1272
        %v2612 = vunpack.c.h.b16 %v1272
        %v2613 = vunpack.c.l.b16 %v1273
        %v2614 = vunpack.c.h.b16 %v1273
        %v2615 = vunpack.c.l.b16 %v1274
        %v2616 = vunpack.c.h.b16 %v1274
        %v2617 = vunpack.c.l.b16 %v1275
        %v2618 = vunpack.c.h.b16 %v1275
        %v2619 = vunpack.c.l.b16 %v1276
        %v2620 = vunpack.c.h.b16 %v1276
        %v2621 = vunpack.c.l.b16 %v1277
        %v2622 = vunpack.c.h.b16 %v1277
        %v2623 = vunpack.c.l.b16 %v1278
        %v2624 = vunpack.c.h.b16 %v1278
        %v2625 = vunpack.c.l.b16 %v1279
        %v2626 = vunpack.c.h.b16 %v1279
        %v2627 = vunpack.c.l.b16 %v1280
        %v2628 = vunpack.c.h.b16 %v1280
        %v2629 = vunpack.c.l.b16 %v1281
        %v2630 = vunpack.c.h.b16 %v1281
        %v2631 = vunpack.c.l.b16 %v1282
        %v2632 = vunpack.c.h.b16 %v1282
        %v2633 = vunpack.c.l.b16 %v1283
        %v2634 = vunpack.c.h.b16 %v1283
        %v2635 = vunpack.c.l.b16 %v1284
        %v2636 = vunpack.c.h.b16 %v1284
        %v2637 = vunpack.c.l.b16 %v1285
        %v2638 = vunpack.c.h.b16 %v1285
        %v2639 = vunpack.c.l.b16 %v1286
        %v2640 = vunpack.c.h.b16 %v1286
        %v2641 = vunpack.c.l.b16 %v1287
        %v2642 = vunpack.c.h.b16 %v1287
        %v2643 = vunpack.c.l.b16 %v1288
        %v2644 = vunpack.c.h.b16 %v1288
        %v2645 = vunpack.c.l.b16 %v1289
        %v2646 = vunpack.c.h.b16 %v1289
        %v2647 = vunpack.c.l.b16 %v1290
        %v2648 = vunpack.c.h.b16 %v1290
        %v2649 = vunpack.c.l.b16 %v1291
        %v2650 = vunpack.c.h.b16 %v1291
        %v2651 = vunpack.c.l.b16 %v1292
        %v2652 = vunpack.c.h.b16 %v1292
        %v2653 = vunpack.c.l.b16 %v1293
        %v2654 = vunpack.c.h.b16 %v1293
        %v2655 = vunpack.c.l.b16 %v1294
        %v2656 = vunpack.c.h.b16 %v1294
        %v2657 = vunpack.c.l.b16 %v1295
        %v2658 = vunpack.c.h.b16 %v1295
        %v2659 = vunpack.c.l.b16 %v1296
        %v2660 = vunpack.c.h.b16 %v1296
        %v2661 = vunpack.c.l.b16 %v1297
        %v2662 = vunpack.c.h.b16 %v1297
        %v2663 = vunpack.c.l.b16 %v1298
        %v2664 = vunpack.c.h.b16 %v1298
        %v2665 = vunpack.c.l.b16 %v1299
        %v2666 = vunpack.c.h.b16 %v1299
        %v2667 = vunpack.c.l.b16 %v1300
        %v2668 = vunpack.c.h.b16 %v1300
        %v2669 = vunpack.c.l.b16 %v1301
        %v2670 = vunpack.c.h.b16 %v1301
        %v2671 = vunpack.c.l.b16 %v1302
        %v2672 = vunpack.c.h.b16 %v1302
        %v2673 = vunpack.c.l.b16 %v1303
        %v2674 = vunpack.c.h.b16 %v1303
        %v2675 = vunpack.c.l.b16 %v1304
        %v2676 = vunpack.c.h.b16 %v1304
        %v2677 = vunpack.c.l.b16 %v1305
        %v2678 = vunpack.c.h.b16 %v1305
        %v2679 = vunpack.c.l.b16 %v1306
        %v2680 = vunpack.c.h.b16 %v1306
        %v2681 = vunpack.c.l.b16 %v1307
        %v2682 = vunpack.c.h.b16 %v1307
        %v2683 = vunpack.c.l.b16 %v1308
        %v2684 = vunpack.c.h.b16 %v1308
        %v2685 = vunpack.c.l.b16 %v1309
        %v2686 = vunpack.c.h.b16 %v1309
        %v2687 = vunpack.c.l.b16 %v1310
        %v2688 = vunpack.c.h.b16 %v1310
        %v2689 = vunpack.c.l.b16 %v1311
        %v2690 = vunpack.c.h.b16 %v1311
        %v2691 = vunpack.c.l.b16 %v1312
        %v2692 = vunpack.c.h.b16 %v1312
        %v2693 = vunpack.c.l.b16 %v1313
        %v2694 = vunpack.c.h.b16 %v1313
        %v2695 = vunpack.c.l.b16 %v1314
        %v2696 = vunpack.c.h.b16 %v1314
        %v2697 = vunpack.c.l.b16 %v1315
        %v2698 = vunpack.c.h.b16 %v1315
        %v2699 = vunpack.c.l.b16 %v1316
        %v2700 = vunpack.c.h.b16 %v1316
        %v2701 = vunpack.c.l.b16 %v1317
        %v2702 = vunpack.c.h.b16 %v1317
        %v2703 = vunpack.c.l.b16 %v1318
        %v2704 = vunpack.c.h.b16 %v1318
        %v2705 = vunpack.c.l.b16 %v1319
        %v2706 = vunpack.c.h.b16 %v1319
        %v2707 = vunpack.c.l.b16 %v1320
        %v2708 = vunpack.c.h.b16 %v1320
        %v2709 = vunpack.c.l.b16 %v1321
        %v2710 = vunpack.c.h.b16 %v1321
        %v2711 = vunpack.c.l.b16 %v1322
        %v2712 = vunpack.c.h.b16 %v1322
        %v2713 = vunpack.c.l.b16 %v1323
        %v2714 = vunpack.c.h.b16 %v1323
        %v2715 = vunpack.c.l.b16 %v1324
        %v2716 = vunpack.c.h.b16 %v1324
        %v2717 = vunpack.c.l.b16 %v1325
        %v2718 = vunpack.c.h.b16 %v1325
        %v2719 = vunpack.c.l.b16 %v1326
        %v2720 = vunpack.c.h.b16 %v1326
        %v2721 = vunpack.c.l.b16 %v1327
        %v2722 = vunpack.c.h.b16 %v1327
        %v2723 = vunpack.c.l.b16 %v1328
        %v2724 = vunpack.c.h.b16 %v1328
        %v2725 = vunpack.c.l.b16 %v1329
        %v2726 = vunpack.c.h.b16 %v1329
        %v2727 = vunpack.c.l.b16 %v1330
        %v2728 = vunpack.c.h.b16 %v1330
        %v2729 = vunpack.c.l.b16 %v1331
        %v2730 = vunpack.c.h.b16 %v1331
        %v2731 = vunpack.c.l.b16 %v1332
        %v2732 = vunpack.c.h.b16 %v1332
        %v2733 = vunpack.c.l.b16 %v1333
        %v2734 = vunpack.c.h.b16 %v1333
        %v2735 = vunpack.c.l.b16 %v1334
        %v2736 = vunpack.c.h.b16 %v1334
        %v2737 = vunpack.c.l.b16 %v1335
        %v2738 = vunpack.c.h.b16 %v1335
        %v2739 = vunpack.c.l.b16 %v1336
        %v2740 = vunpack.c.h.b16 %v1336
        %v2741 = vunpack.c.l.b16 %v1337
        %v2742 = vunpack.c.h.b16 %v1337
        %v2743 = vunpack.c.l.b16 %v1338
        %v2744 = vunpack.c.h.b16 %v1338
        %v2745 = vunpack.c.l.b16 %v1339
        %v2746 = vunpack.c.h.b16 %v1339
        %v2747 = vunpack.c.l.b16 %v1340
        %v2748 = vunpack.c.h.b16 %v1340
        %v2749 = vunpack.c.l.b16 %v1341
        %v2750 = vunpack.c.h.b16 %v1341
        %v2751 = vunpack.c.l.b16 %v1342
        %v2752 = vunpack.c.h.b16 %v1342
        %v2753 = vunpack.c.l.b16 %v1343
        %v2754 = vunpack.c.h.b16 %v1343
        %v2755 = vunpack.c.l.b16 %v1344
        %v2756 = vunpack.c.h.b16 %v1344
        %v2757 = vunpack.c.l.b16 %v1345
        %v2758 = vunpack.c.h.b16 %v1345
        %v2759 = vunpack.c.l.b16 %v1346
        %v2760 = vunpack.c.h.b16 %v1346
        %v2761 = vunpack.c.l.b16 %v1347
        %v2762 = vunpack.c.h.b16 %v1347
        %v2763 = vunpack.c.l.b16 %v1348
        %v2764 = vunpack.c.h.b16 %v1348
        %v2765 = vunpack.c.l.b16 %v1349
        %v2766 = vunpack.c.h.b16 %v1349
        %v2767 = vunpack.c.l.b16 %v1350
        %v2768 = vunpack.c.h.b16 %v1350
        %v2769 = vunpack.c.l.b16 %v1351
        %v2770 = vunpack.c.h.b16 %v1351
        %v2771 = vunpack.c.l.b16 %v1352
        %v2772 = vunpack.c.h.b16 %v1352
        %v2773 = vunpack.c.l.b16 %v1353
        %v2774 = vunpack.c.h.b16 %v1353
        %v2775 = vunpack.c.l.b16 %v1354
        %v2776 = vunpack.c.h.b16 %v1354
        %v2777 = vunpack.c.l.b16 %v1355
        %v2778 = vunpack.c.h.b16 %v1355
        %v2779 = vunpack.c.l.b16 %v1356
        %v2780 = vunpack.c.h.b16 %v1356
        %v2781 = vunpack.c.l.b16 %v1357
        %v2782 = vunpack.c.h.b16 %v1357
        %v2783 = vunpack.c.l.b16 %v1358
        %v2784 = vunpack.c.h.b16 %v1358
        %v2785 = vunpack.c.l.b16 %v1359
        %v2786 = vunpack.c.h.b16 %v1359
        %v2787 = vunpack.c.l.b16 %v1360
        %v2788 = vunpack.c.h.b16 %v1360
        %v2789 = vunpack.c.l.b16 %v1361
        %v2790 = vunpack.c.h.b16 %v1361
        %v2791 = vunpack.c.l.b16 %v1362
        %v2792 = vunpack.c.h.b16 %v1362
        %v2793 = vunpack.c.l.b16 %v1363
        %v2794 = vunpack.c.h.b16 %v1363
        %v2795 = vunpack.c.l.b16 %v1364
        %v2796 = vunpack.c.h.b16 %v1364
        %v2797 = vunpack.c.l.b16 %v1365
        %v2798 = vunpack.c.h.b16 %v1365
        %v2799 = vunpack.c.l.b16 %v1366
        %v2800 = vunpack.c.h.b16 %v1366
        %v2801 = vunpack.c.l.b16 %v1367
        %v2802 = vunpack.c.h.b16 %v1367
        %v2803 = vunpack.c.l.b16 %v1368
        %v2804 = vunpack.c.h.b16 %v1368
        %v2805 = vunpack.c.l.b16 %v1369
        %v2806 = vunpack.c.h.b16 %v1369
        %v2807 = vunpack.c.l.b16 %v1370
        %v2808 = vunpack.c.h.b16 %v1370
        %v2809 = vunpack.c.l.b16 %v1371
        %v2810 = vunpack.c.h.b16 %v1371
        %v2811 = vunpack.c.l.b16 %v1372
        %v2812 = vunpack.c.h.b16 %v1372
        %v2813 = vunpack.c.l.b16 %v1373
        %v2814 = vunpack.c.h.b16 %v1373
        %v2815 = vunpack.c.l.b16 %v1374
        %v2816 = vunpack.c.h.b16 %v1374
        %v2817 = vunpack.c.l.b16 %v1375
        %v2818 = vunpack.c.h.b16 %v1375
        %v2819 = vunpack.c.l.b16 %v1376
        %v2820 = vunpack.c.h.b16 %v1376
        %v2821 = vunpack.c.l.b16 %v1377
        %v2822 = vunpack.c.h.b16 %v1377
        %v2823 = vunpack.c.l.b16 %v1378
        %v2824 = vunpack.c.h.b16 %v1378
        %v2825 = vunpack.c.l.b16 %v1379
        %v2826 = vunpack.c.h.b16 %v1379
        %v2827 = vunpack.c.l.b16 %v1380
        %v2828 = vunpack.c.h.b16 %v1380
        %v2829 = vunpack.c.l.b16 %v1381
        %v2830 = vunpack.c.h.b16 %v1381
        %v2831 = vunpack.c.l.b16 %v1382
        %v2832 = vunpack.c.h.b16 %v1382
        %v2833 = vunpack.c.l.b16 %v1383
        %v2834 = vunpack.c.h.b16 %v1383
        %v2835 = vunpack.c.l.b16 %v1384
        %v2836 = vunpack.c.h.b16 %v1384
        %v2837 = vunpack.c.l.b16 %v1385
        %v2838 = vunpack.c.h.b16 %v1385
        %v2839 = vunpack.c.l.b16 %v1386
        %v2840 = vunpack.c.h.b16 %v1386
        %v2841 = vunpack.c.l.b16 %v1387
        %v2842 = vunpack.c.h.b16 %v1387
        %v2843 = vunpack.c.l.b16 %v1388
        %v2844 = vunpack.c.h.b16 %v1388
        %v2845 = vunpack.c.l.b16 %v1389
        %v2846 = vunpack.c.h.b16 %v1389
        %v2847 = vunpack.c.l.b16 %v1390
        %v2848 = vunpack.c.h.b16 %v1390
        %v2849 = vunpack.c.l.b16 %v1391
        %v2850 = vunpack.c.h.b16 %v1391
        %v2851 = vunpack.c.l.b16 %v1392
        %v2852 = vunpack.c.h.b16 %v1392
        %v2853 = vunpack.c.l.b16 %v1393
        %v2854 = vunpack.c.h.b16 %v1393
        %v2855 = vunpack.c.l.b16 %v1394
        %v2856 = vunpack.c.h.b16 %v1394
        %v2857 = vunpack.c.l.b16 %v1395
        %v2858 = vunpack.c.h.b16 %v1395
        %v2859 = vunpack.c.l.b16 %v1396
        %v2860 = vunpack.c.h.b16 %v1396
        %v2861 = vunpack.c.l.b16 %v1397
        %v2862 = vunpack.c.h.b16 %v1397
        %v2863 = vunpack.c.l.b16 %v1398
        %v2864 = vunpack.c.h.b16 %v1398
        %v2865 = vunpack.c.l.b16 %v1399
        %v2866 = vunpack.c.h.b16 %v1399
        %v2867 = vunpack.c.l.b16 %v1400
        %v2868 = vunpack.c.h.b16 %v1400
        %v2869 = vunpack.c.l.b16 %v1401
        %v2870 = vunpack.c.h.b16 %v1401
        %v2871 = vunpack.c.l.b16 %v1402
        %v2872 = vunpack.c.h.b16 %v1402
        %v2873 = vunpack.c.l.b16 %v1403
        %v2874 = vunpack.c.h.b16 %v1403
        %v2875 = vunpack.c.l.b16 %v1404
        %v2876 = vunpack.c.h.b16 %v1404
        %v2877 = vunpack.c.l.b16 %v1405
        %v2878 = vunpack.c.h.b16 %v1405
        %v2879 = vunpack.c.l.b16 %v1406
        %v2880 = vunpack.c.h.b16 %v1406
        %v2881 = vunpack.c.l.b16 %v1407
        %v2882 = vunpack.c.h.b16 %v1407
        %v2883 = vunpack.c.l.b16 %v1408
        %v2884 = vunpack.c.h.b16 %v1408
        %v2885 = vunpack.c.l.b16 %v1409
        %v2886 = vunpack.c.h.b16 %v1409
        %v2887 = vunpack.c.l.b16 %v1410
        %v2888 = vunpack.c.h.b16 %v1410
        %v2889 = vunpack.c.l.b16 %v1411
        %v2890 = vunpack.c.h.b16 %v1411
        %v2891 = vunpack.c.l.b16 %v1412
        %v2892 = vunpack.c.h.b16 %v1412
        %v2893 = vunpack.c.l.b16 %v1413
        %v2894 = vunpack.c.h.b16 %v1413
        %v2895 = vunpack.c.l.b16 %v1414
        %v2896 = vunpack.c.h.b16 %v1414
        %v2897 = vunpack.c.l.b16 %v1415
        %v2898 = vunpack.c.h.b16 %v1415
        %v2899 = vunpack.c.l.b16 %v1416
        %v2900 = vunpack.c.h.b16 %v1416
        %v2901 = vunpack.c.l.b16 %v1417
        %v2902 = vunpack.c.h.b16 %v1417
        %v2903 = vunpack.c.l.b16 %v1418
        %v2904 = vunpack.c.h.b16 %v1418
        %v2905 = vunpack.c.l.b16 %v1419
        %v2906 = vunpack.c.h.b16 %v1419
        %v2907 = vunpack.c.l.b16 %v1420
        %v2908 = vunpack.c.h.b16 %v1420
        %v2909 = vunpack.c.l.b16 %v1421
        %v2910 = vunpack.c.h.b16 %v1421
        %v2911 = vunpack.c.l.b16 %v1422
        %v2912 = vunpack.c.h.b16 %v1422
        %v2913 = vunpack.c.l.b16 %v1423
        %v2914 = vunpack.c.h.b16 %v1423
        %v2915 = vunpack.c.l.b16 %v1424
        %v2916 = vunpack.c.h.b16 %v1424
        %v2917 = vunpack.c.l.b16 %v1425
        %v2918 = vunpack.c.h.b16 %v1425
        %v2919 = vunpack.c.l.b16 %v1426
        %v2920 = vunpack.c.h.b16 %v1426
        %v2921 = vunpack.c.l.b16 %v1427
        %v2922 = vunpack.c.h.b16 %v1427
        %v2923 = vunpack.c.l.b16 %v1428
        %v2924 = vunpack.c.h.b16 %v1428
        %v2925 = vunpack.c.l.b16 %v1429
        %v2926 = vunpack.c.h.b16 %v1429
        %v2927 = vunpack.c.l.b16 %v1430
        %v2928 = vunpack.c.h.b16 %v1430
        %v2929 = vunpack.c.l.b16 %v1431
        %v2930 = vunpack.c.h.b16 %v1431
        %v2931 = vunpack.c.l.b16 %v1432
        %v2932 = vunpack.c.h.b16 %v1432
        %v2933 = vunpack.c.l.b16 %v1433
        %v2934 = vunpack.c.h.b16 %v1433
        %v2935 = vunpack.c.l.b16 %v1434
        %v2936 = vunpack.c.h.b16 %v1434
        %v2937 = vunpack.c.l.b16 %v1435
        %v2938 = vunpack.c.h.b16 %v1435
        %v2939 = vunpack.c.l.b16 %v1436
        %v2940 = vunpack.c.h.b16 %v1436
        %v2941 = vunpack.c.l.b16 %v1437
        %v2942 = vunpack.c.h.b16 %v1437
        %v2943 = vunpack.c.l.b16 %v1438
        %v2944 = vunpack.c.h.b16 %v1438
        %v2945 = vunpack.c.l.b16 %v1439
        %v2946 = vunpack.c.h.b16 %v1439
        %v2947 = vunpack.c.l.b16 %v1440
        %v2948 = vunpack.c.h.b16 %v1440
        %v2949 = vunpack.c.l.b16 %v1441
        %v2950 = vunpack.c.h.b16 %v1441
        %v2951 = vunpack.c.l.b16 %v1442
        %v2952 = vunpack.c.h.b16 %v1442
        %v2953 = vunpack.c.l.b16 %v1443
        %v2954 = vunpack.c.h.b16 %v1443
        %v2955 = vunpack.c.l.b16 %v1444
        %v2956 = vunpack.c.h.b16 %v1444
        %v2957 = vunpack.c.l.b16 %v1445
        %v2958 = vunpack.c.h.b16 %v1445
        %v2959 = vunpack.c.l.b16 %v1446
        %v2960 = vunpack.c.h.b16 %v1446
        %v2961 = vunpack.c.l.b16 %v1447
        %v2962 = vunpack.c.h.b16 %v1447
        %v2963 = vunpack.c.l.b16 %v1448
        %v2964 = vunpack.c.h.b16 %v1448
        %v2965 = vunpack.c.l.b16 %v1449
        %v2966 = vunpack.c.h.b16 %v1449
        %v2967 = vunpack.c.l.b16 %v1450
        %v2968 = vunpack.c.h.b16 %v1450
        %v2969 = vunpack.c.l.b16 %v1451
        %v2970 = vunpack.c.h.b16 %v1451
        %v2971 = vunpack.c.l.b16 %v1452
        %v2972 = vunpack.c.h.b16 %v1452
        %v2973 = vunpack.c.l.b16 %v1453
        %v2974 = vunpack.c.h.b16 %v1453
        %v2975 = vunpack.c.l.b16 %v1454
        %v2976 = vunpack.c.h.b16 %v1454
        %v2977 = vunpack.c.l.b16 %v1455
        %v2978 = vunpack.c.h.b16 %v1455
        %v2979 = vunpack.c.l.b16 %v1456
        %v2980 = vunpack.c.h.b16 %v1456
        %v2981 = vunpack.c.l.b16 %v1457
        %v2982 = vunpack.c.h.b16 %v1457
        %v2983 = vunpack.c.l.b16 %v1458
        %v2984 = vunpack.c.h.b16 %v1458
        %v2985 = vunpack.c.l.b16 %v1459
        %v2986 = vunpack.c.h.b16 %v1459
        %v2987 = vunpack.c.l.b16 %v1460
        %v2988 = vunpack.c.h.b16 %v1460
        %v2989 = vunpack.c.l.b16 %v1461
        %v2990 = vunpack.c.h.b16 %v1461
        %v2991 = vunpack.c.l.b16 %v1462
        %v2992 = vunpack.c.h.b16 %v1462
        %v2993 = vunpack.c.l.b16 %v1463
        %v2994 = vunpack.c.h.b16 %v1463
        %v2995 = vunpack.c.l.b16 %v1464
        %v2996 = vunpack.c.h.b16 %v1464
        %v2997 = vunpack.c.l.b16 %v1465
        %v2998 = vunpack.c.h.b16 %v1465
        %v2999 = vunpack.c.l.b16 %v1466
        %v3000 = vunpack.c.h.b16 %v1466
        %v3001 = vunpack.c.l.b16 %v1467
        %v3002 = vunpack.c.h.b16 %v1467
        %v3003 = vunpack.c.l.b16 %v1468
        %v3004 = vunpack.c.h.b16 %v1468
        %v3005 = vunpack.c.l.b16 %v1469
        %v3006 = vunpack.c.h.b16 %v1469
        %v3007 = vunpack.c.l.b16 %v1470
        %v3008 = vunpack.c.h.b16 %v1470
        %v3009 = vunpack.c.l.b16 %v1471
        %v3010 = vunpack.c.h.b16 %v1471
        %v3011 = vunpack.c.l.b16 %v1472
        %v3012 = vunpack.c.h.b16 %v1472
        %v3013 = vunpack.c.l.b16 %v1473
        %v3014 = vunpack.c.h.b16 %v1473
        %v3015 = vunpack.c.l.b16 %v1474
        %v3016 = vunpack.c.h.b16 %v1474
        %v3017 = vunpack.c.l.b16 %v1475
        %v3018 = vunpack.c.h.b16 %v1475
        %v3019 = vunpack.c.l.b16 %v1476
        %v3020 = vunpack.c.h.b16 %v1476
        %v3021 = vunpack.c.l.b16 %v1477
        %v3022 = vunpack.c.h.b16 %v1477
        %v3023 = vunpack.c.l.b16 %v1478
        %v3024 = vunpack.c.h.b16 %v1478
        %v3025 = vpack.c.b16 %v2005, %v2001
        %v3026 = vpack.c.b16 %v2006, %v2002
        %v3027 = vpack.c.b16 %v2007, %v2003
        %v3028 = vpack.c.b16 %v2008, %v2004
        %v3029 = vpack.c.b16 %v2013, %v2009
        %v3030 = vpack.c.b16 %v2014, %v2010
        %v3031 = vpack.c.b16 %v2015, %v2011
        %v3032 = vpack.c.b16 %v2016, %v2012
        %v3033 = vpack.c.b16 %v2021, %v2017
        %v3034 = vpack.c.b16 %v2022, %v2018
        %v3035 = vpack.c.b16 %v2023, %v2019
        %v3036 = vpack.c.b16 %v2024, %v2020
        %v3037 = vpack.c.b16 %v2029, %v2025
        %v3038 = vpack.c.b16 %v2030, %v2026
        %v3039 = vpack.c.b16 %v2031, %v2027
        %v3040 = vpack.c.b16 %v2032, %v2028
        %v3041 = vpack.c.b16 %v2037, %v2033
        %v3042 = vpack.c.b16 %v2038, %v2034
        %v3043 = vpack.c.b16 %v2039, %v2035
        %v3044 = vpack.c.b16 %v2040, %v2036
        %v3045 = vpack.c.b16 %v2045, %v2041
        %v3046 = vpack.c.b16 %v2046, %v2042
        %v3047 = vpack.c.b16 %v2047, %v2043
        %v3048 = vpack.c.b16 %v2048, %v2044
        %v3049 = vpack.c.b16 %v2053, %v2049
        %v3050 = vpack.c.b16 %v2054, %v2050
        %v3051 = vpack.c.b16 %v2055, %v2051
        %v3052 = vpack.c.b16 %v2056, %v2052
        %v3053 = vpack.c.b16 %v2061, %v2057
        %v3054 = vpack.c.b16 %v2062, %v2058
        %v3055 = vpack.c.b16 %v2063, %v2059
        %v3056 = vpack.c.b16 %v2064, %v2060
        %v3057 = vpack.c.b16 %v2069, %v2065
        %v3058 = vpack.c.b16 %v2070, %v2066
        %v3059 = vpack.c.b16 %v2071, %v2067
        %v3060 = vpack.c.b16 %v2072, %v2068
        %v3061 = vpack.c.b16 %v2077, %v2073
        %v3062 = vpack.c.b16 %v2078, %v2074
        %v3063 = vpack.c.b16 %v2079, %v2075
        %v3064 = vpack.c.b16 %v2080, %v2076
        %v3065 = vpack.c.b16 %v2085, %v2081
        %v3066 = vpack.c.b16 %v2086, %v2082
        %v3067 = vpack.c.b16 %v2087, %v2083
        %v3068 = vpack.c.b16 %v2088, %v2084
        %v3069 = vpack.c.b16 %v2093, %v2089
        %v3070 = vpack.c.b16 %v2094, %v2090
        %v3071 = vpack.c.b16 %v2095, %v2091
        %v3072 = vpack.c.b16 %v2096, %v2092
        %v3073 = vpack.c.b16 %v2101, %v2097
        %v3074 = vpack.c.b16 %v2102, %v2098
        %v3075 = vpack.c.b16 %v2103, %v2099
        %v3076 = vpack.c.b16 %v2104, %v2100
        %v3077 = vpack.c.b16 %v2109, %v2105
        %v3078 = vpack.c.b16 %v2110, %v2106
        %v3079 = vpack.c.b16 %v2111, %v2107
        %v3080 = vpack.c.b16 %v2112, %v2108
        %v3081 = vpack.c.b16 %v2117, %v2113
        %v3082 = vpack.c.b16 %v2118, %v2114
        %v3083 = vpack.c.b16 %v2119, %v2115
        %v3084 = vpack.c.b16 %v2120, %v2116
        %v3085 = vpack.c.b16 %v2125, %v2121
        %v3086 = vpack.c.b16 %v2126, %v2122
        %v3087 = vpack.c.b16 %v2127, %v2123
        %v3088 = vpack.c.b16 %v2128, %v2124
        %v3089 = vpack.c.b16 %v2133, %v2129
        %v3090 = vpack.c.b16 %v2134, %v2130
        %v3091 = vpack.c.b16 %v2135, %v2131
        %v3092 = vpack.c.b16 %v2136, %v2132
        %v3093 = vpack.c.b16 %v2141, %v2137
        %v3094 = vpack.c.b16 %v2142, %v2138
        %v3095 = vpack.c.b16 %v2143, %v2139
        %v3096 = vpack.c.b16 %v2144, %v2140
        %v3097 = vpack.c.b16 %v2149, %v2145
        %v3098 = vpack.c.b16 %v2150, %v2146
        %v3099 = vpack.c.b16 %v2151, %v2147
        %v3100 = vpack.c.b16 %v2152, %v2148
        %v3101 = vpack.c.b16 %v2157, %v2153
        %v3102 = vpack.c.b16 %v2158, %v2154
        %v3103 = vpack.c.b16 %v2159, %v2155
        %v3104 = vpack.c.b16 %v2160, %v2156
        %v3105 = vpack.c.b16 %v2165, %v2161
        %v3106 = vpack.c.b16 %v2166, %v2162
        %v3107 = vpack.c.b16 %v2167, %v2163
        %v3108 = vpack.c.b16 %v2168, %v2164
        %v3109 = vpack.c.b16 %v2173, %v2169
        %v3110 = vpack.c.b16 %v2174, %v2170
        %v3111 = vpack.c.b16 %v2175, %v2171
        %v3112 = vpack.c.b16 %v2176, %v2172
        %v3113 = vpack.c.b16 %v2181, %v2177
        %v3114 = vpack.c.b16 %v2182, %v2178
        %v3115 = vpack.c.b16 %v2183, %v2179
        %v3116 = vpack.c.b16 %v2184, %v2180
        %v3117 = vpack.c.b16 %v2189, %v2185
        %v3118 = vpack.c.b16 %v2190, %v2186
        %v3119 = vpack.c.b16 %v2191, %v2187
        %v3120 = vpack.c.b16 %v2192, %v2188
        %v3121 = vpack.c.b16 %v2197, %v2193
        %v3122 = vpack.c.b16 %v2198, %v2194
        %v3123 = vpack.c.b16 %v2199, %v2195
        %v3124 = vpack.c.b16 %v2200, %v2196
        %v3125 = vpack.c.b16 %v2205, %v2201
        %v3126 = vpack.c.b16 %v2206, %v2202
        %v3127 = vpack.c.b16 %v2207, %v2203
        %v3128 = vpack.c.b16 %v2208, %v2204
        %v3129 = vpack.c.b16 %v2213, %v2209
        %v3130 = vpack.c.b16 %v2214, %v2210
        %v3131 = vpack.c.b16 %v2215, %v2211
        %v3132 = vpack.c.b16 %v2216, %v2212
        %v3133 = vpack.c.b16 %v2221, %v2217
        %v3134 = vpack.c.b16 %v2222, %v2218
        %v3135 = vpack.c.b16 %v2223, %v2219
        %v3136 = vpack.c.b16 %v2224, %v2220
        %v3137 = vpack.c.b16 %v2229, %v2225
        %v3138 = vpack.c.b16 %v2230, %v2226
        %v3139 = vpack.c.b16 %v2231, %v2227
        %v3140 = vpack.c.b16 %v2232, %v2228
        %v3141 = vpack.c.b16 %v2237, %v2233
        %v3142 = vpack.c.b16 %v2238, %v2234
        %v3143 = vpack.c.b16 %v2239, %v2235
        %v3144 = vpack.c.b16 %v2240, %v2236
        %v3145 = vpack.c.b16 %v2245, %v2241
        %v3146 = vpack.c.b16 %v2246, %v2242
        %v3147 = vpack.c.b16 %v2247, %v2243
        %v3148 = vpack.c.b16 %v2248, %v2244
        %v3149 = vpack.c.b16 %v2253, %v2249
        %v3150 = vpack.c.b16 %v2254, %v2250
        %v3151 = vpack.c.b16 %v2255, %v2251
        %v3152 = vpack.c.b16 %v2256, %v2252
        %v3153 = vpack.c.b16 %v2261, %v2257
        %v3154 = vpack.c.b16 %v2262, %v2258
        %v3155 = vpack.c.b16 %v2263, %v2259
        %v3156 = vpack.c.b16 %v2264, %v2260
        %v3157 = vpack.c.b16 %v2269, %v2265
        %v3158 = vpack.c.b16 %v2270, %v2266
        %v3159 = vpack.c.b16 %v2271, %v2267
        %v3160 = vpack.c.b16 %v2272, %v2268
        %v3161 = vpack.c.b16 %v2277, %v2273
        %v3162 = vpack.c.b16 %v2278, %v2274
        %v3163 = vpack.c.b16 %v2279, %v2275
        %v3164 = vpack.c.b16 %v2280, %v2276
        %v3165 = vpack.c.b16 %v2285, %v2281
        %v3166 = vpack.c.b16 %v2286, %v2282
        %v3167 = vpack.c.b16 %v2287, %v2283
        %v3168 = vpack.c.b16 %v2288, %v2284
        %v3169 = vpack.c.b16 %v2293, %v2289
        %v3170 = vpack.c.b16 %v2294, %v2290
        %v3171 = vpack.c.b16 %v2295, %v2291
        %v3172 = vpack.c.b16 %v2296, %v2292
        %v3173 = vpack.c.b16 %v2301, %v2297
        %v3174 = vpack.c.b16 %v2302, %v2298
        %v3175 = vpack.c.b16 %v2303, %v2299
        %v3176 = vpack.c.b16 %v2304, %v2300
        %v3177 = vpack.c.b16 %v2309, %v2305
        %v3178 = vpack.c.b16 %v2310, %v2306
        %v3179 = vpack.c.b16 %v2311, %v2307
        %v3180 = vpack.c.b16 %v2312, %v2308
        %v3181 = vpack.c.b16 %v2317, %v2313
        %v3182 = vpack.c.b16 %v2318, %v2314
        %v3183 = vpack.c.b16 %v2319, %v2315
        %v3184 = vpack.c.b16 %v2320, %v2316
        %v3185 = vpack.c.b16 %v2325, %v2321
        %v3186 = vpack.c.b16 %v2326, %v2322
        %v3187 = vpack.c.b16 %v2327, %v2323
        %v3188 = vpack.c.b16 %v2328, %v2324
        %v3189 = vpack.c.b16 %v2333, %v2329
        %v3190 = vpack.c.b16 %v2334, %v2330
        %v3191 = vpack.c.b16 %v2335, %v2331
        %v3192 = vpack.c.b16 %v2336, %v2332
        %v3193 = vpack.c.b16 %v2341, %v2337
        %v3194 = vpack.c.b16 %v2342, %v2338
        %v3195 = vpack.c.b16 %v2343, %v2339
        %v3196 = vpack.c.b16 %v2344, %v2340
        %v3197 = vpack.c.b16 %v2349, %v2345
        %v3198 = vpack.c.b16 %v2350, %v2346
        %v3199 = vpack.c.b16 %v2351, %v2347
        %v3200 = vpack.c.b16 %v2352, %v2348
        %v3201 = vpack.c.b16 %v2357, %v2353
        %v3202 = vpack.c.b16 %v2358, %v2354
        %v3203 = vpack.c.b16 %v2359, %v2355
        %v3204 = vpack.c.b16 %v2360, %v2356
        %v3205 = vpack.c.b16 %v2365, %v2361
        %v3206 = vpack.c.b16 %v2366, %v2362
        %v3207 = vpack.c.b16 %v2367, %v2363
        %v3208 = vpack.c.b16 %v2368, %v2364
        %v3209 = vpack.c.b16 %v2373, %v2369
        %v3210 = vpack.c.b16 %v2374, %v2370
        %v3211 = vpack.c.b16 %v2375, %v2371
        %v3212 = vpack.c.b16 %v2376, %v2372
        %v3213 = vpack.c.b16 %v2381, %v2377
        %v3214 = vpack.c.b16 %v2382, %v2378
        %v3215 = vpack.c.b16 %v2383, %v2379
        %v3216 = vpack.c.b16 %v2384, %v2380
        %v3217 = vpack.c.b16 %v2389, %v2385
        %v3218 = vpack.c.b16 %v2390, %v2386
        %v3219 = vpack.c.b16 %v2391, %v2387
        %v3220 = vpack.c.b16 %v2392, %v2388
        %v3221 = vpack.c.b16 %v2397, %v2393
        %v3222 = vpack.c.b16 %v2398, %v2394
        %v3223 = vpack.c.b16 %v2399, %v2395
        %v3224 = vpack.c.b16 %v2400, %v2396
        %v3225 = vpack.c.b16 %v2405, %v2401
        %v3226 = vpack.c.b16 %v2406, %v2402
        %v3227 = vpack.c.b16 %v2407, %v2403
        %v3228 = vpack.c.b16 %v2408, %v2404
        %v3229 = vpack.c.b16 %v2413, %v2409
        %v3230 = vpack.c.b16 %v2414, %v2410
        %v3231 = vpack.c.b16 %v2415, %v2411
        %v3232 = vpack.c.b16 %v2416, %v2412
        %v3233 = vpack.c.b16 %v2421, %v2417
        %v3234 = vpack.c.b16 %v2422, %v2418
        %v3235 = vpack.c.b16 %v2423, %v2419
        %v3236 = vpack.c.b16 %v2424, %v2420
        %v3237 = vpack.c.b16 %v2429, %v2425
        %v3238 = vpack.c.b16 %v2430, %v2426
        %v3239 = vpack.c.b16 %v2431, %v2427
        %v3240 = vpack.c.b16 %v2432, %v2428
        %v3241 = vpack.c.b16 %v2437, %v2433
        %v3242 = vpack.c.b16 %v2438, %v2434
        %v3243 = vpack.c.b16 %v2439, %v2435
        %v3244 = vpack.c.b16 %v2440, %v2436
        %v3245 = vpack.c.b16 %v2445, %v2441
        %v3246 = vpack.c.b16 %v2446, %v2442
        %v3247 = vpack.c.b16 %v2447, %v2443
        %v3248 = vpack.c.b16 %v2448, %v2444
        %v3249 = vpack.c.b16 %v2453, %v2449
        %v3250 = vpack.c.b16 %v2454, %v2450
        %v3251 = vpack.c.b16 %v2455, %v2451
        %v3252 = vpack.c.b16 %v2456, %v2452
        %v3253 = vpack.c.b16 %v2461, %v2457
        %v3254 = vpack.c.b16 %v2462, %v2458
        %v3255 = vpack.c.b16 %v2463, %v2459
        %v3256 = vpack.c.b16 %v2464, %v2460
        %v3257 = vpack.c.b16 %v2469, %v2465
        %v3258 = vpack.c.b16 %v2470, %v2466
        %v3259 = vpack.c.b16 %v2471, %v2467
        %v3260 = vpack.c.b16 %v2472, %v2468
        %v3261 = vpack.c.b16 %v2477, %v2473
        %v3262 = vpack.c.b16 %v2478, %v2474
        %v3263 = vpack.c.b16 %v2479, %v2475
        %v3264 = vpack.c.b16 %v2480, %v2476
        %v3265 = vpack.c.b16 %v2485, %v2481
        %v3266 = vpack.c.b16 %v2486, %v2482
        %v3267 = vpack.c.b16 %v2487, %v2483
        %v3268 = vpack.c.b16 %v2488, %v2484
        %v3269 = vpack.c.b16 %v2493, %v2489
        %v3270 = vpack.c.b16 %v2494, %v2490
        %v3271 = vpack.c.b16 %v2495, %v2491
        %v3272 = vpack.c.b16 %v2496, %v2492
        %v3273 = vpack.c.b16 %v2501, %v2497
        %v3274 = vpack.c.b16 %v2502, %v2498
        %v3275 = vpack.c.b16 %v2503, %v2499
        %v3276 = vpack.c.b16 %v2504, %v2500
        %v3277 = vpack.c.b16 %v2509, %v2505
        %v3278 = vpack.c.b16 %v2510, %v2506
        %v3279 = vpack.c.b16 %v2511, %v2507
        %v3280 = vpack.c.b16 %v2512, %v2508
        %v3281 = vpack.c.b16 %v2517, %v2513
        %v3282 = vpack.c.b16 %v2518, %v2514
        %v3283 = vpack.c.b16 %v2519, %v2515
        %v3284 = vpack.c.b16 %v2520, %v2516
        %v3285 = vpack.c.b16 %v2525, %v2521
        %v3286 = vpack.c.b16 %v2526, %v2522
        %v3287 = vpack.c.b16 %v2527, %v2523
        %v3288 = vpack.c.b16 %v2528, %v2524
        %v3289 = vpack.c.b16 %v2533, %v2529
        %v3290 = vpack.c.b16 %v2534, %v2530
        %v3291 = vpack.c.b16 %v2535, %v2531
        %v3292 = vpack.c.b16 %v2536, %v2532
        %v3293 = vpack.c.b16 %v2541, %v2537
        %v3294 = vpack.c.b16 %v2542, %v2538
        %v3295 = vpack.c.b16 %v2543, %v2539
        %v3296 = vpack.c.b16 %v2544, %v2540
        %v3297 = vpack.c.b16 %v2549, %v2545
        %v3298 = vpack.c.b16 %v2550, %v2546
        %v3299 = vpack.c.b16 %v2551, %v2547
        %v3300 = vpack.c.b16 %v2552, %v2548
        %v3301 = vpack.c.b16 %v2557, %v2553
        %v3302 = vpack.c.b16 %v2558, %v2554
        %v3303 = vpack.c.b16 %v2559, %v2555
        %v3304 = vpack.c.b16 %v2560, %v2556
        %v3305 = vpack.c.b16 %v2565, %v2561
        %v3306 = vpack.c.b16 %v2566, %v2562
        %v3307 = vpack.c.b16 %v2567, %v2563
        %v3308 = vpack.c.b16 %v2568, %v2564
        %v3309 = vpack.c.b16 %v2573, %v2569
        %v3310 = vpack.c.b16 %v2574, %v2570
        %v3311 = vpack.c.b16 %v2575, %v2571
        %v3312 = vpack.c.b16 %v2576, %v2572
        %v3313 = vpack.c.b16 %v2581, %v2577
        %v3314 = vpack.c.b16 %v2582, %v2578
        %v3315 = vpack.c.b16 %v2583, %v2579
        %v3316 = vpack.c.b16 %v2584, %v2580
        %v3317 = vpack.c.b16 %v2589, %v2585
        %v3318 = vpack.c.b16 %v2590, %v2586
        %v3319 = vpack.c.b16 %v2591, %v2587
        %v3320 = vpack.c.b16 %v2592, %v2588
        %v3321 = vpack.c.b16 %v2597, %v2593
        %v3322 = vpack.c.b16 %v2598, %v2594
        %v3323 = vpack.c.b16 %v2599, %v2595
        %v3324 = vpack.c.b16 %v2600, %v2596
        %v3325 = vpack.c.b16 %v2605, %v2601
        %v3326 = vpack.c.b16 %v2606, %v2602
        %v3327 = vpack.c.b16 %v2607, %v2603
        %v3328 = vpack.c.b16 %v2608, %v2604
        %v3329 = vpack.c.b16 %v2613, %v2609
        %v3330 = vpack.c.b16 %v2614, %v2610
        %v3331 = vpack.c.b16 %v2615, %v2611
        %v3332 = vpack.c.b16 %v2616, %v2612
        %v3333 = vpack.c.b16 %v2621, %v2617
        %v3334 = vpack.c.b16 %v2622, %v2618
        %v3335 = vpack.c.b16 %v2623, %v2619
        %v3336 = vpack.c.b16 %v2624, %v2620
        %v3337 = vpack.c.b16 %v2629, %v2625
        %v3338 = vpack.c.b16 %v2630, %v2626
        %v3339 = vpack.c.b16 %v2631, %v2627
        %v3340 = vpack.c.b16 %v2632, %v2628
        %v3341 = vpack.c.b16 %v2637, %v2633
        %v3342 = vpack.c.b16 %v2638, %v2634
        %v3343 = vpack.c.b16 %v2639, %v2635
        %v3344 = vpack.c.b16 %v2640, %v2636
        %v3345 = vpack.c.b16 %v2645, %v2641
        %v3346 = vpack.c.b16 %v2646, %v2642
        %v3347 = vpack.c.b16 %v2647, %v2643
        %v3348 = vpack.c.b16 %v2648, %v2644
        %v3349 = vpack.c.b16 %v2653, %v2649
        %v3350 = vpack.c.b16 %v2654, %v2650
        %v3351 = vpack.c.b16 %v2655, %v2651
        %v3352 = vpack.c.b16 %v2656, %v2652
        %v3353 = vpack.c.b16 %v2661, %v2657
        %v3354 = vpack.c.b16 %v2662, %v2658
        %v3355 = vpack.c.b16 %v2663, %v2659
        %v3356 = vpack.c.b16 %v2664, %v2660
        %v3357 = vpack.c.b16 %v2669, %v2665
        %v3358 = vpack.c.b16 %v2670, %v2666
        %v3359 = vpack.c.b16 %v2671, %v2667
        %v3360 = vpack.c.b16 %v2672, %v2668
        %v3361 = vpack.c.b16 %v2677, %v2673
        %v3362 = vpack.c.b16 %v2678, %v2674
        %v3363 = vpack.c.b16 %v2679, %v2675
        %v3364 = vpack.c.b16 %v2680, %v2676
        %v3365 = vpack.c.b16 %v2685, %v2681
        %v3366 = vpack.c.b16 %v2686, %v2682
        %v3367 = vpack.c.b16 %v2687, %v2683
        %v3368 = vpack.c.b16 %v2688, %v2684
        %v3369 = vpack.c.b16 %v2693, %v2689
        %v3370 = vpack.c.b16 %v2694, %v2690
        %v3371 = vpack.c.b16 %v2695, %v2691
        %v3372 = vpack.c.b16 %v2696, %v2692
        %v3373 = vpack.c.b16 %v2701, %v2697
        %v3374 = vpack.c.b16 %v2702, %v2698
        %v3375 = vpack.c.b16 %v2703, %v2699
        %v3376 = vpack.c.b16 %v2704, %v2700
        %v3377 = vpack.c.b16 %v2709, %v2705
        %v3378 = vpack.c.b16 %v2710, %v2706
        %v3379 = vpack.c.b16 %v2711, %v2707
        %v3380 = vpack.c.b16 %v2712, %v2708
        %v3381 = vpack.c.b16 %v2717, %v2713
        %v3382 = vpack.c.b16 %v2718, %v2714
        %v3383 = vpack.c.b16 %v2719, %v2715
        %v3384 = vpack.c.b16 %v2720, %v2716
        %v3385 = vpack.c.b16 %v2725, %v2721
        %v3386 = vpack.c.b16 %v2726, %v2722
        %v3387 = vpack.c.b16 %v2727, %v2723
        %v3388 = vpack.c.b16 %v2728, %v2724
        %v3389 = vpack.c.b16 %v2733, %v2729
        %v3390 = vpack.c.b16 %v2734, %v2730
        %v3391 = vpack.c.b16 %v2735, %v2731
        %v3392 = vpack.c.b16 %v2736, %v2732
        %v3393 = vpack.c.b16 %v2741, %v2737
        %v3394 = vpack.c.b16 %v2742, %v2738
        %v3395 = vpack.c.b16 %v2743, %v2739
        %v3396 = vpack.c.b16 %v2744, %v2740
        %v3397 = vpack.c.b16 %v2749, %v2745
        %v3398 = vpack.c.b16 %v2750, %v2746
        %v3399 = vpack.c.b16 %v2751, %v2747
        %v3400 = vpack.c.b16 %v2752, %v2748
        %v3401 = vpack.c.b16 %v2757, %v2753
        %v3402 = vpack.c.b16 %v2758, %v2754
        %v3403 = vpack.c.b16 %v2759, %v2755
        %v3404 = vpack.c.b16 %v2760, %v2756
        %v3405 = vpack.c.b16 %v2765, %v2761
        %v3406 = vpack.c.b16 %v2766, %v2762
        %v3407 = vpack.c.b16 %v2767, %v2763
        %v3408 = vpack.c.b16 %v2768, %v2764
        %v3409 = vpack.c.b16 %v2773, %v2769
        %v3410 = vpack.c.b16 %v2774, %v2770
        %v3411 = vpack.c.b16 %v2775, %v2771
        %v3412 = vpack.c.b16 %v2776, %v2772
        %v3413 = vpack.c.b16 %v2781, %v2777
        %v3414 = vpack.c.b16 %v2782, %v2778
        %v3415 = vpack.c.b16 %v2783, %v2779
        %v3416 = vpack.c.b16 %v2784, %v2780
        %v3417 = vpack.c.b16 %v2789, %v2785
        %v3418 = vpack.c.b16 %v2790, %v2786
        %v3419 = vpack.c.b16 %v2791, %v2787
        %v3420 = vpack.c.b16 %v2792, %v2788
        %v3421 = vpack.c.b16 %v2797, %v2793
        %v3422 = vpack.c.b16 %v2798, %v2794
        %v3423 = vpack.c.b16 %v2799, %v2795
        %v3424 = vpack.c.b16 %v2800, %v2796
        %v3425 = vpack.c.b16 %v2805, %v2801
        %v3426 = vpack.c.b16 %v2806, %v2802
        %v3427 = vpack.c.b16 %v2807, %v2803
        %v3428 = vpack.c.b16 %v2808, %v2804
        %v3429 = vpack.c.b16 %v2813, %v2809
        %v3430 = vpack.c.b16 %v2814, %v2810
        %v3431 = vpack.c.b16 %v2815, %v2811
        %v3432 = vpack.c.b16 %v2816, %v2812
        %v3433 = vpack.c.b16 %v2821, %v2817
        %v3434 = vpack.c.b16 %v2822, %v2818
        %v3435 = vpack.c.b16 %v2823, %v2819
        %v3436 = vpack.c.b16 %v2824, %v2820
        %v3437 = vpack.c.b16 %v2829, %v2825
        %v3438 = vpack.c.b16 %v2830, %v2826
        %v3439 = vpack.c.b16 %v2831, %v2827
        %v3440 = vpack.c.b16 %v2832, %v2828
        %v3441 = vpack.c.b16 %v2837, %v2833
        %v3442 = vpack.c.b16 %v2838, %v2834
        %v3443 = vpack.c.b16 %v2839, %v2835
        %v3444 = vpack.c.b16 %v2840, %v2836
        %v3445 = vpack.c.b16 %v2845, %v2841
        %v3446 = vpack.c.b16 %v2846, %v2842
        %v3447 = vpack.c.b16 %v2847, %v2843
        %v3448 = vpack.c.b16 %v2848, %v2844
        %v3449 = vpack.c.b16 %v2853, %v2849
        %v3450 = vpack.c.b16 %v2854, %v2850
        %v3451 = vpack.c.b16 %v2855, %v2851
        %v3452 = vpack.c.b16 %v2856, %v2852
        %v3453 = vpack.c.b16 %v2861, %v2857
        %v3454 = vpack.c.b16 %v2862, %v2858
        %v3455 = vpack.c.b16 %v2863, %v2859
        %v3456 = vpack.c.b16 %v2864, %v2860
        %v3457 = vpack.c.b16 %v2869, %v2865
        %v3458 = vpack.c.b16 %v2870, %v2866
        %v3459 = vpack.c.b16 %v2871, %v2867
        %v3460 = vpack.c.b16 %v2872, %v2868
        %v3461 = vpack.c.b16 %v2877, %v2873
        %v3462 = vpack.c.b16 %v2878, %v2874
        %v3463 = vpack.c.b16 %v2879, %v2875
        %v3464 = vpack.c.b16 %v2880, %v2876
        %v3465 = vpack.c.b16 %v2885, %v2881
        %v3466 = vpack.c.b16 %v2886, %v2882
        %v3467 = vpack.c.b16 %v2887, %v2883
        %v3468 = vpack.c.b16 %v2888, %v2884
        %v3469 = vpack.c.b16 %v2893, %v2889
        %v3470 = vpack.c.b16 %v2894, %v2890
        %v3471 = vpack.c.b16 %v2895, %v2891
        %v3472 = vpack.c.b16 %v2896, %v2892
        %v3473 = vpack.c.b16 %v2901, %v2897
        %v3474 = vpack.c.b16 %v2902, %v2898
        %v3475 = vpack.c.b16 %v2903, %v2899
        %v3476 = vpack.c.b16 %v2904, %v2900
        %v3477 = vpack.c.b16 %v2909, %v2905
        %v3478 = vpack.c.b16 %v2910, %v2906
        %v3479 = vpack.c.b16 %v2911, %v2907
        %v3480 = vpack.c.b16 %v2912, %v2908
        %v3481 = vpack.c.b16 %v2917, %v2913
        %v3482 = vpack.c.b16 %v2918, %v2914
        %v3483 = vpack.c.b16 %v2919, %v2915
        %v3484 = vpack.c.b16 %v2920, %v2916
        %v3485 = vpack.c.b16 %v2925, %v2921
        %v3486 = vpack.c.b16 %v2926, %v2922
        %v3487 = vpack.c.b16 %v2927, %v2923
        %v3488 = vpack.c.b16 %v2928, %v2924
        %v3489 = vpack.c.b16 %v2933, %v2929
        %v3490 = vpack.c.b16 %v2934, %v2930
        %v3491 = vpack.c.b16 %v2935, %v2931
        %v3492 = vpack.c.b16 %v2936, %v2932
        %v3493 = vpack.c.b16 %v2941, %v2937
        %v3494 = vpack.c.b16 %v2942, %v2938
        %v3495 = vpack.c.b16 %v2943, %v2939
        %v3496 = vpack.c.b16 %v2944, %v2940
        %v3497 = vpack.c.b16 %v2949, %v2945
        %v3498 = vpack.c.b16 %v2950, %v2946
        %v3499 = vpack.c.b16 %v2951, %v2947
        %v3500 = vpack.c.b16 %v2952, %v2948
        %v3501 = vpack.c.b16 %v2957, %v2953
        %v3502 = vpack.c.b16 %v2958, %v2954
        %v3503 = vpack.c.b16 %v2959, %v2955
        %v3504 = vpack.c.b16 %v2960, %v2956
        %v3505 = vpack.c.b16 %v2965, %v2961
        %v3506 = vpack.c.b16 %v2966, %v2962
        %v3507 = vpack.c.b16 %v2967, %v2963
        %v3508 = vpack.c.b16 %v2968, %v2964
        %v3509 = vpack.c.b16 %v2973, %v2969
        %v3510 = vpack.c.b16 %v2974, %v2970
        %v3511 = vpack.c.b16 %v2975, %v2971
        %v3512 = vpack.c.b16 %v2976, %v2972
        %v3513 = vpack.c.b16 %v2981, %v2977
        %v3514 = vpack.c.b16 %v2982, %v2978
        %v3515 = vpack.c.b16 %v2983, %v2979
        %v3516 = vpack.c.b16 %v2984, %v2980
        %v3517 = vpack.c.b16 %v2989, %v2985
        %v3518 = vpack.c.b16 %v2990, %v2986
        %v3519 = vpack.c.b16 %v2991, %v2987
        %v3520 = vpack.c.b16 %v2992, %v2988
        %v3521 = vpack.c.b16 %v2997, %v2993
        %v3522 = vpack.c.b16 %v2998, %v2994
        %v3523 = vpack.c.b16 %v2999, %v2995
        %v3524 = vpack.c.b16 %v3000, %v2996
        %v3525 = vpack.c.b16 %v3005, %v3001
        %v3526 = vpack.c.b16 %v3006, %v3002
        %v3527 = vpack.c.b16 %v3007, %v3003
        %v3528 = vpack.c.b16 %v3008, %v3004
        %v3529 = vpack.c.b16 %v3013, %v3009
        %v3530 = vpack.c.b16 %v3014, %v3010
        %v3531 = vpack.c.b16 %v3015, %v3011
        %v3532 = vpack.c.b16 %v3016, %v3012
        %v3533 = vpack.c.b16 %v3021, %v3017
        %v3534 = vpack.c.b16 %v3022, %v3018
        %v3535 = vpack.c.b16 %v3023, %v3019
        %v3536 = vpack.c.b16 %v3024, %v3020
        %4049 = vmatpush.bf16.msra.mxu0 %v3053
        %4050 = vmatpush.bf16.msra.mxu0 %v3049
        %4051 = vmatpush.bf16.msra.mxu0 %v3045
        %4052 = vmatpush.bf16.msra.mxu0 %v3041
        %4053 = vmatpush.bf16.msra.mxu0 %v3037
        %4054 = vmatpush.bf16.msra.mxu0 %v3033
        %4055 = vmatpush.bf16.msra.mxu0 %v3029
        %4056 = vmatpush.bf16.msra.mxu0 %v3025
        %4057 = vmatmul.bf16.gmra.mxu0 %v951
        %v4058 = vpop.f32.mrf.mxu0
        %v4059 = vadd.f32 %v1481, %v4058
        %v4060 = vpop.f32.mrf.mxu0
        %4061 = vdwg.mxu0
        %4062 = vmatpush.bf16.msra.mxu0 %v3085
        %4063 = vmatpush.bf16.msra.mxu0 %v3081
        %4064 = vmatpush.bf16.msra.mxu0 %v3077
        %4065 = vmatpush.bf16.msra.mxu0 %v3073
        %4066 = vmatpush.bf16.msra.mxu0 %v3069
        %4067 = vmatpush.bf16.msra.mxu0 %v3065
        %4068 = vmatpush.bf16.msra.mxu0 %v3061
        %4069 = vmatpush.bf16.msra.mxu0 %v3057
        %4070 = vmatmul.bf16.gmra.mxu0 %v952
        %v4071 = vpop.f32.mrf.mxu0
        %v4072 = vadd.f32 %v4059, %v4071
        %v4073 = vpop.f32.mrf.mxu0
        %4074 = vdwg.mxu0
        %4075 = vmatpush.bf16.msra.mxu0 %v3117
        %4076 = vmatpush.bf16.msra.mxu0 %v3113
        %4077 = vmatpush.bf16.msra.mxu0 %v3109
        %4078 = vmatpush.bf16.msra.mxu0 %v3105
        %4079 = vmatpush.bf16.msra.mxu0 %v3101
        %4080 = vmatpush.bf16.msra.mxu0 %v3097
        %4081 = vmatpush.bf16.msra.mxu0 %v3093
        %4082 = vmatpush.bf16.msra.mxu0 %v3089
        %4083 = vmatmul.bf16.gmra.mxu0 %v953
        %v4084 = vpop.f32.mrf.mxu0
        %v4085 = vadd.f32 %v4072, %v4084
        %v4086 = vpop.f32.mrf.mxu0
        %4087 = vdwg.mxu0
        %4088 = vmatpush.bf16.msra.mxu0 %v3149
        %4089 = vmatpush.bf16.msra.mxu0 %v3145
        %4090 = vmatpush.bf16.msra.mxu0 %v3141
        %4091 = vmatpush.bf16.msra.mxu0 %v3137
        %4092 = vmatpush.bf16.msra.mxu0 %v3133
        %4093 = vmatpush.bf16.msra.mxu0 %v3129
        %4094 = vmatpush.bf16.msra.mxu0 %v3125
        %4095 = vmatpush.bf16.msra.mxu0 %v3121
        %4096 = vmatmul.bf16.gmra.mxu0 %v954
        %v4097 = vpop.f32.mrf.mxu0
        %v4098 = vadd.f32 %v4085, %v4097
        %v4099 = vpop.f32.mrf.mxu0
        %4100 = vdwg.mxu0
        %4101 = vmatpush.bf16.msra.mxu0 %v3181
        %4102 = vmatpush.bf16.msra.mxu0 %v3177
        %4103 = vmatpush.bf16.msra.mxu0 %v3173
        %4104 = vmatpush.bf16.msra.mxu0 %v3169
        %4105 = vmatpush.bf16.msra.mxu0 %v3165
        %4106 = vmatpush.bf16.msra.mxu0 %v3161
        %4107 = vmatpush.bf16.msra.mxu0 %v3157
        %4108 = vmatpush.bf16.msra.mxu0 %v3153
        %4109 = vmatmul.bf16.gmra.mxu0 %v955
        %v4110 = vpop.f32.mrf.mxu0
        %v4111 = vadd.f32 %v4098, %v4110
        %v4112 = vpop.f32.mrf.mxu0
        %4113 = vdwg.mxu0
        %4114 = vmatpush.bf16.msra.mxu0 %v3213
        %4115 = vmatpush.bf16.msra.mxu0 %v3209
        %4116 = vmatpush.bf16.msra.mxu0 %v3205
        %4117 = vmatpush.bf16.msra.mxu0 %v3201
        %4118 = vmatpush.bf16.msra.mxu0 %v3197
        %4119 = vmatpush.bf16.msra.mxu0 %v3193
        %4120 = vmatpush.bf16.msra.mxu0 %v3189
        %4121 = vmatpush.bf16.msra.mxu0 %v3185
        %4122 = vmatmul.bf16.gmra.mxu0 %v956
        %v4123 = vpop.f32.mrf.mxu0
        %v4124 = vadd.f32 %v4111, %v4123
        %v4125 = vpop.f32.mrf.mxu0
        %4126 = vdwg.mxu0
        %4127 = vmatpush.bf16.msra.mxu0 %v3245
        %4128 = vmatpush.bf16.msra.mxu0 %v3241
        %4129 = vmatpush.bf16.msra.mxu0 %v3237
        %4130 = vmatpush.bf16.msra.mxu0 %v3233
        %4131 = vmatpush.bf16.msra.mxu0 %v3229
        %4132 = vmatpush.bf16.msra.mxu0 %v3225
        %4133 = vmatpush.bf16.msra.mxu0 %v3221
        %4134 = vmatpush.bf16.msra.mxu0 %v3217
        %4135 = vmatmul.bf16.gmra.mxu0 %v957
        %v4136 = vpop.f32.mrf.mxu0
        %v4137 = vadd.f32 %v4124, %v4136
        %v4138 = vpop.f32.mrf.mxu0
        %4139 = vdwg.mxu0
        %4140 = vmatpush.bf16.msra.mxu0 %v3277
        %4141 = vmatpush.bf16.msra.mxu0 %v3273
        %4142 = vmatpush.bf16.msra.mxu0 %v3269
        %4143 = vmatpush.bf16.msra.mxu0 %v3265
        %4144 = vmatpush.bf16.msra.mxu0 %v3261
        %4145 = vmatpush.bf16.msra.mxu0 %v3257
        %4146 = vmatpush.bf16.msra.mxu0 %v3253
        %4147 = vmatpush.bf16.msra.mxu0 %v3249
        %4148 = vmatmul.bf16.gmra.mxu0 %v958
        %v4149 = vpop.f32.mrf.mxu0
        %v4150 = vadd.f32 %v4137, %v4149
        %v4151 = vpop.f32.mrf.mxu0
        %4152 = vdwg.mxu0
        %4153 = vmatpush.bf16.msra.mxu0 %v3309
        %4154 = vmatpush.bf16.msra.mxu0 %v3305
        %4155 = vmatpush.bf16.msra.mxu0 %v3301
        %4156 = vmatpush.bf16.msra.mxu0 %v3297
        %4157 = vmatpush.bf16.msra.mxu0 %v3293
        %4158 = vmatpush.bf16.msra.mxu0 %v3289
        %4159 = vmatpush.bf16.msra.mxu0 %v3285
        %4160 = vmatpush.bf16.msra.mxu0 %v3281
        %4161 = vmatmul.bf16.gmra.mxu0 %v959
        %v4162 = vpop.f32.mrf.mxu0
        %v4163 = vadd.f32 %v4150, %v4162
        %v4164 = vpop.f32.mrf.mxu0
        %4165 = vdwg.mxu0
        %4166 = vmatpush.bf16.msra.mxu0 %v3341
        %4167 = vmatpush.bf16.msra.mxu0 %v3337
        %4168 = vmatpush.bf16.msra.mxu0 %v3333
        %4169 = vmatpush.bf16.msra.mxu0 %v3329
        %4170 = vmatpush.bf16.msra.mxu0 %v3325
        %4171 = vmatpush.bf16.msra.mxu0 %v3321
        %4172 = vmatpush.bf16.msra.mxu0 %v3317
        %4173 = vmatpush.bf16.msra.mxu0 %v3313
        %4174 = vmatmul.bf16.gmra.mxu0 %v960
        %v4175 = vpop.f32.mrf.mxu0
        %v4176 = vadd.f32 %v4163, %v4175
        %v4177 = vpop.f32.mrf.mxu0
        %4178 = vdwg.mxu0
        %4179 = vmatpush.bf16.msra.mxu0 %v3373
        %4180 = vmatpush.bf16.msra.mxu0 %v3369
        %4181 = vmatpush.bf16.msra.mxu0 %v3365
        %4182 = vmatpush.bf16.msra.mxu0 %v3361
        %4183 = vmatpush.bf16.msra.mxu0 %v3357
        %4184 = vmatpush.bf16.msra.mxu0 %v3353
        %4185 = vmatpush.bf16.msra.mxu0 %v3349
        %4186 = vmatpush.bf16.msra.mxu0 %v3345
        %4187 = vmatmul.bf16.gmra.mxu0 %v961
        %v4188 = vpop.f32.mrf.mxu0
        %v4189 = vadd.f32 %v4176, %v4188
        %v4190 = vpop.f32.mrf.mxu0
        %4191 = vdwg.mxu0
        %4192 = vmatpush.bf16.msra.mxu0 %v3405
        %4193 = vmatpush.bf16.msra.mxu0 %v3401
        %4194 = vmatpush.bf16.msra.mxu0 %v3397
        %4195 = vmatpush.bf16.msra.mxu0 %v3393
        %4196 = vmatpush.bf16.msra.mxu0 %v3389
        %4197 = vmatpush.bf16.msra.mxu0 %v3385
        %4198 = vmatpush.bf16.msra.mxu0 %v3381
        %4199 = vmatpush.bf16.msra.mxu0 %v3377
        %4200 = vmatmul.bf16.gmra.mxu0 %v962
        %v4201 = vpop.f32.mrf.mxu0
        %v4202 = vadd.f32 %v4189, %v4201
        %v4203 = vpop.f32.mrf.mxu0
        %4204 = vdwg.mxu0
        %4205 = vmatpush.bf16.msra.mxu0 %v3437
        %4206 = vmatpush.bf16.msra.mxu0 %v3433
        %4207 = vmatpush.bf16.msra.mxu0 %v3429
        %4208 = vmatpush.bf16.msra.mxu0 %v3425
        %4209 = vmatpush.bf16.msra.mxu0 %v3421
        %4210 = vmatpush.bf16.msra.mxu0 %v3417
        %4211 = vmatpush.bf16.msra.mxu0 %v3413
        %4212 = vmatpush.bf16.msra.mxu0 %v3409
        %4213 = vmatmul.bf16.gmra.mxu0 %v963
        %v4214 = vpop.f32.mrf.mxu0
        %v4215 = vadd.f32 %v4202, %v4214
        %v4216 = vpop.f32.mrf.mxu0
        %4217 = vdwg.mxu0
        %4218 = vmatpush.bf16.msra.mxu0 %v3469
        %4219 = vmatpush.bf16.msra.mxu0 %v3465
        %4220 = vmatpush.bf16.msra.mxu0 %v3461
        %4221 = vmatpush.bf16.msra.mxu0 %v3457
        %4222 = vmatpush.bf16.msra.mxu0 %v3453
        %4223 = vmatpush.bf16.msra.mxu0 %v3449
        %4224 = vmatpush.bf16.msra.mxu0 %v3445
        %4225 = vmatpush.bf16.msra.mxu0 %v3441
        %4226 = vmatmul.bf16.gmra.mxu0 %v964
        %v4227 = vpop.f32.mrf.mxu0
        %v4228 = vadd.f32 %v4215, %v4227
        %v4229 = vpop.f32.mrf.mxu0
        %4230 = vdwg.mxu0
        %4231 = vmatpush.bf16.msra.mxu0 %v3501
        %4232 = vmatpush.bf16.msra.mxu0 %v3497
        %4233 = vmatpush.bf16.msra.mxu0 %v3493
        %4234 = vmatpush.bf16.msra.mxu0 %v3489
        %4235 = vmatpush.bf16.msra.mxu0 %v3485
        %4236 = vmatpush.bf16.msra.mxu0 %v3481
        %4237 = vmatpush.bf16.msra.mxu0 %v3477
        %4238 = vmatpush.bf16.msra.mxu0 %v3473
        %4239 = vmatmul.bf16.gmra.mxu0 %v965
        %v4240 = vpop.f32.mrf.mxu0
        %v4241 = vadd.f32 %v4228, %v4240
        %v4242 = vpop.f32.mrf.mxu0
        %4243 = vdwg.mxu0
        %4244 = vmatpush.bf16.msra.mxu0 %v3533
        %4245 = vmatpush.bf16.msra.mxu0 %v3529
        %4246 = vmatpush.bf16.msra.mxu0 %v3525
        %4247 = vmatpush.bf16.msra.mxu0 %v3521
        %4248 = vmatpush.bf16.msra.mxu0 %v3517
        %4249 = vmatpush.bf16.msra.mxu0 %v3513
        %4250 = vmatpush.bf16.msra.mxu0 %v3509
        %4251 = vmatpush.bf16.msra.mxu0 %v3505
        %4252 = vmatmul.bf16.gmra.mxu0 %v966
        %v4253 = vpop.f32.mrf.mxu0
        %v4254 = vadd.f32 %v4241, %v4253
        %v4255 = vpop.f32.mrf.mxu0
        %4256 = vdwg.mxu0
        %4257 = vmatpush.bf16.msra.mxu0 %v3054
        %4258 = vmatpush.bf16.msra.mxu0 %v3050
        %4259 = vmatpush.bf16.msra.mxu0 %v3046
        %4260 = vmatpush.bf16.msra.mxu0 %v3042
        %4261 = vmatpush.bf16.msra.mxu0 %v3038
        %4262 = vmatpush.bf16.msra.mxu0 %v3034
        %4263 = vmatpush.bf16.msra.mxu0 %v3030
        %4264 = vmatpush.bf16.msra.mxu0 %v3026
        %4265 = vmatmul.bf16.gmra.mxu0 %v951
        %v4266 = vpop.f32.mrf.mxu0
        %v4267 = vadd.f32 %v1482, %v4266
        %v4268 = vpop.f32.mrf.mxu0
        %4269 = vdwg.mxu0
        %4270 = vmatpush.bf16.msra.mxu0 %v3086
        %4271 = vmatpush.bf16.msra.mxu0 %v3082
        %4272 = vmatpush.bf16.msra.mxu0 %v3078
        %4273 = vmatpush.bf16.msra.mxu0 %v3074
        %4274 = vmatpush.bf16.msra.mxu0 %v3070
        %4275 = vmatpush.bf16.msra.mxu0 %v3066
        %4276 = vmatpush.bf16.msra.mxu0 %v3062
        %4277 = vmatpush.bf16.msra.mxu0 %v3058
        %4278 = vmatmul.bf16.gmra.mxu0 %v952
        %v4279 = vpop.f32.mrf.mxu0
        %v4280 = vadd.f32 %v4267, %v4279
        %v4281 = vpop.f32.mrf.mxu0
        %4282 = vdwg.mxu0
        %4283 = vmatpush.bf16.msra.mxu0 %v3118
        %4284 = vmatpush.bf16.msra.mxu0 %v3114
        %4285 = vmatpush.bf16.msra.mxu0 %v3110
        %4286 = vmatpush.bf16.msra.mxu0 %v3106
        %4287 = vmatpush.bf16.msra.mxu0 %v3102
        %4288 = vmatpush.bf16.msra.mxu0 %v3098
        %4289 = vmatpush.bf16.msra.mxu0 %v3094
        %4290 = vmatpush.bf16.msra.mxu0 %v3090
        %4291 = vmatmul.bf16.gmra.mxu0 %v953
        %v4292 = vpop.f32.mrf.mxu0
        %v4293 = vadd.f32 %v4280, %v4292
        %v4294 = vpop.f32.mrf.mxu0
        %4295 = vdwg.mxu0
        %4296 = vmatpush.bf16.msra.mxu0 %v3150
        %4297 = vmatpush.bf16.msra.mxu0 %v3146
        %4298 = vmatpush.bf16.msra.mxu0 %v3142
        %4299 = vmatpush.bf16.msra.mxu0 %v3138
        %4300 = vmatpush.bf16.msra.mxu0 %v3134
        %4301 = vmatpush.bf16.msra.mxu0 %v3130
        %4302 = vmatpush.bf16.msra.mxu0 %v3126
        %4303 = vmatpush.bf16.msra.mxu0 %v3122
        %4304 = vmatmul.bf16.gmra.mxu0 %v954
        %v4305 = vpop.f32.mrf.mxu0
        %v4306 = vadd.f32 %v4293, %v4305
        %v4307 = vpop.f32.mrf.mxu0
        %4308 = vdwg.mxu0
        %4309 = vmatpush.bf16.msra.mxu0 %v3182
        %4310 = vmatpush.bf16.msra.mxu0 %v3178
        %4311 = vmatpush.bf16.msra.mxu0 %v3174
        %4312 = vmatpush.bf16.msra.mxu0 %v3170
        %4313 = vmatpush.bf16.msra.mxu0 %v3166
        %4314 = vmatpush.bf16.msra.mxu0 %v3162
        %4315 = vmatpush.bf16.msra.mxu0 %v3158
        %4316 = vmatpush.bf16.msra.mxu0 %v3154
        %4317 = vmatmul.bf16.gmra.mxu0 %v955
        %v4318 = vpop.f32.mrf.mxu0
        %v4319 = vadd.f32 %v4306, %v4318
        %v4320 = vpop.f32.mrf.mxu0
        %4321 = vdwg.mxu0
        %4322 = vmatpush.bf16.msra.mxu0 %v3214
        %4323 = vmatpush.bf16.msra.mxu0 %v3210
        %4324 = vmatpush.bf16.msra.mxu0 %v3206
        %4325 = vmatpush.bf16.msra.mxu0 %v3202
        %4326 = vmatpush.bf16.msra.mxu0 %v3198
        %4327 = vmatpush.bf16.msra.mxu0 %v3194
        %4328 = vmatpush.bf16.msra.mxu0 %v3190
        %4329 = vmatpush.bf16.msra.mxu0 %v3186
        %4330 = vmatmul.bf16.gmra.mxu0 %v956
        %v4331 = vpop.f32.mrf.mxu0
        %v4332 = vadd.f32 %v4319, %v4331
        %v4333 = vpop.f32.mrf.mxu0
        %4334 = vdwg.mxu0
        %4335 = vmatpush.bf16.msra.mxu0 %v3246
        %4336 = vmatpush.bf16.msra.mxu0 %v3242
        %4337 = vmatpush.bf16.msra.mxu0 %v3238
        %4338 = vmatpush.bf16.msra.mxu0 %v3234
        %4339 = vmatpush.bf16.msra.mxu0 %v3230
        %4340 = vmatpush.bf16.msra.mxu0 %v3226
        %4341 = vmatpush.bf16.msra.mxu0 %v3222
        %4342 = vmatpush.bf16.msra.mxu0 %v3218
        %4343 = vmatmul.bf16.gmra.mxu0 %v957
        %v4344 = vpop.f32.mrf.mxu0
        %v4345 = vadd.f32 %v4332, %v4344
        %v4346 = vpop.f32.mrf.mxu0
        %4347 = vdwg.mxu0
        %4348 = vmatpush.bf16.msra.mxu0 %v3278
        %4349 = vmatpush.bf16.msra.mxu0 %v3274
        %4350 = vmatpush.bf16.msra.mxu0 %v3270
        %4351 = vmatpush.bf16.msra.mxu0 %v3266
        %4352 = vmatpush.bf16.msra.mxu0 %v3262
        %4353 = vmatpush.bf16.msra.mxu0 %v3258
        %4354 = vmatpush.bf16.msra.mxu0 %v3254
        %4355 = vmatpush.bf16.msra.mxu0 %v3250
        %4356 = vmatmul.bf16.gmra.mxu0 %v958
        %v4357 = vpop.f32.mrf.mxu0
        %v4358 = vadd.f32 %v4345, %v4357
        %v4359 = vpop.f32.mrf.mxu0
        %4360 = vdwg.mxu0
        %4361 = vmatpush.bf16.msra.mxu0 %v3310
        %4362 = vmatpush.bf16.msra.mxu0 %v3306
        %4363 = vmatpush.bf16.msra.mxu0 %v3302
        %4364 = vmatpush.bf16.msra.mxu0 %v3298
        %4365 = vmatpush.bf16.msra.mxu0 %v3294
        %4366 = vmatpush.bf16.msra.mxu0 %v3290
        %4367 = vmatpush.bf16.msra.mxu0 %v3286
        %4368 = vmatpush.bf16.msra.mxu0 %v3282
        %4369 = vmatmul.bf16.gmra.mxu0 %v959
        %v4370 = vpop.f32.mrf.mxu0
        %v4371 = vadd.f32 %v4358, %v4370
        %v4372 = vpop.f32.mrf.mxu0
        %4373 = vdwg.mxu0
        %4374 = vmatpush.bf16.msra.mxu0 %v3342
        %4375 = vmatpush.bf16.msra.mxu0 %v3338
        %4376 = vmatpush.bf16.msra.mxu0 %v3334
        %4377 = vmatpush.bf16.msra.mxu0 %v3330
        %4378 = vmatpush.bf16.msra.mxu0 %v3326
        %4379 = vmatpush.bf16.msra.mxu0 %v3322
        %4380 = vmatpush.bf16.msra.mxu0 %v3318
        %4381 = vmatpush.bf16.msra.mxu0 %v3314
        %4382 = vmatmul.bf16.gmra.mxu0 %v960
        %v4383 = vpop.f32.mrf.mxu0
        %v4384 = vadd.f32 %v4371, %v4383
        %v4385 = vpop.f32.mrf.mxu0
        %4386 = vdwg.mxu0
        %4387 = vmatpush.bf16.msra.mxu0 %v3374
        %4388 = vmatpush.bf16.msra.mxu0 %v3370
        %4389 = vmatpush.bf16.msra.mxu0 %v3366
        %4390 = vmatpush.bf16.msra.mxu0 %v3362
        %4391 = vmatpush.bf16.msra.mxu0 %v3358
        %4392 = vmatpush.bf16.msra.mxu0 %v3354
        %4393 = vmatpush.bf16.msra.mxu0 %v3350
        %4394 = vmatpush.bf16.msra.mxu0 %v3346
        %4395 = vmatmul.bf16.gmra.mxu0 %v961
        %v4396 = vpop.f32.mrf.mxu0
        %v4397 = vadd.f32 %v4384, %v4396
        %v4398 = vpop.f32.mrf.mxu0
        %4399 = vdwg.mxu0
        %4400 = vmatpush.bf16.msra.mxu0 %v3406
        %4401 = vmatpush.bf16.msra.mxu0 %v3402
        %4402 = vmatpush.bf16.msra.mxu0 %v3398
        %4403 = vmatpush.bf16.msra.mxu0 %v3394
        %4404 = vmatpush.bf16.msra.mxu0 %v3390
        %4405 = vmatpush.bf16.msra.mxu0 %v3386
        %4406 = vmatpush.bf16.msra.mxu0 %v3382
        %4407 = vmatpush.bf16.msra.mxu0 %v3378
        %4408 = vmatmul.bf16.gmra.mxu0 %v962
        %v4409 = vpop.f32.mrf.mxu0
        %v4410 = vadd.f32 %v4397, %v4409
        %v4411 = vpop.f32.mrf.mxu0
        %4412 = vdwg.mxu0
        %4413 = vmatpush.bf16.msra.mxu0 %v3438
        %4414 = vmatpush.bf16.msra.mxu0 %v3434
        %4415 = vmatpush.bf16.msra.mxu0 %v3430
        %4416 = vmatpush.bf16.msra.mxu0 %v3426
        %4417 = vmatpush.bf16.msra.mxu0 %v3422
        %4418 = vmatpush.bf16.msra.mxu0 %v3418
        %4419 = vmatpush.bf16.msra.mxu0 %v3414
        %4420 = vmatpush.bf16.msra.mxu0 %v3410
        %4421 = vmatmul.bf16.gmra.mxu0 %v963
        %v4422 = vpop.f32.mrf.mxu0
        %v4423 = vadd.f32 %v4410, %v4422
        %v4424 = vpop.f32.mrf.mxu0
        %4425 = vdwg.mxu0
        %4426 = vmatpush.bf16.msra.mxu0 %v3470
        %4427 = vmatpush.bf16.msra.mxu0 %v3466
        %4428 = vmatpush.bf16.msra.mxu0 %v3462
        %4429 = vmatpush.bf16.msra.mxu0 %v3458
        %4430 = vmatpush.bf16.msra.mxu0 %v3454
        %4431 = vmatpush.bf16.msra.mxu0 %v3450
        %4432 = vmatpush.bf16.msra.mxu0 %v3446
        %4433 = vmatpush.bf16.msra.mxu0 %v3442
        %4434 = vmatmul.bf16.gmra.mxu0 %v964
        %v4435 = vpop.f32.mrf.mxu0
        %v4436 = vadd.f32 %v4423, %v4435
        %v4437 = vpop.f32.mrf.mxu0
        %4438 = vdwg.mxu0
        %4439 = vmatpush.bf16.msra.mxu0 %v3502
        %4440 = vmatpush.bf16.msra.mxu0 %v3498
        %4441 = vmatpush.bf16.msra.mxu0 %v3494
        %4442 = vmatpush.bf16.msra.mxu0 %v3490
        %4443 = vmatpush.bf16.msra.mxu0 %v3486
        %4444 = vmatpush.bf16.msra.mxu0 %v3482
        %4445 = vmatpush.bf16.msra.mxu0 %v3478
        %4446 = vmatpush.bf16.msra.mxu0 %v3474
        %4447 = vmatmul.bf16.gmra.mxu0 %v965
        %v4448 = vpop.f32.mrf.mxu0
        %v4449 = vadd.f32 %v4436, %v4448
        %v4450 = vpop.f32.mrf.mxu0
        %4451 = vdwg.mxu0
        %4452 = vmatpush.bf16.msra.mxu0 %v3534
        %4453 = vmatpush.bf16.msra.mxu0 %v3530
        %4454 = vmatpush.bf16.msra.mxu0 %v3526
        %4455 = vmatpush.bf16.msra.mxu0 %v3522
        %4456 = vmatpush.bf16.msra.mxu0 %v3518
        %4457 = vmatpush.bf16.msra.mxu0 %v3514
        %4458 = vmatpush.bf16.msra.mxu0 %v3510
        %4459 = vmatpush.bf16.msra.mxu0 %v3506
        %4460 = vmatmul.bf16.gmra.mxu0 %v966
        %v4461 = vpop.f32.mrf.mxu0
        %v4462 = vadd.f32 %v4449, %v4461
        %v4463 = vpop.f32.mrf.mxu0
        %4464 = vdwg.mxu0
        %4465 = vmatpush.bf16.msra.mxu0 %v3055
        %4466 = vmatpush.bf16.msra.mxu0 %v3051
        %4467 = vmatpush.bf16.msra.mxu0 %v3047
        %4468 = vmatpush.bf16.msra.mxu0 %v3043
        %4469 = vmatpush.bf16.msra.mxu0 %v3039
        %4470 = vmatpush.bf16.msra.mxu0 %v3035
        %4471 = vmatpush.bf16.msra.mxu0 %v3031
        %4472 = vmatpush.bf16.msra.mxu0 %v3027
        %4473 = vmatmul.bf16.gmra.mxu0 %v951
        %v4474 = vpop.f32.mrf.mxu0
        %v4475 = vadd.f32 %v1483, %v4474
        %v4476 = vpop.f32.mrf.mxu0
        %4477 = vdwg.mxu0
        %4478 = vmatpush.bf16.msra.mxu0 %v3087
        %4479 = vmatpush.bf16.msra.mxu0 %v3083
        %4480 = vmatpush.bf16.msra.mxu0 %v3079
        %4481 = vmatpush.bf16.msra.mxu0 %v3075
        %4482 = vmatpush.bf16.msra.mxu0 %v3071
        %4483 = vmatpush.bf16.msra.mxu0 %v3067
        %4484 = vmatpush.bf16.msra.mxu0 %v3063
        %4485 = vmatpush.bf16.msra.mxu0 %v3059
        %4486 = vmatmul.bf16.gmra.mxu0 %v952
        %v4487 = vpop.f32.mrf.mxu0
        %v4488 = vadd.f32 %v4475, %v4487
        %v4489 = vpop.f32.mrf.mxu0
        %4490 = vdwg.mxu0
        %4491 = vmatpush.bf16.msra.mxu0 %v3119
        %4492 = vmatpush.bf16.msra.mxu0 %v3115
        %4493 = vmatpush.bf16.msra.mxu0 %v3111
        %4494 = vmatpush.bf16.msra.mxu0 %v3107
        %4495 = vmatpush.bf16.msra.mxu0 %v3103
        %4496 = vmatpush.bf16.msra.mxu0 %v3099
        %4497 = vmatpush.bf16.msra.mxu0 %v3095
        %4498 = vmatpush.bf16.msra.mxu0 %v3091
        %4499 = vmatmul.bf16.gmra.mxu0 %v953
        %v4500 = vpop.f32.mrf.mxu0
        %v4501 = vadd.f32 %v4488, %v4500
        %v4502 = vpop.f32.mrf.mxu0
        %4503 = vdwg.mxu0
        %4504 = vmatpush.bf16.msra.mxu0 %v3151
        %4505 = vmatpush.bf16.msra.mxu0 %v3147
        %4506 = vmatpush.bf16.msra.mxu0 %v3143
        %4507 = vmatpush.bf16.msra.mxu0 %v3139
        %4508 = vmatpush.bf16.msra.mxu0 %v3135
        %4509 = vmatpush.bf16.msra.mxu0 %v3131
        %4510 = vmatpush.bf16.msra.mxu0 %v3127
        %4511 = vmatpush.bf16.msra.mxu0 %v3123
        %4512 = vmatmul.bf16.gmra.mxu0 %v954
        %v4513 = vpop.f32.mrf.mxu0
        %v4514 = vadd.f32 %v4501, %v4513
        %v4515 = vpop.f32.mrf.mxu0
        %4516 = vdwg.mxu0
        %4517 = vmatpush.bf16.msra.mxu0 %v3183
        %4518 = vmatpush.bf16.msra.mxu0 %v3179
        %4519 = vmatpush.bf16.msra.mxu0 %v3175
        %4520 = vmatpush.bf16.msra.mxu0 %v3171
        %4521 = vmatpush.bf16.msra.mxu0 %v3167
        %4522 = vmatpush.bf16.msra.mxu0 %v3163
        %4523 = vmatpush.bf16.msra.mxu0 %v3159
        %4524 = vmatpush.bf16.msra.mxu0 %v3155
        %4525 = vmatmul.bf16.gmra.mxu0 %v955
        %v4526 = vpop.f32.mrf.mxu0
        %v4527 = vadd.f32 %v4514, %v4526
        %v4528 = vpop.f32.mrf.mxu0
        %4529 = vdwg.mxu0
        %4530 = vmatpush.bf16.msra.mxu0 %v3215
        %4531 = vmatpush.bf16.msra.mxu0 %v3211
        %4532 = vmatpush.bf16.msra.mxu0 %v3207
        %4533 = vmatpush.bf16.msra.mxu0 %v3203
        %4534 = vmatpush.bf16.msra.mxu0 %v3199
        %4535 = vmatpush.bf16.msra.mxu0 %v3195
        %4536 = vmatpush.bf16.msra.mxu0 %v3191
        %4537 = vmatpush.bf16.msra.mxu0 %v3187
        %4538 = vmatmul.bf16.gmra.mxu0 %v956
        %v4539 = vpop.f32.mrf.mxu0
        %v4540 = vadd.f32 %v4527, %v4539
        %v4541 = vpop.f32.mrf.mxu0
        %4542 = vdwg.mxu0
        %4543 = vmatpush.bf16.msra.mxu0 %v3247
        %4544 = vmatpush.bf16.msra.mxu0 %v3243
        %4545 = vmatpush.bf16.msra.mxu0 %v3239
        %4546 = vmatpush.bf16.msra.mxu0 %v3235
        %4547 = vmatpush.bf16.msra.mxu0 %v3231
        %4548 = vmatpush.bf16.msra.mxu0 %v3227
        %4549 = vmatpush.bf16.msra.mxu0 %v3223
        %4550 = vmatpush.bf16.msra.mxu0 %v3219
        %4551 = vmatmul.bf16.gmra.mxu0 %v957
        %v4552 = vpop.f32.mrf.mxu0
        %v4553 = vadd.f32 %v4540, %v4552
        %v4554 = vpop.f32.mrf.mxu0
        %4555 = vdwg.mxu0
        %4556 = vmatpush.bf16.msra.mxu0 %v3279
        %4557 = vmatpush.bf16.msra.mxu0 %v3275
        %4558 = vmatpush.bf16.msra.mxu0 %v3271
        %4559 = vmatpush.bf16.msra.mxu0 %v3267
        %4560 = vmatpush.bf16.msra.mxu0 %v3263
        %4561 = vmatpush.bf16.msra.mxu0 %v3259
        %4562 = vmatpush.bf16.msra.mxu0 %v3255
        %4563 = vmatpush.bf16.msra.mxu0 %v3251
        %4564 = vmatmul.bf16.gmra.mxu0 %v958
        %v4565 = vpop.f32.mrf.mxu0
        %v4566 = vadd.f32 %v4553, %v4565
        %v4567 = vpop.f32.mrf.mxu0
        %4568 = vdwg.mxu0
        %4569 = vmatpush.bf16.msra.mxu0 %v3311
        %4570 = vmatpush.bf16.msra.mxu0 %v3307
        %4571 = vmatpush.bf16.msra.mxu0 %v3303
        %4572 = vmatpush.bf16.msra.mxu0 %v3299
        %4573 = vmatpush.bf16.msra.mxu0 %v3295
        %4574 = vmatpush.bf16.msra.mxu0 %v3291
        %4575 = vmatpush.bf16.msra.mxu0 %v3287
        %4576 = vmatpush.bf16.msra.mxu0 %v3283
        %4577 = vmatmul.bf16.gmra.mxu0 %v959
        %v4578 = vpop.f32.mrf.mxu0
        %v4579 = vadd.f32 %v4566, %v4578
        %v4580 = vpop.f32.mrf.mxu0
        %4581 = vdwg.mxu0
        %4582 = vmatpush.bf16.msra.mxu0 %v3343
        %4583 = vmatpush.bf16.msra.mxu0 %v3339
        %4584 = vmatpush.bf16.msra.mxu0 %v3335
        %4585 = vmatpush.bf16.msra.mxu0 %v3331
        %4586 = vmatpush.bf16.msra.mxu0 %v3327
        %4587 = vmatpush.bf16.msra.mxu0 %v3323
        %4588 = vmatpush.bf16.msra.mxu0 %v3319
        %4589 = vmatpush.bf16.msra.mxu0 %v3315
        %4590 = vmatmul.bf16.gmra.mxu0 %v960
        %v4591 = vpop.f32.mrf.mxu0
        %v4592 = vadd.f32 %v4579, %v4591
        %v4593 = vpop.f32.mrf.mxu0
        %4594 = vdwg.mxu0
        %4595 = vmatpush.bf16.msra.mxu0 %v3375
        %4596 = vmatpush.bf16.msra.mxu0 %v3371
        %4597 = vmatpush.bf16.msra.mxu0 %v3367
        %4598 = vmatpush.bf16.msra.mxu0 %v3363
        %4599 = vmatpush.bf16.msra.mxu0 %v3359
        %4600 = vmatpush.bf16.msra.mxu0 %v3355
        %4601 = vmatpush.bf16.msra.mxu0 %v3351
        %4602 = vmatpush.bf16.msra.mxu0 %v3347
        %4603 = vmatmul.bf16.gmra.mxu0 %v961
        %v4604 = vpop.f32.mrf.mxu0
        %v4605 = vadd.f32 %v4592, %v4604
        %v4606 = vpop.f32.mrf.mxu0
        %4607 = vdwg.mxu0
        %4608 = vmatpush.bf16.msra.mxu0 %v3407
        %4609 = vmatpush.bf16.msra.mxu0 %v3403
        %4610 = vmatpush.bf16.msra.mxu0 %v3399
        %4611 = vmatpush.bf16.msra.mxu0 %v3395
        %4612 = vmatpush.bf16.msra.mxu0 %v3391
        %4613 = vmatpush.bf16.msra.mxu0 %v3387
        %4614 = vmatpush.bf16.msra.mxu0 %v3383
        %4615 = vmatpush.bf16.msra.mxu0 %v3379
        %4616 = vmatmul.bf16.gmra.mxu0 %v962
        %v4617 = vpop.f32.mrf.mxu0
        %v4618 = vadd.f32 %v4605, %v4617
        %v4619 = vpop.f32.mrf.mxu0
        %4620 = vdwg.mxu0
        %4621 = vmatpush.bf16.msra.mxu0 %v3439
        %4622 = vmatpush.bf16.msra.mxu0 %v3435
        %4623 = vmatpush.bf16.msra.mxu0 %v3431
        %4624 = vmatpush.bf16.msra.mxu0 %v3427
        %4625 = vmatpush.bf16.msra.mxu0 %v3423
        %4626 = vmatpush.bf16.msra.mxu0 %v3419
        %4627 = vmatpush.bf16.msra.mxu0 %v3415
        %4628 = vmatpush.bf16.msra.mxu0 %v3411
        %4629 = vmatmul.bf16.gmra.mxu0 %v963
        %v4630 = vpop.f32.mrf.mxu0
        %v4631 = vadd.f32 %v4618, %v4630
        %v4632 = vpop.f32.mrf.mxu0
        %4633 = vdwg.mxu0
        %4634 = vmatpush.bf16.msra.mxu0 %v3471
        %4635 = vmatpush.bf16.msra.mxu0 %v3467
        %4636 = vmatpush.bf16.msra.mxu0 %v3463
        %4637 = vmatpush.bf16.msra.mxu0 %v3459
        %4638 = vmatpush.bf16.msra.mxu0 %v3455
        %4639 = vmatpush.bf16.msra.mxu0 %v3451
        %4640 = vmatpush.bf16.msra.mxu0 %v3447
        %4641 = vmatpush.bf16.msra.mxu0 %v3443
        %4642 = vmatmul.bf16.gmra.mxu0 %v964
        %v4643 = vpop.f32.mrf.mxu0
        %v4644 = vadd.f32 %v4631, %v4643
        %v4645 = vpop.f32.mrf.mxu0
        %4646 = vdwg.mxu0
        %4647 = vmatpush.bf16.msra.mxu0 %v3503
        %4648 = vmatpush.bf16.msra.mxu0 %v3499
        %4649 = vmatpush.bf16.msra.mxu0 %v3495
        %4650 = vmatpush.bf16.msra.mxu0 %v3491
        %4651 = vmatpush.bf16.msra.mxu0 %v3487
        %4652 = vmatpush.bf16.msra.mxu0 %v3483
        %4653 = vmatpush.bf16.msra.mxu0 %v3479
        %4654 = vmatpush.bf16.msra.mxu0 %v3475
        %4655 = vmatmul.bf16.gmra.mxu0 %v965
        %v4656 = vpop.f32.mrf.mxu0
        %v4657 = vadd.f32 %v4644, %v4656
        %v4658 = vpop.f32.mrf.mxu0
        %4659 = vdwg.mxu0
        %4660 = vmatpush.bf16.msra.mxu0 %v3535
        %4661 = vmatpush.bf16.msra.mxu0 %v3531
        %4662 = vmatpush.bf16.msra.mxu0 %v3527
        %4663 = vmatpush.bf16.msra.mxu0 %v3523
        %4664 = vmatpush.bf16.msra.mxu0 %v3519
        %4665 = vmatpush.bf16.msra.mxu0 %v3515
        %4666 = vmatpush.bf16.msra.mxu0 %v3511
        %4667 = vmatpush.bf16.msra.mxu0 %v3507
        %4668 = vmatmul.bf16.gmra.mxu0 %v966
        %v4669 = vpop.f32.mrf.mxu0
        %v4670 = vadd.f32 %v4657, %v4669
        %v4671 = vpop.f32.mrf.mxu0
        %4672 = vdwg.mxu0
        %4673 = vmatpush.bf16.msra.mxu0 %v3056
        %4674 = vmatpush.bf16.msra.mxu0 %v3052
        %4675 = vmatpush.bf16.msra.mxu0 %v3048
        %4676 = vmatpush.bf16.msra.mxu0 %v3044
        %4677 = vmatpush.bf16.msra.mxu0 %v3040
        %4678 = vmatpush.bf16.msra.mxu0 %v3036
        %4679 = vmatpush.bf16.msra.mxu0 %v3032
        %4680 = vmatpush.bf16.msra.mxu0 %v3028
        %4681 = vmatmul.bf16.gmra.mxu0 %v951
        %v4682 = vpop.f32.mrf.mxu0
        %v4683 = vadd.f32 %v1484, %v4682
        %v4684 = vpop.f32.mrf.mxu0
        %4685 = vdwg.mxu0
        %4686 = vmatpush.bf16.msra.mxu0 %v3088
        %4687 = vmatpush.bf16.msra.mxu0 %v3084
        %4688 = vmatpush.bf16.msra.mxu0 %v3080
        %4689 = vmatpush.bf16.msra.mxu0 %v3076
        %4690 = vmatpush.bf16.msra.mxu0 %v3072
        %4691 = vmatpush.bf16.msra.mxu0 %v3068
        %4692 = vmatpush.bf16.msra.mxu0 %v3064
        %4693 = vmatpush.bf16.msra.mxu0 %v3060
        %4694 = vmatmul.bf16.gmra.mxu0 %v952
        %v4695 = vpop.f32.mrf.mxu0
        %v4696 = vadd.f32 %v4683, %v4695
        %v4697 = vpop.f32.mrf.mxu0
        %4698 = vdwg.mxu0
        %4699 = vmatpush.bf16.msra.mxu0 %v3120
        %4700 = vmatpush.bf16.msra.mxu0 %v3116
        %4701 = vmatpush.bf16.msra.mxu0 %v3112
        %4702 = vmatpush.bf16.msra.mxu0 %v3108
        %4703 = vmatpush.bf16.msra.mxu0 %v3104
        %4704 = vmatpush.bf16.msra.mxu0 %v3100
        %4705 = vmatpush.bf16.msra.mxu0 %v3096
        %4706 = vmatpush.bf16.msra.mxu0 %v3092
        %4707 = vmatmul.bf16.gmra.mxu0 %v953
        %v4708 = vpop.f32.mrf.mxu0
        %v4709 = vadd.f32 %v4696, %v4708
        %v4710 = vpop.f32.mrf.mxu0
        %4711 = vdwg.mxu0
        %4712 = vmatpush.bf16.msra.mxu0 %v3152
        %4713 = vmatpush.bf16.msra.mxu0 %v3148
        %4714 = vmatpush.bf16.msra.mxu0 %v3144
        %4715 = vmatpush.bf16.msra.mxu0 %v3140
        %4716 = vmatpush.bf16.msra.mxu0 %v3136
        %4717 = vmatpush.bf16.msra.mxu0 %v3132
        %4718 = vmatpush.bf16.msra.mxu0 %v3128
        %4719 = vmatpush.bf16.msra.mxu0 %v3124
        %4720 = vmatmul.bf16.gmra.mxu0 %v954
        %v4721 = vpop.f32.mrf.mxu0
        %v4722 = vadd.f32 %v4709, %v4721
        %v4723 = vpop.f32.mrf.mxu0
        %4724 = vdwg.mxu0
        %4725 = vmatpush.bf16.msra.mxu0 %v3184
        %4726 = vmatpush.bf16.msra.mxu0 %v3180
        %4727 = vmatpush.bf16.msra.mxu0 %v3176
        %4728 = vmatpush.bf16.msra.mxu0 %v3172
        %4729 = vmatpush.bf16.msra.mxu0 %v3168
        %4730 = vmatpush.bf16.msra.mxu0 %v3164
        %4731 = vmatpush.bf16.msra.mxu0 %v3160
        %4732 = vmatpush.bf16.msra.mxu0 %v3156
        %4733 = vmatmul.bf16.gmra.mxu0 %v955
        %v4734 = vpop.f32.mrf.mxu0
        %v4735 = vadd.f32 %v4722, %v4734
        %v4736 = vpop.f32.mrf.mxu0
        %4737 = vdwg.mxu0
        %4738 = vmatpush.bf16.msra.mxu0 %v3216
        %4739 = vmatpush.bf16.msra.mxu0 %v3212
        %4740 = vmatpush.bf16.msra.mxu0 %v3208
        %4741 = vmatpush.bf16.msra.mxu0 %v3204
        %4742 = vmatpush.bf16.msra.mxu0 %v3200
        %4743 = vmatpush.bf16.msra.mxu0 %v3196
        %4744 = vmatpush.bf16.msra.mxu0 %v3192
        %4745 = vmatpush.bf16.msra.mxu0 %v3188
        %4746 = vmatmul.bf16.gmra.mxu0 %v956
        %v4747 = vpop.f32.mrf.mxu0
        %v4748 = vadd.f32 %v4735, %v4747
        %v4749 = vpop.f32.mrf.mxu0
        %4750 = vdwg.mxu0
        %4751 = vmatpush.bf16.msra.mxu0 %v3248
        %4752 = vmatpush.bf16.msra.mxu0 %v3244
        %4753 = vmatpush.bf16.msra.mxu0 %v3240
        %4754 = vmatpush.bf16.msra.mxu0 %v3236
        %4755 = vmatpush.bf16.msra.mxu0 %v3232
        %4756 = vmatpush.bf16.msra.mxu0 %v3228
        %4757 = vmatpush.bf16.msra.mxu0 %v3224
        %4758 = vmatpush.bf16.msra.mxu0 %v3220
        %4759 = vmatmul.bf16.gmra.mxu0 %v957
        %v4760 = vpop.f32.mrf.mxu0
        %v4761 = vadd.f32 %v4748, %v4760
        %v4762 = vpop.f32.mrf.mxu0
        %4763 = vdwg.mxu0
        %4764 = vmatpush.bf16.msra.mxu0 %v3280
        %4765 = vmatpush.bf16.msra.mxu0 %v3276
        %4766 = vmatpush.bf16.msra.mxu0 %v3272
        %4767 = vmatpush.bf16.msra.mxu0 %v3268
        %4768 = vmatpush.bf16.msra.mxu0 %v3264
        %4769 = vmatpush.bf16.msra.mxu0 %v3260
        %4770 = vmatpush.bf16.msra.mxu0 %v3256
        %4771 = vmatpush.bf16.msra.mxu0 %v3252
        %4772 = vmatmul.bf16.gmra.mxu0 %v958
        %v4773 = vpop.f32.mrf.mxu0
        %v4774 = vadd.f32 %v4761, %v4773
        %v4775 = vpop.f32.mrf.mxu0
        %4776 = vdwg.mxu0
        %4777 = vmatpush.bf16.msra.mxu0 %v3312
        %4778 = vmatpush.bf16.msra.mxu0 %v3308
        %4779 = vmatpush.bf16.msra.mxu0 %v3304
        %4780 = vmatpush.bf16.msra.mxu0 %v3300
        %4781 = vmatpush.bf16.msra.mxu0 %v3296
        %4782 = vmatpush.bf16.msra.mxu0 %v3292
        %4783 = vmatpush.bf16.msra.mxu0 %v3288
        %4784 = vmatpush.bf16.msra.mxu0 %v3284
        %4785 = vmatmul.bf16.gmra.mxu0 %v959
        %v4786 = vpop.f32.mrf.mxu0
        %v4787 = vadd.f32 %v4774, %v4786
        %v4788 = vpop.f32.mrf.mxu0
        %4789 = vdwg.mxu0
        %4790 = vmatpush.bf16.msra.mxu0 %v3344
        %4791 = vmatpush.bf16.msra.mxu0 %v3340
        %4792 = vmatpush.bf16.msra.mxu0 %v3336
        %4793 = vmatpush.bf16.msra.mxu0 %v3332
        %4794 = vmatpush.bf16.msra.mxu0 %v3328
        %4795 = vmatpush.bf16.msra.mxu0 %v3324
        %4796 = vmatpush.bf16.msra.mxu0 %v3320
        %4797 = vmatpush.bf16.msra.mxu0 %v3316
        %4798 = vmatmul.bf16.gmra.mxu0 %v960
        %v4799 = vpop.f32.mrf.mxu0
        %v4800 = vadd.f32 %v4787, %v4799
        %v4801 = vpop.f32.mrf.mxu0
        %4802 = vdwg.mxu0
        %4803 = vmatpush.bf16.msra.mxu0 %v3376
        %4804 = vmatpush.bf16.msra.mxu0 %v3372
        %4805 = vmatpush.bf16.msra.mxu0 %v3368
        %4806 = vmatpush.bf16.msra.mxu0 %v3364
        %4807 = vmatpush.bf16.msra.mxu0 %v3360
        %4808 = vmatpush.bf16.msra.mxu0 %v3356
        %4809 = vmatpush.bf16.msra.mxu0 %v3352
        %4810 = vmatpush.bf16.msra.mxu0 %v3348
        %4811 = vmatmul.bf16.gmra.mxu0 %v961
        %v4812 = vpop.f32.mrf.mxu0
        %v4813 = vadd.f32 %v4800, %v4812
        %v4814 = vpop.f32.mrf.mxu0
        %4815 = vdwg.mxu0
        %4816 = vmatpush.bf16.msra.mxu0 %v3408
        %4817 = vmatpush.bf16.msra.mxu0 %v3404
        %4818 = vmatpush.bf16.msra.mxu0 %v3400
        %4819 = vmatpush.bf16.msra.mxu0 %v3396
        %4820 = vmatpush.bf16.msra.mxu0 %v3392
        %4821 = vmatpush.bf16.msra.mxu0 %v3388
        %4822 = vmatpush.bf16.msra.mxu0 %v3384
        %4823 = vmatpush.bf16.msra.mxu0 %v3380
        %4824 = vmatmul.bf16.gmra.mxu0 %v962
        %v4825 = vpop.f32.mrf.mxu0
        %v4826 = vadd.f32 %v4813, %v4825
        %v4827 = vpop.f32.mrf.mxu0
        %4828 = vdwg.mxu0
        %4829 = vmatpush.bf16.msra.mxu0 %v3440
        %4830 = vmatpush.bf16.msra.mxu0 %v3436
        %4831 = vmatpush.bf16.msra.mxu0 %v3432
        %4832 = vmatpush.bf16.msra.mxu0 %v3428
        %4833 = vmatpush.bf16.msra.mxu0 %v3424
        %4834 = vmatpush.bf16.msra.mxu0 %v3420
        %4835 = vmatpush.bf16.msra.mxu0 %v3416
        %4836 = vmatpush.bf16.msra.mxu0 %v3412
        %4837 = vmatmul.bf16.gmra.mxu0 %v963
        %v4838 = vpop.f32.mrf.mxu0
        %v4839 = vadd.f32 %v4826, %v4838
        %v4840 = vpop.f32.mrf.mxu0
        %4841 = vdwg.mxu0
        %4842 = vmatpush.bf16.msra.mxu0 %v3472
        %4843 = vmatpush.bf16.msra.mxu0 %v3468
        %4844 = vmatpush.bf16.msra.mxu0 %v3464
        %4845 = vmatpush.bf16.msra.mxu0 %v3460
        %4846 = vmatpush.bf16.msra.mxu0 %v3456
        %4847 = vmatpush.bf16.msra.mxu0 %v3452
        %4848 = vmatpush.bf16.msra.mxu0 %v3448
        %4849 = vmatpush.bf16.msra.mxu0 %v3444
        %4850 = vmatmul.bf16.gmra.mxu0 %v964
        %v4851 = vpop.f32.mrf.mxu0
        %v4852 = vadd.f32 %v4839, %v4851
        %v4853 = vpop.f32.mrf.mxu0
        %4854 = vdwg.mxu0
        %4855 = vmatpush.bf16.msra.mxu0 %v3504
        %4856 = vmatpush.bf16.msra.mxu0 %v3500
        %4857 = vmatpush.bf16.msra.mxu0 %v3496
        %4858 = vmatpush.bf16.msra.mxu0 %v3492
        %4859 = vmatpush.bf16.msra.mxu0 %v3488
        %4860 = vmatpush.bf16.msra.mxu0 %v3484
        %4861 = vmatpush.bf16.msra.mxu0 %v3480
        %4862 = vmatpush.bf16.msra.mxu0 %v3476
        %4863 = vmatmul.bf16.gmra.mxu0 %v965
        %v4864 = vpop.f32.mrf.mxu0
        %v4865 = vadd.f32 %v4852, %v4864
        %v4866 = vpop.f32.mrf.mxu0
        %4867 = vdwg.mxu0
        %4868 = vmatpush.bf16.msra.mxu0 %v3536
        %4869 = vmatpush.bf16.msra.mxu0 %v3532
        %4870 = vmatpush.bf16.msra.mxu0 %v3528
        %4871 = vmatpush.bf16.msra.mxu0 %v3524
        %4872 = vmatpush.bf16.msra.mxu0 %v3520
        %4873 = vmatpush.bf16.msra.mxu0 %v3516
        %4874 = vmatpush.bf16.msra.mxu0 %v3512
        %4875 = vmatpush.bf16.msra.mxu0 %v3508
        %4876 = vmatmul.bf16.gmra.mxu0 %v966
        %v4877 = vpop.f32.mrf.mxu0
        %v4878 = vadd.f32 %v4865, %v4877
        %v4879 = vpop.f32.mrf.mxu0
        %4880 = vdwg.mxu0
        %v4881 = vtanh.pop %v4254
        %v4882 = vtanh.pop %v4462
        %v4883 = vtanh.pop %v4670
        %v4884 = vtanh.pop %v4878
        %v4885 = vld [vmem:[#allocation3] sm:$0x3]
        %v4886 = vpack.c.bf16 %v4881, %v4881
        %v4887 = vpack.c.bf16 %v4882, %v4882
        %v4888 = vpack.c.bf16 %v4883, %v4883
        %v4889 = vpack.c.bf16 %v4884, %v4884
        %v4890 = vld [vmem:[%s388] sm:$0xf]
        %v4891 = vld [vmem:[%s388 + $0x4] sm:$0xf]
        %v4892 = vld [vmem:[%s388 + $0x8] sm:$0xf]
        %v4893 = vld [vmem:[%s388 + $0xc] sm:$0xf]
        %v4894 = vld [vmem:[%s388 + $0x10] sm:$0xf]
        %v4895 = vld [vmem:[%s388 + $0x14] sm:$0xf]
        %v4896 = vld [vmem:[%s388 + $0x18] sm:$0xf]
        %v4897 = vld [vmem:[%s388 + $0x1c] sm:$0xf]
        %v4898 = vld [vmem:[%s388 + $0x20] sm:$0xf]
        %v4899 = vld [vmem:[%s388 + $0x24] sm:$0xf]
        %v4900 = vld [vmem:[%s388 + $0x28] sm:$0xf]
        %v4901 = vld [vmem:[%s388 + $0x2c] sm:$0xf]
        %v4902 = vld [vmem:[%s388 + $0x30] sm:$0xf]
        %v4903 = vld [vmem:[%s388 + $0x34] sm:$0xf]
        %v4904 = vld [vmem:[%s388 + $0x38] sm:$0xf]
        %v4905 = vld [vmem:[%s388 + $0x3c] sm:$0xf]
        %v4906 = vld [vmem:[%s388 + $0x40] sm:$0xf]
        %v4907 = vld [vmem:[%s388 + $0x44] sm:$0xf]
        %v4908 = vld [vmem:[%s388 + $0x48] sm:$0xf]
        %v4909 = vld [vmem:[%s388 + $0x4c] sm:$0xf]
        %v4910 = vld [vmem:[%s388 + $0x50] sm:$0xf]
        %v4911 = vld [vmem:[%s388 + $0x54] sm:$0xf]
        %v4912 = vld [vmem:[%s388 + $0x58] sm:$0xf]
        %v4913 = vld [vmem:[%s388 + $0x5c] sm:$0xf]
        %v4914 = vld [vmem:[%s388 + $0x60] sm:$0xf]
        %v4915 = vld [vmem:[%s388 + $0x64] sm:$0xf]
        %v4916 = vld [vmem:[%s388 + $0x68] sm:$0xf]
        %v4917 = vld [vmem:[%s388 + $0x6c] sm:$0xf]
        %v4918 = vld [vmem:[%s388 + $0x70] sm:$0xf]
        %v4919 = vld [vmem:[%s388 + $0x74] sm:$0xf]
        %v4920 = vld [vmem:[%s388 + $0x78] sm:$0xf]
        %v4921 = vld [vmem:[%s388 + $0x7c] sm:$0xf]
        %v4922 = vld [vmem:[%s388 + $0x80] sm:$0xf]
        %v4923 = vld [vmem:[%s388 + $0x84] sm:$0xf]
        %v4924 = vld [vmem:[%s388 + $0x88] sm:$0xf]
        %v4925 = vld [vmem:[%s388 + $0x8c] sm:$0xf]
        %v4926 = vld [vmem:[%s388 + $0x90] sm:$0xf]
        %v4927 = vld [vmem:[%s388 + $0x94] sm:$0xf]
        %v4928 = vld [vmem:[%s388 + $0x98] sm:$0xf]
        %v4929 = vld [vmem:[%s388 + $0x9c] sm:$0xf]
        %v4930 = vld [vmem:[%s388 + $0xa0] sm:$0xf]
        %v4931 = vld [vmem:[%s388 + $0xa4] sm:$0xf]
        %v4932 = vld [vmem:[%s388 + $0xa8] sm:$0xf]
        %v4933 = vld [vmem:[%s388 + $0xac] sm:$0xf]
        %v4934 = vld [vmem:[%s388 + $0xb0] sm:$0xf]
        %v4935 = vld [vmem:[%s388 + $0xb4] sm:$0xf]
        %v4936 = vld [vmem:[%s388 + $0xb8] sm:$0xf]
        %v4937 = vld [vmem:[%s388 + $0xbc] sm:$0xf]
        %v4938 = vld [vmem:[%s388 + $0xc0] sm:$0xf]
        %v4939 = vld [vmem:[%s388 + $0xc4] sm:$0xf]
        %v4940 = vld [vmem:[%s388 + $0xc8] sm:$0xf]
        %v4941 = vld [vmem:[%s388 + $0xcc] sm:$0xf]
        %v4942 = vld [vmem:[%s388 + $0xd0] sm:$0xf]
        %v4943 = vld [vmem:[%s388 + $0xd4] sm:$0xf]
        %v4944 = vld [vmem:[%s388 + $0xd8] sm:$0xf]
        %v4945 = vld [vmem:[%s388 + $0xdc] sm:$0xf]
        %v4946 = vld [vmem:[%s388 + $0xe0] sm:$0xf]
        %v4947 = vld [vmem:[%s388 + $0xe4] sm:$0xf]
        %v4948 = vld [vmem:[%s388 + $0xe8] sm:$0xf]
        %v4949 = vld [vmem:[%s388 + $0xec] sm:$0xf]
        %v4950 = vld [vmem:[%s388 + $0xf0] sm:$0xf]
        %v4951 = vld [vmem:[%s388 + $0xf4] sm:$0xf]
        %v4952 = vld [vmem:[%s388 + $0xf8] sm:$0xf]
        %v4953 = vld [vmem:[%s388 + $0xfc] sm:$0xf]
        %v5018 = vunpack.c.l.b16 %v4890
        %v5019 = vunpack.c.l.b16 %v4891
        %v5020 = vunpack.c.l.b16 %v4892
        %v5021 = vunpack.c.l.b16 %v4893
        %v5022 = vunpack.c.l.b16 %v4894
        %v5023 = vunpack.c.l.b16 %v4895
        %v5024 = vunpack.c.l.b16 %v4896
        %v5025 = vunpack.c.l.b16 %v4897
        %v5026 = vunpack.c.l.b16 %v4898
        %v5027 = vunpack.c.l.b16 %v4899
        %v5028 = vunpack.c.l.b16 %v4900
        %v5029 = vunpack.c.l.b16 %v4901
        %v5030 = vunpack.c.l.b16 %v4902
        %v5031 = vunpack.c.l.b16 %v4903
        %v5032 = vunpack.c.l.b16 %v4904
        %v5033 = vunpack.c.l.b16 %v4905
        %v5034 = vunpack.c.l.b16 %v4906
        %v5035 = vunpack.c.l.b16 %v4907
        %v5036 = vunpack.c.l.b16 %v4908
        %v5037 = vunpack.c.l.b16 %v4909
        %v5038 = vunpack.c.l.b16 %v4910
        %v5039 = vunpack.c.l.b16 %v4911
        %v5040 = vunpack.c.l.b16 %v4912
        %v5041 = vunpack.c.l.b16 %v4913
        %v5042 = vunpack.c.l.b16 %v4914
        %v5043 = vunpack.c.l.b16 %v4915
        %v5044 = vunpack.c.l.b16 %v4916
        %v5045 = vunpack.c.l.b16 %v4917
        %v5046 = vunpack.c.l.b16 %v4918
        %v5047 = vunpack.c.l.b16 %v4919
        %v5048 = vunpack.c.l.b16 %v4920
        %v5049 = vunpack.c.l.b16 %v4921
        %v5050 = vunpack.c.l.b16 %v4922
        %v5051 = vunpack.c.l.b16 %v4923
        %v5052 = vunpack.c.l.b16 %v4924
        %v5053 = vunpack.c.l.b16 %v4925
        %v5054 = vunpack.c.l.b16 %v4926
        %v5055 = vunpack.c.l.b16 %v4927
        %v5056 = vunpack.c.l.b16 %v4928
        %v5057 = vunpack.c.l.b16 %v4929
        %v5058 = vunpack.c.l.b16 %v4930
        %v5059 = vunpack.c.l.b16 %v4931
        %v5060 = vunpack.c.l.b16 %v4932
        %v5061 = vunpack.c.l.b16 %v4933
        %v5062 = vunpack.c.l.b16 %v4934
        %v5063 = vunpack.c.l.b16 %v4935
        %v5064 = vunpack.c.l.b16 %v4936
        %v5065 = vunpack.c.l.b16 %v4937
        %v5066 = vunpack.c.l.b16 %v4938
        %v5067 = vunpack.c.l.b16 %v4939
        %v5068 = vunpack.c.l.b16 %v4940
        %v5069 = vunpack.c.l.b16 %v4941
        %v5070 = vunpack.c.l.b16 %v4942
        %v5071 = vunpack.c.l.b16 %v4943
        %v5072 = vunpack.c.l.b16 %v4944
        %v5073 = vunpack.c.l.b16 %v4945
        %v5074 = vunpack.c.l.b16 %v4946
        %v5075 = vunpack.c.l.b16 %v4947
        %v5076 = vunpack.c.l.b16 %v4948
        %v5077 = vunpack.c.l.b16 %v4949
        %v5078 = vunpack.c.l.b16 %v4950
        %v5079 = vunpack.c.l.b16 %v4951
        %v5080 = vunpack.c.l.b16 %v4952
        %v5081 = vunpack.c.l.b16 %v4953
        %v5082 = vpack.c.b16 %v5019, %v5018
        %v5083 = vpack.c.b16 %v5021, %v5020
        %v5084 = vpack.c.b16 %v5023, %v5022
        %v5085 = vpack.c.b16 %v5025, %v5024
        %v5086 = vpack.c.b16 %v5027, %v5026
        %v5087 = vpack.c.b16 %v5029, %v5028
        %v5088 = vpack.c.b16 %v5031, %v5030
        %v5089 = vpack.c.b16 %v5033, %v5032
        %v5090 = vpack.c.b16 %v5035, %v5034
        %v5091 = vpack.c.b16 %v5037, %v5036
        %v5092 = vpack.c.b16 %v5039, %v5038
        %v5093 = vpack.c.b16 %v5041, %v5040
        %v5094 = vpack.c.b16 %v5043, %v5042
        %v5095 = vpack.c.b16 %v5045, %v5044
        %v5096 = vpack.c.b16 %v5047, %v5046
        %v5097 = vpack.c.b16 %v5049, %v5048
        %v5098 = vpack.c.b16 %v5051, %v5050
        %v5099 = vpack.c.b16 %v5053, %v5052
        %v5100 = vpack.c.b16 %v5055, %v5054
        %v5101 = vpack.c.b16 %v5057, %v5056
        %v5102 = vpack.c.b16 %v5059, %v5058
        %v5103 = vpack.c.b16 %v5061, %v5060
        %v5104 = vpack.c.b16 %v5063, %v5062
        %v5105 = vpack.c.b16 %v5065, %v5064
        %v5106 = vpack.c.b16 %v5067, %v5066
        %v5107 = vpack.c.b16 %v5069, %v5068
        %v5108 = vpack.c.b16 %v5071, %v5070
        %v5109 = vpack.c.b16 %v5073, %v5072
        %v5110 = vpack.c.b16 %v5075, %v5074
        %v5111 = vpack.c.b16 %v5077, %v5076
        %v5112 = vpack.c.b16 %v5079, %v5078
        %v5113 = vpack.c.b16 %v5081, %v5080
        %5146 = vmatpush.bf16.msra.mxu0 %v5089
        %5147 = vmatpush.bf16.msra.mxu0 %v5088
        %5148 = vmatpush.bf16.msra.mxu0 %v5087
        %5149 = vmatpush.bf16.msra.mxu0 %v5086
        %5150 = vmatpush.bf16.msra.mxu0 %v5085
        %5151 = vmatpush.bf16.msra.mxu0 %v5084
        %5152 = vmatpush.bf16.msra.mxu0 %v5083
        %5153 = vmatpush.bf16.msra.mxu0 %v5082
        %5154 = vmatmul.bf16.gmra.mxu0 %v4886
        %v5155 = vpop.f32.mrf.mxu0
        %v5156 = vadd.f32 0.0, %v5155
        %v5157 = vpop.f32.mrf.mxu0
        %5158 = vdwg.mxu0
        %5159 = vmatpush.bf16.msra.mxu0 %v5097
        %5160 = vmatpush.bf16.msra.mxu0 %v5096
        %5161 = vmatpush.bf16.msra.mxu0 %v5095
        %5162 = vmatpush.bf16.msra.mxu0 %v5094
        %5163 = vmatpush.bf16.msra.mxu0 %v5093
        %5164 = vmatpush.bf16.msra.mxu0 %v5092
        %5165 = vmatpush.bf16.msra.mxu0 %v5091
        %5166 = vmatpush.bf16.msra.mxu0 %v5090
        %5167 = vmatmul.bf16.gmra.mxu0 %v4887
        %v5168 = vpop.f32.mrf.mxu0
        %v5169 = vadd.f32 %v5156, %v5168
        %v5170 = vpop.f32.mrf.mxu0
        %5171 = vdwg.mxu0
        %5172 = vmatpush.bf16.msra.mxu0 %v5105
        %5173 = vmatpush.bf16.msra.mxu0 %v5104
        %5174 = vmatpush.bf16.msra.mxu0 %v5103
        %5175 = vmatpush.bf16.msra.mxu0 %v5102
        %5176 = vmatpush.bf16.msra.mxu0 %v5101
        %5177 = vmatpush.bf16.msra.mxu0 %v5100
        %5178 = vmatpush.bf16.msra.mxu0 %v5099
        %5179 = vmatpush.bf16.msra.mxu0 %v5098
        %5180 = vmatmul.bf16.gmra.mxu0 %v4888
        %v5181 = vpop.f32.mrf.mxu0
        %v5182 = vadd.f32 %v5169, %v5181
        %v5183 = vpop.f32.mrf.mxu0
        %5184 = vdwg.mxu0
        %5185 = vmatpush.bf16.msra.mxu0 %v5113
        %5186 = vmatpush.bf16.msra.mxu0 %v5112
        %5187 = vmatpush.bf16.msra.mxu0 %v5111
        %5188 = vmatpush.bf16.msra.mxu0 %v5110
        %5189 = vmatpush.bf16.msra.mxu0 %v5109
        %5190 = vmatpush.bf16.msra.mxu0 %v5108
        %5191 = vmatpush.bf16.msra.mxu0 %v5107
        %5192 = vmatpush.bf16.msra.mxu0 %v5106
        %5193 = vmatmul.bf16.gmra.mxu0 %v4889
        %v5194 = vpop.f32.mrf.mxu0
        %v5195 = vadd.f32 %v5182, %v5194
        %v5196 = vpop.f32.mrf.mxu0
        %5197 = vdwg.mxu0
        %v5198 = vadd.f32 %v4885, %v5195
        %vm5199 = vcmask 74752
        %5200 = vst.msk [vmem:[#allocation3] sm:$0x3] %vm5199, %v5198
        %p5201 = scmp.eq.s32.totalorder %s21, 3
        // Predicated region
        $region73: #{_lambda_.7} parent=47 // pred_check
          %p5202 = pneg %p5201
        $region74: #{_lambda_.7} parent=47 // pred_check_branch
          %5204 = sbr.rel (%p5202) target = $region76
        $region75: #{_lambda_.7} parent=47 // pred_region
          %v5205 = vld [vmem:[#allocation3] sm:$0x3]
          %v5206 = vld [vmem:[#allocation11] sm:$0x1]
          %v5208 = vperm.slane %v5206, 0
          %v5210 = vadd.f32 %v5205, %v5208
          %v5211 = vxor.u32 %v5210, 2147483648
          %v5212 = vmul.f32 %v5211, 1.442695
          %v5213 = vpow.pop %v5212
          %v5214 = vadd.f32 %v5213, 1.0
          %v5215 = vrcp.pop %v5214
          %v5216 = vmul.f32 %v5214, %v5215
          %v5217 = vsub.f32 1.0, %v5216
          %v5218 = vmul.f32 %v5215, %v5217
          %v5219 = vadd.f32 %v5215, %v5218
          %vm5220 = vweird.f32 %v5214
          %vm5221 = vweird.f32 %v5215
          %vm5222 = vmor %vm5220, %vm5221
          %v5223 = vsel %vm5222, %v5215, %v5219
          %v5224 = vand.u32 2147483647, %v5214
          %vm5225 = vcmp.eq.f32.partialorder %v5224, 8.507059e+37
          %v5226 = vand.u32 %v5214, 2147483648
          %v5227 = vor.u32 1.1754944e-38, %v5226
          %v5228 = vsel %vm5225, %v5227, %v5223
          %v5229 = vmul.f32 1.0, %v5228
          %5230 = vst.msk [vmem:[#allocation12] sm:$0x3] %vm5199, %v5229
        $region76: #{_lambda_.7} parent=47 // pred_fallthru
          _
        // Predicated region
        $region77: #{_lambda_.7} parent=47 // pred_check
          %p5231 = pneg %p196
        $region78: #{_lambda_.7} parent=47 // pred_check_branch
          %5233 = sbr.rel (%p5231) target = $region80
        $region79: #{_lambda_.7} parent=47 // pred_region
          %5235 = vsyncadd [#allocation6], 0
          %s5237 = sshll.u32 [#allocation12], 4
          %s5238 = int_to_ptr.vmem [resolvable:$true] %s5237
          %s5239 = sshll.u32 %s7, 4
          %s5240 = int_to_ptr.hbm [resolvable:$true] %s5239
          %5242 = dma.vmem_to_hbm [thread:$0]  %s5238, 32, %s5240, [#allocation6]
        $region80: #{_lambda_.7} parent=47 // pred_fallthru
          _
        // Predicated region
        $region81: #{_lambda_.7} parent=47 // pred_check
          %p5243 = pneg %p196
        $region82: #{_lambda_.7} parent=47 // pred_check_branch
          %5245 = sbr.rel (%p5243) target = $region84
        $region83: #{_lambda_.7} parent=47 // pred_region
          %5247 = dma.done [#allocation6], 32
        $region84: #{_lambda_.7} parent=47 // pred_fallthru
          _
      $region48: #{_lambda_.7} parent=5 // pred_fallthru
        _
      %p5248 = scmp.le.s32.totalorder 2, %s16
      // Predicated region
      $region85: #{_lambda_.7} parent=5 // pred_check
        %p5249 = pneg %p5248
      $region86: #{_lambda_.7} parent=5 // pred_check_branch
        %5251 = sbr.rel (%p5249) target = $region88
      $region87: #{_lambda_.7} parent=5 // pred_region
        %s5252 = ssub.s32 %s16, 2
      $region88: #{_lambda_.7} parent=5 // pred_fallthru
        _
    $region6: #{_lambda_.7} parent=1 // loop_footer
      %s20 = sadd.s32 1, %s16
    $region7: #{_lambda_.7} parent=1 // loop_footer_branch
      %15 = sbr.rel target = $region3
    $region8: #{_lambda_.7} parent=1 // loop_exit
      _
    %5253 = vsyncpa [#allocation5], 1
    %s5254 = scalar_lea.sflag [#allocation5], 1
    %5255 = vsyncpa %s5254, 1
    %5256 = vsyncpa [#allocation8], 1
    %5257 = vsyncpa [#allocation6], 1
    %s5258 = scalar_lea.sflag [#allocation6], 1
    %5259 = vsyncpa %s5258, 1

</llo_original>
